<compile_context>
chip_gen: v7x
topology: tpu7x:2x2x1
jax: 0.10.0
libtpu: 0.0.40
codegen_flags: <defaults>
</compile_context>

<pallas_src>
import jax
import jax.numpy as jnp
import numpy as np
from jax.experimental import pallas as pl
from jax.experimental.pallas import tpu as pltpu

# ---- model dimensions (small, consistent with the module's forward) ----
B = 2           # batch (number of prompts)
S = 8           # sequence length (context length)
D = 32          # transformer width
H = 4           # attention heads
HD = D // H     # head dim
N_LAYERS = 3    # transformer depth
N_CTX = 2       # MaPLe compound-prompt context length
N_DEEP = 2      # number of deeper compound prompts (layers 1..N_DEEP get spliced)
OUT_DIM = 32    # text projection output dim
EPS = 1e-5
NEG_INF = -1e9
BS = B * S       # residual-stream rows
BHS = B * H * S  # rows of the head-major attention problem

assert (S & (S - 1)) == 0 and (BS & (BS - 1)) == 0 and (HD & (HD - 1)) == 0
LOG2_S = S.bit_length() - 1
LOG2_BS = BS.bit_length() - 1
LOG2_HD = HD.bit_length() - 1


# ----------------------------- fused kernel --------------------------------

def _fused_text_encoder_kernel(eot_ref,
                               x0_ref, ctx_ref,
                               ln1g_ref, ln1b_ref, wqkv_ref, bqkv_ref,
                               wo_ref, bo_ref, ln2g_ref, ln2b_ref,
                               w1_ref, b1_ref, w2_ref, b2_ref,
                               lnfg_ref, lnfb_ref, proj_ref,
                               out_ref, x_scratch):
    f32 = jnp.float32

    # ================= layer-invariant constants (built ONCE) =================
    # ones vectors: push LN / softmax reductions onto the MXU (XLU is the scarce unit here)
    ones_d = jnp.ones((D, 1), f32)
    ones_n = jnp.ones((BHS, 1), f32)
    inv_d = 1.0 / D

    # validity mask for the (BHS, BHS) block-diagonal + causal score matrix
    r = jax.lax.broadcasted_iota(jnp.int32, (BHS, BHS), 0)
    c = jax.lax.broadcasted_iota(jnp.int32, (BHS, BHS), 1)
    valid = jnp.logical_and((r >> LOG2_S) == (c >> LOG2_S),        # same (head, batch) block
                            (c & (S - 1)) <= (r & (S - 1)))        # causal inside the block

    # R  : (BHS, BS)  row-replication  -> head-major rows via the MXU (R[h*BS + r, r] = 1)
    # RT : (BS, BHS)  its transpose    -> regroup head-major rows back to residual layout
    ri = jax.lax.broadcasted_iota(jnp.int32, (BHS, BS), 0)
    ci = jax.lax.broadcasted_iota(jnp.int32, (BHS, BS), 1)
    R = ((ri & (BS - 1)) == ci).astype(f32)
    ti = jax.lax.broadcasted_iota(jnp.int32, (BS, BHS), 0)
    tj = jax.lax.broadcasted_iota(jnp.int32, (BS, BHS), 1)
    RT = (ti == (tj & (BS - 1))).astype(f32)

    # M : (BHS, D) per-row head column mask (head-major row block h keeps head h's HD cols)
    ii = jax.lax.broadcasted_iota(jnp.int32, (BHS, D), 0)
    di = jax.lax.broadcasted_iota(jnp.int32, (BHS, D), 1)
    M = ((ii >> LOG2_BS) == (di >> LOG2_HD)).astype(f32)

    # MaPLe splice helpers: replace rows [1 : 1+N_CTX] of every batch element
    si = jax.lax.broadcasted_iota(jnp.int32, (BS, 1), 0)
    pos = si & (S - 1)
    splice_mask = jnp.logical_and(pos >= 1, pos < 1 + N_CTX)        # (BS, 1) bool
    sj = jax.lax.broadcasted_iota(jnp.int32, (BS, N_CTX), 0)
    sc = jax.lax.broadcasted_iota(jnp.int32, (BS, N_CTX), 1)
    Rc = ((sj & (S - 1)) == (sc + 1)).astype(f32)                   # (BS, N_CTX) replication

    def layer_norm(x, g, b):
        # mean / var as matmuls against ones_d (MXU) instead of cross-lane XLU reductions
        mu = jnp.dot(x, ones_d, preferred_element_type=f32) * inv_d
        xc = x - mu
        var = jnp.dot(xc * xc, ones_d, preferred_element_type=f32) * inv_d
        return xc * jax.lax.rsqrt(var + EPS) * g + b

    scale = 1.0 / (HD ** 0.5)

    # ========================== transformer layers ==========================
    x = x0_ref[...]                                                 # (BS, D), lives in vregs

    for l in range(N_LAYERS):                                       # fully-unrolled static loop
        # ---- MaPLe compound-prompt splice (static condition; no pl.when needed) ----
        if 1 <= l <= N_DEEP:
            ctx = ctx_ref[l - 1]                                    # (N_CTX, D), static index
            ctx_b = jnp.dot(Rc, ctx, preferred_element_type=f32)    # (BS, D) row broadcast
            x = jnp.where(splice_mask, ctx_b, x)

        # ---- LayerNorm 1 ----
        xn = layer_norm(x, ln1g_ref[l], ln1b_ref[l])

        # ---- causal MHSA: all heads & batches in one block-diagonal masked matmul ----
        qkv = jnp.dot(xn, wqkv_ref[l], preferred_element_type=f32) + bqkv_ref[l]
        q = qkv[:, :D]
        k = qkv[:, D:2 * D]
        v = qkv[:, 2 * D:]
        qh = jnp.dot(R, q, preferred_element_type=f32) * M          # (BHS, D) head-masked
        kh = jnp.dot(R, k, preferred_element_type=f32)              # (BHS, D)
        vh = jnp.dot(R, v, preferred_element_type=f32) * M          # (BHS, D) head-masked

        s = jax.lax.dot_general(qh, kh, (((1,), (1,)), ((), ())),
                                preferred_element_type=f32) * scale
        s = jnp.where(valid, s, NEG_INF)
        s = s - jnp.max(s, axis=-1, keepdims=True)
        p = jnp.exp(s)
        denom = jnp.dot(p, ones_n, preferred_element_type=f32)      # row sums on the MXU
        p = p / denom
        o = jnp.dot(p, vh, preferred_element_type=f32)              # (BHS, D), disjoint cols
        # regroup back to (BS, D): sum over head row-blocks of disjoint column blocks
        attn = jnp.dot(RT, o, preferred_element_type=f32)
        attn = jnp.dot(attn, wo_ref[l], preferred_element_type=f32) + bo_ref[l]
        x = x + attn

        # ---- LayerNorm 2 + QuickGELU MLP ----
        xn2 = layer_norm(x, ln2g_ref[l], ln2b_ref[l])
        h1 = jnp.dot(xn2, w1_ref[l], preferred_element_type=f32) + b1_ref[l]
        h1 = h1 * jax.nn.sigmoid(1.702 * h1)                        # QuickGELU
        x = x + jnp.dot(h1, w2_ref[l], preferred_element_type=f32) + b2_ref[l]

    # ---- epilogue: EOT-row gather (dynamic sublane reads) + ln_final + projection ----
    x_scratch[...] = x
    rows = [x_scratch[pl.ds(eot_ref[b] + b * S, 1), :] for b in range(B)]
    sel = jnp.concatenate(rows, axis=0)                             # (B, D)
    xf = layer_norm(sel, lnfg_ref[...], lnfb_ref[...])
    out_ref[...] = jnp.dot(xf, proj_ref[...], preferred_element_type=f32)


# ----------------------------- wrapper --------------------------------------

def text_encoder_maple_forward(prompts, tokenized_prompts, compound_prompts,
                               params, pos_emb, lnf_g, lnf_b, proj):
    x0 = (prompts + pos_emb[None]).reshape(B * S, D)
    eot = jnp.argmax(tokenized_prompts, axis=-1).astype(jnp.int32)  # (B,) EOT indices -> SMEM
    ctx = jnp.stack(compound_prompts, axis=0)                       # (N_DEEP, N_CTX, D)

    def full2(i, eot_ref):   # layer-invariant 2-D block, fetched once
        return (0, 0)

    def full3(i, eot_ref):   # full 3-D stack, fetched once
        return (0, 0, 0)

    grid_spec = pltpu.PrefetchScalarGridSpec(
        num_scalar_prefetch=1,
        grid=(1,),                                        # single step: no per-layer pipeline
        in_specs=[
            pl.BlockSpec((B * S, D), full2),              # x0 (prompts + pos_emb)
            pl.BlockSpec((N_DEEP, N_CTX, D), full3),      # compound prompts (all layers)
            pl.BlockSpec((N_LAYERS, 1, D), full3),        # ln1_g
            pl.BlockSpec((N_LAYERS, 1, D), full3),        # ln1_b
            pl.BlockSpec((N_LAYERS, D, 3 * D), full3),    # W_qkv
            pl.BlockSpec((N_LAYERS, 1, 3 * D), full3),    # b_qkv
            pl.BlockSpec((N_LAYERS, D, D), full3),        # W_out
            pl.BlockSpec((N_LAYERS, 1, D), full3),        # b_out
            pl.BlockSpec((N_LAYERS, 1, D), full3),        # ln2_g
            pl.BlockSpec((N_LAYERS, 1, D), full3),        # ln2_b
            pl.BlockSpec((N_LAYERS, D, 4 * D), full3),    # W_fc1
            pl.BlockSpec((N_LAYERS, 1, 4 * D), full3),    # b_fc1
            pl.BlockSpec((N_LAYERS, 4 * D, D), full3),    # W_fc2
            pl.BlockSpec((N_LAYERS, 1, D), full3),        # b_fc2
            pl.BlockSpec((1, D), full2),                  # lnf gamma
            pl.BlockSpec((1, D), full2),                  # lnf beta
            pl.BlockSpec((D, OUT_DIM), full2),            # text projection
        ],
        out_specs=pl.BlockSpec((B, OUT_DIM), full2),      # 2-D output, written exactly once
        scratch_shapes=[pltpu.VMEM((B * S, D), jnp.float32)],
    )

    return pl.pallas_call(
        _fused_text_encoder_kernel,
        out_shape=jax.ShapeDtypeStruct((B, OUT_DIM), jnp.float32),
        grid_spec=grid_spec,
        compiler_params=pltpu.CompilerParams(dimension_semantics=("arbitrary",)),
    )(eot, x0, ctx,
      params["ln1_g"], params["ln1_b"], params["wqkv"], params["bqkv"],
      params["wo"], params["bo"], params["ln2_g"], params["ln2_b"],
      params["w1"], params["b1"], params["w2"], params["b2"],
      lnf_g, lnf_b, proj)


# --------------------------- reference (pure JAX) ---------------------------

def _ln(x, g, b):
    mu = x.mean(-1, keepdims=True)
    var = ((x - mu) ** 2).mean(-1, keepdims=True)
    return (x - mu) / jnp.sqrt(var + EPS) * g + b


def reference_forward(prompts, tokenized_prompts, compound_prompts,
                      params, pos_emb, lnf_g, lnf_b, proj):
    x = prompts + pos_emb[None]
    mask = jnp.where(jnp.triu(jnp.ones((S, S), bool), k=1), NEG_INF, 0.0).astype(jnp.float32)
    counter = 0
    for i in range(N_LAYERS):
        if i > 0 and counter < len(compound_prompts):
            ctx = jnp.broadcast_to(compound_prompts[counter][None], (B, N_CTX, D))
            x = jnp.concatenate([x[:, :1], ctx, x[:, 1 + N_CTX:]], axis=1)
            counter += 1
        p = {k: v[i] for k, v in params.items()}
        xn = _ln(x, p["ln1_g"], p["ln1_b"])
        qkv = xn @ p["wqkv"] + p["bqkv"]
        q, k, v = jnp.split(qkv, 3, axis=-1)
        q = q.reshape(B, S, H, HD)
        k = k.reshape(B, S, H, HD)
        v = v.reshape(B, S, H, HD)
        s = jnp.einsum("bqhd,bkhd->bhqk", q, k) / (HD ** 0.5) + mask
        pw = jax.nn.softmax(s, axis=-1)
        a = jnp.einsum("bhqk,bkhd->bqhd", pw, v).reshape(B, S, D)
        x = x + a @ p["wo"] + p["bo"]
        xn2 = _ln(x, p["ln2_g"], p["ln2_b"])
        h1 = xn2 @ p["w1"] + p["b1"]
        h1 = h1 * jax.nn.sigmoid(1.702 * h1)
        x = x + h1 @ p["w2"] + p["b2"]
    eot = jnp.argmax(tokenized_prompts, axis=-1)
    xf = _ln(x, lnf_g, lnf_b)
    sel = xf[jnp.arange(B), eot]
    return sel @ proj


# --------------------------- deterministic init ---------------------------

def init_params(key):
    keys = jax.random.split(key, 16)
    it = iter(keys)

    def w(shape, scale=0.05):
        return scale * jax.random.normal(next(it), shape, jnp.float32)

    params = dict(
        ln1_g=jnp.ones((N_LAYERS, 1, D), jnp.float32),
        ln1_b=jnp.zeros((N_LAYERS, 1, D), jnp.float32),
        wqkv=w((N_LAYERS, D, 3 * D)), bqkv=w((N_LAYERS, 1, 3 * D), 0.01),
        wo=w((N_LAYERS, D, D)), bo=w((N_LAYERS, 1, D), 0.01),
        ln2_g=jnp.ones((N_LAYERS, 1, D), jnp.float32),
        ln2_b=jnp.zeros((N_LAYERS, 1, D), jnp.float32),
        w1=w((N_LAYERS, D, 4 * D)), b1=w((N_LAYERS, 1, 4 * D), 0.01),
        w2=w((N_LAYERS, 4 * D, D)), b2=w((N_LAYERS, 1, D), 0.01),
    )
    pos_emb = w((S, D), 0.02)
    lnf_g = jnp.ones((1, D), jnp.float32)
    lnf_b = jnp.zeros((1, D), jnp.float32)
    proj = w((D, OUT_DIM))
    return params, pos_emb, lnf_g, lnf_b, proj


# --------------------------------- main ------------------------------------

if __name__ == "__main__":
    key = jax.random.PRNGKey(0)
    kp, kt, kc, kw = jax.random.split(key, 4)

    # Example inputs (shapes implied by the module's forward):
    prompts = 0.1 * jax.random.normal(kp, (B, S, D), jnp.float32)        # prompt embeddings
    tokenized = jax.random.randint(kt, (B, S), 0, 100)                   # token ids
    tokenized = tokenized.at[0, 5].set(1000).at[1, 6].set(1000)          # EOT = max token id
    compound = [0.1 * jax.random.normal(k, (N_CTX, D), jnp.float32)
                for k in jax.random.split(kc, N_DEEP)]                   # deeper text prompts

    params, pos_emb, lnf_g, lnf_b, proj = init_params(kw)

    out = text_encoder_maple_forward(prompts, tokenized, compound,
                                     params, pos_emb, lnf_g, lnf_b, proj)
    out = jax.block_until_ready(out)

    ref = reference_forward(prompts, tokenized, compound,
                            params, pos_emb, lnf_g, lnf_b, proj)
    np.testing.assert_allclose(np.asarray(out), np.asarray(ref), rtol=2e-3, atol=2e-3)
    print("KERNEL_OK")
</pallas_src>

<mosaic_0001>
module attributes {stable_mosaic.version = 11 : i64} {
  func.func @_fused_text_encoder_kernel(%arg0: i32, %arg1: memref<2xi32, #tpu.memory_space<smem>>, %arg2: memref<16x32xf32, #tpu.memory_space<vmem>>, %arg3: memref<2x2x32xf32, #tpu.memory_space<vmem>>, %arg4: memref<3x1x32xf32, #tpu.memory_space<vmem>>, %arg5: memref<3x1x32xf32, #tpu.memory_space<vmem>>, %arg6: memref<3x32x96xf32, #tpu.memory_space<vmem>>, %arg7: memref<3x1x96xf32, #tpu.memory_space<vmem>>, %arg8: memref<3x32x32xf32, #tpu.memory_space<vmem>>, %arg9: memref<3x1x32xf32, #tpu.memory_space<vmem>>, %arg10: memref<3x1x32xf32, #tpu.memory_space<vmem>>, %arg11: memref<3x1x32xf32, #tpu.memory_space<vmem>>, %arg12: memref<3x32x128xf32, #tpu.memory_space<vmem>>, %arg13: memref<3x1x128xf32, #tpu.memory_space<vmem>>, %arg14: memref<3x128x32xf32, #tpu.memory_space<vmem>>, %arg15: memref<3x1x32xf32, #tpu.memory_space<vmem>>, %arg16: memref<1x32xf32, #tpu.memory_space<vmem>>, %arg17: memref<1x32xf32, #tpu.memory_space<vmem>>, %arg18: memref<32x32xf32, #tpu.memory_space<vmem>>, %arg19: memref<2x32xf32, #tpu.memory_space<vmem>>, %arg20: memref<16x32xf32, #tpu.memory_space<vmem>>) attributes {dimension_semantics = [#tpu.dimension_semantics<arbitrary>], iteration_bounds = array<i64: 1>, scalar_prefetch = 1 : i64, scratch_operands = 1 : i64, tpu.core_type = #tpu.core_type<tc>, window_params = [{pipeline_mode = #tpu.pipeline_mode<synchronous>, transform_indices = @transform_0, window_bounds = array<i64: 16, 32>}, {pipeline_mode = #tpu.pipeline_mode<synchronous>, transform_indices = @transform_1, window_bounds = array<i64: 2, 2, 32>}, {pipeline_mode = #tpu.pipeline_mode<synchronous>, transform_indices = @transform_2, window_bounds = array<i64: 3, 1, 32>}, {pipeline_mode = #tpu.pipeline_mode<synchronous>, transform_indices = @transform_3, window_bounds = array<i64: 3, 1, 32>}, {pipeline_mode = #tpu.pipeline_mode<synchronous>, transform_indices = @transform_4, window_bounds = array<i64: 3, 32, 96>}, {pipeline_mode = #tpu.pipeline_mode<synchronous>, transform_indices = @transform_5, window_bounds = array<i64: 3, 1, 96>}, {pipeline_mode = #tpu.pipeline_mode<synchronous>, transform_indices = @transform_6, window_bounds = array<i64: 3, 32, 32>}, {pipeline_mode = #tpu.pipeline_mode<synchronous>, transform_indices = @transform_7, window_bounds = array<i64: 3, 1, 32>}, {pipeline_mode = #tpu.pipeline_mode<synchronous>, transform_indices = @transform_8, window_bounds = array<i64: 3, 1, 32>}, {pipeline_mode = #tpu.pipeline_mode<synchronous>, transform_indices = @transform_9, window_bounds = array<i64: 3, 1, 32>}, {pipeline_mode = #tpu.pipeline_mode<synchronous>, transform_indices = @transform_10, window_bounds = array<i64: 3, 32, 128>}, {pipeline_mode = #tpu.pipeline_mode<synchronous>, transform_indices = @transform_11, window_bounds = array<i64: 3, 1, 128>}, {pipeline_mode = #tpu.pipeline_mode<synchronous>, transform_indices = @transform_12, window_bounds = array<i64: 3, 128, 32>}, {pipeline_mode = #tpu.pipeline_mode<synchronous>, transform_indices = @transform_13, window_bounds = array<i64: 3, 1, 32>}, {pipeline_mode = #tpu.pipeline_mode<synchronous>, transform_indices = @transform_14, window_bounds = array<i64: 1, 32>}, {pipeline_mode = #tpu.pipeline_mode<synchronous>, transform_indices = @transform_15, window_bounds = array<i64: 1, 32>}, {pipeline_mode = #tpu.pipeline_mode<synchronous>, transform_indices = @transform_16, window_bounds = array<i64: 32, 32>}, {pipeline_mode = #tpu.pipeline_mode<synchronous>, transform_indices = @transform_17, window_bounds = array<i64: 2, 32>}]} {
    %cst = arith.constant 1.000000e+00 : f32
    %0 = vector.broadcast %cst : f32 to vector<32x1xf32>
    %cst_0 = arith.constant 1.000000e+00 : f32
    %1 = vector.broadcast %cst_0 : f32 to vector<64x1xf32>
    %2 = tpu.iota {dimensions = array<i32: 0>} : vector<64x64xi32>
    %3 = tpu.iota {dimensions = array<i32: 1>} : vector<64x64xi32>
    %c3_i32 = arith.constant 3 : i32
    %4 = vector.broadcast %c3_i32 : i32 to vector<64x64xi32>
    %5 = arith.shrsi %2, %4 : vector<64x64xi32>
    %c3_i32_1 = arith.constant 3 : i32
    %6 = vector.broadcast %c3_i32_1 : i32 to vector<64x64xi32>
    %7 = arith.shrsi %3, %6 : vector<64x64xi32>
    %8 = arith.cmpi eq, %5, %7 : vector<64x64xi32>
    %c7_i32 = arith.constant 7 : i32
    %9 = vector.broadcast %c7_i32 : i32 to vector<64x64xi32>
    %10 = arith.andi %3, %9 : vector<64x64xi32>
    %c7_i32_2 = arith.constant 7 : i32
    %11 = vector.broadcast %c7_i32_2 : i32 to vector<64x64xi32>
    %12 = arith.andi %2, %11 : vector<64x64xi32>
    %13 = arith.cmpi sle, %10, %12 : vector<64x64xi32>
    %14 = arith.andi %8, %13 : vector<64x64xi1>
    %15 = tpu.iota {dimensions = array<i32: 0>} : vector<64x16xi32>
    %16 = tpu.iota {dimensions = array<i32: 1>} : vector<64x16xi32>
    %c15_i32 = arith.constant 15 : i32
    %17 = vector.broadcast %c15_i32 : i32 to vector<64x16xi32>
    %18 = arith.andi %15, %17 : vector<64x16xi32>
    %19 = arith.cmpi eq, %18, %16 : vector<64x16xi32>
    %20 = arith.extui %19 : vector<64x16xi1> to vector<64x16xi32>
    %21 = arith.sitofp %20 : vector<64x16xi32> to vector<64x16xf32>
    %22 = tpu.iota {dimensions = array<i32: 0>} : vector<16x64xi32>
    %23 = tpu.iota {dimensions = array<i32: 1>} : vector<16x64xi32>
    %c15_i32_3 = arith.constant 15 : i32
    %24 = vector.broadcast %c15_i32_3 : i32 to vector<16x64xi32>
    %25 = arith.andi %23, %24 : vector<16x64xi32>
    %26 = arith.cmpi eq, %22, %25 : vector<16x64xi32>
    %27 = arith.extui %26 : vector<16x64xi1> to vector<16x64xi32>
    %28 = arith.sitofp %27 : vector<16x64xi32> to vector<16x64xf32>
    %29 = tpu.iota {dimensions = array<i32: 0>} : vector<64x32xi32>
    %30 = tpu.iota {dimensions = array<i32: 1>} : vector<64x32xi32>
    %c4_i32 = arith.constant 4 : i32
    %31 = vector.broadcast %c4_i32 : i32 to vector<64x32xi32>
    %32 = arith.shrsi %29, %31 : vector<64x32xi32>
    %c3_i32_4 = arith.constant 3 : i32
    %33 = vector.broadcast %c3_i32_4 : i32 to vector<64x32xi32>
    %34 = arith.shrsi %30, %33 : vector<64x32xi32>
    %35 = arith.cmpi eq, %32, %34 : vector<64x32xi32>
    %36 = arith.extui %35 : vector<64x32xi1> to vector<64x32xi32>
    %37 = arith.sitofp %36 : vector<64x32xi32> to vector<64x32xf32>
    %38 = tpu.iota {dimensions = array<i32: 0>} : vector<16x1xi32>
    %c7_i32_5 = arith.constant 7 : i32
    %39 = vector.broadcast %c7_i32_5 : i32 to vector<16x1xi32>
    %40 = arith.andi %38, %39 : vector<16x1xi32>
    %c1_i32 = arith.constant 1 : i32
    %41 = vector.broadcast %c1_i32 : i32 to vector<16x1xi32>
    %42 = arith.cmpi sge, %40, %41 : vector<16x1xi32>
    %c3_i32_6 = arith.constant 3 : i32
    %43 = vector.broadcast %c3_i32_6 : i32 to vector<16x1xi32>
    %44 = arith.cmpi slt, %40, %43 : vector<16x1xi32>
    %45 = arith.andi %42, %44 : vector<16x1xi1>
    %46 = tpu.iota {dimensions = array<i32: 0>} : vector<16x2xi32>
    %47 = tpu.iota {dimensions = array<i32: 1>} : vector<16x2xi32>
    %c7_i32_7 = arith.constant 7 : i32
    %48 = vector.broadcast %c7_i32_7 : i32 to vector<16x2xi32>
    %49 = arith.andi %46, %48 : vector<16x2xi32>
    %c1_i32_8 = arith.constant 1 : i32
    %50 = vector.broadcast %c1_i32_8 : i32 to vector<16x2xi32>
    %51 = arith.addi %47, %50 : vector<16x2xi32>
    %52 = arith.cmpi eq, %49, %51 : vector<16x2xi32>
    %53 = arith.extui %52 : vector<16x2xi1> to vector<16x2xi32>
    %54 = arith.sitofp %53 : vector<16x2xi32> to vector<16x2xf32>
    %c0 = arith.constant 0 : index
    %c0_9 = arith.constant 0 : index
    %55 = vector.load %arg2[%c0, %c0_9] : memref<16x32xf32, #tpu.memory_space<vmem>>, vector<16x32xf32>
    %c0_10 = arith.constant 0 : index
    %c0_11 = arith.constant 0 : index
    %c0_12 = arith.constant 0 : index
    %56 = vector.load %arg4[%c0_10, %c0_11, %c0_12] : memref<3x1x32xf32, #tpu.memory_space<vmem>>, vector<1x1x32xf32>
    %57 = vector.shape_cast %56 : vector<1x1x32xf32> to vector<1x32xf32>
    %c0_13 = arith.constant 0 : index
    %c0_14 = arith.constant 0 : index
    %c0_15 = arith.constant 0 : index
    %58 = vector.load %arg5[%c0_13, %c0_14, %c0_15] : memref<3x1x32xf32, #tpu.memory_space<vmem>>, vector<1x1x32xf32>
    %59 = vector.shape_cast %58 : vector<1x1x32xf32> to vector<1x32xf32>
    %cst_16 = arith.constant dense<0.000000e+00> : vector<16x1xf32>
    %60 = tpu.matmul %55, %0, %cst_16 {dimension_numbers = #tpu.dot_dimension_numbers<[1], [0], [0], [1], [0, 0, 1, 1], [], []>} : vector<16x32xf32>, vector<32x1xf32>, vector<16x1xf32> -> vector<16x1xf32>
    %cst_17 = arith.constant 3.125000e-02 : f32
    %61 = vector.broadcast %cst_17 : f32 to vector<16x1xf32>
    %62 = arith.mulf %60, %61 : vector<16x1xf32>
    %63 = vector.broadcast %62 : vector<16x1xf32> to vector<16x32xf32>
    %64 = arith.subf %55, %63 : vector<16x32xf32>
    %65 = arith.mulf %64, %64 : vector<16x32xf32>
    %cst_18 = arith.constant dense<0.000000e+00> : vector<16x1xf32>
    %66 = tpu.matmul %65, %0, %cst_18 {dimension_numbers = #tpu.dot_dimension_numbers<[1], [0], [0], [1], [0, 0, 1, 1], [], []>} : vector<16x32xf32>, vector<32x1xf32>, vector<16x1xf32> -> vector<16x1xf32>
    %cst_19 = arith.constant 3.125000e-02 : f32
    %67 = vector.broadcast %cst_19 : f32 to vector<16x1xf32>
    %68 = arith.mulf %66, %67 : vector<16x1xf32>
    %cst_20 = arith.constant 9.99999974E-6 : f32
    %69 = vector.broadcast %cst_20 : f32 to vector<16x1xf32>
    %70 = arith.addf %68, %69 : vector<16x1xf32>
    %71 = math.rsqrt %70 : vector<16x1xf32>
    %72 = vector.broadcast %71 : vector<16x1xf32> to vector<16x32xf32>
    %73 = arith.mulf %64, %72 : vector<16x32xf32>
    %74 = vector.broadcast %57 : vector<1x32xf32> to vector<16x32xf32>
    %75 = arith.mulf %73, %74 : vector<16x32xf32>
    %76 = vector.broadcast %59 : vector<1x32xf32> to vector<16x32xf32>
    %77 = arith.addf %75, %76 : vector<16x32xf32>
    %c0_21 = arith.constant 0 : index
    %c0_22 = arith.constant 0 : index
    %c0_23 = arith.constant 0 : index
    %78 = vector.load %arg6[%c0_21, %c0_22, %c0_23] : memref<3x32x96xf32, #tpu.memory_space<vmem>>, vector<1x32x96xf32>
    %79 = vector.shape_cast %78 : vector<1x32x96xf32> to vector<32x96xf32>
    %cst_24 = arith.constant dense<0.000000e+00> : vector<16x96xf32>
    %80 = tpu.matmul %77, %79, %cst_24 {dimension_numbers = #tpu.dot_dimension_numbers<[1], [0], [0], [1], [0, 0, 1, 1], [], []>} : vector<16x32xf32>, vector<32x96xf32>, vector<16x96xf32> -> vector<16x96xf32>
    %c0_25 = arith.constant 0 : index
    %c0_26 = arith.constant 0 : index
    %c0_27 = arith.constant 0 : index
    %81 = vector.load %arg7[%c0_25, %c0_26, %c0_27] : memref<3x1x96xf32, #tpu.memory_space<vmem>>, vector<1x1x96xf32>
    %82 = vector.shape_cast %81 : vector<1x1x96xf32> to vector<1x96xf32>
    %83 = vector.broadcast %82 : vector<1x96xf32> to vector<16x96xf32>
    %84 = arith.addf %80, %83 : vector<16x96xf32>
    %85 = vector.extract_strided_slice %84 {offsets = [0, 0], sizes = [16, 32], strides = [1, 1]} : vector<16x96xf32> to vector<16x32xf32>
    %86 = vector.extract_strided_slice %84 {offsets = [0, 32], sizes = [16, 32], strides = [1, 1]} : vector<16x96xf32> to vector<16x32xf32>
    %87 = vector.extract_strided_slice %84 {offsets = [0, 64], sizes = [16, 32], strides = [1, 1]} : vector<16x96xf32> to vector<16x32xf32>
    %cst_28 = arith.constant dense<0.000000e+00> : vector<64x32xf32>
    %88 = tpu.matmul %21, %85, %cst_28 {dimension_numbers = #tpu.dot_dimension_numbers<[1], [0], [0], [1], [0, 0, 1, 1], [], []>} : vector<64x16xf32>, vector<16x32xf32>, vector<64x32xf32> -> vector<64x32xf32>
    %89 = arith.mulf %88, %37 : vector<64x32xf32>
    %cst_29 = arith.constant dense<0.000000e+00> : vector<64x32xf32>
    %90 = tpu.matmul %21, %86, %cst_29 {dimension_numbers = #tpu.dot_dimension_numbers<[1], [0], [0], [1], [0, 0, 1, 1], [], []>} : vector<64x16xf32>, vector<16x32xf32>, vector<64x32xf32> -> vector<64x32xf32>
    %cst_30 = arith.constant dense<0.000000e+00> : vector<64x32xf32>
    %91 = tpu.matmul %21, %87, %cst_30 {dimension_numbers = #tpu.dot_dimension_numbers<[1], [0], [0], [1], [0, 0, 1, 1], [], []>} : vector<64x16xf32>, vector<16x32xf32>, vector<64x32xf32> -> vector<64x32xf32>
    %92 = arith.mulf %91, %37 : vector<64x32xf32>
    %cst_31 = arith.constant dense<0.000000e+00> : vector<64x64xf32>
    %93 = tpu.matmul %89, %90, %cst_31 {dimension_numbers = #tpu.dot_dimension_numbers<[1], [1], [0], [0], [0, 0, 1, 0], [], []>} : vector<64x32xf32>, vector<64x32xf32>, vector<64x64xf32> -> vector<64x64xf32>
    %cst_32 = arith.constant 0.353553385 : f32
    %94 = vector.broadcast %cst_32 : f32 to vector<64x64xf32>
    %95 = arith.mulf %93, %94 : vector<64x64xf32>
    %cst_33 = arith.constant -1.000000e+09 : f32
    %96 = vector.broadcast %cst_33 : f32 to vector<64x64xf32>
    %97 = arith.select %14, %95, %96 : vector<64x64xi1>, vector<64x64xf32>
    %cst_34 = arith.constant dense<0xFF800000> : vector<64xf32>
    %98 = vector.multi_reduction <maximumf>, %97, %cst_34 [1] : vector<64x64xf32> to vector<64xf32>
    %99 = vector.shape_cast %98 : vector<64xf32> to vector<64x1xf32>
    %100 = vector.broadcast %99 : vector<64x1xf32> to vector<64x64xf32>
    %101 = arith.subf %97, %100 : vector<64x64xf32>
    %102 = math.exp %101 : vector<64x64xf32>
    %cst_35 = arith.constant dense<0.000000e+00> : vector<64x1xf32>
    %103 = tpu.matmul %102, %1, %cst_35 {dimension_numbers = #tpu.dot_dimension_numbers<[1], [0], [0], [1], [0, 0, 1, 1], [], []>} : vector<64x64xf32>, vector<64x1xf32>, vector<64x1xf32> -> vector<64x1xf32>
    %104 = vector.broadcast %103 : vector<64x1xf32> to vector<64x64xf32>
    %105 = arith.divf %102, %104 : vector<64x64xf32>
    %cst_36 = arith.constant dense<0.000000e+00> : vector<64x32xf32>
    %106 = tpu.matmul %105, %92, %cst_36 {dimension_numbers = #tpu.dot_dimension_numbers<[1], [0], [0], [1], [0, 0, 1, 1], [], []>} : vector<64x64xf32>, vector<64x32xf32>, vector<64x32xf32> -> vector<64x32xf32>
    %cst_37 = arith.constant dense<0.000000e+00> : vector<16x32xf32>
    %107 = tpu.matmul %28, %106, %cst_37 {dimension_numbers = #tpu.dot_dimension_numbers<[1], [0], [0], [1], [0, 0, 1, 1], [], []>} : vector<16x64xf32>, vector<64x32xf32>, vector<16x32xf32> -> vector<16x32xf32>
    %c0_38 = arith.constant 0 : index
    %c0_39 = arith.constant 0 : index
    %c0_40 = arith.constant 0 : index
    %108 = vector.load %arg8[%c0_38, %c0_39, %c0_40] : memref<3x32x32xf32, #tpu.memory_space<vmem>>, vector<1x32x32xf32>
    %109 = vector.shape_cast %108 : vector<1x32x32xf32> to vector<32x32xf32>
    %cst_41 = arith.constant dense<0.000000e+00> : vector<16x32xf32>
    %110 = tpu.matmul %107, %109, %cst_41 {dimension_numbers = #tpu.dot_dimension_numbers<[1], [0], [0], [1], [0, 0, 1, 1], [], []>} : vector<16x32xf32>, vector<32x32xf32>, vector<16x32xf32> -> vector<16x32xf32>
    %c0_42 = arith.constant 0 : index
    %c0_43 = arith.constant 0 : index
    %c0_44 = arith.constant 0 : index
    %111 = vector.load %arg9[%c0_42, %c0_43, %c0_44] : memref<3x1x32xf32, #tpu.memory_space<vmem>>, vector<1x1x32xf32>
    %112 = vector.shape_cast %111 : vector<1x1x32xf32> to vector<1x32xf32>
    %113 = vector.broadcast %112 : vector<1x32xf32> to vector<16x32xf32>
    %114 = arith.addf %110, %113 : vector<16x32xf32>
    %115 = arith.addf %55, %114 : vector<16x32xf32>
    %c0_45 = arith.constant 0 : index
    %c0_46 = arith.constant 0 : index
    %c0_47 = arith.constant 0 : index
    %116 = vector.load %arg10[%c0_45, %c0_46, %c0_47] : memref<3x1x32xf32, #tpu.memory_space<vmem>>, vector<1x1x32xf32>
    %117 = vector.shape_cast %116 : vector<1x1x32xf32> to vector<1x32xf32>
    %c0_48 = arith.constant 0 : index
    %c0_49 = arith.constant 0 : index
    %c0_50 = arith.constant 0 : index
    %118 = vector.load %arg11[%c0_48, %c0_49, %c0_50] : memref<3x1x32xf32, #tpu.memory_space<vmem>>, vector<1x1x32xf32>
    %119 = vector.shape_cast %118 : vector<1x1x32xf32> to vector<1x32xf32>
    %cst_51 = arith.constant dense<0.000000e+00> : vector<16x1xf32>
    %120 = tpu.matmul %115, %0, %cst_51 {dimension_numbers = #tpu.dot_dimension_numbers<[1], [0], [0], [1], [0, 0, 1, 1], [], []>} : vector<16x32xf32>, vector<32x1xf32>, vector<16x1xf32> -> vector<16x1xf32>
    %cst_52 = arith.constant 3.125000e-02 : f32
    %121 = vector.broadcast %cst_52 : f32 to vector<16x1xf32>
    %122 = arith.mulf %120, %121 : vector<16x1xf32>
    %123 = vector.broadcast %122 : vector<16x1xf32> to vector<16x32xf32>
    %124 = arith.subf %115, %123 : vector<16x32xf32>
    %125 = arith.mulf %124, %124 : vector<16x32xf32>
    %cst_53 = arith.constant dense<0.000000e+00> : vector<16x1xf32>
    %126 = tpu.matmul %125, %0, %cst_53 {dimension_numbers = #tpu.dot_dimension_numbers<[1], [0], [0], [1], [0, 0, 1, 1], [], []>} : vector<16x32xf32>, vector<32x1xf32>, vector<16x1xf32> -> vector<16x1xf32>
    %cst_54 = arith.constant 3.125000e-02 : f32
    %127 = vector.broadcast %cst_54 : f32 to vector<16x1xf32>
    %128 = arith.mulf %126, %127 : vector<16x1xf32>
    %cst_55 = arith.constant 9.99999974E-6 : f32
    %129 = vector.broadcast %cst_55 : f32 to vector<16x1xf32>
    %130 = arith.addf %128, %129 : vector<16x1xf32>
    %131 = math.rsqrt %130 : vector<16x1xf32>
    %132 = vector.broadcast %131 : vector<16x1xf32> to vector<16x32xf32>
    %133 = arith.mulf %124, %132 : vector<16x32xf32>
    %134 = vector.broadcast %117 : vector<1x32xf32> to vector<16x32xf32>
    %135 = arith.mulf %133, %134 : vector<16x32xf32>
    %136 = vector.broadcast %119 : vector<1x32xf32> to vector<16x32xf32>
    %137 = arith.addf %135, %136 : vector<16x32xf32>
    %c0_56 = arith.constant 0 : index
    %c0_57 = arith.constant 0 : index
    %c0_58 = arith.constant 0 : index
    %138 = vector.load %arg12[%c0_56, %c0_57, %c0_58] : memref<3x32x128xf32, #tpu.memory_space<vmem>>, vector<1x32x128xf32>
    %139 = vector.shape_cast %138 : vector<1x32x128xf32> to vector<32x128xf32>
    %cst_59 = arith.constant dense<0.000000e+00> : vector<16x128xf32>
    %140 = tpu.matmul %137, %139, %cst_59 {dimension_numbers = #tpu.dot_dimension_numbers<[1], [0], [0], [1], [0, 0, 1, 1], [], []>} : vector<16x32xf32>, vector<32x128xf32>, vector<16x128xf32> -> vector<16x128xf32>
    %c0_60 = arith.constant 0 : index
    %c0_61 = arith.constant 0 : index
    %c0_62 = arith.constant 0 : index
    %141 = vector.load %arg13[%c0_60, %c0_61, %c0_62] : memref<3x1x128xf32, #tpu.memory_space<vmem>>, vector<1x1x128xf32>
    %142 = vector.shape_cast %141 : vector<1x1x128xf32> to vector<1x128xf32>
    %143 = vector.broadcast %142 : vector<1x128xf32> to vector<16x128xf32>
    %144 = arith.addf %140, %143 : vector<16x128xf32>
    %cst_63 = arith.constant 1.702000e+00 : f32
    %145 = vector.broadcast %cst_63 : f32 to vector<16x128xf32>
    %146 = arith.mulf %145, %144 : vector<16x128xf32>
    %147 = arith.negf %146 : vector<16x128xf32>
    %148 = math.exp %147 : vector<16x128xf32>
    %cst_64 = arith.constant 1.000000e+00 : f32
    %149 = vector.broadcast %cst_64 : f32 to vector<16x128xf32>
    %150 = arith.addf %149, %148 : vector<16x128xf32>
    %151 = arith.divf %149, %150 : vector<16x128xf32>
    %152 = arith.mulf %144, %151 : vector<16x128xf32>
    %c0_65 = arith.constant 0 : index
    %c0_66 = arith.constant 0 : index
    %c0_67 = arith.constant 0 : index
    %153 = vector.load %arg14[%c0_65, %c0_66, %c0_67] : memref<3x128x32xf32, #tpu.memory_space<vmem>>, vector<1x128x32xf32>
    %154 = vector.shape_cast %153 : vector<1x128x32xf32> to vector<128x32xf32>
    %cst_68 = arith.constant dense<0.000000e+00> : vector<16x32xf32>
    %155 = tpu.matmul %152, %154, %cst_68 {dimension_numbers = #tpu.dot_dimension_numbers<[1], [0], [0], [1], [0, 0, 1, 1], [], []>} : vector<16x128xf32>, vector<128x32xf32>, vector<16x32xf32> -> vector<16x32xf32>
    %156 = arith.addf %115, %155 : vector<16x32xf32>
    %c0_69 = arith.constant 0 : index
    %c0_70 = arith.constant 0 : index
    %c0_71 = arith.constant 0 : index
    %157 = vector.load %arg15[%c0_69, %c0_70, %c0_71] : memref<3x1x32xf32, #tpu.memory_space<vmem>>, vector<1x1x32xf32>
    %158 = vector.shape_cast %157 : vector<1x1x32xf32> to vector<1x32xf32>
    %159 = vector.broadcast %158 : vector<1x32xf32> to vector<16x32xf32>
    %160 = arith.addf %156, %159 : vector<16x32xf32>
    %c0_72 = arith.constant 0 : index
    %c0_73 = arith.constant 0 : index
    %c0_74 = arith.constant 0 : index
    %161 = vector.load %arg3[%c0_72, %c0_73, %c0_74] : memref<2x2x32xf32, #tpu.memory_space<vmem>>, vector<1x2x32xf32>
    %162 = vector.shape_cast %161 : vector<1x2x32xf32> to vector<2x32xf32>
    %cst_75 = arith.constant dense<0.000000e+00> : vector<16x32xf32>
    %163 = tpu.matmul %54, %162, %cst_75 {dimension_numbers = #tpu.dot_dimension_numbers<[1], [0], [0], [1], [0, 0, 1, 1], [], []>} : vector<16x2xf32>, vector<2x32xf32>, vector<16x32xf32> -> vector<16x32xf32>
    %164 = vector.shape_cast %45 : vector<16x1xi1> to vector<16x1xi1>
    %165 = vector.broadcast %164 : vector<16x1xi1> to vector<16x32xi1>
    %166 = arith.select %165, %163, %160 : vector<16x32xi1>, vector<16x32xf32>
    %c1 = arith.constant 1 : index
    %c0_76 = arith.constant 0 : index
    %c0_77 = arith.constant 0 : index
    %167 = vector.load %arg4[%c1, %c0_76, %c0_77] : memref<3x1x32xf32, #tpu.memory_space<vmem>>, vector<1x1x32xf32>
    %168 = vector.shape_cast %167 : vector<1x1x32xf32> to vector<1x32xf32>
    %c1_78 = arith.constant 1 : index
    %c0_79 = arith.constant 0 : index
    %c0_80 = arith.constant 0 : index
    %169 = vector.load %arg5[%c1_78, %c0_79, %c0_80] : memref<3x1x32xf32, #tpu.memory_space<vmem>>, vector<1x1x32xf32>
    %170 = vector.shape_cast %169 : vector<1x1x32xf32> to vector<1x32xf32>
    %cst_81 = arith.constant dense<0.000000e+00> : vector<16x1xf32>
    %171 = tpu.matmul %166, %0, %cst_81 {dimension_numbers = #tpu.dot_dimension_numbers<[1], [0], [0], [1], [0, 0, 1, 1], [], []>} : vector<16x32xf32>, vector<32x1xf32>, vector<16x1xf32> -> vector<16x1xf32>
    %cst_82 = arith.constant 3.125000e-02 : f32
    %172 = vector.broadcast %cst_82 : f32 to vector<16x1xf32>
    %173 = arith.mulf %171, %172 : vector<16x1xf32>
    %174 = vector.broadcast %173 : vector<16x1xf32> to vector<16x32xf32>
    %175 = arith.subf %166, %174 : vector<16x32xf32>
    %176 = arith.mulf %175, %175 : vector<16x32xf32>
    %cst_83 = arith.constant dense<0.000000e+00> : vector<16x1xf32>
    %177 = tpu.matmul %176, %0, %cst_83 {dimension_numbers = #tpu.dot_dimension_numbers<[1], [0], [0], [1], [0, 0, 1, 1], [], []>} : vector<16x32xf32>, vector<32x1xf32>, vector<16x1xf32> -> vector<16x1xf32>
    %cst_84 = arith.constant 3.125000e-02 : f32
    %178 = vector.broadcast %cst_84 : f32 to vector<16x1xf32>
    %179 = arith.mulf %177, %178 : vector<16x1xf32>
    %cst_85 = arith.constant 9.99999974E-6 : f32
    %180 = vector.broadcast %cst_85 : f32 to vector<16x1xf32>
    %181 = arith.addf %179, %180 : vector<16x1xf32>
    %182 = math.rsqrt %181 : vector<16x1xf32>
    %183 = vector.broadcast %182 : vector<16x1xf32> to vector<16x32xf32>
    %184 = arith.mulf %175, %183 : vector<16x32xf32>
    %185 = vector.broadcast %168 : vector<1x32xf32> to vector<16x32xf32>
    %186 = arith.mulf %184, %185 : vector<16x32xf32>
    %187 = vector.broadcast %170 : vector<1x32xf32> to vector<16x32xf32>
    %188 = arith.addf %186, %187 : vector<16x32xf32>
    %c1_86 = arith.constant 1 : index
    %c0_87 = arith.constant 0 : index
    %c0_88 = arith.constant 0 : index
    %189 = vector.load %arg6[%c1_86, %c0_87, %c0_88] : memref<3x32x96xf32, #tpu.memory_space<vmem>>, vector<1x32x96xf32>
    %190 = vector.shape_cast %189 : vector<1x32x96xf32> to vector<32x96xf32>
    %cst_89 = arith.constant dense<0.000000e+00> : vector<16x96xf32>
    %191 = tpu.matmul %188, %190, %cst_89 {dimension_numbers = #tpu.dot_dimension_numbers<[1], [0], [0], [1], [0, 0, 1, 1], [], []>} : vector<16x32xf32>, vector<32x96xf32>, vector<16x96xf32> -> vector<16x96xf32>
    %c1_90 = arith.constant 1 : index
    %c0_91 = arith.constant 0 : index
    %c0_92 = arith.constant 0 : index
    %192 = vector.load %arg7[%c1_90, %c0_91, %c0_92] : memref<3x1x96xf32, #tpu.memory_space<vmem>>, vector<1x1x96xf32>
    %193 = vector.shape_cast %192 : vector<1x1x96xf32> to vector<1x96xf32>
    %194 = vector.broadcast %193 : vector<1x96xf32> to vector<16x96xf32>
    %195 = arith.addf %191, %194 : vector<16x96xf32>
    %196 = vector.extract_strided_slice %195 {offsets = [0, 0], sizes = [16, 32], strides = [1, 1]} : vector<16x96xf32> to vector<16x32xf32>
    %197 = vector.extract_strided_slice %195 {offsets = [0, 32], sizes = [16, 32], strides = [1, 1]} : vector<16x96xf32> to vector<16x32xf32>
    %198 = vector.extract_strided_slice %195 {offsets = [0, 64], sizes = [16, 32], strides = [1, 1]} : vector<16x96xf32> to vector<16x32xf32>
    %cst_93 = arith.constant dense<0.000000e+00> : vector<64x32xf32>
    %199 = tpu.matmul %21, %196, %cst_93 {dimension_numbers = #tpu.dot_dimension_numbers<[1], [0], [0], [1], [0, 0, 1, 1], [], []>} : vector<64x16xf32>, vector<16x32xf32>, vector<64x32xf32> -> vector<64x32xf32>
    %200 = arith.mulf %199, %37 : vector<64x32xf32>
    %cst_94 = arith.constant dense<0.000000e+00> : vector<64x32xf32>
    %201 = tpu.matmul %21, %197, %cst_94 {dimension_numbers = #tpu.dot_dimension_numbers<[1], [0], [0], [1], [0, 0, 1, 1], [], []>} : vector<64x16xf32>, vector<16x32xf32>, vector<64x32xf32> -> vector<64x32xf32>
    %cst_95 = arith.constant dense<0.000000e+00> : vector<64x32xf32>
    %202 = tpu.matmul %21, %198, %cst_95 {dimension_numbers = #tpu.dot_dimension_numbers<[1], [0], [0], [1], [0, 0, 1, 1], [], []>} : vector<64x16xf32>, vector<16x32xf32>, vector<64x32xf32> -> vector<64x32xf32>
    %203 = arith.mulf %202, %37 : vector<64x32xf32>
    %cst_96 = arith.constant dense<0.000000e+00> : vector<64x64xf32>
    %204 = tpu.matmul %200, %201, %cst_96 {dimension_numbers = #tpu.dot_dimension_numbers<[1], [1], [0], [0], [0, 0, 1, 0], [], []>} : vector<64x32xf32>, vector<64x32xf32>, vector<64x64xf32> -> vector<64x64xf32>
    %cst_97 = arith.constant 0.353553385 : f32
    %205 = vector.broadcast %cst_97 : f32 to vector<64x64xf32>
    %206 = arith.mulf %204, %205 : vector<64x64xf32>
    %cst_98 = arith.constant -1.000000e+09 : f32
    %207 = vector.broadcast %cst_98 : f32 to vector<64x64xf32>
    %208 = arith.select %14, %206, %207 : vector<64x64xi1>, vector<64x64xf32>
    %cst_99 = arith.constant dense<0xFF800000> : vector<64xf32>
    %209 = vector.multi_reduction <maximumf>, %208, %cst_99 [1] : vector<64x64xf32> to vector<64xf32>
    %210 = vector.shape_cast %209 : vector<64xf32> to vector<64x1xf32>
    %211 = vector.broadcast %210 : vector<64x1xf32> to vector<64x64xf32>
    %212 = arith.subf %208, %211 : vector<64x64xf32>
    %213 = math.exp %212 : vector<64x64xf32>
    %cst_100 = arith.constant dense<0.000000e+00> : vector<64x1xf32>
    %214 = tpu.matmul %213, %1, %cst_100 {dimension_numbers = #tpu.dot_dimension_numbers<[1], [0], [0], [1], [0, 0, 1, 1], [], []>} : vector<64x64xf32>, vector<64x1xf32>, vector<64x1xf32> -> vector<64x1xf32>
    %215 = vector.broadcast %214 : vector<64x1xf32> to vector<64x64xf32>
    %216 = arith.divf %213, %215 : vector<64x64xf32>
    %cst_101 = arith.constant dense<0.000000e+00> : vector<64x32xf32>
    %217 = tpu.matmul %216, %203, %cst_101 {dimension_numbers = #tpu.dot_dimension_numbers<[1], [0], [0], [1], [0, 0, 1, 1], [], []>} : vector<64x64xf32>, vector<64x32xf32>, vector<64x32xf32> -> vector<64x32xf32>
    %cst_102 = arith.constant dense<0.000000e+00> : vector<16x32xf32>
    %218 = tpu.matmul %28, %217, %cst_102 {dimension_numbers = #tpu.dot_dimension_numbers<[1], [0], [0], [1], [0, 0, 1, 1], [], []>} : vector<16x64xf32>, vector<64x32xf32>, vector<16x32xf32> -> vector<16x32xf32>
    %c1_103 = arith.constant 1 : index
    %c0_104 = arith.constant 0 : index
    %c0_105 = arith.constant 0 : index
    %219 = vector.load %arg8[%c1_103, %c0_104, %c0_105] : memref<3x32x32xf32, #tpu.memory_space<vmem>>, vector<1x32x32xf32>
    %220 = vector.shape_cast %219 : vector<1x32x32xf32> to vector<32x32xf32>
    %cst_106 = arith.constant dense<0.000000e+00> : vector<16x32xf32>
    %221 = tpu.matmul %218, %220, %cst_106 {dimension_numbers = #tpu.dot_dimension_numbers<[1], [0], [0], [1], [0, 0, 1, 1], [], []>} : vector<16x32xf32>, vector<32x32xf32>, vector<16x32xf32> -> vector<16x32xf32>
    %c1_107 = arith.constant 1 : index
    %c0_108 = arith.constant 0 : index
    %c0_109 = arith.constant 0 : index
    %222 = vector.load %arg9[%c1_107, %c0_108, %c0_109] : memref<3x1x32xf32, #tpu.memory_space<vmem>>, vector<1x1x32xf32>
    %223 = vector.shape_cast %222 : vector<1x1x32xf32> to vector<1x32xf32>
    %224 = vector.broadcast %223 : vector<1x32xf32> to vector<16x32xf32>
    %225 = arith.addf %221, %224 : vector<16x32xf32>
    %226 = arith.addf %166, %225 : vector<16x32xf32>
    %c1_110 = arith.constant 1 : index
    %c0_111 = arith.constant 0 : index
    %c0_112 = arith.constant 0 : index
    %227 = vector.load %arg10[%c1_110, %c0_111, %c0_112] : memref<3x1x32xf32, #tpu.memory_space<vmem>>, vector<1x1x32xf32>
    %228 = vector.shape_cast %227 : vector<1x1x32xf32> to vector<1x32xf32>
    %c1_113 = arith.constant 1 : index
    %c0_114 = arith.constant 0 : index
    %c0_115 = arith.constant 0 : index
    %229 = vector.load %arg11[%c1_113, %c0_114, %c0_115] : memref<3x1x32xf32, #tpu.memory_space<vmem>>, vector<1x1x32xf32>
    %230 = vector.shape_cast %229 : vector<1x1x32xf32> to vector<1x32xf32>
    %cst_116 = arith.constant dense<0.000000e+00> : vector<16x1xf32>
    %231 = tpu.matmul %226, %0, %cst_116 {dimension_numbers = #tpu.dot_dimension_numbers<[1], [0], [0], [1], [0, 0, 1, 1], [], []>} : vector<16x32xf32>, vector<32x1xf32>, vector<16x1xf32> -> vector<16x1xf32>
    %cst_117 = arith.constant 3.125000e-02 : f32
    %232 = vector.broadcast %cst_117 : f32 to vector<16x1xf32>
    %233 = arith.mulf %231, %232 : vector<16x1xf32>
    %234 = vector.broadcast %233 : vector<16x1xf32> to vector<16x32xf32>
    %235 = arith.subf %226, %234 : vector<16x32xf32>
    %236 = arith.mulf %235, %235 : vector<16x32xf32>
    %cst_118 = arith.constant dense<0.000000e+00> : vector<16x1xf32>
    %237 = tpu.matmul %236, %0, %cst_118 {dimension_numbers = #tpu.dot_dimension_numbers<[1], [0], [0], [1], [0, 0, 1, 1], [], []>} : vector<16x32xf32>, vector<32x1xf32>, vector<16x1xf32> -> vector<16x1xf32>
    %cst_119 = arith.constant 3.125000e-02 : f32
    %238 = vector.broadcast %cst_119 : f32 to vector<16x1xf32>
    %239 = arith.mulf %237, %238 : vector<16x1xf32>
    %cst_120 = arith.constant 9.99999974E-6 : f32
    %240 = vector.broadcast %cst_120 : f32 to vector<16x1xf32>
    %241 = arith.addf %239, %240 : vector<16x1xf32>
    %242 = math.rsqrt %241 : vector<16x1xf32>
    %243 = vector.broadcast %242 : vector<16x1xf32> to vector<16x32xf32>
    %244 = arith.mulf %235, %243 : vector<16x32xf32>
    %245 = vector.broadcast %228 : vector<1x32xf32> to vector<16x32xf32>
    %246 = arith.mulf %244, %245 : vector<16x32xf32>
    %247 = vector.broadcast %230 : vector<1x32xf32> to vector<16x32xf32>
    %248 = arith.addf %246, %247 : vector<16x32xf32>
    %c1_121 = arith.constant 1 : index
    %c0_122 = arith.constant 0 : index
    %c0_123 = arith.constant 0 : index
    %249 = vector.load %arg12[%c1_121, %c0_122, %c0_123] : memref<3x32x128xf32, #tpu.memory_space<vmem>>, vector<1x32x128xf32>
    %250 = vector.shape_cast %249 : vector<1x32x128xf32> to vector<32x128xf32>
    %cst_124 = arith.constant dense<0.000000e+00> : vector<16x128xf32>
    %251 = tpu.matmul %248, %250, %cst_124 {dimension_numbers = #tpu.dot_dimension_numbers<[1], [0], [0], [1], [0, 0, 1, 1], [], []>} : vector<16x32xf32>, vector<32x128xf32>, vector<16x128xf32> -> vector<16x128xf32>
    %c1_125 = arith.constant 1 : index
    %c0_126 = arith.constant 0 : index
    %c0_127 = arith.constant 0 : index
    %252 = vector.load %arg13[%c1_125, %c0_126, %c0_127] : memref<3x1x128xf32, #tpu.memory_space<vmem>>, vector<1x1x128xf32>
    %253 = vector.shape_cast %252 : vector<1x1x128xf32> to vector<1x128xf32>
    %254 = vector.broadcast %253 : vector<1x128xf32> to vector<16x128xf32>
    %255 = arith.addf %251, %254 : vector<16x128xf32>
    %cst_128 = arith.constant 1.702000e+00 : f32
    %256 = vector.broadcast %cst_128 : f32 to vector<16x128xf32>
    %257 = arith.mulf %256, %255 : vector<16x128xf32>
    %258 = arith.negf %257 : vector<16x128xf32>
    %259 = math.exp %258 : vector<16x128xf32>
    %cst_129 = arith.constant 1.000000e+00 : f32
    %260 = vector.broadcast %cst_129 : f32 to vector<16x128xf32>
    %261 = arith.addf %260, %259 : vector<16x128xf32>
    %262 = arith.divf %260, %261 : vector<16x128xf32>
    %263 = arith.mulf %255, %262 : vector<16x128xf32>
    %c1_130 = arith.constant 1 : index
    %c0_131 = arith.constant 0 : index
    %c0_132 = arith.constant 0 : index
    %264 = vector.load %arg14[%c1_130, %c0_131, %c0_132] : memref<3x128x32xf32, #tpu.memory_space<vmem>>, vector<1x128x32xf32>
    %265 = vector.shape_cast %264 : vector<1x128x32xf32> to vector<128x32xf32>
    %cst_133 = arith.constant dense<0.000000e+00> : vector<16x32xf32>
    %266 = tpu.matmul %263, %265, %cst_133 {dimension_numbers = #tpu.dot_dimension_numbers<[1], [0], [0], [1], [0, 0, 1, 1], [], []>} : vector<16x128xf32>, vector<128x32xf32>, vector<16x32xf32> -> vector<16x32xf32>
    %267 = arith.addf %226, %266 : vector<16x32xf32>
    %c1_134 = arith.constant 1 : index
    %c0_135 = arith.constant 0 : index
    %c0_136 = arith.constant 0 : index
    %268 = vector.load %arg15[%c1_134, %c0_135, %c0_136] : memref<3x1x32xf32, #tpu.memory_space<vmem>>, vector<1x1x32xf32>
    %269 = vector.shape_cast %268 : vector<1x1x32xf32> to vector<1x32xf32>
    %270 = vector.broadcast %269 : vector<1x32xf32> to vector<16x32xf32>
    %271 = arith.addf %267, %270 : vector<16x32xf32>
    %c1_137 = arith.constant 1 : index
    %c0_138 = arith.constant 0 : index
    %c0_139 = arith.constant 0 : index
    %272 = vector.load %arg3[%c1_137, %c0_138, %c0_139] : memref<2x2x32xf32, #tpu.memory_space<vmem>>, vector<1x2x32xf32>
    %273 = vector.shape_cast %272 : vector<1x2x32xf32> to vector<2x32xf32>
    %cst_140 = arith.constant dense<0.000000e+00> : vector<16x32xf32>
    %274 = tpu.matmul %54, %273, %cst_140 {dimension_numbers = #tpu.dot_dimension_numbers<[1], [0], [0], [1], [0, 0, 1, 1], [], []>} : vector<16x2xf32>, vector<2x32xf32>, vector<16x32xf32> -> vector<16x32xf32>
    %275 = vector.shape_cast %45 : vector<16x1xi1> to vector<16x1xi1>
    %276 = vector.broadcast %275 : vector<16x1xi1> to vector<16x32xi1>
    %277 = arith.select %276, %274, %271 : vector<16x32xi1>, vector<16x32xf32>
    %c2 = arith.constant 2 : index
    %c0_141 = arith.constant 0 : index
    %c0_142 = arith.constant 0 : index
    %278 = vector.load %arg4[%c2, %c0_141, %c0_142] : memref<3x1x32xf32, #tpu.memory_space<vmem>>, vector<1x1x32xf32>
    %279 = vector.shape_cast %278 : vector<1x1x32xf32> to vector<1x32xf32>
    %c2_143 = arith.constant 2 : index
    %c0_144 = arith.constant 0 : index
    %c0_145 = arith.constant 0 : index
    %280 = vector.load %arg5[%c2_143, %c0_144, %c0_145] : memref<3x1x32xf32, #tpu.memory_space<vmem>>, vector<1x1x32xf32>
    %281 = vector.shape_cast %280 : vector<1x1x32xf32> to vector<1x32xf32>
    %cst_146 = arith.constant dense<0.000000e+00> : vector<16x1xf32>
    %282 = tpu.matmul %277, %0, %cst_146 {dimension_numbers = #tpu.dot_dimension_numbers<[1], [0], [0], [1], [0, 0, 1, 1], [], []>} : vector<16x32xf32>, vector<32x1xf32>, vector<16x1xf32> -> vector<16x1xf32>
    %cst_147 = arith.constant 3.125000e-02 : f32
    %283 = vector.broadcast %cst_147 : f32 to vector<16x1xf32>
    %284 = arith.mulf %282, %283 : vector<16x1xf32>
    %285 = vector.broadcast %284 : vector<16x1xf32> to vector<16x32xf32>
    %286 = arith.subf %277, %285 : vector<16x32xf32>
    %287 = arith.mulf %286, %286 : vector<16x32xf32>
    %cst_148 = arith.constant dense<0.000000e+00> : vector<16x1xf32>
    %288 = tpu.matmul %287, %0, %cst_148 {dimension_numbers = #tpu.dot_dimension_numbers<[1], [0], [0], [1], [0, 0, 1, 1], [], []>} : vector<16x32xf32>, vector<32x1xf32>, vector<16x1xf32> -> vector<16x1xf32>
    %cst_149 = arith.constant 3.125000e-02 : f32
    %289 = vector.broadcast %cst_149 : f32 to vector<16x1xf32>
    %290 = arith.mulf %288, %289 : vector<16x1xf32>
    %cst_150 = arith.constant 9.99999974E-6 : f32
    %291 = vector.broadcast %cst_150 : f32 to vector<16x1xf32>
    %292 = arith.addf %290, %291 : vector<16x1xf32>
    %293 = math.rsqrt %292 : vector<16x1xf32>
    %294 = vector.broadcast %293 : vector<16x1xf32> to vector<16x32xf32>
    %295 = arith.mulf %286, %294 : vector<16x32xf32>
    %296 = vector.broadcast %279 : vector<1x32xf32> to vector<16x32xf32>
    %297 = arith.mulf %295, %296 : vector<16x32xf32>
    %298 = vector.broadcast %281 : vector<1x32xf32> to vector<16x32xf32>
    %299 = arith.addf %297, %298 : vector<16x32xf32>
    %c2_151 = arith.constant 2 : index
    %c0_152 = arith.constant 0 : index
    %c0_153 = arith.constant 0 : index
    %300 = vector.load %arg6[%c2_151, %c0_152, %c0_153] : memref<3x32x96xf32, #tpu.memory_space<vmem>>, vector<1x32x96xf32>
    %301 = vector.shape_cast %300 : vector<1x32x96xf32> to vector<32x96xf32>
    %cst_154 = arith.constant dense<0.000000e+00> : vector<16x96xf32>
    %302 = tpu.matmul %299, %301, %cst_154 {dimension_numbers = #tpu.dot_dimension_numbers<[1], [0], [0], [1], [0, 0, 1, 1], [], []>} : vector<16x32xf32>, vector<32x96xf32>, vector<16x96xf32> -> vector<16x96xf32>
    %c2_155 = arith.constant 2 : index
    %c0_156 = arith.constant 0 : index
    %c0_157 = arith.constant 0 : index
    %303 = vector.load %arg7[%c2_155, %c0_156, %c0_157] : memref<3x1x96xf32, #tpu.memory_space<vmem>>, vector<1x1x96xf32>
    %304 = vector.shape_cast %303 : vector<1x1x96xf32> to vector<1x96xf32>
    %305 = vector.broadcast %304 : vector<1x96xf32> to vector<16x96xf32>
    %306 = arith.addf %302, %305 : vector<16x96xf32>
    %307 = vector.extract_strided_slice %306 {offsets = [0, 0], sizes = [16, 32], strides = [1, 1]} : vector<16x96xf32> to vector<16x32xf32>
    %308 = vector.extract_strided_slice %306 {offsets = [0, 32], sizes = [16, 32], strides = [1, 1]} : vector<16x96xf32> to vector<16x32xf32>
    %309 = vector.extract_strided_slice %306 {offsets = [0, 64], sizes = [16, 32], strides = [1, 1]} : vector<16x96xf32> to vector<16x32xf32>
    %cst_158 = arith.constant dense<0.000000e+00> : vector<64x32xf32>
    %310 = tpu.matmul %21, %307, %cst_158 {dimension_numbers = #tpu.dot_dimension_numbers<[1], [0], [0], [1], [0, 0, 1, 1], [], []>} : vector<64x16xf32>, vector<16x32xf32>, vector<64x32xf32> -> vector<64x32xf32>
    %311 = arith.mulf %310, %37 : vector<64x32xf32>
    %cst_159 = arith.constant dense<0.000000e+00> : vector<64x32xf32>
    %312 = tpu.matmul %21, %308, %cst_159 {dimension_numbers = #tpu.dot_dimension_numbers<[1], [0], [0], [1], [0, 0, 1, 1], [], []>} : vector<64x16xf32>, vector<16x32xf32>, vector<64x32xf32> -> vector<64x32xf32>
    %cst_160 = arith.constant dense<0.000000e+00> : vector<64x32xf32>
    %313 = tpu.matmul %21, %309, %cst_160 {dimension_numbers = #tpu.dot_dimension_numbers<[1], [0], [0], [1], [0, 0, 1, 1], [], []>} : vector<64x16xf32>, vector<16x32xf32>, vector<64x32xf32> -> vector<64x32xf32>
    %314 = arith.mulf %313, %37 : vector<64x32xf32>
    %cst_161 = arith.constant dense<0.000000e+00> : vector<64x64xf32>
    %315 = tpu.matmul %311, %312, %cst_161 {dimension_numbers = #tpu.dot_dimension_numbers<[1], [1], [0], [0], [0, 0, 1, 0], [], []>} : vector<64x32xf32>, vector<64x32xf32>, vector<64x64xf32> -> vector<64x64xf32>
    %cst_162 = arith.constant 0.353553385 : f32
    %316 = vector.broadcast %cst_162 : f32 to vector<64x64xf32>
    %317 = arith.mulf %315, %316 : vector<64x64xf32>
    %cst_163 = arith.constant -1.000000e+09 : f32
    %318 = vector.broadcast %cst_163 : f32 to vector<64x64xf32>
    %319 = arith.select %14, %317, %318 : vector<64x64xi1>, vector<64x64xf32>
    %cst_164 = arith.constant dense<0xFF800000> : vector<64xf32>
    %320 = vector.multi_reduction <maximumf>, %319, %cst_164 [1] : vector<64x64xf32> to vector<64xf32>
    %321 = vector.shape_cast %320 : vector<64xf32> to vector<64x1xf32>
    %322 = vector.broadcast %321 : vector<64x1xf32> to vector<64x64xf32>
    %323 = arith.subf %319, %322 : vector<64x64xf32>
    %324 = math.exp %323 : vector<64x64xf32>
    %cst_165 = arith.constant dense<0.000000e+00> : vector<64x1xf32>
    %325 = tpu.matmul %324, %1, %cst_165 {dimension_numbers = #tpu.dot_dimension_numbers<[1], [0], [0], [1], [0, 0, 1, 1], [], []>} : vector<64x64xf32>, vector<64x1xf32>, vector<64x1xf32> -> vector<64x1xf32>
    %326 = vector.broadcast %325 : vector<64x1xf32> to vector<64x64xf32>
    %327 = arith.divf %324, %326 : vector<64x64xf32>
    %cst_166 = arith.constant dense<0.000000e+00> : vector<64x32xf32>
    %328 = tpu.matmul %327, %314, %cst_166 {dimension_numbers = #tpu.dot_dimension_numbers<[1], [0], [0], [1], [0, 0, 1, 1], [], []>} : vector<64x64xf32>, vector<64x32xf32>, vector<64x32xf32> -> vector<64x32xf32>
    %cst_167 = arith.constant dense<0.000000e+00> : vector<16x32xf32>
    %329 = tpu.matmul %28, %328, %cst_167 {dimension_numbers = #tpu.dot_dimension_numbers<[1], [0], [0], [1], [0, 0, 1, 1], [], []>} : vector<16x64xf32>, vector<64x32xf32>, vector<16x32xf32> -> vector<16x32xf32>
    %c2_168 = arith.constant 2 : index
    %c0_169 = arith.constant 0 : index
    %c0_170 = arith.constant 0 : index
    %330 = vector.load %arg8[%c2_168, %c0_169, %c0_170] : memref<3x32x32xf32, #tpu.memory_space<vmem>>, vector<1x32x32xf32>
    %331 = vector.shape_cast %330 : vector<1x32x32xf32> to vector<32x32xf32>
    %cst_171 = arith.constant dense<0.000000e+00> : vector<16x32xf32>
    %332 = tpu.matmul %329, %331, %cst_171 {dimension_numbers = #tpu.dot_dimension_numbers<[1], [0], [0], [1], [0, 0, 1, 1], [], []>} : vector<16x32xf32>, vector<32x32xf32>, vector<16x32xf32> -> vector<16x32xf32>
    %c2_172 = arith.constant 2 : index
    %c0_173 = arith.constant 0 : index
    %c0_174 = arith.constant 0 : index
    %333 = vector.load %arg9[%c2_172, %c0_173, %c0_174] : memref<3x1x32xf32, #tpu.memory_space<vmem>>, vector<1x1x32xf32>
    %334 = vector.shape_cast %333 : vector<1x1x32xf32> to vector<1x32xf32>
    %335 = vector.broadcast %334 : vector<1x32xf32> to vector<16x32xf32>
    %336 = arith.addf %332, %335 : vector<16x32xf32>
    %337 = arith.addf %277, %336 : vector<16x32xf32>
    %c2_175 = arith.constant 2 : index
    %c0_176 = arith.constant 0 : index
    %c0_177 = arith.constant 0 : index
    %338 = vector.load %arg10[%c2_175, %c0_176, %c0_177] : memref<3x1x32xf32, #tpu.memory_space<vmem>>, vector<1x1x32xf32>
    %339 = vector.shape_cast %338 : vector<1x1x32xf32> to vector<1x32xf32>
    %c2_178 = arith.constant 2 : index
    %c0_179 = arith.constant 0 : index
    %c0_180 = arith.constant 0 : index
    %340 = vector.load %arg11[%c2_178, %c0_179, %c0_180] : memref<3x1x32xf32, #tpu.memory_space<vmem>>, vector<1x1x32xf32>
    %341 = vector.shape_cast %340 : vector<1x1x32xf32> to vector<1x32xf32>
    %cst_181 = arith.constant dense<0.000000e+00> : vector<16x1xf32>
    %342 = tpu.matmul %337, %0, %cst_181 {dimension_numbers = #tpu.dot_dimension_numbers<[1], [0], [0], [1], [0, 0, 1, 1], [], []>} : vector<16x32xf32>, vector<32x1xf32>, vector<16x1xf32> -> vector<16x1xf32>
    %cst_182 = arith.constant 3.125000e-02 : f32
    %343 = vector.broadcast %cst_182 : f32 to vector<16x1xf32>
    %344 = arith.mulf %342, %343 : vector<16x1xf32>
    %345 = vector.broadcast %344 : vector<16x1xf32> to vector<16x32xf32>
    %346 = arith.subf %337, %345 : vector<16x32xf32>
    %347 = arith.mulf %346, %346 : vector<16x32xf32>
    %cst_183 = arith.constant dense<0.000000e+00> : vector<16x1xf32>
    %348 = tpu.matmul %347, %0, %cst_183 {dimension_numbers = #tpu.dot_dimension_numbers<[1], [0], [0], [1], [0, 0, 1, 1], [], []>} : vector<16x32xf32>, vector<32x1xf32>, vector<16x1xf32> -> vector<16x1xf32>
    %cst_184 = arith.constant 3.125000e-02 : f32
    %349 = vector.broadcast %cst_184 : f32 to vector<16x1xf32>
    %350 = arith.mulf %348, %349 : vector<16x1xf32>
    %cst_185 = arith.constant 9.99999974E-6 : f32
    %351 = vector.broadcast %cst_185 : f32 to vector<16x1xf32>
    %352 = arith.addf %350, %351 : vector<16x1xf32>
    %353 = math.rsqrt %352 : vector<16x1xf32>
    %354 = vector.broadcast %353 : vector<16x1xf32> to vector<16x32xf32>
    %355 = arith.mulf %346, %354 : vector<16x32xf32>
    %356 = vector.broadcast %339 : vector<1x32xf32> to vector<16x32xf32>
    %357 = arith.mulf %355, %356 : vector<16x32xf32>
    %358 = vector.broadcast %341 : vector<1x32xf32> to vector<16x32xf32>
    %359 = arith.addf %357, %358 : vector<16x32xf32>
    %c2_186 = arith.constant 2 : index
    %c0_187 = arith.constant 0 : index
    %c0_188 = arith.constant 0 : index
    %360 = vector.load %arg12[%c2_186, %c0_187, %c0_188] : memref<3x32x128xf32, #tpu.memory_space<vmem>>, vector<1x32x128xf32>
    %361 = vector.shape_cast %360 : vector<1x32x128xf32> to vector<32x128xf32>
    %cst_189 = arith.constant dense<0.000000e+00> : vector<16x128xf32>
    %362 = tpu.matmul %359, %361, %cst_189 {dimension_numbers = #tpu.dot_dimension_numbers<[1], [0], [0], [1], [0, 0, 1, 1], [], []>} : vector<16x32xf32>, vector<32x128xf32>, vector<16x128xf32> -> vector<16x128xf32>
    %c2_190 = arith.constant 2 : index
    %c0_191 = arith.constant 0 : index
    %c0_192 = arith.constant 0 : index
    %363 = vector.load %arg13[%c2_190, %c0_191, %c0_192] : memref<3x1x128xf32, #tpu.memory_space<vmem>>, vector<1x1x128xf32>
    %364 = vector.shape_cast %363 : vector<1x1x128xf32> to vector<1x128xf32>
    %365 = vector.broadcast %364 : vector<1x128xf32> to vector<16x128xf32>
    %366 = arith.addf %362, %365 : vector<16x128xf32>
    %cst_193 = arith.constant 1.702000e+00 : f32
    %367 = vector.broadcast %cst_193 : f32 to vector<16x128xf32>
    %368 = arith.mulf %367, %366 : vector<16x128xf32>
    %369 = arith.negf %368 : vector<16x128xf32>
    %370 = math.exp %369 : vector<16x128xf32>
    %cst_194 = arith.constant 1.000000e+00 : f32
    %371 = vector.broadcast %cst_194 : f32 to vector<16x128xf32>
    %372 = arith.addf %371, %370 : vector<16x128xf32>
    %373 = arith.divf %371, %372 : vector<16x128xf32>
    %374 = arith.mulf %366, %373 : vector<16x128xf32>
    %c2_195 = arith.constant 2 : index
    %c0_196 = arith.constant 0 : index
    %c0_197 = arith.constant 0 : index
    %375 = vector.load %arg14[%c2_195, %c0_196, %c0_197] : memref<3x128x32xf32, #tpu.memory_space<vmem>>, vector<1x128x32xf32>
    %376 = vector.shape_cast %375 : vector<1x128x32xf32> to vector<128x32xf32>
    %cst_198 = arith.constant dense<0.000000e+00> : vector<16x32xf32>
    %377 = tpu.matmul %374, %376, %cst_198 {dimension_numbers = #tpu.dot_dimension_numbers<[1], [0], [0], [1], [0, 0, 1, 1], [], []>} : vector<16x128xf32>, vector<128x32xf32>, vector<16x32xf32> -> vector<16x32xf32>
    %378 = arith.addf %337, %377 : vector<16x32xf32>
    %c2_199 = arith.constant 2 : index
    %c0_200 = arith.constant 0 : index
    %c0_201 = arith.constant 0 : index
    %379 = vector.load %arg15[%c2_199, %c0_200, %c0_201] : memref<3x1x32xf32, #tpu.memory_space<vmem>>, vector<1x1x32xf32>
    %380 = vector.shape_cast %379 : vector<1x1x32xf32> to vector<1x32xf32>
    %381 = vector.broadcast %380 : vector<1x32xf32> to vector<16x32xf32>
    %382 = arith.addf %378, %381 : vector<16x32xf32>
    %c0_202 = arith.constant 0 : index
    %c0_203 = arith.constant 0 : index
    %383 = vector.load %arg20[%c0_202, %c0_203] : memref<16x32xf32, #tpu.memory_space<vmem>>, vector<16x32xf32>
    tpu.vector_store %arg20[%c0_202, %c0_203], %382 {strides = array<i32>} : memref<16x32xf32, #tpu.memory_space<vmem>>, vector<16x32xf32>,
    %c0_204 = arith.constant 0 : index
    %384 = memref.load %arg1[%c0_204] : memref<2xi32, #tpu.memory_space<smem>>
    %c0_i32 = arith.constant 0 : i32
    %385 = arith.addi %384, %c0_i32 : i32
    %386 = arith.index_cast %385 : i32 to index
    %c0_205 = arith.constant 0 : index
    %387 = vector.load %arg20[%386, %c0_205] : memref<16x32xf32, #tpu.memory_space<vmem>>, vector<1x32xf32>
    %c1_206 = arith.constant 1 : index
    %388 = memref.load %arg1[%c1_206] : memref<2xi32, #tpu.memory_space<smem>>
    %c8_i32 = arith.constant 8 : i32
    %389 = arith.addi %388, %c8_i32 : i32
    %390 = arith.index_cast %389 : i32 to index
    %c0_207 = arith.constant 0 : index
    %391 = vector.load %arg20[%390, %c0_207] : memref<16x32xf32, #tpu.memory_space<vmem>>, vector<1x32xf32>
    %392 = tpu.concatenate %387, %391 in 0 : vector<1x32xf32>, vector<1x32xf32> -> vector<2x32xf32>
    %c0_208 = arith.constant 0 : index
    %c0_209 = arith.constant 0 : index
    %393 = vector.load %arg16[%c0_208, %c0_209] : memref<1x32xf32, #tpu.memory_space<vmem>>, vector<1x32xf32>
    %c0_210 = arith.constant 0 : index
    %c0_211 = arith.constant 0 : index
    %394 = vector.load %arg17[%c0_210, %c0_211] : memref<1x32xf32, #tpu.memory_space<vmem>>, vector<1x32xf32>
    %cst_212 = arith.constant dense<0.000000e+00> : vector<2x1xf32>
    %395 = tpu.matmul %392, %0, %cst_212 {dimension_numbers = #tpu.dot_dimension_numbers<[1], [0], [0], [1], [0, 0, 1, 1], [], []>} : vector<2x32xf32>, vector<32x1xf32>, vector<2x1xf32> -> vector<2x1xf32>
    %cst_213 = arith.constant 3.125000e-02 : f32
    %396 = vector.broadcast %cst_213 : f32 to vector<2x1xf32>
    %397 = arith.mulf %395, %396 : vector<2x1xf32>
    %398 = vector.broadcast %397 : vector<2x1xf32> to vector<2x32xf32>
    %399 = arith.subf %392, %398 : vector<2x32xf32>
    %400 = arith.mulf %399, %399 : vector<2x32xf32>
    %cst_214 = arith.constant dense<0.000000e+00> : vector<2x1xf32>
    %401 = tpu.matmul %400, %0, %cst_214 {dimension_numbers = #tpu.dot_dimension_numbers<[1], [0], [0], [1], [0, 0, 1, 1], [], []>} : vector<2x32xf32>, vector<32x1xf32>, vector<2x1xf32> -> vector<2x1xf32>
    %cst_215 = arith.constant 3.125000e-02 : f32
    %402 = vector.broadcast %cst_215 : f32 to vector<2x1xf32>
    %403 = arith.mulf %401, %402 : vector<2x1xf32>
    %cst_216 = arith.constant 9.99999974E-6 : f32
    %404 = vector.broadcast %cst_216 : f32 to vector<2x1xf32>
    %405 = arith.addf %403, %404 : vector<2x1xf32>
    %406 = math.rsqrt %405 : vector<2x1xf32>
    %407 = vector.broadcast %406 : vector<2x1xf32> to vector<2x32xf32>
    %408 = arith.mulf %399, %407 : vector<2x32xf32>
    %409 = vector.broadcast %393 : vector<1x32xf32> to vector<2x32xf32>
    %410 = arith.mulf %408, %409 : vector<2x32xf32>
    %411 = vector.broadcast %394 : vector<1x32xf32> to vector<2x32xf32>
    %412 = arith.addf %410, %411 : vector<2x32xf32>
    %c0_217 = arith.constant 0 : index
    %c0_218 = arith.constant 0 : index
    %413 = vector.load %arg18[%c0_217, %c0_218] : memref<32x32xf32, #tpu.memory_space<vmem>>, vector<32x32xf32>
    %cst_219 = arith.constant dense<0.000000e+00> : vector<2x32xf32>
    %414 = tpu.matmul %412, %413, %cst_219 {dimension_numbers = #tpu.dot_dimension_numbers<[1], [0], [0], [1], [0, 0, 1, 1], [], []>} : vector<2x32xf32>, vector<32x32xf32>, vector<2x32xf32> -> vector<2x32xf32>
    %c0_220 = arith.constant 0 : index
    %c0_221 = arith.constant 0 : index
    %415 = vector.load %arg19[%c0_220, %c0_221] : memref<2x32xf32, #tpu.memory_space<vmem>>, vector<2x32xf32>
    tpu.vector_store %arg19[%c0_220, %c0_221], %414 {strides = array<i32>} : memref<2x32xf32, #tpu.memory_space<vmem>>, vector<2x32xf32>,
    return
  }
  func.func @transform_0(%arg0: i32, %arg1: memref<2xi32, #tpu.memory_space<smem>>) -> (i32, i32) {
    %c0_i32 = arith.constant 0 : i32
    %c0_i32_0 = arith.constant 0 : i32
    %c0_i32_1 = arith.constant 0 : i32
    return %c0_i32, %c0_i32_0 : i32, i32
  }
  func.func @transform_1(%arg0: i32, %arg1: memref<2xi32, #tpu.memory_space<smem>>) -> (i32, i32, i32) {
    %c0_i32 = arith.constant 0 : i32
    %c0_i32_0 = arith.constant 0 : i32
    %c0_i32_1 = arith.constant 0 : i32
    %c0_i32_2 = arith.constant 0 : i32
    return %c0_i32, %c0_i32_0, %c0_i32_1 : i32, i32, i32
  }
  func.func @transform_2(%arg0: i32, %arg1: memref<2xi32, #tpu.memory_space<smem>>) -> (i32, i32, i32) {
    %c0_i32 = arith.constant 0 : i32
    %c0_i32_0 = arith.constant 0 : i32
    %c0_i32_1 = arith.constant 0 : i32
    %c0_i32_2 = arith.constant 0 : i32
    return %c0_i32, %c0_i32_0, %c0_i32_1 : i32, i32, i32
  }
  func.func @transform_3(%arg0: i32, %arg1: memref<2xi32, #tpu.memory_space<smem>>) -> (i32, i32, i32) {
    %c0_i32 = arith.constant 0 : i32
    %c0_i32_0 = arith.constant 0 : i32
    %c0_i32_1 = arith.constant 0 : i32
    %c0_i32_2 = arith.constant 0 : i32
    return %c0_i32, %c0_i32_0, %c0_i32_1 : i32, i32, i32
  }
  func.func @transform_4(%arg0: i32, %arg1: memref<2xi32, #tpu.memory_space<smem>>) -> (i32, i32, i32) {
    %c0_i32 = arith.constant 0 : i32
    %c0_i32_0 = arith.constant 0 : i32
    %c0_i32_1 = arith.constant 0 : i32
    %c0_i32_2 = arith.constant 0 : i32
    return %c0_i32, %c0_i32_0, %c0_i32_1 : i32, i32, i32
  }
  func.func @transform_5(%arg0: i32, %arg1: memref<2xi32, #tpu.memory_space<smem>>) -> (i32, i32, i32) {
    %c0_i32 = arith.constant 0 : i32
    %c0_i32_0 = arith.constant 0 : i32
    %c0_i32_1 = arith.constant 0 : i32
    %c0_i32_2 = arith.constant 0 : i32
    return %c0_i32, %c0_i32_0, %c0_i32_1 : i32, i32, i32
  }
  func.func @transform_6(%arg0: i32, %arg1: memref<2xi32, #tpu.memory_space<smem>>) -> (i32, i32, i32) {
    %c0_i32 = arith.constant 0 : i32
    %c0_i32_0 = arith.constant 0 : i32
    %c0_i32_1 = arith.constant 0 : i32
    %c0_i32_2 = arith.constant 0 : i32
    return %c0_i32, %c0_i32_0, %c0_i32_1 : i32, i32, i32
  }
  func.func @transform_7(%arg0: i32, %arg1: memref<2xi32, #tpu.memory_space<smem>>) -> (i32, i32, i32) {
    %c0_i32 = arith.constant 0 : i32
    %c0_i32_0 = arith.constant 0 : i32
    %c0_i32_1 = arith.constant 0 : i32
    %c0_i32_2 = arith.constant 0 : i32
    return %c0_i32, %c0_i32_0, %c0_i32_1 : i32, i32, i32
  }
  func.func @transform_8(%arg0: i32, %arg1: memref<2xi32, #tpu.memory_space<smem>>) -> (i32, i32, i32) {
    %c0_i32 = arith.constant 0 : i32
    %c0_i32_0 = arith.constant 0 : i32
    %c0_i32_1 = arith.constant 0 : i32
    %c0_i32_2 = arith.constant 0 : i32
    return %c0_i32, %c0_i32_0, %c0_i32_1 : i32, i32, i32
  }
  func.func @transform_9(%arg0: i32, %arg1: memref<2xi32, #tpu.memory_space<smem>>) -> (i32, i32, i32) {
    %c0_i32 = arith.constant 0 : i32
    %c0_i32_0 = arith.constant 0 : i32
    %c0_i32_1 = arith.constant 0 : i32
    %c0_i32_2 = arith.constant 0 : i32
    return %c0_i32, %c0_i32_0, %c0_i32_1 : i32, i32, i32
  }
  func.func @transform_10(%arg0: i32, %arg1: memref<2xi32, #tpu.memory_space<smem>>) -> (i32, i32, i32) {
    %c0_i32 = arith.constant 0 : i32
    %c0_i32_0 = arith.constant 0 : i32
    %c0_i32_1 = arith.constant 0 : i32
    %c0_i32_2 = arith.constant 0 : i32
    return %c0_i32, %c0_i32_0, %c0_i32_1 : i32, i32, i32
  }
  func.func @transform_11(%arg0: i32, %arg1: memref<2xi32, #tpu.memory_space<smem>>) -> (i32, i32, i32) {
    %c0_i32 = arith.constant 0 : i32
    %c0_i32_0 = arith.constant 0 : i32
    %c0_i32_1 = arith.constant 0 : i32
    %c0_i32_2 = arith.constant 0 : i32
    return %c0_i32, %c0_i32_0, %c0_i32_1 : i32, i32, i32
  }
  func.func @transform_12(%arg0: i32, %arg1: memref<2xi32, #tpu.memory_space<smem>>) -> (i32, i32, i32) {
    %c0_i32 = arith.constant 0 : i32
    %c0_i32_0 = arith.constant 0 : i32
    %c0_i32_1 = arith.constant 0 : i32
    %c0_i32_2 = arith.constant 0 : i32
    return %c0_i32, %c0_i32_0, %c0_i32_1 : i32, i32, i32
  }
  func.func @transform_13(%arg0: i32, %arg1: memref<2xi32, #tpu.memory_space<smem>>) -> (i32, i32, i32) {
    %c0_i32 = arith.constant 0 : i32
    %c0_i32_0 = arith.constant 0 : i32
    %c0_i32_1 = arith.constant 0 : i32
    %c0_i32_2 = arith.constant 0 : i32
    return %c0_i32, %c0_i32_0, %c0_i32_1 : i32, i32, i32
  }
  func.func @transform_14(%arg0: i32, %arg1: memref<2xi32, #tpu.memory_space<smem>>) -> (i32, i32) {
    %c0_i32 = arith.constant 0 : i32
    %c0_i32_0 = arith.constant 0 : i32
    %c0_i32_1 = arith.constant 0 : i32
    return %c0_i32, %c0_i32_0 : i32, i32
  }
  func.func @transform_15(%arg0: i32, %arg1: memref<2xi32, #tpu.memory_space<smem>>) -> (i32, i32) {
    %c0_i32 = arith.constant 0 : i32
    %c0_i32_0 = arith.constant 0 : i32
    %c0_i32_1 = arith.constant 0 : i32
    return %c0_i32, %c0_i32_0 : i32, i32
  }
  func.func @transform_16(%arg0: i32, %arg1: memref<2xi32, #tpu.memory_space<smem>>) -> (i32, i32) {
    %c0_i32 = arith.constant 0 : i32
    %c0_i32_0 = arith.constant 0 : i32
    %c0_i32_1 = arith.constant 0 : i32
    return %c0_i32, %c0_i32_0 : i32, i32
  }
  func.func @transform_17(%arg0: i32, %arg1: memref<2xi32, #tpu.memory_space<smem>>) -> (i32, i32) {
    %c0_i32 = arith.constant 0 : i32
    %c0_i32_0 = arith.constant 0 : i32
    %c0_i32_1 = arith.constant 0 : i32
    return %c0_i32, %c0_i32_0 : i32, i32
  }
}

</mosaic_0001>

<llo_original>
// kernel: tpu_custom_call.1
$region0: #{tpu_custom_call.1}
  #allocation0 [shape = 'u32[]', space=smem, size = 0x4, offset = 0x4, fixed_abs, tag = 'smem constant byte address 0x4 - core index']
  #allocation1 [shape = 'u32[144,128]{1,0:T(1,128)}', space=vmem, size = 0x12000, scoped, tag = 'internal scratch']
  #allocation2 [shape = 'f32[16,32]{1,0:T(8,128)}', space=vmem, size = 0x2000, scoped, tag = 'scratch operand']
  #allocation3 [shape = 's32[1]{0}', space=sflag, size = 0x4, scoped, tag = 'scoped memory for tpu_custom_call.1']
  #allocation4 [shape = 'u8[512]{0}', space=smem, size = 0x200, scoped, tag = 'prefetched SMEM operand 0']
  %s0 = inlined_call_operand.vmem [shape: s32[2], index: 0, kind: input, shape index: {}]
  %s1 = inlined_call_operand.vmem [shape: f32[16,32], index: 1, kind: input, shape index: {}]
  %s2 = inlined_call_operand.vmem [shape: f32[2,2,32], index: 2, kind: input, shape index: {}]
  %s3 = inlined_call_operand.vmem [shape: f32[3,1,32], index: 3, kind: input, shape index: {}]
  %s4 = inlined_call_operand.vmem [shape: f32[3,1,32], index: 4, kind: input, shape index: {}]
  %s5 = inlined_call_operand.vmem [shape: f32[3,32,96], index: 5, kind: input, shape index: {}]
  %s6 = inlined_call_operand.vmem [shape: f32[3,1,96], index: 6, kind: input, shape index: {}]
  %s7 = inlined_call_operand.vmem [shape: f32[3,32,32], index: 7, kind: input, shape index: {}]
  %s8 = inlined_call_operand.vmem [shape: f32[3,1,32], index: 8, kind: input, shape index: {}]
  %s9 = inlined_call_operand.vmem [shape: f32[3,1,32], index: 9, kind: input, shape index: {}]
  %s10 = inlined_call_operand.vmem [shape: f32[3,1,32], index: 10, kind: input, shape index: {}]
  %s11 = inlined_call_operand.vmem [shape: f32[3,32,128], index: 11, kind: input, shape index: {}]
  %s12 = inlined_call_operand.vmem [shape: f32[3,1,128], index: 12, kind: input, shape index: {}]
  %s13 = inlined_call_operand.vmem [shape: f32[3,128,32], index: 13, kind: input, shape index: {}]
  %s14 = inlined_call_operand.vmem [shape: f32[3,1,32], index: 14, kind: input, shape index: {}]
  %s15 = inlined_call_operand.vmem [shape: f32[1,32], index: 15, kind: input, shape index: {}]
  %s16 = inlined_call_operand.vmem [shape: f32[1,32], index: 16, kind: input, shape index: {}]
  %s17 = inlined_call_operand.vmem [shape: f32[32,32], index: 17, kind: input, shape index: {}]
  %s18 = inlined_call_operand.hbm [shape: f32[2,32], index: 18, kind: output, shape index: {}]
  %s19 = sld [smem:[#allocation0]]
  $region78: #{tpu_custom_call.1} parent=0
    _
  %s21 = ssub.s32 1, %s19
  %s22 = scalar_select 0, %s21, %s19
  %s23 = sshll.u32 %s0, 4
  %s24 = int_to_ptr.vmem [resolvable:$true] %s23
  %26 = dma.vmem_to_smem %s24, 16, [#allocation4], [#allocation3]
  %27 = dma.done [#allocation3], 16
  %28 = sfence
  $region1: #{tpu_custom_call.1} parent=0
    #allocation5 [shape = 'u8[1024]{0}', space=vmem, size = 0x400, scoped, tag = 'output window, operand 0, single buffered']
    #allocation6 [shape = 's32[1]{0}', space=sflag, size = 0x4, scoped, tag = 'scoped memory for tpu_custom_call.1']
    %29 = vsyncpa [#allocation6], 0
    // Predicated region
    $region2: #{tpu_custom_call.1} parent=1 // pred_check
      _
    $region3: #{tpu_custom_call.1} parent=1 // pred_check_branch
      %31 = sbr.rel (0) target = $region5
    $region4: #{tpu_custom_call.1} parent=1 // pred_region
      _
    $region5: #{tpu_custom_call.1} parent=1 // pred_fallthru
      _
    // Predicated region
    $region6: #{tpu_custom_call.1} parent=1 // pred_check
      _
    $region7: #{tpu_custom_call.1} parent=1 // pred_check_branch
      %33 = sbr.rel (0) target = $region9
    $region8: #{tpu_custom_call.1} parent=1 // pred_region
      _
    $region9: #{tpu_custom_call.1} parent=1 // pred_fallthru
      _
    // Predicated region
    $region10: #{tpu_custom_call.1} parent=1 // pred_check
      _
    $region11: #{tpu_custom_call.1} parent=1 // pred_check_branch
      %35 = sbr.rel (0) target = $region13
    $region12: #{tpu_custom_call.1} parent=1 // pred_region
      _
    $region13: #{tpu_custom_call.1} parent=1 // pred_fallthru
      _
    // Predicated region
    $region14: #{tpu_custom_call.1} parent=1 // pred_check
      _
    $region15: #{tpu_custom_call.1} parent=1 // pred_check_branch
      %37 = sbr.rel (0) target = $region17
    $region16: #{tpu_custom_call.1} parent=1 // pred_region
      _
    $region17: #{tpu_custom_call.1} parent=1 // pred_fallthru
      _
    // Predicated region
    $region18: #{tpu_custom_call.1} parent=1 // pred_check
      _
    $region19: #{tpu_custom_call.1} parent=1 // pred_check_branch
      %39 = sbr.rel (0) target = $region21
    $region20: #{tpu_custom_call.1} parent=1 // pred_region
      _
    $region21: #{tpu_custom_call.1} parent=1 // pred_fallthru
      _
    // Predicated region
    $region22: #{tpu_custom_call.1} parent=1 // pred_check
      _
    $region23: #{tpu_custom_call.1} parent=1 // pred_check_branch
      %41 = sbr.rel (0) target = $region25
    $region24: #{tpu_custom_call.1} parent=1 // pred_region
      _
    $region25: #{tpu_custom_call.1} parent=1 // pred_fallthru
      _
    // Predicated region
    $region26: #{tpu_custom_call.1} parent=1 // pred_check
      _
    $region27: #{tpu_custom_call.1} parent=1 // pred_check_branch
      %43 = sbr.rel (0) target = $region29
    $region28: #{tpu_custom_call.1} parent=1 // pred_region
      _
    $region29: #{tpu_custom_call.1} parent=1 // pred_fallthru
      _
    // Predicated region
    $region30: #{tpu_custom_call.1} parent=1 // pred_check
      _
    $region31: #{tpu_custom_call.1} parent=1 // pred_check_branch
      %45 = sbr.rel (0) target = $region33
    $region32: #{tpu_custom_call.1} parent=1 // pred_region
      _
    $region33: #{tpu_custom_call.1} parent=1 // pred_fallthru
      _
    // Predicated region
    $region34: #{tpu_custom_call.1} parent=1 // pred_check
      _
    $region35: #{tpu_custom_call.1} parent=1 // pred_check_branch
      %47 = sbr.rel (0) target = $region37
    $region36: #{tpu_custom_call.1} parent=1 // pred_region
      _
    $region37: #{tpu_custom_call.1} parent=1 // pred_fallthru
      _
    // Predicated region
    $region38: #{tpu_custom_call.1} parent=1 // pred_check
      _
    $region39: #{tpu_custom_call.1} parent=1 // pred_check_branch
      %49 = sbr.rel (0) target = $region41
    $region40: #{tpu_custom_call.1} parent=1 // pred_region
      _
    $region41: #{tpu_custom_call.1} parent=1 // pred_fallthru
      _
    // Predicated region
    $region42: #{tpu_custom_call.1} parent=1 // pred_check
      _
    $region43: #{tpu_custom_call.1} parent=1 // pred_check_branch
      %51 = sbr.rel (0) target = $region45
    $region44: #{tpu_custom_call.1} parent=1 // pred_region
      _
    $region45: #{tpu_custom_call.1} parent=1 // pred_fallthru
      _
    // Predicated region
    $region46: #{tpu_custom_call.1} parent=1 // pred_check
      _
    $region47: #{tpu_custom_call.1} parent=1 // pred_check_branch
      %53 = sbr.rel (0) target = $region49
    $region48: #{tpu_custom_call.1} parent=1 // pred_region
      _
    $region49: #{tpu_custom_call.1} parent=1 // pred_fallthru
      _
    // Predicated region
    $region50: #{tpu_custom_call.1} parent=1 // pred_check
      _
    $region51: #{tpu_custom_call.1} parent=1 // pred_check_branch
      %55 = sbr.rel (0) target = $region53
    $region52: #{tpu_custom_call.1} parent=1 // pred_region
      _
    $region53: #{tpu_custom_call.1} parent=1 // pred_fallthru
      _
    // Predicated region
    $region54: #{tpu_custom_call.1} parent=1 // pred_check
      _
    $region55: #{tpu_custom_call.1} parent=1 // pred_check_branch
      %57 = sbr.rel (0) target = $region57
    $region56: #{tpu_custom_call.1} parent=1 // pred_region
      _
    $region57: #{tpu_custom_call.1} parent=1 // pred_fallthru
      _
    // Predicated region
    $region58: #{tpu_custom_call.1} parent=1 // pred_check
      _
    $region59: #{tpu_custom_call.1} parent=1 // pred_check_branch
      %59 = sbr.rel (0) target = $region61
    $region60: #{tpu_custom_call.1} parent=1 // pred_region
      _
    $region61: #{tpu_custom_call.1} parent=1 // pred_fallthru
      _
    // Predicated region
    $region62: #{tpu_custom_call.1} parent=1 // pred_check
      _
    $region63: #{tpu_custom_call.1} parent=1 // pred_check_branch
      %61 = sbr.rel (0) target = $region65
    $region64: #{tpu_custom_call.1} parent=1 // pred_region
      _
    $region65: #{tpu_custom_call.1} parent=1 // pred_fallthru
      _
    // Predicated region
    $region66: #{tpu_custom_call.1} parent=1 // pred_check
      _
    $region67: #{tpu_custom_call.1} parent=1 // pred_check_branch
      %63 = sbr.rel (0) target = $region69
    $region68: #{tpu_custom_call.1} parent=1 // pred_region
      _
    $region69: #{tpu_custom_call.1} parent=1 // pred_fallthru
      _
    %v64 = vlaneseq
    %v65 = vshrl.u32 %v64, 7
    %v66 = vadd.s32 %v65, 8
    %v67 = vadd.s32 %v65, 16
    %v68 = vadd.s32 %v65, 24
    %v69 = vadd.s32 %v65, 32
    %v70 = vadd.s32 %v65, 40
    %v71 = vadd.s32 %v65, 48
    %v72 = vadd.s32 %v65, 56
    %v73 = vlaneseq
    %v74 = vand.u32 %v73, 127
    %v75 = vshra.s32 %v65, 3
    %v76 = vshra.s32 %v66, 3
    %v77 = vshra.s32 %v67, 3
    %v78 = vshra.s32 %v68, 3
    %v79 = vshra.s32 %v69, 3
    %v80 = vshra.s32 %v70, 3
    %v81 = vshra.s32 %v71, 3
    %v82 = vshra.s32 %v72, 3
    %v83 = vshra.s32 %v74, 3
    %vm84 = vcmp.eq.s32.totalorder %v75, %v83
    %vm85 = vcmp.eq.s32.totalorder %v76, %v83
    %vm86 = vcmp.eq.s32.totalorder %v77, %v83
    %vm87 = vcmp.eq.s32.totalorder %v78, %v83
    %vm88 = vcmp.eq.s32.totalorder %v79, %v83
    %vm89 = vcmp.eq.s32.totalorder %v80, %v83
    %vm90 = vcmp.eq.s32.totalorder %v81, %v83
    %vm91 = vcmp.eq.s32.totalorder %v82, %v83
    %v92 = vand.u32 %v74, 7
    %v93 = vand.u32 %v65, 7
    %v94 = vand.u32 %v66, 7
    %v95 = vand.u32 %v67, 7
    %v96 = vand.u32 %v68, 7
    %v97 = vand.u32 %v69, 7
    %v98 = vand.u32 %v70, 7
    %v99 = vand.u32 %v71, 7
    %v100 = vand.u32 %v72, 7
    %vm101 = vcmp.le.s32.totalorder %v92, %v93
    %vm102 = vcmp.le.s32.totalorder %v92, %v94
    %vm103 = vcmp.le.s32.totalorder %v92, %v95
    %vm104 = vcmp.le.s32.totalorder %v92, %v96
    %vm105 = vcmp.le.s32.totalorder %v92, %v97
    %vm106 = vcmp.le.s32.totalorder %v92, %v98
    %vm107 = vcmp.le.s32.totalorder %v92, %v99
    %vm108 = vcmp.le.s32.totalorder %v92, %v100
    %vm109 = vmand %vm84, %vm101
    %vm110 = vmand %vm85, %vm102
    %vm111 = vmand %vm86, %vm103
    %vm112 = vmand %vm87, %vm104
    %vm113 = vmand %vm88, %vm105
    %vm114 = vmand %vm89, %vm106
    %vm115 = vmand %vm90, %vm107
    %vm116 = vmand %vm91, %vm108
    %v117 = vand.u32 %v65, 15
    %v118 = vand.u32 %v66, 15
    %v119 = vand.u32 %v67, 15
    %v120 = vand.u32 %v68, 15
    %v121 = vand.u32 %v69, 15
    %v122 = vand.u32 %v70, 15
    %v123 = vand.u32 %v71, 15
    %v124 = vand.u32 %v72, 15
    %vm125 = vcmp.eq.s32.totalorder %v117, %v74
    %vm126 = vcmp.eq.s32.totalorder %v118, %v74
    %vm127 = vcmp.eq.s32.totalorder %v119, %v74
    %vm128 = vcmp.eq.s32.totalorder %v120, %v74
    %vm129 = vcmp.eq.s32.totalorder %v121, %v74
    %vm130 = vcmp.eq.s32.totalorder %v122, %v74
    %vm131 = vcmp.eq.s32.totalorder %v123, %v74
    %vm132 = vcmp.eq.s32.totalorder %v124, %v74
    %v133 = vsel %vm125, 1, 0
    %v134 = vsel %vm126, 1, 0
    %v135 = vsel %vm127, 1, 0
    %v136 = vsel %vm128, 1, 0
    %v137 = vsel %vm129, 1, 0
    %v138 = vsel %vm130, 1, 0
    %v139 = vsel %vm131, 1, 0
    %v140 = vsel %vm132, 1, 0
    %v141 = vcvt.s32.f32 %v133
    %v142 = vcvt.s32.f32 %v134
    %v143 = vcvt.s32.f32 %v135
    %v144 = vcvt.s32.f32 %v136
    %v145 = vcvt.s32.f32 %v137
    %v146 = vcvt.s32.f32 %v138
    %v147 = vcvt.s32.f32 %v139
    %v148 = vcvt.s32.f32 %v140
    %v149 = vand.u32 %v74, 15
    %vm150 = vcmp.eq.s32.totalorder %v65, %v149
    %vm151 = vcmp.eq.s32.totalorder %v66, %v149
    %v152 = vsel %vm150, 1, 0
    %v153 = vsel %vm151, 1, 0
    %v154 = vcvt.s32.f32 %v152
    %v155 = vcvt.s32.f32 %v153
    %v156 = vshra.s32 %v65, 4
    %v157 = vshra.s32 %v66, 4
    %v158 = vshra.s32 %v67, 4
    %v159 = vshra.s32 %v68, 4
    %v160 = vshra.s32 %v69, 4
    %v161 = vshra.s32 %v70, 4
    %v162 = vshra.s32 %v71, 4
    %v163 = vshra.s32 %v72, 4
    %vm164 = vcmp.eq.s32.totalorder %v156, %v83
    %vm165 = vcmp.eq.s32.totalorder %v157, %v83
    %vm166 = vcmp.eq.s32.totalorder %v158, %v83
    %vm167 = vcmp.eq.s32.totalorder %v159, %v83
    %vm168 = vcmp.eq.s32.totalorder %v160, %v83
    %vm169 = vcmp.eq.s32.totalorder %v161, %v83
    %vm170 = vcmp.eq.s32.totalorder %v162, %v83
    %vm171 = vcmp.eq.s32.totalorder %v163, %v83
    %v172 = vsel %vm164, 1, 0
    %v173 = vsel %vm165, 1, 0
    %v174 = vsel %vm166, 1, 0
    %v175 = vsel %vm167, 1, 0
    %v176 = vsel %vm168, 1, 0
    %v177 = vsel %vm169, 1, 0
    %v178 = vsel %vm170, 1, 0
    %v179 = vsel %vm171, 1, 0
    %v180 = vcvt.s32.f32 %v172
    %v181 = vcvt.s32.f32 %v173
    %v182 = vcvt.s32.f32 %v174
    %v183 = vcvt.s32.f32 %v175
    %v184 = vcvt.s32.f32 %v176
    %v185 = vcvt.s32.f32 %v177
    %v186 = vcvt.s32.f32 %v178
    %v187 = vcvt.s32.f32 %v179
    %vm188 = vcmp.ge.s32.totalorder %v93, 1
    %vm189 = vcmp.ge.s32.totalorder %v94, 1
    %vm190 = vcmp.lt.s32.totalorder %v93, 3
    %vm191 = vcmp.lt.s32.totalorder %v94, 3
    %vm192 = vmand %vm188, %vm190
    %vm193 = vmand %vm189, %vm191
    %v194 = vadd.s32 %v74, 1
    %vm195 = vcmp.eq.s32.totalorder %v93, %v194
    %vm196 = vcmp.eq.s32.totalorder %v94, %v194
    %v197 = vsel %vm195, 1, 0
    %v198 = vsel %vm196, 1, 0
    %v199 = vcvt.s32.f32 %v197
    %v200 = vcvt.s32.f32 %v198
    %v201 = vld [vmem:[%s1] sm:$0xff]
    %v202 = vld [vmem:[%s1 + $0x8] sm:$0xff]
    %v203 = vld [vmem:[%s3] sm:$0x1]
    %v204 = vld [vmem:[%s4] sm:$0x1]
    %vm205 = vcmask 261120
    %v207 = vsel %vm205, %v201, 0
    %v210 = vsel %vm205, %v202, 0
    %212 = vmatprep.subr.mxu0 0.0
    %213 = vmatpush1.msra.mxu0 1.0
    %214 = vmatprep.subr.mxu0 0.0
    %215 = vmatpush1.msra.mxu0 1.0
    %216 = vmatprep.subr.mxu0 0.0
    %217 = vmatpush1.msra.mxu0 1.0
    %218 = vmatprep.subr.mxu0 0.0
    %219 = vmatpush1.msra.mxu0 1.0
    %220 = vmatprep.subr.mxu0 0.0
    %221 = vmatpush1.msra.mxu0 0.0
    %222 = vmatprep.subr.mxu0 0.0
    %223 = vmatpush1.msra.mxu0 0.0
    %224 = vmatprep.subr.mxu0 0.0
    %225 = vmatpush1.msra.mxu0 0.0
    %226 = vmatprep.subr.mxu0 0.0
    %227 = vmatpush1.msra.mxu0 0.0
    %228 = vmatprep.subr.mxu0 0.0
    %229 = vmatpush1.msra.mxu0 0.0
    %230 = vmatprep.subr.mxu0 0.0
    %231 = vmatpush1.msra.mxu0 0.0
    %232 = vmatprep.subr.mxu0 0.0
    %233 = vmatpush1.msra.mxu0 0.0
    %234 = vmatprep.subr.mxu0 0.0
    %235 = vmatpush1.msra.mxu0 0.0
    %236 = vmatprep.subr.mxu0 0.0
    %237 = vmatpush1.msra.mxu0 0.0
    %238 = vmatprep.subr.mxu0 0.0
    %239 = vmatpush1.msra.mxu0 0.0
    %240 = vmatprep.subr.mxu0 0.0
    %241 = vmatpush1.msra.mxu0 0.0
    %242 = vmatprep.subr.mxu0 0.0
    %243 = vmatpush1.msra.mxu0 0.0
    %244 = vmatprep.subr.mxu0 0.0
    %245 = vmatpush1.msra.mxu0 0.0
    %246 = vmatprep.subr.mxu0 0.0
    %247 = vmatpush1.msra.mxu0 0.0
    %248 = vmatprep.subr.mxu0 0.0
    %249 = vmatpush1.msra.mxu0 0.0
    %250 = vmatprep.subr.mxu0 0.0
    %251 = vmatpush1.msra.mxu0 0.0
    %252 = vmatprep.subr.mxu0 0.0
    %253 = vmatpush1.msra.mxu0 0.0
    %254 = vmatprep.subr.mxu0 0.0
    %255 = vmatpush1.msra.mxu0 0.0
    %256 = vmatprep.subr.mxu0 0.0
    %257 = vmatpush1.msra.mxu0 0.0
    %258 = vmatprep.subr.mxu0 0.0
    %259 = vmatpush1.msra.mxu0 0.0
    %260 = vmatprep.subr.mxu0 0.0
    %261 = vmatpush1.msra.mxu0 0.0
    %262 = vmatprep.subr.mxu0 0.0
    %263 = vmatpush1.msra.mxu0 0.0
    %264 = vmatprep.subr.mxu0 0.0
    %265 = vmatpush1.msra.mxu0 0.0
    %266 = vmatprep.subr.mxu0 0.0
    %267 = vmatpush1.msra.mxu0 0.0
    %268 = vmatprep.subr.mxu0 0.0
    %269 = vmatpush1.msra.mxu0 0.0
    %270 = vmatprep.subr.mxu0 0.0
    %271 = vmatpush1.msra.mxu0 0.0
    %272 = vmatprep.subr.mxu0 0.0
    %273 = vmatpush1.msra.mxu0 0.0
    %274 = vmatprep.subr.mxu0 0.0
    %275 = vmatpush1.msra.mxu0 0.0
    %276 = vmatprep.mubr.f32.mxu0 0.0
    %277 = vmatmul.mubr.f32.gmra.mrb[0].mxu0 %v207
    %v278 = vpop.f32.mrb[0].mxu0
    %v279 = vadd.f32 0.0, %v278
    %v280 = vpop.f32.mrb[0].mxu0
    %281 = vmatprep.mubr.f32.mxu0 0.0
    %282 = vmatmul.mubr.f32.gmra.mrb[0].mxu0 %v210
    %v283 = vpop.f32.mrb[0].mxu0
    %v284 = vadd.f32 0.0, %v283
    %v285 = vpop.f32.mrb[0].mxu0
    %286 = vdwg.mxu0
    %v287 = vmul.f32 %v279, 0.03125
    %v288 = vmul.f32 %v284, 0.03125
    %290 = vset.pattern.permute.xlu0 0
    %291 = vperm.xlu0 %290, %v287
    %v292 = vpop.permute.xlu0 %291
    %295 = vset.pattern.permute.xlu0 0
    %296 = vperm.xlu0 %295, %v288
    %v297 = vpop.permute.xlu0 %296
    %v299 = vsub.f32 %v201, %v292
    %v300 = vsub.f32 %v202, %v297
    %v301 = vmul.f32 %v299, %v299
    %v302 = vmul.f32 %v300, %v300
    %v304 = vsel %vm205, %v301, 0
    %v307 = vsel %vm205, %v302, 0
    %309 = vmatprep.subr.mxu0 0.0
    %310 = vmatpush1.msra.mxu0 1.0
    %311 = vmatprep.subr.mxu0 0.0
    %312 = vmatpush1.msra.mxu0 1.0
    %313 = vmatprep.subr.mxu0 0.0
    %314 = vmatpush1.msra.mxu0 1.0
    %315 = vmatprep.subr.mxu0 0.0
    %316 = vmatpush1.msra.mxu0 1.0
    %317 = vmatprep.subr.mxu0 0.0
    %318 = vmatpush1.msra.mxu0 0.0
    %319 = vmatprep.subr.mxu0 0.0
    %320 = vmatpush1.msra.mxu0 0.0
    %321 = vmatprep.subr.mxu0 0.0
    %322 = vmatpush1.msra.mxu0 0.0
    %323 = vmatprep.subr.mxu0 0.0
    %324 = vmatpush1.msra.mxu0 0.0
    %325 = vmatprep.subr.mxu0 0.0
    %326 = vmatpush1.msra.mxu0 0.0
    %327 = vmatprep.subr.mxu0 0.0
    %328 = vmatpush1.msra.mxu0 0.0
    %329 = vmatprep.subr.mxu0 0.0
    %330 = vmatpush1.msra.mxu0 0.0
    %331 = vmatprep.subr.mxu0 0.0
    %332 = vmatpush1.msra.mxu0 0.0
    %333 = vmatprep.subr.mxu0 0.0
    %334 = vmatpush1.msra.mxu0 0.0
    %335 = vmatprep.subr.mxu0 0.0
    %336 = vmatpush1.msra.mxu0 0.0
    %337 = vmatprep.subr.mxu0 0.0
    %338 = vmatpush1.msra.mxu0 0.0
    %339 = vmatprep.subr.mxu0 0.0
    %340 = vmatpush1.msra.mxu0 0.0
    %341 = vmatprep.subr.mxu0 0.0
    %342 = vmatpush1.msra.mxu0 0.0
    %343 = vmatprep.subr.mxu0 0.0
    %344 = vmatpush1.msra.mxu0 0.0
    %345 = vmatprep.subr.mxu0 0.0
    %346 = vmatpush1.msra.mxu0 0.0
    %347 = vmatprep.subr.mxu0 0.0
    %348 = vmatpush1.msra.mxu0 0.0
    %349 = vmatprep.subr.mxu0 0.0
    %350 = vmatpush1.msra.mxu0 0.0
    %351 = vmatprep.subr.mxu0 0.0
    %352 = vmatpush1.msra.mxu0 0.0
    %353 = vmatprep.subr.mxu0 0.0
    %354 = vmatpush1.msra.mxu0 0.0
    %355 = vmatprep.subr.mxu0 0.0
    %356 = vmatpush1.msra.mxu0 0.0
    %357 = vmatprep.subr.mxu0 0.0
    %358 = vmatpush1.msra.mxu0 0.0
    %359 = vmatprep.subr.mxu0 0.0
    %360 = vmatpush1.msra.mxu0 0.0
    %361 = vmatprep.subr.mxu0 0.0
    %362 = vmatpush1.msra.mxu0 0.0
    %363 = vmatprep.subr.mxu0 0.0
    %364 = vmatpush1.msra.mxu0 0.0
    %365 = vmatprep.subr.mxu0 0.0
    %366 = vmatpush1.msra.mxu0 0.0
    %367 = vmatprep.subr.mxu0 0.0
    %368 = vmatpush1.msra.mxu0 0.0
    %369 = vmatprep.subr.mxu0 0.0
    %370 = vmatpush1.msra.mxu0 0.0
    %371 = vmatprep.subr.mxu0 0.0
    %372 = vmatpush1.msra.mxu0 0.0
    %373 = vmatprep.mubr.f32.mxu0 0.0
    %374 = vmatmul.mubr.f32.gmra.mrb[0].mxu0 %v304
    %v375 = vpop.f32.mrb[0].mxu0
    %v376 = vadd.f32 0.0, %v375
    %v377 = vpop.f32.mrb[0].mxu0
    %378 = vmatprep.mubr.f32.mxu0 0.0
    %379 = vmatmul.mubr.f32.gmra.mrb[0].mxu0 %v307
    %v380 = vpop.f32.mrb[0].mxu0
    %v381 = vadd.f32 0.0, %v380
    %v382 = vpop.f32.mrb[0].mxu0
    %383 = vdwg.mxu0
    %v384 = vmul.f32 %v376, 0.03125
    %v385 = vmul.f32 %v381, 0.03125
    %v386 = vadd.f32 %v384, 1e-05
    %v387 = vadd.f32 %v385, 1e-05
    %v388 = vrsqrt.pop %v386
    %v389 = vrsqrt.pop %v387
    %391 = vset.pattern.permute.xlu0 0
    %392 = vperm.xlu0 %391, %v388
    %v393 = vpop.permute.xlu0 %392
    %396 = vset.pattern.permute.xlu0 0
    %397 = vperm.xlu0 %396, %v389
    %v398 = vpop.permute.xlu0 %397
    %v400 = vmul.f32 %v299, %v393
    %v401 = vmul.f32 %v300, %v398
    %v403 = vlaneseq
    %v404 = vshrl.u32 %v403, 7
    %v405 = vsub.s32 0, %v404
    %v406 = vrot.slane %v203, %v405
    %v408 = vmul.f32 %v400, %v406
    %v409 = vmul.f32 %v401, %v406
    %v411 = vlaneseq
    %v412 = vshrl.u32 %v411, 7
    %v413 = vsub.s32 0, %v412
    %v414 = vrot.slane %v204, %v413
    %v416 = vadd.f32 %v408, %v414
    %v417 = vadd.f32 %v409, %v414
    %v418 = vld [vmem:[%s5] sm:$0xff]
    %v419 = vld [vmem:[%s5 + $0x8] sm:$0xff]
    %v420 = vld [vmem:[%s5 + $0x10] sm:$0xff]
    %v421 = vld [vmem:[%s5 + $0x18] sm:$0xff]
    %v422 = vld [vmem:[%s6] sm:$0x1]
    %v424 = vlaneseq
    %v425 = vshrl.u32 %v424, 7
    %v426 = vsub.s32 0, %v425
    %v427 = vrot.slane %v422, %v426
    %v430 = vsel %vm205, %v416, 0
    %v433 = vsel %vm205, %v417, 0
    %435 = vmatprep.subr.mxu0 0.0
    %436 = vmatpush1.msra.mxu0 %v418
    %437 = vmatprep.subr.mxu0 0.0
    %438 = vmatpush1.msra.mxu0 %v419
    %439 = vmatprep.subr.mxu0 0.0
    %440 = vmatpush1.msra.mxu0 %v420
    %441 = vmatprep.subr.mxu0 0.0
    %442 = vmatpush1.msra.mxu0 %v421
    %443 = vmatprep.subr.mxu0 0.0
    %444 = vmatpush1.msra.mxu0 0.0
    %445 = vmatprep.subr.mxu0 0.0
    %446 = vmatpush1.msra.mxu0 0.0
    %447 = vmatprep.subr.mxu0 0.0
    %448 = vmatpush1.msra.mxu0 0.0
    %449 = vmatprep.subr.mxu0 0.0
    %450 = vmatpush1.msra.mxu0 0.0
    %451 = vmatprep.subr.mxu0 0.0
    %452 = vmatpush1.msra.mxu0 0.0
    %453 = vmatprep.subr.mxu0 0.0
    %454 = vmatpush1.msra.mxu0 0.0
    %455 = vmatprep.subr.mxu0 0.0
    %456 = vmatpush1.msra.mxu0 0.0
    %457 = vmatprep.subr.mxu0 0.0
    %458 = vmatpush1.msra.mxu0 0.0
    %459 = vmatprep.subr.mxu0 0.0
    %460 = vmatpush1.msra.mxu0 0.0
    %461 = vmatprep.subr.mxu0 0.0
    %462 = vmatpush1.msra.mxu0 0.0
    %463 = vmatprep.subr.mxu0 0.0
    %464 = vmatpush1.msra.mxu0 0.0
    %465 = vmatprep.subr.mxu0 0.0
    %466 = vmatpush1.msra.mxu0 0.0
    %467 = vmatprep.subr.mxu0 0.0
    %468 = vmatpush1.msra.mxu0 0.0
    %469 = vmatprep.subr.mxu0 0.0
    %470 = vmatpush1.msra.mxu0 0.0
    %471 = vmatprep.subr.mxu0 0.0
    %472 = vmatpush1.msra.mxu0 0.0
    %473 = vmatprep.subr.mxu0 0.0
    %474 = vmatpush1.msra.mxu0 0.0
    %475 = vmatprep.subr.mxu0 0.0
    %476 = vmatpush1.msra.mxu0 0.0
    %477 = vmatprep.subr.mxu0 0.0
    %478 = vmatpush1.msra.mxu0 0.0
    %479 = vmatprep.subr.mxu0 0.0
    %480 = vmatpush1.msra.mxu0 0.0
    %481 = vmatprep.subr.mxu0 0.0
    %482 = vmatpush1.msra.mxu0 0.0
    %483 = vmatprep.subr.mxu0 0.0
    %484 = vmatpush1.msra.mxu0 0.0
    %485 = vmatprep.subr.mxu0 0.0
    %486 = vmatpush1.msra.mxu0 0.0
    %487 = vmatprep.subr.mxu0 0.0
    %488 = vmatpush1.msra.mxu0 0.0
    %489 = vmatprep.subr.mxu0 0.0
    %490 = vmatpush1.msra.mxu0 0.0
    %491 = vmatprep.subr.mxu0 0.0
    %492 = vmatpush1.msra.mxu0 0.0
    %493 = vmatprep.subr.mxu0 0.0
    %494 = vmatpush1.msra.mxu0 0.0
    %495 = vmatprep.subr.mxu0 0.0
    %496 = vmatpush1.msra.mxu0 0.0
    %497 = vmatprep.subr.mxu0 0.0
    %498 = vmatpush1.msra.mxu0 0.0
    %499 = vmatprep.mubr.f32.mxu0 0.0
    %500 = vmatmul.mubr.f32.gmra.mrb[0].mxu0 %v430
    %v501 = vpop.f32.mrb[0].mxu0
    %v502 = vadd.f32 %v427, %v501
    %v503 = vpop.f32.mrb[0].mxu0
    %504 = vmatprep.mubr.f32.mxu0 0.0
    %505 = vmatmul.mubr.f32.gmra.mrb[0].mxu0 %v433
    %v506 = vpop.f32.mrb[0].mxu0
    %v507 = vadd.f32 %v427, %v506
    %v508 = vpop.f32.mrb[0].mxu0
    %509 = vdwg.mxu0
    %vm510 = vcmask 130048
    %v512 = vsel %vm510, %v141, 0
    %v515 = vsel %vm510, %v142, 0
    %v518 = vsel %vm510, %v143, 0
    %v521 = vsel %vm510, %v144, 0
    %v524 = vsel %vm510, %v145, 0
    %v527 = vsel %vm510, %v146, 0
    %v530 = vsel %vm510, %v147, 0
    %v533 = vsel %vm510, %v148, 0
    %535 = vmatprep.subr.mxu0 0.0
    %536 = vmatpush1.msra.mxu0 %v502
    %537 = vmatprep.subr.mxu0 0.0
    %538 = vmatpush1.msra.mxu0 %v507
    %539 = vmatprep.subr.mxu0 0.0
    %540 = vmatpush1.msra.mxu0 0.0
    %541 = vmatprep.subr.mxu0 0.0
    %542 = vmatpush1.msra.mxu0 0.0
    %543 = vmatprep.subr.mxu0 0.0
    %544 = vmatpush1.msra.mxu0 0.0
    %545 = vmatprep.subr.mxu0 0.0
    %546 = vmatpush1.msra.mxu0 0.0
    %547 = vmatprep.subr.mxu0 0.0
    %548 = vmatpush1.msra.mxu0 0.0
    %549 = vmatprep.subr.mxu0 0.0
    %550 = vmatpush1.msra.mxu0 0.0
    %551 = vmatprep.subr.mxu0 0.0
    %552 = vmatpush1.msra.mxu0 0.0
    %553 = vmatprep.subr.mxu0 0.0
    %554 = vmatpush1.msra.mxu0 0.0
    %555 = vmatprep.subr.mxu0 0.0
    %556 = vmatpush1.msra.mxu0 0.0
    %557 = vmatprep.subr.mxu0 0.0
    %558 = vmatpush1.msra.mxu0 0.0
    %559 = vmatprep.subr.mxu0 0.0
    %560 = vmatpush1.msra.mxu0 0.0
    %561 = vmatprep.subr.mxu0 0.0
    %562 = vmatpush1.msra.mxu0 0.0
    %563 = vmatprep.subr.mxu0 0.0
    %564 = vmatpush1.msra.mxu0 0.0
    %565 = vmatprep.subr.mxu0 0.0
    %566 = vmatpush1.msra.mxu0 0.0
    %567 = vmatprep.subr.mxu0 0.0
    %568 = vmatpush1.msra.mxu0 0.0
    %569 = vmatprep.subr.mxu0 0.0
    %570 = vmatpush1.msra.mxu0 0.0
    %571 = vmatprep.subr.mxu0 0.0
    %572 = vmatpush1.msra.mxu0 0.0
    %573 = vmatprep.subr.mxu0 0.0
    %574 = vmatpush1.msra.mxu0 0.0
    %575 = vmatprep.subr.mxu0 0.0
    %576 = vmatpush1.msra.mxu0 0.0
    %577 = vmatprep.subr.mxu0 0.0
    %578 = vmatpush1.msra.mxu0 0.0
    %579 = vmatprep.subr.mxu0 0.0
    %580 = vmatpush1.msra.mxu0 0.0
    %581 = vmatprep.subr.mxu0 0.0
    %582 = vmatpush1.msra.mxu0 0.0
    %583 = vmatprep.subr.mxu0 0.0
    %584 = vmatpush1.msra.mxu0 0.0
    %585 = vmatprep.subr.mxu0 0.0
    %586 = vmatpush1.msra.mxu0 0.0
    %587 = vmatprep.subr.mxu0 0.0
    %588 = vmatpush1.msra.mxu0 0.0
    %589 = vmatprep.subr.mxu0 0.0
    %590 = vmatpush1.msra.mxu0 0.0
    %591 = vmatprep.subr.mxu0 0.0
    %592 = vmatpush1.msra.mxu0 0.0
    %593 = vmatprep.subr.mxu0 0.0
    %594 = vmatpush1.msra.mxu0 0.0
    %595 = vmatprep.subr.mxu0 0.0
    %596 = vmatpush1.msra.mxu0 0.0
    %597 = vmatprep.subr.mxu0 0.0
    %598 = vmatpush1.msra.mxu0 0.0
    %599 = vmatprep.mubr.f32.mxu0 0.0
    %600 = vmatmul.mubr.f32.gmra.mrb[0].mxu0 %v512
    %v601 = vpop.f32.mrb[0].mxu0
    %v602 = vadd.f32 0.0, %v601
    %v603 = vpop.f32.mrb[0].mxu0
    %604 = vmatprep.mubr.f32.mxu0 0.0
    %605 = vmatmul.mubr.f32.gmra.mrb[0].mxu0 %v515
    %v606 = vpop.f32.mrb[0].mxu0
    %v607 = vadd.f32 0.0, %v606
    %v608 = vpop.f32.mrb[0].mxu0
    %609 = vmatprep.mubr.f32.mxu0 0.0
    %610 = vmatmul.mubr.f32.gmra.mrb[0].mxu0 %v518
    %v611 = vpop.f32.mrb[0].mxu0
    %v612 = vadd.f32 0.0, %v611
    %v613 = vpop.f32.mrb[0].mxu0
    %614 = vmatprep.mubr.f32.mxu0 0.0
    %615 = vmatmul.mubr.f32.gmra.mrb[0].mxu0 %v521
    %v616 = vpop.f32.mrb[0].mxu0
    %v617 = vadd.f32 0.0, %v616
    %v618 = vpop.f32.mrb[0].mxu0
    %619 = vmatprep.mubr.f32.mxu0 0.0
    %620 = vmatmul.mubr.f32.gmra.mrb[0].mxu0 %v524
    %v621 = vpop.f32.mrb[0].mxu0
    %v622 = vadd.f32 0.0, %v621
    %v623 = vpop.f32.mrb[0].mxu0
    %624 = vmatprep.mubr.f32.mxu0 0.0
    %625 = vmatmul.mubr.f32.gmra.mrb[0].mxu0 %v527
    %v626 = vpop.f32.mrb[0].mxu0
    %v627 = vadd.f32 0.0, %v626
    %v628 = vpop.f32.mrb[0].mxu0
    %629 = vmatprep.mubr.f32.mxu0 0.0
    %630 = vmatmul.mubr.f32.gmra.mrb[0].mxu0 %v530
    %v631 = vpop.f32.mrb[0].mxu0
    %v632 = vadd.f32 0.0, %v631
    %v633 = vpop.f32.mrb[0].mxu0
    %634 = vmatprep.mubr.f32.mxu0 0.0
    %635 = vmatmul.mubr.f32.gmra.mrb[0].mxu0 %v533
    %v636 = vpop.f32.mrb[0].mxu0
    %v637 = vadd.f32 0.0, %v636
    %v638 = vpop.f32.mrb[0].mxu0
    %639 = vdwg.mxu0
    %v640 = vmul.f32 %v602, %v180
    %v641 = vmul.f32 %v607, %v181
    %v642 = vmul.f32 %v612, %v182
    %v643 = vmul.f32 %v617, %v183
    %v644 = vmul.f32 %v622, %v184
    %v645 = vmul.f32 %v627, %v185
    %v646 = vmul.f32 %v632, %v186
    %v647 = vmul.f32 %v637, %v187
    %650 = vrot.lane.b32.xlu0 %v502, 96
    %v651 = vpop.permute.xlu0 %650
    %652 = vrot.lane.b32.xlu0 %v507, 96
    %v653 = vpop.permute.xlu0 %652
    %656 = vmatprep.subr.mxu0 0.0
    %657 = vmatpush1.msra.mxu0 %v651
    %658 = vmatprep.subr.mxu0 0.0
    %659 = vmatpush1.msra.mxu0 %v653
    %660 = vmatprep.subr.mxu0 0.0
    %661 = vmatpush1.msra.mxu0 0.0
    %662 = vmatprep.subr.mxu0 0.0
    %663 = vmatpush1.msra.mxu0 0.0
    %664 = vmatprep.subr.mxu0 0.0
    %665 = vmatpush1.msra.mxu0 0.0
    %666 = vmatprep.subr.mxu0 0.0
    %667 = vmatpush1.msra.mxu0 0.0
    %668 = vmatprep.subr.mxu0 0.0
    %669 = vmatpush1.msra.mxu0 0.0
    %670 = vmatprep.subr.mxu0 0.0
    %671 = vmatpush1.msra.mxu0 0.0
    %672 = vmatprep.subr.mxu0 0.0
    %673 = vmatpush1.msra.mxu0 0.0
    %674 = vmatprep.subr.mxu0 0.0
    %675 = vmatpush1.msra.mxu0 0.0
    %676 = vmatprep.subr.mxu0 0.0
    %677 = vmatpush1.msra.mxu0 0.0
    %678 = vmatprep.subr.mxu0 0.0
    %679 = vmatpush1.msra.mxu0 0.0
    %680 = vmatprep.subr.mxu0 0.0
    %681 = vmatpush1.msra.mxu0 0.0
    %682 = vmatprep.subr.mxu0 0.0
    %683 = vmatpush1.msra.mxu0 0.0
    %684 = vmatprep.subr.mxu0 0.0
    %685 = vmatpush1.msra.mxu0 0.0
    %686 = vmatprep.subr.mxu0 0.0
    %687 = vmatpush1.msra.mxu0 0.0
    %688 = vmatprep.subr.mxu0 0.0
    %689 = vmatpush1.msra.mxu0 0.0
    %690 = vmatprep.subr.mxu0 0.0
    %691 = vmatpush1.msra.mxu0 0.0
    %692 = vmatprep.subr.mxu0 0.0
    %693 = vmatpush1.msra.mxu0 0.0
    %694 = vmatprep.subr.mxu0 0.0
    %695 = vmatpush1.msra.mxu0 0.0
    %696 = vmatprep.subr.mxu0 0.0
    %697 = vmatpush1.msra.mxu0 0.0
    %698 = vmatprep.subr.mxu0 0.0
    %699 = vmatpush1.msra.mxu0 0.0
    %700 = vmatprep.subr.mxu0 0.0
    %701 = vmatpush1.msra.mxu0 0.0
    %702 = vmatprep.subr.mxu0 0.0
    %703 = vmatpush1.msra.mxu0 0.0
    %704 = vmatprep.subr.mxu0 0.0
    %705 = vmatpush1.msra.mxu0 0.0
    %706 = vmatprep.subr.mxu0 0.0
    %707 = vmatpush1.msra.mxu0 0.0
    %708 = vmatprep.subr.mxu0 0.0
    %709 = vmatpush1.msra.mxu0 0.0
    %710 = vmatprep.subr.mxu0 0.0
    %711 = vmatpush1.msra.mxu0 0.0
    %712 = vmatprep.subr.mxu0 0.0
    %713 = vmatpush1.msra.mxu0 0.0
    %714 = vmatprep.subr.mxu0 0.0
    %715 = vmatpush1.msra.mxu0 0.0
    %716 = vmatprep.subr.mxu0 0.0
    %717 = vmatpush1.msra.mxu0 0.0
    %718 = vmatprep.subr.mxu0 0.0
    %719 = vmatpush1.msra.mxu0 0.0
    %720 = vmatprep.mubr.f32.mxu0 0.0
    %721 = vmatmul.mubr.f32.gmra.mrb[0].mxu0 %v512
    %v722 = vpop.f32.mrb[0].mxu0
    %v723 = vadd.f32 0.0, %v722
    %v724 = vpop.f32.mrb[0].mxu0
    %725 = vmatprep.mubr.f32.mxu0 0.0
    %726 = vmatmul.mubr.f32.gmra.mrb[0].mxu0 %v515
    %v727 = vpop.f32.mrb[0].mxu0
    %v728 = vadd.f32 0.0, %v727
    %v729 = vpop.f32.mrb[0].mxu0
    %730 = vmatprep.mubr.f32.mxu0 0.0
    %731 = vmatmul.mubr.f32.gmra.mrb[0].mxu0 %v518
    %v732 = vpop.f32.mrb[0].mxu0
    %v733 = vadd.f32 0.0, %v732
    %v734 = vpop.f32.mrb[0].mxu0
    %735 = vmatprep.mubr.f32.mxu0 0.0
    %736 = vmatmul.mubr.f32.gmra.mrb[0].mxu0 %v521
    %v737 = vpop.f32.mrb[0].mxu0
    %v738 = vadd.f32 0.0, %v737
    %v739 = vpop.f32.mrb[0].mxu0
    %740 = vmatprep.mubr.f32.mxu0 0.0
    %741 = vmatmul.mubr.f32.gmra.mrb[0].mxu0 %v524
    %v742 = vpop.f32.mrb[0].mxu0
    %v743 = vadd.f32 0.0, %v742
    %v744 = vpop.f32.mrb[0].mxu0
    %745 = vmatprep.mubr.f32.mxu0 0.0
    %746 = vmatmul.mubr.f32.gmra.mrb[0].mxu0 %v527
    %v747 = vpop.f32.mrb[0].mxu0
    %v748 = vadd.f32 0.0, %v747
    %v749 = vpop.f32.mrb[0].mxu0
    %750 = vmatprep.mubr.f32.mxu0 0.0
    %751 = vmatmul.mubr.f32.gmra.mrb[0].mxu0 %v530
    %v752 = vpop.f32.mrb[0].mxu0
    %v753 = vadd.f32 0.0, %v752
    %v754 = vpop.f32.mrb[0].mxu0
    %755 = vmatprep.mubr.f32.mxu0 0.0
    %756 = vmatmul.mubr.f32.gmra.mrb[0].mxu0 %v533
    %v757 = vpop.f32.mrb[0].mxu0
    %v758 = vadd.f32 0.0, %v757
    %v759 = vpop.f32.mrb[0].mxu0
    %760 = vdwg.mxu0
    %761 = vrot.lane.b32.xlu0 %v502, 64
    %v762 = vpop.permute.xlu0 %761
    %763 = vrot.lane.b32.xlu0 %v507, 64
    %v764 = vpop.permute.xlu0 %763
    %767 = vmatprep.subr.mxu0 0.0
    %768 = vmatpush1.msra.mxu0 %v762
    %769 = vmatprep.subr.mxu0 0.0
    %770 = vmatpush1.msra.mxu0 %v764
    %771 = vmatprep.subr.mxu0 0.0
    %772 = vmatpush1.msra.mxu0 0.0
    %773 = vmatprep.subr.mxu0 0.0
    %774 = vmatpush1.msra.mxu0 0.0
    %775 = vmatprep.subr.mxu0 0.0
    %776 = vmatpush1.msra.mxu0 0.0
    %777 = vmatprep.subr.mxu0 0.0
    %778 = vmatpush1.msra.mxu0 0.0
    %779 = vmatprep.subr.mxu0 0.0
    %780 = vmatpush1.msra.mxu0 0.0
    %781 = vmatprep.subr.mxu0 0.0
    %782 = vmatpush1.msra.mxu0 0.0
    %783 = vmatprep.subr.mxu0 0.0
    %784 = vmatpush1.msra.mxu0 0.0
    %785 = vmatprep.subr.mxu0 0.0
    %786 = vmatpush1.msra.mxu0 0.0
    %787 = vmatprep.subr.mxu0 0.0
    %788 = vmatpush1.msra.mxu0 0.0
    %789 = vmatprep.subr.mxu0 0.0
    %790 = vmatpush1.msra.mxu0 0.0
    %791 = vmatprep.subr.mxu0 0.0
    %792 = vmatpush1.msra.mxu0 0.0
    %793 = vmatprep.subr.mxu0 0.0
    %794 = vmatpush1.msra.mxu0 0.0
    %795 = vmatprep.subr.mxu0 0.0
    %796 = vmatpush1.msra.mxu0 0.0
    %797 = vmatprep.subr.mxu0 0.0
    %798 = vmatpush1.msra.mxu0 0.0
    %799 = vmatprep.subr.mxu0 0.0
    %800 = vmatpush1.msra.mxu0 0.0
    %801 = vmatprep.subr.mxu0 0.0
    %802 = vmatpush1.msra.mxu0 0.0
    %803 = vmatprep.subr.mxu0 0.0
    %804 = vmatpush1.msra.mxu0 0.0
    %805 = vmatprep.subr.mxu0 0.0
    %806 = vmatpush1.msra.mxu0 0.0
    %807 = vmatprep.subr.mxu0 0.0
    %808 = vmatpush1.msra.mxu0 0.0
    %809 = vmatprep.subr.mxu0 0.0
    %810 = vmatpush1.msra.mxu0 0.0
    %811 = vmatprep.subr.mxu0 0.0
    %812 = vmatpush1.msra.mxu0 0.0
    %813 = vmatprep.subr.mxu0 0.0
    %814 = vmatpush1.msra.mxu0 0.0
    %815 = vmatprep.subr.mxu0 0.0
    %816 = vmatpush1.msra.mxu0 0.0
    %817 = vmatprep.subr.mxu0 0.0
    %818 = vmatpush1.msra.mxu0 0.0
    %819 = vmatprep.subr.mxu0 0.0
    %820 = vmatpush1.msra.mxu0 0.0
    %821 = vmatprep.subr.mxu0 0.0
    %822 = vmatpush1.msra.mxu0 0.0
    %823 = vmatprep.subr.mxu0 0.0
    %824 = vmatpush1.msra.mxu0 0.0
    %825 = vmatprep.subr.mxu0 0.0
    %826 = vmatpush1.msra.mxu0 0.0
    %827 = vmatprep.subr.mxu0 0.0
    %828 = vmatpush1.msra.mxu0 0.0
    %829 = vmatprep.subr.mxu0 0.0
    %830 = vmatpush1.msra.mxu0 0.0
    %831 = vmatprep.mubr.f32.mxu0 0.0
    %832 = vmatmul.mubr.f32.gmra.mrb[0].mxu0 %v512
    %v833 = vpop.f32.mrb[0].mxu0
    %v834 = vadd.f32 0.0, %v833
    %v835 = vpop.f32.mrb[0].mxu0
    %836 = vmatprep.mubr.f32.mxu0 0.0
    %837 = vmatmul.mubr.f32.gmra.mrb[0].mxu0 %v515
    %v838 = vpop.f32.mrb[0].mxu0
    %v839 = vadd.f32 0.0, %v838
    %v840 = vpop.f32.mrb[0].mxu0
    %841 = vmatprep.mubr.f32.mxu0 0.0
    %842 = vmatmul.mubr.f32.gmra.mrb[0].mxu0 %v518
    %v843 = vpop.f32.mrb[0].mxu0
    %v844 = vadd.f32 0.0, %v843
    %v845 = vpop.f32.mrb[0].mxu0
    %846 = vmatprep.mubr.f32.mxu0 0.0
    %847 = vmatmul.mubr.f32.gmra.mrb[0].mxu0 %v521
    %v848 = vpop.f32.mrb[0].mxu0
    %v849 = vadd.f32 0.0, %v848
    %v850 = vpop.f32.mrb[0].mxu0
    %851 = vmatprep.mubr.f32.mxu0 0.0
    %852 = vmatmul.mubr.f32.gmra.mrb[0].mxu0 %v524
    %v853 = vpop.f32.mrb[0].mxu0
    %v854 = vadd.f32 0.0, %v853
    %v855 = vpop.f32.mrb[0].mxu0
    %856 = vmatprep.mubr.f32.mxu0 0.0
    %857 = vmatmul.mubr.f32.gmra.mrb[0].mxu0 %v527
    %v858 = vpop.f32.mrb[0].mxu0
    %v859 = vadd.f32 0.0, %v858
    %v860 = vpop.f32.mrb[0].mxu0
    %861 = vmatprep.mubr.f32.mxu0 0.0
    %862 = vmatmul.mubr.f32.gmra.mrb[0].mxu0 %v530
    %v863 = vpop.f32.mrb[0].mxu0
    %v864 = vadd.f32 0.0, %v863
    %v865 = vpop.f32.mrb[0].mxu0
    %866 = vmatprep.mubr.f32.mxu0 0.0
    %867 = vmatmul.mubr.f32.gmra.mrb[0].mxu0 %v533
    %v868 = vpop.f32.mrb[0].mxu0
    %v869 = vadd.f32 0.0, %v868
    %v870 = vpop.f32.mrb[0].mxu0
    %871 = vdwg.mxu0
    %v872 = vmul.f32 %v834, %v180
    %v873 = vmul.f32 %v839, %v181
    %v874 = vmul.f32 %v844, %v182
    %v875 = vmul.f32 %v849, %v183
    %v876 = vmul.f32 %v854, %v184
    %v877 = vmul.f32 %v859, %v185
    %v878 = vmul.f32 %v864, %v186
    %v879 = vmul.f32 %v869, %v187
    %v881 = vsel %vm205, %v640, 0
    %v884 = vsel %vm205, %v641, 0
    %v887 = vsel %vm205, %v642, 0
    %v890 = vsel %vm205, %v643, 0
    %v893 = vsel %vm205, %v644, 0
    %v896 = vsel %vm205, %v645, 0
    %v899 = vsel %vm205, %v646, 0
    %v902 = vsel %vm205, %v647, 0
    %v905 = vsel %vm205, %v723, 0
    %v908 = vsel %vm205, %v728, 0
    %v911 = vsel %vm205, %v733, 0
    %v914 = vsel %vm205, %v738, 0
    %v917 = vsel %vm205, %v743, 0
    %v920 = vsel %vm205, %v748, 0
    %v923 = vsel %vm205, %v753, 0
    %v926 = vsel %vm205, %v758, 0
    %928 = vmatprep.subr.mxu0 0.0
    %929 = vmatpush1.xpose.msra.mxu0 %v905
    %930 = vmatprep.subr.mxu0 0.0
    %931 = vmatpush1.xpose.msra.mxu0 %v908
    %932 = vmatprep.subr.mxu0 0.0
    %933 = vmatpush1.xpose.msra.mxu0 %v911
    %934 = vmatprep.subr.mxu0 0.0
    %935 = vmatpush1.xpose.msra.mxu0 %v914
    %936 = vmatprep.subr.mxu0 0.0
    %937 = vmatpush1.xpose.msra.mxu0 %v917
    %938 = vmatprep.subr.mxu0 0.0
    %939 = vmatpush1.xpose.msra.mxu0 %v920
    %940 = vmatprep.subr.mxu0 0.0
    %941 = vmatpush1.xpose.msra.mxu0 %v923
    %942 = vmatprep.subr.mxu0 0.0
    %943 = vmatpush1.xpose.msra.mxu0 %v926
    %944 = vmatprep.subr.mxu0 0.0
    %945 = vmatpush1.xpose.msra.mxu0 0.0
    %946 = vmatprep.subr.mxu0 0.0
    %947 = vmatpush1.xpose.msra.mxu0 0.0
    %948 = vmatprep.subr.mxu0 0.0
    %949 = vmatpush1.xpose.msra.mxu0 0.0
    %950 = vmatprep.subr.mxu0 0.0
    %951 = vmatpush1.xpose.msra.mxu0 0.0
    %952 = vmatprep.subr.mxu0 0.0
    %953 = vmatpush1.xpose.msra.mxu0 0.0
    %954 = vmatprep.subr.mxu0 0.0
    %955 = vmatpush1.xpose.msra.mxu0 0.0
    %956 = vmatprep.subr.mxu0 0.0
    %957 = vmatpush1.xpose.msra.mxu0 0.0
    %958 = vmatprep.subr.mxu0 0.0
    %959 = vmatpush1.xpose.msra.mxu0 0.0
    %960 = vmatprep.subr.mxu0 0.0
    %961 = vmatpush1.xpose.msra.mxu0 0.0
    %962 = vmatprep.subr.mxu0 0.0
    %963 = vmatpush1.xpose.msra.mxu0 0.0
    %964 = vmatprep.subr.mxu0 0.0
    %965 = vmatpush1.xpose.msra.mxu0 0.0
    %966 = vmatprep.subr.mxu0 0.0
    %967 = vmatpush1.xpose.msra.mxu0 0.0
    %968 = vmatprep.subr.mxu0 0.0
    %969 = vmatpush1.xpose.msra.mxu0 0.0
    %970 = vmatprep.subr.mxu0 0.0
    %971 = vmatpush1.xpose.msra.mxu0 0.0
    %972 = vmatprep.subr.mxu0 0.0
    %973 = vmatpush1.xpose.msra.mxu0 0.0
    %974 = vmatprep.subr.mxu0 0.0
    %975 = vmatpush1.xpose.msra.mxu0 0.0
    %976 = vmatprep.subr.mxu0 0.0
    %977 = vmatpush1.xpose.msra.mxu0 0.0
    %978 = vmatprep.subr.mxu0 0.0
    %979 = vmatpush1.xpose.msra.mxu0 0.0
    %980 = vmatprep.subr.mxu0 0.0
    %981 = vmatpush1.xpose.msra.mxu0 0.0
    %982 = vmatprep.subr.mxu0 0.0
    %983 = vmatpush1.xpose.msra.mxu0 0.0
    %984 = vmatprep.subr.mxu0 0.0
    %985 = vmatpush1.xpose.msra.mxu0 0.0
    %986 = vmatprep.subr.mxu0 0.0
    %987 = vmatpush1.xpose.msra.mxu0 0.0
    %988 = vmatprep.subr.mxu0 0.0
    %989 = vmatpush1.xpose.msra.mxu0 0.0
    %990 = vmatprep.subr.mxu0 0.0
    %991 = vmatpush1.xpose.msra.mxu0 0.0
    %992 = vmatprep.mubr.f32.mxu0 0.0
    %993 = vmatmul.mubr.f32.gmra.mrb[0].mxu0 %v881
    %v994 = vpop.f32.mrb[0].mxu0
    %v995 = vadd.f32 0.0, %v994
    %v996 = vpop.f32.mrb[0].mxu0
    %997 = vmatprep.mubr.f32.mxu0 0.0
    %998 = vmatmul.mubr.f32.gmra.mrb[0].mxu0 %v884
    %v999 = vpop.f32.mrb[0].mxu0
    %v1000 = vadd.f32 0.0, %v999
    %v1001 = vpop.f32.mrb[0].mxu0
    %1002 = vmatprep.mubr.f32.mxu0 0.0
    %1003 = vmatmul.mubr.f32.gmra.mrb[0].mxu0 %v887
    %v1004 = vpop.f32.mrb[0].mxu0
    %v1005 = vadd.f32 0.0, %v1004
    %v1006 = vpop.f32.mrb[0].mxu0
    %1007 = vmatprep.mubr.f32.mxu0 0.0
    %1008 = vmatmul.mubr.f32.gmra.mrb[0].mxu0 %v890
    %v1009 = vpop.f32.mrb[0].mxu0
    %v1010 = vadd.f32 0.0, %v1009
    %v1011 = vpop.f32.mrb[0].mxu0
    %1012 = vmatprep.mubr.f32.mxu0 0.0
    %1013 = vmatmul.mubr.f32.gmra.mrb[0].mxu0 %v893
    %v1014 = vpop.f32.mrb[0].mxu0
    %v1015 = vadd.f32 0.0, %v1014
    %v1016 = vpop.f32.mrb[0].mxu0
    %1017 = vmatprep.mubr.f32.mxu0 0.0
    %1018 = vmatmul.mubr.f32.gmra.mrb[0].mxu0 %v896
    %v1019 = vpop.f32.mrb[0].mxu0
    %v1020 = vadd.f32 0.0, %v1019
    %v1021 = vpop.f32.mrb[0].mxu0
    %1022 = vmatprep.mubr.f32.mxu0 0.0
    %1023 = vmatmul.mubr.f32.gmra.mrb[0].mxu0 %v899
    %v1024 = vpop.f32.mrb[0].mxu0
    %v1025 = vadd.f32 0.0, %v1024
    %v1026 = vpop.f32.mrb[0].mxu0
    %1027 = vmatprep.mubr.f32.mxu0 0.0
    %1028 = vmatmul.mubr.f32.gmra.mrb[0].mxu0 %v902
    %v1029 = vpop.f32.mrb[0].mxu0
    %v1030 = vadd.f32 0.0, %v1029
    %v1031 = vpop.f32.mrb[0].mxu0
    %1032 = vdwg.mxu0
    %v1033 = vmul.f32 %v995, 0.35355338
    %v1034 = vmul.f32 %v1000, 0.35355338
    %v1035 = vmul.f32 %v1005, 0.35355338
    %v1036 = vmul.f32 %v1010, 0.35355338
    %v1037 = vmul.f32 %v1015, 0.35355338
    %v1038 = vmul.f32 %v1020, 0.35355338
    %v1039 = vmul.f32 %v1025, 0.35355338
    %v1040 = vmul.f32 %v1030, 0.35355338
    %v1041 = vsel %vm109, %v1033, -1e+09
    %v1042 = vsel %vm110, %v1034, -1e+09
    %v1043 = vsel %vm111, %v1035, -1e+09
    %v1044 = vsel %vm112, %v1036, -1e+09
    %v1045 = vsel %vm113, %v1037, -1e+09
    %v1046 = vsel %vm114, %v1038, -1e+09
    %v1047 = vsel %vm115, %v1039, -1e+09
    %v1048 = vsel %vm116, %v1040, -1e+09
    %vm1049 = vcmask 523264
    %v1050 = vsel %vm1049, %v1041, -inf
    %1051 = vmax.xlane.f32.xlu0 %v1050
    %v1052 = vpop.xlane.xlu0 %1051
    %v1053 = vsel %vm1049, %v1042, -inf
    %1054 = vmax.xlane.f32.xlu0 %v1053
    %v1055 = vpop.xlane.xlu0 %1054
    %v1056 = vsel %vm1049, %v1043, -inf
    %1057 = vmax.xlane.f32.xlu0 %v1056
    %v1058 = vpop.xlane.xlu0 %1057
    %v1059 = vsel %vm1049, %v1044, -inf
    %1060 = vmax.xlane.f32.xlu0 %v1059
    %v1061 = vpop.xlane.xlu0 %1060
    %v1062 = vsel %vm1049, %v1045, -inf
    %1063 = vmax.xlane.f32.xlu0 %v1062
    %v1064 = vpop.xlane.xlu0 %1063
    %v1065 = vsel %vm1049, %v1046, -inf
    %1066 = vmax.xlane.f32.xlu0 %v1065
    %v1067 = vpop.xlane.xlu0 %1066
    %v1068 = vsel %vm1049, %v1047, -inf
    %1069 = vmax.xlane.f32.xlu0 %v1068
    %v1070 = vpop.xlane.xlu0 %1069
    %v1071 = vsel %vm1049, %v1048, -inf
    %1072 = vmax.xlane.f32.xlu0 %v1071
    %v1073 = vpop.xlane.xlu0 %1072
    %v1074 = vsub.f32 %v1041, %v1052
    %v1075 = vsub.f32 %v1042, %v1055
    %v1076 = vsub.f32 %v1043, %v1058
    %v1077 = vsub.f32 %v1044, %v1061
    %v1078 = vsub.f32 %v1045, %v1064
    %v1079 = vsub.f32 %v1046, %v1067
    %v1080 = vsub.f32 %v1047, %v1070
    %v1081 = vsub.f32 %v1048, %v1073
    %v1082 = vmul.f32 %v1074, 1.442695
    %v1083 = vpow.pop %v1082
    %v1084 = vmul.f32 %v1075, 1.442695
    %v1085 = vpow.pop %v1084
    %v1086 = vmul.f32 %v1076, 1.442695
    %v1087 = vpow.pop %v1086
    %v1088 = vmul.f32 %v1077, 1.442695
    %v1089 = vpow.pop %v1088
    %v1090 = vmul.f32 %v1078, 1.442695
    %v1091 = vpow.pop %v1090
    %v1092 = vmul.f32 %v1079, 1.442695
    %v1093 = vpow.pop %v1092
    %v1094 = vmul.f32 %v1080, 1.442695
    %v1095 = vpow.pop %v1094
    %v1096 = vmul.f32 %v1081, 1.442695
    %v1097 = vpow.pop %v1096
    %v1099 = vsel %vm1049, %v1083, 0
    %v1102 = vsel %vm1049, %v1085, 0
    %v1105 = vsel %vm1049, %v1087, 0
    %v1108 = vsel %vm1049, %v1089, 0
    %v1111 = vsel %vm1049, %v1091, 0
    %v1114 = vsel %vm1049, %v1093, 0
    %v1117 = vsel %vm1049, %v1095, 0
    %v1120 = vsel %vm1049, %v1097, 0
    %1122 = vmatprep.subr.mxu0 0.0
    %1123 = vmatpush1.msra.mxu0 1.0
    %1124 = vmatprep.subr.mxu0 0.0
    %1125 = vmatpush1.msra.mxu0 1.0
    %1126 = vmatprep.subr.mxu0 0.0
    %1127 = vmatpush1.msra.mxu0 1.0
    %1128 = vmatprep.subr.mxu0 0.0
    %1129 = vmatpush1.msra.mxu0 1.0
    %1130 = vmatprep.subr.mxu0 0.0
    %1131 = vmatpush1.msra.mxu0 1.0
    %1132 = vmatprep.subr.mxu0 0.0
    %1133 = vmatpush1.msra.mxu0 1.0
    %1134 = vmatprep.subr.mxu0 0.0
    %1135 = vmatpush1.msra.mxu0 1.0
    %1136 = vmatprep.subr.mxu0 0.0
    %1137 = vmatpush1.msra.mxu0 1.0
    %1138 = vmatprep.subr.mxu0 0.0
    %1139 = vmatpush1.msra.mxu0 0.0
    %1140 = vmatprep.subr.mxu0 0.0
    %1141 = vmatpush1.msra.mxu0 0.0
    %1142 = vmatprep.subr.mxu0 0.0
    %1143 = vmatpush1.msra.mxu0 0.0
    %1144 = vmatprep.subr.mxu0 0.0
    %1145 = vmatpush1.msra.mxu0 0.0
    %1146 = vmatprep.subr.mxu0 0.0
    %1147 = vmatpush1.msra.mxu0 0.0
    %1148 = vmatprep.subr.mxu0 0.0
    %1149 = vmatpush1.msra.mxu0 0.0
    %1150 = vmatprep.subr.mxu0 0.0
    %1151 = vmatpush1.msra.mxu0 0.0
    %1152 = vmatprep.subr.mxu0 0.0
    %1153 = vmatpush1.msra.mxu0 0.0
    %1154 = vmatprep.subr.mxu0 0.0
    %1155 = vmatpush1.msra.mxu0 0.0
    %1156 = vmatprep.subr.mxu0 0.0
    %1157 = vmatpush1.msra.mxu0 0.0
    %1158 = vmatprep.subr.mxu0 0.0
    %1159 = vmatpush1.msra.mxu0 0.0
    %1160 = vmatprep.subr.mxu0 0.0
    %1161 = vmatpush1.msra.mxu0 0.0
    %1162 = vmatprep.subr.mxu0 0.0
    %1163 = vmatpush1.msra.mxu0 0.0
    %1164 = vmatprep.subr.mxu0 0.0
    %1165 = vmatpush1.msra.mxu0 0.0
    %1166 = vmatprep.subr.mxu0 0.0
    %1167 = vmatpush1.msra.mxu0 0.0
    %1168 = vmatprep.subr.mxu0 0.0
    %1169 = vmatpush1.msra.mxu0 0.0
    %1170 = vmatprep.subr.mxu0 0.0
    %1171 = vmatpush1.msra.mxu0 0.0
    %1172 = vmatprep.subr.mxu0 0.0
    %1173 = vmatpush1.msra.mxu0 0.0
    %1174 = vmatprep.subr.mxu0 0.0
    %1175 = vmatpush1.msra.mxu0 0.0
    %1176 = vmatprep.subr.mxu0 0.0
    %1177 = vmatpush1.msra.mxu0 0.0
    %1178 = vmatprep.subr.mxu0 0.0
    %1179 = vmatpush1.msra.mxu0 0.0
    %1180 = vmatprep.subr.mxu0 0.0
    %1181 = vmatpush1.msra.mxu0 0.0
    %1182 = vmatprep.subr.mxu0 0.0
    %1183 = vmatpush1.msra.mxu0 0.0
    %1184 = vmatprep.subr.mxu0 0.0
    %1185 = vmatpush1.msra.mxu0 0.0
    %1186 = vmatprep.mubr.f32.mxu0 0.0
    %1187 = vmatmul.mubr.f32.gmra.mrb[0].mxu0 %v1099
    %v1188 = vpop.f32.mrb[0].mxu0
    %v1189 = vadd.f32 0.0, %v1188
    %v1190 = vpop.f32.mrb[0].mxu0
    %1191 = vmatprep.mubr.f32.mxu0 0.0
    %1192 = vmatmul.mubr.f32.gmra.mrb[0].mxu0 %v1102
    %v1193 = vpop.f32.mrb[0].mxu0
    %v1194 = vadd.f32 0.0, %v1193
    %v1195 = vpop.f32.mrb[0].mxu0
    %1196 = vmatprep.mubr.f32.mxu0 0.0
    %1197 = vmatmul.mubr.f32.gmra.mrb[0].mxu0 %v1105
    %v1198 = vpop.f32.mrb[0].mxu0
    %v1199 = vadd.f32 0.0, %v1198
    %v1200 = vpop.f32.mrb[0].mxu0
    %1201 = vmatprep.mubr.f32.mxu0 0.0
    %1202 = vmatmul.mubr.f32.gmra.mrb[0].mxu0 %v1108
    %v1203 = vpop.f32.mrb[0].mxu0
    %v1204 = vadd.f32 0.0, %v1203
    %v1205 = vpop.f32.mrb[0].mxu0
    %1206 = vmatprep.mubr.f32.mxu0 0.0
    %1207 = vmatmul.mubr.f32.gmra.mrb[0].mxu0 %v1111
    %v1208 = vpop.f32.mrb[0].mxu0
    %v1209 = vadd.f32 0.0, %v1208
    %v1210 = vpop.f32.mrb[0].mxu0
    %1211 = vmatprep.mubr.f32.mxu0 0.0
    %1212 = vmatmul.mubr.f32.gmra.mrb[0].mxu0 %v1114
    %v1213 = vpop.f32.mrb[0].mxu0
    %v1214 = vadd.f32 0.0, %v1213
    %v1215 = vpop.f32.mrb[0].mxu0
    %1216 = vmatprep.mubr.f32.mxu0 0.0
    %1217 = vmatmul.mubr.f32.gmra.mrb[0].mxu0 %v1117
    %v1218 = vpop.f32.mrb[0].mxu0
    %v1219 = vadd.f32 0.0, %v1218
    %v1220 = vpop.f32.mrb[0].mxu0
    %1221 = vmatprep.mubr.f32.mxu0 0.0
    %1222 = vmatmul.mubr.f32.gmra.mrb[0].mxu0 %v1120
    %v1223 = vpop.f32.mrb[0].mxu0
    %v1224 = vadd.f32 0.0, %v1223
    %v1225 = vpop.f32.mrb[0].mxu0
    %1226 = vdwg.mxu0
    %1228 = vset.pattern.permute.xlu0 0
    %1229 = vperm.xlu0 %1228, %v1189
    %v1230 = vpop.permute.xlu0 %1229
    %1233 = vset.pattern.permute.xlu0 0
    %1234 = vperm.xlu0 %1233, %v1194
    %v1235 = vpop.permute.xlu0 %1234
    %1238 = vset.pattern.permute.xlu0 0
    %1239 = vperm.xlu0 %1238, %v1199
    %v1240 = vpop.permute.xlu0 %1239
    %1243 = vset.pattern.permute.xlu0 0
    %1244 = vperm.xlu0 %1243, %v1204
    %v1245 = vpop.permute.xlu0 %1244
    %1248 = vset.pattern.permute.xlu0 0
    %1249 = vperm.xlu0 %1248, %v1209
    %v1250 = vpop.permute.xlu0 %1249
    %1253 = vset.pattern.permute.xlu0 0
    %1254 = vperm.xlu0 %1253, %v1214
    %v1255 = vpop.permute.xlu0 %1254
    %1258 = vset.pattern.permute.xlu0 0
    %1259 = vperm.xlu0 %1258, %v1219
    %v1260 = vpop.permute.xlu0 %1259
    %1263 = vset.pattern.permute.xlu0 0
    %1264 = vperm.xlu0 %1263, %v1224
    %v1265 = vpop.permute.xlu0 %1264
    %v1267 = vrcp.pop %v1230
    %v1268 = vmul.f32 %v1083, %v1267
    %v1269 = vrcp.pop %v1235
    %v1270 = vmul.f32 %v1085, %v1269
    %v1271 = vrcp.pop %v1240
    %v1272 = vmul.f32 %v1087, %v1271
    %v1273 = vrcp.pop %v1245
    %v1274 = vmul.f32 %v1089, %v1273
    %v1275 = vrcp.pop %v1250
    %v1276 = vmul.f32 %v1091, %v1275
    %v1277 = vrcp.pop %v1255
    %v1278 = vmul.f32 %v1093, %v1277
    %v1279 = vrcp.pop %v1260
    %v1280 = vmul.f32 %v1095, %v1279
    %v1281 = vrcp.pop %v1265
    %v1282 = vmul.f32 %v1097, %v1281
    %v1284 = vsel %vm1049, %v1268, 0
    %v1287 = vsel %vm1049, %v1270, 0
    %v1290 = vsel %vm1049, %v1272, 0
    %v1293 = vsel %vm1049, %v1274, 0
    %v1296 = vsel %vm1049, %v1276, 0
    %v1299 = vsel %vm1049, %v1278, 0
    %v1302 = vsel %vm1049, %v1280, 0
    %v1305 = vsel %vm1049, %v1282, 0
    %1307 = vmatprep.subr.mxu0 0.0
    %1308 = vmatpush1.msra.mxu0 %v872
    %1309 = vmatprep.subr.mxu0 0.0
    %1310 = vmatpush1.msra.mxu0 %v873
    %1311 = vmatprep.subr.mxu0 0.0
    %1312 = vmatpush1.msra.mxu0 %v874
    %1313 = vmatprep.subr.mxu0 0.0
    %1314 = vmatpush1.msra.mxu0 %v875
    %1315 = vmatprep.subr.mxu0 0.0
    %1316 = vmatpush1.msra.mxu0 %v876
    %1317 = vmatprep.subr.mxu0 0.0
    %1318 = vmatpush1.msra.mxu0 %v877
    %1319 = vmatprep.subr.mxu0 0.0
    %1320 = vmatpush1.msra.mxu0 %v878
    %1321 = vmatprep.subr.mxu0 0.0
    %1322 = vmatpush1.msra.mxu0 %v879
    %1323 = vmatprep.subr.mxu0 0.0
    %1324 = vmatpush1.msra.mxu0 0.0
    %1325 = vmatprep.subr.mxu0 0.0
    %1326 = vmatpush1.msra.mxu0 0.0
    %1327 = vmatprep.subr.mxu0 0.0
    %1328 = vmatpush1.msra.mxu0 0.0
    %1329 = vmatprep.subr.mxu0 0.0
    %1330 = vmatpush1.msra.mxu0 0.0
    %1331 = vmatprep.subr.mxu0 0.0
    %1332 = vmatpush1.msra.mxu0 0.0
    %1333 = vmatprep.subr.mxu0 0.0
    %1334 = vmatpush1.msra.mxu0 0.0
    %1335 = vmatprep.subr.mxu0 0.0
    %1336 = vmatpush1.msra.mxu0 0.0
    %1337 = vmatprep.subr.mxu0 0.0
    %1338 = vmatpush1.msra.mxu0 0.0
    %1339 = vmatprep.subr.mxu0 0.0
    %1340 = vmatpush1.msra.mxu0 0.0
    %1341 = vmatprep.subr.mxu0 0.0
    %1342 = vmatpush1.msra.mxu0 0.0
    %1343 = vmatprep.subr.mxu0 0.0
    %1344 = vmatpush1.msra.mxu0 0.0
    %1345 = vmatprep.subr.mxu0 0.0
    %1346 = vmatpush1.msra.mxu0 0.0
    %1347 = vmatprep.subr.mxu0 0.0
    %1348 = vmatpush1.msra.mxu0 0.0
    %1349 = vmatprep.subr.mxu0 0.0
    %1350 = vmatpush1.msra.mxu0 0.0
    %1351 = vmatprep.subr.mxu0 0.0
    %1352 = vmatpush1.msra.mxu0 0.0
    %1353 = vmatprep.subr.mxu0 0.0
    %1354 = vmatpush1.msra.mxu0 0.0
    %1355 = vmatprep.subr.mxu0 0.0
    %1356 = vmatpush1.msra.mxu0 0.0
    %1357 = vmatprep.subr.mxu0 0.0
    %1358 = vmatpush1.msra.mxu0 0.0
    %1359 = vmatprep.subr.mxu0 0.0
    %1360 = vmatpush1.msra.mxu0 0.0
    %1361 = vmatprep.subr.mxu0 0.0
    %1362 = vmatpush1.msra.mxu0 0.0
    %1363 = vmatprep.subr.mxu0 0.0
    %1364 = vmatpush1.msra.mxu0 0.0
    %1365 = vmatprep.subr.mxu0 0.0
    %1366 = vmatpush1.msra.mxu0 0.0
    %1367 = vmatprep.subr.mxu0 0.0
    %1368 = vmatpush1.msra.mxu0 0.0
    %1369 = vmatprep.subr.mxu0 0.0
    %1370 = vmatpush1.msra.mxu0 0.0
    %1371 = vmatprep.mubr.f32.mxu0 0.0
    %1372 = vmatmul.mubr.f32.gmra.mrb[0].mxu0 %v1284
    %v1373 = vpop.f32.mrb[0].mxu0
    %v1374 = vadd.f32 0.0, %v1373
    %v1375 = vpop.f32.mrb[0].mxu0
    %1376 = vmatprep.mubr.f32.mxu0 0.0
    %1377 = vmatmul.mubr.f32.gmra.mrb[0].mxu0 %v1287
    %v1378 = vpop.f32.mrb[0].mxu0
    %v1379 = vadd.f32 0.0, %v1378
    %v1380 = vpop.f32.mrb[0].mxu0
    %1381 = vmatprep.mubr.f32.mxu0 0.0
    %1382 = vmatmul.mubr.f32.gmra.mrb[0].mxu0 %v1290
    %v1383 = vpop.f32.mrb[0].mxu0
    %v1384 = vadd.f32 0.0, %v1383
    %v1385 = vpop.f32.mrb[0].mxu0
    %1386 = vmatprep.mubr.f32.mxu0 0.0
    %1387 = vmatmul.mubr.f32.gmra.mrb[0].mxu0 %v1293
    %v1388 = vpop.f32.mrb[0].mxu0
    %v1389 = vadd.f32 0.0, %v1388
    %v1390 = vpop.f32.mrb[0].mxu0
    %1391 = vmatprep.mubr.f32.mxu0 0.0
    %1392 = vmatmul.mubr.f32.gmra.mrb[0].mxu0 %v1296
    %v1393 = vpop.f32.mrb[0].mxu0
    %v1394 = vadd.f32 0.0, %v1393
    %v1395 = vpop.f32.mrb[0].mxu0
    %1396 = vmatprep.mubr.f32.mxu0 0.0
    %1397 = vmatmul.mubr.f32.gmra.mrb[0].mxu0 %v1299
    %v1398 = vpop.f32.mrb[0].mxu0
    %v1399 = vadd.f32 0.0, %v1398
    %v1400 = vpop.f32.mrb[0].mxu0
    %1401 = vmatprep.mubr.f32.mxu0 0.0
    %1402 = vmatmul.mubr.f32.gmra.mrb[0].mxu0 %v1302
    %v1403 = vpop.f32.mrb[0].mxu0
    %v1404 = vadd.f32 0.0, %v1403
    %v1405 = vpop.f32.mrb[0].mxu0
    %1406 = vmatprep.mubr.f32.mxu0 0.0
    %1407 = vmatmul.mubr.f32.gmra.mrb[0].mxu0 %v1305
    %v1408 = vpop.f32.mrb[0].mxu0
    %v1409 = vadd.f32 0.0, %v1408
    %v1410 = vpop.f32.mrb[0].mxu0
    %1411 = vdwg.mxu0
    %v1413 = vsel %vm1049, %v154, 0
    %v1416 = vsel %vm1049, %v155, 0
    %1418 = vmatprep.subr.mxu0 0.0
    %1419 = vmatpush1.msra.mxu0 %v1374
    %1420 = vmatprep.subr.mxu0 0.0
    %1421 = vmatpush1.msra.mxu0 %v1379
    %1422 = vmatprep.subr.mxu0 0.0
    %1423 = vmatpush1.msra.mxu0 %v1384
    %1424 = vmatprep.subr.mxu0 0.0
    %1425 = vmatpush1.msra.mxu0 %v1389
    %1426 = vmatprep.subr.mxu0 0.0
    %1427 = vmatpush1.msra.mxu0 %v1394
    %1428 = vmatprep.subr.mxu0 0.0
    %1429 = vmatpush1.msra.mxu0 %v1399
    %1430 = vmatprep.subr.mxu0 0.0
    %1431 = vmatpush1.msra.mxu0 %v1404
    %1432 = vmatprep.subr.mxu0 0.0
    %1433 = vmatpush1.msra.mxu0 %v1409
    %1434 = vmatprep.subr.mxu0 0.0
    %1435 = vmatpush1.msra.mxu0 0.0
    %1436 = vmatprep.subr.mxu0 0.0
    %1437 = vmatpush1.msra.mxu0 0.0
    %1438 = vmatprep.subr.mxu0 0.0
    %1439 = vmatpush1.msra.mxu0 0.0
    %1440 = vmatprep.subr.mxu0 0.0
    %1441 = vmatpush1.msra.mxu0 0.0
    %1442 = vmatprep.subr.mxu0 0.0
    %1443 = vmatpush1.msra.mxu0 0.0
    %1444 = vmatprep.subr.mxu0 0.0
    %1445 = vmatpush1.msra.mxu0 0.0
    %1446 = vmatprep.subr.mxu0 0.0
    %1447 = vmatpush1.msra.mxu0 0.0
    %1448 = vmatprep.subr.mxu0 0.0
    %1449 = vmatpush1.msra.mxu0 0.0
    %1450 = vmatprep.subr.mxu0 0.0
    %1451 = vmatpush1.msra.mxu0 0.0
    %1452 = vmatprep.subr.mxu0 0.0
    %1453 = vmatpush1.msra.mxu0 0.0
    %1454 = vmatprep.subr.mxu0 0.0
    %1455 = vmatpush1.msra.mxu0 0.0
    %1456 = vmatprep.subr.mxu0 0.0
    %1457 = vmatpush1.msra.mxu0 0.0
    %1458 = vmatprep.subr.mxu0 0.0
    %1459 = vmatpush1.msra.mxu0 0.0
    %1460 = vmatprep.subr.mxu0 0.0
    %1461 = vmatpush1.msra.mxu0 0.0
    %1462 = vmatprep.subr.mxu0 0.0
    %1463 = vmatpush1.msra.mxu0 0.0
    %1464 = vmatprep.subr.mxu0 0.0
    %1465 = vmatpush1.msra.mxu0 0.0
    %1466 = vmatprep.subr.mxu0 0.0
    %1467 = vmatpush1.msra.mxu0 0.0
    %1468 = vmatprep.subr.mxu0 0.0
    %1469 = vmatpush1.msra.mxu0 0.0
    %1470 = vmatprep.subr.mxu0 0.0
    %1471 = vmatpush1.msra.mxu0 0.0
    %1472 = vmatprep.subr.mxu0 0.0
    %1473 = vmatpush1.msra.mxu0 0.0
    %1474 = vmatprep.subr.mxu0 0.0
    %1475 = vmatpush1.msra.mxu0 0.0
    %1476 = vmatprep.subr.mxu0 0.0
    %1477 = vmatpush1.msra.mxu0 0.0
    %1478 = vmatprep.subr.mxu0 0.0
    %1479 = vmatpush1.msra.mxu0 0.0
    %1480 = vmatprep.subr.mxu0 0.0
    %1481 = vmatpush1.msra.mxu0 0.0
    %1482 = vmatprep.mubr.f32.mxu0 0.0
    %1483 = vmatmul.mubr.f32.gmra.mrb[0].mxu0 %v1413
    %v1484 = vpop.f32.mrb[0].mxu0
    %v1485 = vadd.f32 0.0, %v1484
    %v1486 = vpop.f32.mrb[0].mxu0
    %1487 = vmatprep.mubr.f32.mxu0 0.0
    %1488 = vmatmul.mubr.f32.gmra.mrb[0].mxu0 %v1416
    %v1489 = vpop.f32.mrb[0].mxu0
    %v1490 = vadd.f32 0.0, %v1489
    %v1491 = vpop.f32.mrb[0].mxu0
    %1492 = vdwg.mxu0
    %v1493 = vld [vmem:[%s7] sm:$0xff]
    %v1494 = vld [vmem:[%s7 + $0x8] sm:$0xff]
    %v1495 = vld [vmem:[%s7 + $0x10] sm:$0xff]
    %v1496 = vld [vmem:[%s7 + $0x18] sm:$0xff]
    %v1497 = vld [vmem:[%s8] sm:$0x1]
    %v1499 = vlaneseq
    %v1500 = vshrl.u32 %v1499, 7
    %v1501 = vsub.s32 0, %v1500
    %v1502 = vrot.slane %v1497, %v1501
    %v1505 = vsel %vm205, %v1485, 0
    %v1508 = vsel %vm205, %v1490, 0
    %1510 = vmatprep.subr.mxu0 0.0
    %1511 = vmatpush1.msra.mxu0 %v1493
    %1512 = vmatprep.subr.mxu0 0.0
    %1513 = vmatpush1.msra.mxu0 %v1494
    %1514 = vmatprep.subr.mxu0 0.0
    %1515 = vmatpush1.msra.mxu0 %v1495
    %1516 = vmatprep.subr.mxu0 0.0
    %1517 = vmatpush1.msra.mxu0 %v1496
    %1518 = vmatprep.subr.mxu0 0.0
    %1519 = vmatpush1.msra.mxu0 0.0
    %1520 = vmatprep.subr.mxu0 0.0
    %1521 = vmatpush1.msra.mxu0 0.0
    %1522 = vmatprep.subr.mxu0 0.0
    %1523 = vmatpush1.msra.mxu0 0.0
    %1524 = vmatprep.subr.mxu0 0.0
    %1525 = vmatpush1.msra.mxu0 0.0
    %1526 = vmatprep.subr.mxu0 0.0
    %1527 = vmatpush1.msra.mxu0 0.0
    %1528 = vmatprep.subr.mxu0 0.0
    %1529 = vmatpush1.msra.mxu0 0.0
    %1530 = vmatprep.subr.mxu0 0.0
    %1531 = vmatpush1.msra.mxu0 0.0
    %1532 = vmatprep.subr.mxu0 0.0
    %1533 = vmatpush1.msra.mxu0 0.0
    %1534 = vmatprep.subr.mxu0 0.0
    %1535 = vmatpush1.msra.mxu0 0.0
    %1536 = vmatprep.subr.mxu0 0.0
    %1537 = vmatpush1.msra.mxu0 0.0
    %1538 = vmatprep.subr.mxu0 0.0
    %1539 = vmatpush1.msra.mxu0 0.0
    %1540 = vmatprep.subr.mxu0 0.0
    %1541 = vmatpush1.msra.mxu0 0.0
    %1542 = vmatprep.subr.mxu0 0.0
    %1543 = vmatpush1.msra.mxu0 0.0
    %1544 = vmatprep.subr.mxu0 0.0
    %1545 = vmatpush1.msra.mxu0 0.0
    %1546 = vmatprep.subr.mxu0 0.0
    %1547 = vmatpush1.msra.mxu0 0.0
    %1548 = vmatprep.subr.mxu0 0.0
    %1549 = vmatpush1.msra.mxu0 0.0
    %1550 = vmatprep.subr.mxu0 0.0
    %1551 = vmatpush1.msra.mxu0 0.0
    %1552 = vmatprep.subr.mxu0 0.0
    %1553 = vmatpush1.msra.mxu0 0.0
    %1554 = vmatprep.subr.mxu0 0.0
    %1555 = vmatpush1.msra.mxu0 0.0
    %1556 = vmatprep.subr.mxu0 0.0
    %1557 = vmatpush1.msra.mxu0 0.0
    %1558 = vmatprep.subr.mxu0 0.0
    %1559 = vmatpush1.msra.mxu0 0.0
    %1560 = vmatprep.subr.mxu0 0.0
    %1561 = vmatpush1.msra.mxu0 0.0
    %1562 = vmatprep.subr.mxu0 0.0
    %1563 = vmatpush1.msra.mxu0 0.0
    %1564 = vmatprep.subr.mxu0 0.0
    %1565 = vmatpush1.msra.mxu0 0.0
    %1566 = vmatprep.subr.mxu0 0.0
    %1567 = vmatpush1.msra.mxu0 0.0
    %1568 = vmatprep.subr.mxu0 0.0
    %1569 = vmatpush1.msra.mxu0 0.0
    %1570 = vmatprep.subr.mxu0 0.0
    %1571 = vmatpush1.msra.mxu0 0.0
    %1572 = vmatprep.subr.mxu0 0.0
    %1573 = vmatpush1.msra.mxu0 0.0
    %1574 = vmatprep.mubr.f32.mxu0 0.0
    %1575 = vmatmul.mubr.f32.gmra.mrb[0].mxu0 %v1505
    %v1576 = vpop.f32.mrb[0].mxu0
    %v1577 = vadd.f32 %v1502, %v1576
    %v1578 = vpop.f32.mrb[0].mxu0
    %1579 = vmatprep.mubr.f32.mxu0 0.0
    %1580 = vmatmul.mubr.f32.gmra.mrb[0].mxu0 %v1508
    %v1581 = vpop.f32.mrb[0].mxu0
    %v1582 = vadd.f32 %v1502, %v1581
    %v1583 = vpop.f32.mrb[0].mxu0
    %1584 = vdwg.mxu0
    %v1585 = vadd.f32 %v201, %v1577
    %v1586 = vadd.f32 %v202, %v1582
    %v1587 = vld [vmem:[%s9] sm:$0x1]
    %v1588 = vld [vmem:[%s10] sm:$0x1]
    %v1590 = vsel %vm205, %v1585, 0
    %v1593 = vsel %vm205, %v1586, 0
    %1595 = vmatprep.subr.mxu0 0.0
    %1596 = vmatpush1.msra.mxu0 1.0
    %1597 = vmatprep.subr.mxu0 0.0
    %1598 = vmatpush1.msra.mxu0 1.0
    %1599 = vmatprep.subr.mxu0 0.0
    %1600 = vmatpush1.msra.mxu0 1.0
    %1601 = vmatprep.subr.mxu0 0.0
    %1602 = vmatpush1.msra.mxu0 1.0
    %1603 = vmatprep.subr.mxu0 0.0
    %1604 = vmatpush1.msra.mxu0 0.0
    %1605 = vmatprep.subr.mxu0 0.0
    %1606 = vmatpush1.msra.mxu0 0.0
    %1607 = vmatprep.subr.mxu0 0.0
    %1608 = vmatpush1.msra.mxu0 0.0
    %1609 = vmatprep.subr.mxu0 0.0
    %1610 = vmatpush1.msra.mxu0 0.0
    %1611 = vmatprep.subr.mxu0 0.0
    %1612 = vmatpush1.msra.mxu0 0.0
    %1613 = vmatprep.subr.mxu0 0.0
    %1614 = vmatpush1.msra.mxu0 0.0
    %1615 = vmatprep.subr.mxu0 0.0
    %1616 = vmatpush1.msra.mxu0 0.0
    %1617 = vmatprep.subr.mxu0 0.0
    %1618 = vmatpush1.msra.mxu0 0.0
    %1619 = vmatprep.subr.mxu0 0.0
    %1620 = vmatpush1.msra.mxu0 0.0
    %1621 = vmatprep.subr.mxu0 0.0
    %1622 = vmatpush1.msra.mxu0 0.0
    %1623 = vmatprep.subr.mxu0 0.0
    %1624 = vmatpush1.msra.mxu0 0.0
    %1625 = vmatprep.subr.mxu0 0.0
    %1626 = vmatpush1.msra.mxu0 0.0
    %1627 = vmatprep.subr.mxu0 0.0
    %1628 = vmatpush1.msra.mxu0 0.0
    %1629 = vmatprep.subr.mxu0 0.0
    %1630 = vmatpush1.msra.mxu0 0.0
    %1631 = vmatprep.subr.mxu0 0.0
    %1632 = vmatpush1.msra.mxu0 0.0
    %1633 = vmatprep.subr.mxu0 0.0
    %1634 = vmatpush1.msra.mxu0 0.0
    %1635 = vmatprep.subr.mxu0 0.0
    %1636 = vmatpush1.msra.mxu0 0.0
    %1637 = vmatprep.subr.mxu0 0.0
    %1638 = vmatpush1.msra.mxu0 0.0
    %1639 = vmatprep.subr.mxu0 0.0
    %1640 = vmatpush1.msra.mxu0 0.0
    %1641 = vmatprep.subr.mxu0 0.0
    %1642 = vmatpush1.msra.mxu0 0.0
    %1643 = vmatprep.subr.mxu0 0.0
    %1644 = vmatpush1.msra.mxu0 0.0
    %1645 = vmatprep.subr.mxu0 0.0
    %1646 = vmatpush1.msra.mxu0 0.0
    %1647 = vmatprep.subr.mxu0 0.0
    %1648 = vmatpush1.msra.mxu0 0.0
    %1649 = vmatprep.subr.mxu0 0.0
    %1650 = vmatpush1.msra.mxu0 0.0
    %1651 = vmatprep.subr.mxu0 0.0
    %1652 = vmatpush1.msra.mxu0 0.0
    %1653 = vmatprep.subr.mxu0 0.0
    %1654 = vmatpush1.msra.mxu0 0.0
    %1655 = vmatprep.subr.mxu0 0.0
    %1656 = vmatpush1.msra.mxu0 0.0
    %1657 = vmatprep.subr.mxu0 0.0
    %1658 = vmatpush1.msra.mxu0 0.0
    %1659 = vmatprep.mubr.f32.mxu0 0.0
    %1660 = vmatmul.mubr.f32.gmra.mrb[0].mxu0 %v1590
    %v1661 = vpop.f32.mrb[0].mxu0
    %v1662 = vadd.f32 0.0, %v1661
    %v1663 = vpop.f32.mrb[0].mxu0
    %1664 = vmatprep.mubr.f32.mxu0 0.0
    %1665 = vmatmul.mubr.f32.gmra.mrb[0].mxu0 %v1593
    %v1666 = vpop.f32.mrb[0].mxu0
    %v1667 = vadd.f32 0.0, %v1666
    %v1668 = vpop.f32.mrb[0].mxu0
    %1669 = vdwg.mxu0
    %v1670 = vmul.f32 %v1662, 0.03125
    %v1671 = vmul.f32 %v1667, 0.03125
    %1673 = vset.pattern.permute.xlu0 0
    %1674 = vperm.xlu0 %1673, %v1670
    %v1675 = vpop.permute.xlu0 %1674
    %1678 = vset.pattern.permute.xlu0 0
    %1679 = vperm.xlu0 %1678, %v1671
    %v1680 = vpop.permute.xlu0 %1679
    %v1682 = vsub.f32 %v1585, %v1675
    %v1683 = vsub.f32 %v1586, %v1680
    %v1684 = vmul.f32 %v1682, %v1682
    %v1685 = vmul.f32 %v1683, %v1683
    %v1687 = vsel %vm205, %v1684, 0
    %v1690 = vsel %vm205, %v1685, 0
    %1692 = vmatprep.subr.mxu0 0.0
    %1693 = vmatpush1.msra.mxu0 1.0
    %1694 = vmatprep.subr.mxu0 0.0
    %1695 = vmatpush1.msra.mxu0 1.0
    %1696 = vmatprep.subr.mxu0 0.0
    %1697 = vmatpush1.msra.mxu0 1.0
    %1698 = vmatprep.subr.mxu0 0.0
    %1699 = vmatpush1.msra.mxu0 1.0
    %1700 = vmatprep.subr.mxu0 0.0
    %1701 = vmatpush1.msra.mxu0 0.0
    %1702 = vmatprep.subr.mxu0 0.0
    %1703 = vmatpush1.msra.mxu0 0.0
    %1704 = vmatprep.subr.mxu0 0.0
    %1705 = vmatpush1.msra.mxu0 0.0
    %1706 = vmatprep.subr.mxu0 0.0
    %1707 = vmatpush1.msra.mxu0 0.0
    %1708 = vmatprep.subr.mxu0 0.0
    %1709 = vmatpush1.msra.mxu0 0.0
    %1710 = vmatprep.subr.mxu0 0.0
    %1711 = vmatpush1.msra.mxu0 0.0
    %1712 = vmatprep.subr.mxu0 0.0
    %1713 = vmatpush1.msra.mxu0 0.0
    %1714 = vmatprep.subr.mxu0 0.0
    %1715 = vmatpush1.msra.mxu0 0.0
    %1716 = vmatprep.subr.mxu0 0.0
    %1717 = vmatpush1.msra.mxu0 0.0
    %1718 = vmatprep.subr.mxu0 0.0
    %1719 = vmatpush1.msra.mxu0 0.0
    %1720 = vmatprep.subr.mxu0 0.0
    %1721 = vmatpush1.msra.mxu0 0.0
    %1722 = vmatprep.subr.mxu0 0.0
    %1723 = vmatpush1.msra.mxu0 0.0
    %1724 = vmatprep.subr.mxu0 0.0
    %1725 = vmatpush1.msra.mxu0 0.0
    %1726 = vmatprep.subr.mxu0 0.0
    %1727 = vmatpush1.msra.mxu0 0.0
    %1728 = vmatprep.subr.mxu0 0.0
    %1729 = vmatpush1.msra.mxu0 0.0
    %1730 = vmatprep.subr.mxu0 0.0
    %1731 = vmatpush1.msra.mxu0 0.0
    %1732 = vmatprep.subr.mxu0 0.0
    %1733 = vmatpush1.msra.mxu0 0.0
    %1734 = vmatprep.subr.mxu0 0.0
    %1735 = vmatpush1.msra.mxu0 0.0
    %1736 = vmatprep.subr.mxu0 0.0
    %1737 = vmatpush1.msra.mxu0 0.0
    %1738 = vmatprep.subr.mxu0 0.0
    %1739 = vmatpush1.msra.mxu0 0.0
    %1740 = vmatprep.subr.mxu0 0.0
    %1741 = vmatpush1.msra.mxu0 0.0
    %1742 = vmatprep.subr.mxu0 0.0
    %1743 = vmatpush1.msra.mxu0 0.0
    %1744 = vmatprep.subr.mxu0 0.0
    %1745 = vmatpush1.msra.mxu0 0.0
    %1746 = vmatprep.subr.mxu0 0.0
    %1747 = vmatpush1.msra.mxu0 0.0
    %1748 = vmatprep.subr.mxu0 0.0
    %1749 = vmatpush1.msra.mxu0 0.0
    %1750 = vmatprep.subr.mxu0 0.0
    %1751 = vmatpush1.msra.mxu0 0.0
    %1752 = vmatprep.subr.mxu0 0.0
    %1753 = vmatpush1.msra.mxu0 0.0
    %1754 = vmatprep.subr.mxu0 0.0
    %1755 = vmatpush1.msra.mxu0 0.0
    %1756 = vmatprep.mubr.f32.mxu0 0.0
    %1757 = vmatmul.mubr.f32.gmra.mrb[0].mxu0 %v1687
    %v1758 = vpop.f32.mrb[0].mxu0
    %v1759 = vadd.f32 0.0, %v1758
    %v1760 = vpop.f32.mrb[0].mxu0
    %1761 = vmatprep.mubr.f32.mxu0 0.0
    %1762 = vmatmul.mubr.f32.gmra.mrb[0].mxu0 %v1690
    %v1763 = vpop.f32.mrb[0].mxu0
    %v1764 = vadd.f32 0.0, %v1763
    %v1765 = vpop.f32.mrb[0].mxu0
    %1766 = vdwg.mxu0
    %v1767 = vmul.f32 %v1759, 0.03125
    %v1768 = vmul.f32 %v1764, 0.03125
    %v1769 = vadd.f32 %v1767, 1e-05
    %v1770 = vadd.f32 %v1768, 1e-05
    %v1771 = vrsqrt.pop %v1769
    %v1772 = vrsqrt.pop %v1770
    %1774 = vset.pattern.permute.xlu0 0
    %1775 = vperm.xlu0 %1774, %v1771
    %v1776 = vpop.permute.xlu0 %1775
    %1779 = vset.pattern.permute.xlu0 0
    %1780 = vperm.xlu0 %1779, %v1772
    %v1781 = vpop.permute.xlu0 %1780
    %v1783 = vmul.f32 %v1682, %v1776
    %v1784 = vmul.f32 %v1683, %v1781
    %v1786 = vlaneseq
    %v1787 = vshrl.u32 %v1786, 7
    %v1788 = vsub.s32 0, %v1787
    %v1789 = vrot.slane %v1587, %v1788
    %v1791 = vmul.f32 %v1783, %v1789
    %v1792 = vmul.f32 %v1784, %v1789
    %v1794 = vlaneseq
    %v1795 = vshrl.u32 %v1794, 7
    %v1796 = vsub.s32 0, %v1795
    %v1797 = vrot.slane %v1588, %v1796
    %v1799 = vadd.f32 %v1791, %v1797
    %v1800 = vadd.f32 %v1792, %v1797
    %v1801 = vld [vmem:[%s11] sm:$0xff]
    %v1802 = vld [vmem:[%s11 + $0x8] sm:$0xff]
    %v1803 = vld [vmem:[%s11 + $0x10] sm:$0xff]
    %v1804 = vld [vmem:[%s11 + $0x18] sm:$0xff]
    %v1805 = vld [vmem:[%s12] sm:$0x1]
    %v1807 = vlaneseq
    %v1808 = vshrl.u32 %v1807, 7
    %v1809 = vsub.s32 0, %v1808
    %v1810 = vrot.slane %v1805, %v1809
    %v1813 = vsel %vm205, %v1799, 0
    %v1816 = vsel %vm205, %v1800, 0
    %1818 = vmatprep.subr.mxu0 0.0
    %1819 = vmatpush1.msra.mxu0 %v1801
    %1820 = vmatprep.subr.mxu0 0.0
    %1821 = vmatpush1.msra.mxu0 %v1802
    %1822 = vmatprep.subr.mxu0 0.0
    %1823 = vmatpush1.msra.mxu0 %v1803
    %1824 = vmatprep.subr.mxu0 0.0
    %1825 = vmatpush1.msra.mxu0 %v1804
    %1826 = vmatprep.subr.mxu0 0.0
    %1827 = vmatpush1.msra.mxu0 0.0
    %1828 = vmatprep.subr.mxu0 0.0
    %1829 = vmatpush1.msra.mxu0 0.0
    %1830 = vmatprep.subr.mxu0 0.0
    %1831 = vmatpush1.msra.mxu0 0.0
    %1832 = vmatprep.subr.mxu0 0.0
    %1833 = vmatpush1.msra.mxu0 0.0
    %1834 = vmatprep.subr.mxu0 0.0
    %1835 = vmatpush1.msra.mxu0 0.0
    %1836 = vmatprep.subr.mxu0 0.0
    %1837 = vmatpush1.msra.mxu0 0.0
    %1838 = vmatprep.subr.mxu0 0.0
    %1839 = vmatpush1.msra.mxu0 0.0
    %1840 = vmatprep.subr.mxu0 0.0
    %1841 = vmatpush1.msra.mxu0 0.0
    %1842 = vmatprep.subr.mxu0 0.0
    %1843 = vmatpush1.msra.mxu0 0.0
    %1844 = vmatprep.subr.mxu0 0.0
    %1845 = vmatpush1.msra.mxu0 0.0
    %1846 = vmatprep.subr.mxu0 0.0
    %1847 = vmatpush1.msra.mxu0 0.0
    %1848 = vmatprep.subr.mxu0 0.0
    %1849 = vmatpush1.msra.mxu0 0.0
    %1850 = vmatprep.subr.mxu0 0.0
    %1851 = vmatpush1.msra.mxu0 0.0
    %1852 = vmatprep.subr.mxu0 0.0
    %1853 = vmatpush1.msra.mxu0 0.0
    %1854 = vmatprep.subr.mxu0 0.0
    %1855 = vmatpush1.msra.mxu0 0.0
    %1856 = vmatprep.subr.mxu0 0.0
    %1857 = vmatpush1.msra.mxu0 0.0
    %1858 = vmatprep.subr.mxu0 0.0
    %1859 = vmatpush1.msra.mxu0 0.0
    %1860 = vmatprep.subr.mxu0 0.0
    %1861 = vmatpush1.msra.mxu0 0.0
    %1862 = vmatprep.subr.mxu0 0.0
    %1863 = vmatpush1.msra.mxu0 0.0
    %1864 = vmatprep.subr.mxu0 0.0
    %1865 = vmatpush1.msra.mxu0 0.0
    %1866 = vmatprep.subr.mxu0 0.0
    %1867 = vmatpush1.msra.mxu0 0.0
    %1868 = vmatprep.subr.mxu0 0.0
    %1869 = vmatpush1.msra.mxu0 0.0
    %1870 = vmatprep.subr.mxu0 0.0
    %1871 = vmatpush1.msra.mxu0 0.0
    %1872 = vmatprep.subr.mxu0 0.0
    %1873 = vmatpush1.msra.mxu0 0.0
    %1874 = vmatprep.subr.mxu0 0.0
    %1875 = vmatpush1.msra.mxu0 0.0
    %1876 = vmatprep.subr.mxu0 0.0
    %1877 = vmatpush1.msra.mxu0 0.0
    %1878 = vmatprep.subr.mxu0 0.0
    %1879 = vmatpush1.msra.mxu0 0.0
    %1880 = vmatprep.subr.mxu0 0.0
    %1881 = vmatpush1.msra.mxu0 0.0
    %1882 = vmatprep.mubr.f32.mxu0 0.0
    %1883 = vmatmul.mubr.f32.gmra.mrb[0].mxu0 %v1813
    %v1884 = vpop.f32.mrb[0].mxu0
    %v1885 = vadd.f32 %v1810, %v1884
    %v1886 = vpop.f32.mrb[0].mxu0
    %1887 = vmatprep.mubr.f32.mxu0 0.0
    %1888 = vmatmul.mubr.f32.gmra.mrb[0].mxu0 %v1816
    %v1889 = vpop.f32.mrb[0].mxu0
    %v1890 = vadd.f32 %v1810, %v1889
    %v1891 = vpop.f32.mrb[0].mxu0
    %1892 = vdwg.mxu0
    %v1893 = vmul.f32 %v1885, 1.702
    %v1894 = vmul.f32 %v1890, 1.702
    %v1895 = vxor.u32 %v1893, 2147483648
    %v1896 = vxor.u32 %v1894, 2147483648
    %v1897 = vmul.f32 %v1895, 1.442695
    %v1898 = vpow.pop %v1897
    %v1899 = vmul.f32 %v1896, 1.442695
    %v1900 = vpow.pop %v1899
    %v1901 = vadd.f32 %v1898, 1.0
    %v1902 = vadd.f32 %v1900, 1.0
    %v1903 = vrcp.pop %v1901
    %v1904 = vmul.f32 1.0, %v1903
    %v1905 = vrcp.pop %v1902
    %v1906 = vmul.f32 1.0, %v1905
    %v1907 = vmul.f32 %v1885, %v1904
    %v1908 = vmul.f32 %v1890, %v1906
    %v1909 = vld [vmem:[%s13] sm:$0xff]
    %v1910 = vld [vmem:[%s13 + $0x8] sm:$0xff]
    %v1911 = vld [vmem:[%s13 + $0x10] sm:$0xff]
    %v1912 = vld [vmem:[%s13 + $0x18] sm:$0xff]
    %v1913 = vld [vmem:[%s13 + $0x20] sm:$0xff]
    %v1914 = vld [vmem:[%s13 + $0x28] sm:$0xff]
    %v1915 = vld [vmem:[%s13 + $0x30] sm:$0xff]
    %v1916 = vld [vmem:[%s13 + $0x38] sm:$0xff]
    %v1917 = vld [vmem:[%s13 + $0x40] sm:$0xff]
    %v1918 = vld [vmem:[%s13 + $0x48] sm:$0xff]
    %v1919 = vld [vmem:[%s13 + $0x50] sm:$0xff]
    %v1920 = vld [vmem:[%s13 + $0x58] sm:$0xff]
    %v1921 = vld [vmem:[%s13 + $0x60] sm:$0xff]
    %v1922 = vld [vmem:[%s13 + $0x68] sm:$0xff]
    %v1923 = vld [vmem:[%s13 + $0x70] sm:$0xff]
    %v1924 = vld [vmem:[%s13 + $0x78] sm:$0xff]
    %1925 = vmatprep.subr.mxu0 0.0
    %1926 = vmatpush1.msra.mxu0 %v1909
    %1927 = vmatprep.subr.mxu0 0.0
    %1928 = vmatpush1.msra.mxu0 %v1910
    %1929 = vmatprep.subr.mxu0 0.0
    %1930 = vmatpush1.msra.mxu0 %v1911
    %1931 = vmatprep.subr.mxu0 0.0
    %1932 = vmatpush1.msra.mxu0 %v1912
    %1933 = vmatprep.subr.mxu0 0.0
    %1934 = vmatpush1.msra.mxu0 %v1913
    %1935 = vmatprep.subr.mxu0 0.0
    %1936 = vmatpush1.msra.mxu0 %v1914
    %1937 = vmatprep.subr.mxu0 0.0
    %1938 = vmatpush1.msra.mxu0 %v1915
    %1939 = vmatprep.subr.mxu0 0.0
    %1940 = vmatpush1.msra.mxu0 %v1916
    %1941 = vmatprep.subr.mxu0 0.0
    %1942 = vmatpush1.msra.mxu0 %v1917
    %1943 = vmatprep.subr.mxu0 0.0
    %1944 = vmatpush1.msra.mxu0 %v1918
    %1945 = vmatprep.subr.mxu0 0.0
    %1946 = vmatpush1.msra.mxu0 %v1919
    %1947 = vmatprep.subr.mxu0 0.0
    %1948 = vmatpush1.msra.mxu0 %v1920
    %1949 = vmatprep.subr.mxu0 0.0
    %1950 = vmatpush1.msra.mxu0 %v1921
    %1951 = vmatprep.subr.mxu0 0.0
    %1952 = vmatpush1.msra.mxu0 %v1922
    %1953 = vmatprep.subr.mxu0 0.0
    %1954 = vmatpush1.msra.mxu0 %v1923
    %1955 = vmatprep.subr.mxu0 0.0
    %1956 = vmatpush1.msra.mxu0 %v1924
    %1957 = vmatprep.subr.mxu0 0.0
    %1958 = vmatpush1.msra.mxu0 0.0
    %1959 = vmatprep.subr.mxu0 0.0
    %1960 = vmatpush1.msra.mxu0 0.0
    %1961 = vmatprep.subr.mxu0 0.0
    %1962 = vmatpush1.msra.mxu0 0.0
    %1963 = vmatprep.subr.mxu0 0.0
    %1964 = vmatpush1.msra.mxu0 0.0
    %1965 = vmatprep.subr.mxu0 0.0
    %1966 = vmatpush1.msra.mxu0 0.0
    %1967 = vmatprep.subr.mxu0 0.0
    %1968 = vmatpush1.msra.mxu0 0.0
    %1969 = vmatprep.subr.mxu0 0.0
    %1970 = vmatpush1.msra.mxu0 0.0
    %1971 = vmatprep.subr.mxu0 0.0
    %1972 = vmatpush1.msra.mxu0 0.0
    %1973 = vmatprep.subr.mxu0 0.0
    %1974 = vmatpush1.msra.mxu0 0.0
    %1975 = vmatprep.subr.mxu0 0.0
    %1976 = vmatpush1.msra.mxu0 0.0
    %1977 = vmatprep.subr.mxu0 0.0
    %1978 = vmatpush1.msra.mxu0 0.0
    %1979 = vmatprep.subr.mxu0 0.0
    %1980 = vmatpush1.msra.mxu0 0.0
    %1981 = vmatprep.subr.mxu0 0.0
    %1982 = vmatpush1.msra.mxu0 0.0
    %1983 = vmatprep.subr.mxu0 0.0
    %1984 = vmatpush1.msra.mxu0 0.0
    %1985 = vmatprep.subr.mxu0 0.0
    %1986 = vmatpush1.msra.mxu0 0.0
    %1987 = vmatprep.subr.mxu0 0.0
    %1988 = vmatpush1.msra.mxu0 0.0
    %1989 = vmatprep.mubr.f32.mxu0 0.0
    %1990 = vmatmul.mubr.f32.gmra.mrb[0].mxu0 %v1907
    %v1991 = vpop.f32.mrb[0].mxu0
    %v1992 = vadd.f32 0.0, %v1991
    %v1993 = vpop.f32.mrb[0].mxu0
    %1994 = vmatprep.mubr.f32.mxu0 0.0
    %1995 = vmatmul.mubr.f32.gmra.mrb[0].mxu0 %v1908
    %v1996 = vpop.f32.mrb[0].mxu0
    %v1997 = vadd.f32 0.0, %v1996
    %v1998 = vpop.f32.mrb[0].mxu0
    %1999 = vdwg.mxu0
    %v2000 = vadd.f32 %v1585, %v1992
    %v2001 = vadd.f32 %v1586, %v1997
    %v2002 = vld [vmem:[%s14] sm:$0x1]
    %v2004 = vlaneseq
    %v2005 = vshrl.u32 %v2004, 7
    %v2006 = vsub.s32 0, %v2005
    %v2007 = vrot.slane %v2002, %v2006
    %v2009 = vadd.f32 %v2000, %v2007
    %v2010 = vadd.f32 %v2001, %v2007
    %v2011 = vld [vmem:[%s2] sm:$0x3]
    %vm2012 = vcmask 15360
    %v2014 = vsel %vm2012, %v199, 0
    %v2017 = vsel %vm2012, %v200, 0
    %vm2019 = vcmask 1041408
    %v2021 = vsel %vm2019, %v2011, 0
    %2023 = vmatprep.subr.mxu0 0.0
    %2024 = vmatpush1.msra.mxu0 %v2021
    %2025 = vmatprep.subr.mxu0 0.0
    %2026 = vmatpush1.msra.mxu0 0.0
    %2027 = vmatprep.subr.mxu0 0.0
    %2028 = vmatpush1.msra.mxu0 0.0
    %2029 = vmatprep.subr.mxu0 0.0
    %2030 = vmatpush1.msra.mxu0 0.0
    %2031 = vmatprep.subr.mxu0 0.0
    %2032 = vmatpush1.msra.mxu0 0.0
    %2033 = vmatprep.subr.mxu0 0.0
    %2034 = vmatpush1.msra.mxu0 0.0
    %2035 = vmatprep.subr.mxu0 0.0
    %2036 = vmatpush1.msra.mxu0 0.0
    %2037 = vmatprep.subr.mxu0 0.0
    %2038 = vmatpush1.msra.mxu0 0.0
    %2039 = vmatprep.subr.mxu0 0.0
    %2040 = vmatpush1.msra.mxu0 0.0
    %2041 = vmatprep.subr.mxu0 0.0
    %2042 = vmatpush1.msra.mxu0 0.0
    %2043 = vmatprep.subr.mxu0 0.0
    %2044 = vmatpush1.msra.mxu0 0.0
    %2045 = vmatprep.subr.mxu0 0.0
    %2046 = vmatpush1.msra.mxu0 0.0
    %2047 = vmatprep.subr.mxu0 0.0
    %2048 = vmatpush1.msra.mxu0 0.0
    %2049 = vmatprep.subr.mxu0 0.0
    %2050 = vmatpush1.msra.mxu0 0.0
    %2051 = vmatprep.subr.mxu0 0.0
    %2052 = vmatpush1.msra.mxu0 0.0
    %2053 = vmatprep.subr.mxu0 0.0
    %2054 = vmatpush1.msra.mxu0 0.0
    %2055 = vmatprep.subr.mxu0 0.0
    %2056 = vmatpush1.msra.mxu0 0.0
    %2057 = vmatprep.subr.mxu0 0.0
    %2058 = vmatpush1.msra.mxu0 0.0
    %2059 = vmatprep.subr.mxu0 0.0
    %2060 = vmatpush1.msra.mxu0 0.0
    %2061 = vmatprep.subr.mxu0 0.0
    %2062 = vmatpush1.msra.mxu0 0.0
    %2063 = vmatprep.subr.mxu0 0.0
    %2064 = vmatpush1.msra.mxu0 0.0
    %2065 = vmatprep.subr.mxu0 0.0
    %2066 = vmatpush1.msra.mxu0 0.0
    %2067 = vmatprep.subr.mxu0 0.0
    %2068 = vmatpush1.msra.mxu0 0.0
    %2069 = vmatprep.subr.mxu0 0.0
    %2070 = vmatpush1.msra.mxu0 0.0
    %2071 = vmatprep.subr.mxu0 0.0
    %2072 = vmatpush1.msra.mxu0 0.0
    %2073 = vmatprep.subr.mxu0 0.0
    %2074 = vmatpush1.msra.mxu0 0.0
    %2075 = vmatprep.subr.mxu0 0.0
    %2076 = vmatpush1.msra.mxu0 0.0
    %2077 = vmatprep.subr.mxu0 0.0
    %2078 = vmatpush1.msra.mxu0 0.0
    %2079 = vmatprep.subr.mxu0 0.0
    %2080 = vmatpush1.msra.mxu0 0.0
    %2081 = vmatprep.subr.mxu0 0.0
    %2082 = vmatpush1.msra.mxu0 0.0
    %2083 = vmatprep.subr.mxu0 0.0
    %2084 = vmatpush1.msra.mxu0 0.0
    %2085 = vmatprep.subr.mxu0 0.0
    %2086 = vmatpush1.msra.mxu0 0.0
    %2087 = vmatprep.mubr.f32.mxu0 0.0
    %2088 = vmatmul.mubr.f32.gmra.mrb[0].mxu0 %v2014
    %v2089 = vpop.f32.mrb[0].mxu0
    %v2090 = vadd.f32 0.0, %v2089
    %v2091 = vpop.f32.mrb[0].mxu0
    %2092 = vmatprep.mubr.f32.mxu0 0.0
    %2093 = vmatmul.mubr.f32.gmra.mrb[0].mxu0 %v2017
    %v2094 = vpop.f32.mrb[0].mxu0
    %v2095 = vadd.f32 0.0, %v2094
    %v2096 = vpop.f32.mrb[0].mxu0
    %2097 = vdwg.mxu0
    %v2098 = vsel %vm192, 1, 0
    %v2099 = vsel %vm193, 1, 0
    %vm2100 = vcmp.eq.s32.totalorder %v2098, 1
    %vm2101 = vcmp.eq.s32.totalorder %v2099, 1
    %v2102 = vsel %vm2100, %v2090, %v2009
    %v2103 = vsel %vm2101, %v2095, %v2010
    %s2104 = scalar_lea.vmem %s3, 1
    %v2105 = vld [vmem:[%s2104] sm:$0x1]
    %s2106 = scalar_lea.vmem %s4, 1
    %v2107 = vld [vmem:[%s2106] sm:$0x1]
    %v2109 = vsel %vm205, %v2102, 0
    %v2112 = vsel %vm205, %v2103, 0
    %2114 = vmatprep.subr.mxu0 0.0
    %2115 = vmatpush1.msra.mxu0 1.0
    %2116 = vmatprep.subr.mxu0 0.0
    %2117 = vmatpush1.msra.mxu0 1.0
    %2118 = vmatprep.subr.mxu0 0.0
    %2119 = vmatpush1.msra.mxu0 1.0
    %2120 = vmatprep.subr.mxu0 0.0
    %2121 = vmatpush1.msra.mxu0 1.0
    %2122 = vmatprep.subr.mxu0 0.0
    %2123 = vmatpush1.msra.mxu0 0.0
    %2124 = vmatprep.subr.mxu0 0.0
    %2125 = vmatpush1.msra.mxu0 0.0
    %2126 = vmatprep.subr.mxu0 0.0
    %2127 = vmatpush1.msra.mxu0 0.0
    %2128 = vmatprep.subr.mxu0 0.0
    %2129 = vmatpush1.msra.mxu0 0.0
    %2130 = vmatprep.subr.mxu0 0.0
    %2131 = vmatpush1.msra.mxu0 0.0
    %2132 = vmatprep.subr.mxu0 0.0
    %2133 = vmatpush1.msra.mxu0 0.0
    %2134 = vmatprep.subr.mxu0 0.0
    %2135 = vmatpush1.msra.mxu0 0.0
    %2136 = vmatprep.subr.mxu0 0.0
    %2137 = vmatpush1.msra.mxu0 0.0
    %2138 = vmatprep.subr.mxu0 0.0
    %2139 = vmatpush1.msra.mxu0 0.0
    %2140 = vmatprep.subr.mxu0 0.0
    %2141 = vmatpush1.msra.mxu0 0.0
    %2142 = vmatprep.subr.mxu0 0.0
    %2143 = vmatpush1.msra.mxu0 0.0
    %2144 = vmatprep.subr.mxu0 0.0
    %2145 = vmatpush1.msra.mxu0 0.0
    %2146 = vmatprep.subr.mxu0 0.0
    %2147 = vmatpush1.msra.mxu0 0.0
    %2148 = vmatprep.subr.mxu0 0.0
    %2149 = vmatpush1.msra.mxu0 0.0
    %2150 = vmatprep.subr.mxu0 0.0
    %2151 = vmatpush1.msra.mxu0 0.0
    %2152 = vmatprep.subr.mxu0 0.0
    %2153 = vmatpush1.msra.mxu0 0.0
    %2154 = vmatprep.subr.mxu0 0.0
    %2155 = vmatpush1.msra.mxu0 0.0
    %2156 = vmatprep.subr.mxu0 0.0
    %2157 = vmatpush1.msra.mxu0 0.0
    %2158 = vmatprep.subr.mxu0 0.0
    %2159 = vmatpush1.msra.mxu0 0.0
    %2160 = vmatprep.subr.mxu0 0.0
    %2161 = vmatpush1.msra.mxu0 0.0
    %2162 = vmatprep.subr.mxu0 0.0
    %2163 = vmatpush1.msra.mxu0 0.0
    %2164 = vmatprep.subr.mxu0 0.0
    %2165 = vmatpush1.msra.mxu0 0.0
    %2166 = vmatprep.subr.mxu0 0.0
    %2167 = vmatpush1.msra.mxu0 0.0
    %2168 = vmatprep.subr.mxu0 0.0
    %2169 = vmatpush1.msra.mxu0 0.0
    %2170 = vmatprep.subr.mxu0 0.0
    %2171 = vmatpush1.msra.mxu0 0.0
    %2172 = vmatprep.subr.mxu0 0.0
    %2173 = vmatpush1.msra.mxu0 0.0
    %2174 = vmatprep.subr.mxu0 0.0
    %2175 = vmatpush1.msra.mxu0 0.0
    %2176 = vmatprep.subr.mxu0 0.0
    %2177 = vmatpush1.msra.mxu0 0.0
    %2178 = vmatprep.mubr.f32.mxu0 0.0
    %2179 = vmatmul.mubr.f32.gmra.mrb[0].mxu0 %v2109
    %v2180 = vpop.f32.mrb[0].mxu0
    %v2181 = vadd.f32 0.0, %v2180
    %v2182 = vpop.f32.mrb[0].mxu0
    %2183 = vmatprep.mubr.f32.mxu0 0.0
    %2184 = vmatmul.mubr.f32.gmra.mrb[0].mxu0 %v2112
    %v2185 = vpop.f32.mrb[0].mxu0
    %v2186 = vadd.f32 0.0, %v2185
    %v2187 = vpop.f32.mrb[0].mxu0
    %2188 = vdwg.mxu0
    %v2189 = vmul.f32 %v2181, 0.03125
    %v2190 = vmul.f32 %v2186, 0.03125
    %2192 = vset.pattern.permute.xlu0 0
    %2193 = vperm.xlu0 %2192, %v2189
    %v2194 = vpop.permute.xlu0 %2193
    %2197 = vset.pattern.permute.xlu0 0
    %2198 = vperm.xlu0 %2197, %v2190
    %v2199 = vpop.permute.xlu0 %2198
    %v2201 = vsub.f32 %v2102, %v2194
    %v2202 = vsub.f32 %v2103, %v2199
    %v2203 = vmul.f32 %v2201, %v2201
    %v2204 = vmul.f32 %v2202, %v2202
    %v2206 = vsel %vm205, %v2203, 0
    %v2209 = vsel %vm205, %v2204, 0
    %2211 = vmatprep.subr.mxu0 0.0
    %2212 = vmatpush1.msra.mxu0 1.0
    %2213 = vmatprep.subr.mxu0 0.0
    %2214 = vmatpush1.msra.mxu0 1.0
    %2215 = vmatprep.subr.mxu0 0.0
    %2216 = vmatpush1.msra.mxu0 1.0
    %2217 = vmatprep.subr.mxu0 0.0
    %2218 = vmatpush1.msra.mxu0 1.0
    %2219 = vmatprep.subr.mxu0 0.0
    %2220 = vmatpush1.msra.mxu0 0.0
    %2221 = vmatprep.subr.mxu0 0.0
    %2222 = vmatpush1.msra.mxu0 0.0
    %2223 = vmatprep.subr.mxu0 0.0
    %2224 = vmatpush1.msra.mxu0 0.0
    %2225 = vmatprep.subr.mxu0 0.0
    %2226 = vmatpush1.msra.mxu0 0.0
    %2227 = vmatprep.subr.mxu0 0.0
    %2228 = vmatpush1.msra.mxu0 0.0
    %2229 = vmatprep.subr.mxu0 0.0
    %2230 = vmatpush1.msra.mxu0 0.0
    %2231 = vmatprep.subr.mxu0 0.0
    %2232 = vmatpush1.msra.mxu0 0.0
    %2233 = vmatprep.subr.mxu0 0.0
    %2234 = vmatpush1.msra.mxu0 0.0
    %2235 = vmatprep.subr.mxu0 0.0
    %2236 = vmatpush1.msra.mxu0 0.0
    %2237 = vmatprep.subr.mxu0 0.0
    %2238 = vmatpush1.msra.mxu0 0.0
    %2239 = vmatprep.subr.mxu0 0.0
    %2240 = vmatpush1.msra.mxu0 0.0
    %2241 = vmatprep.subr.mxu0 0.0
    %2242 = vmatpush1.msra.mxu0 0.0
    %2243 = vmatprep.subr.mxu0 0.0
    %2244 = vmatpush1.msra.mxu0 0.0
    %2245 = vmatprep.subr.mxu0 0.0
    %2246 = vmatpush1.msra.mxu0 0.0
    %2247 = vmatprep.subr.mxu0 0.0
    %2248 = vmatpush1.msra.mxu0 0.0
    %2249 = vmatprep.subr.mxu0 0.0
    %2250 = vmatpush1.msra.mxu0 0.0
    %2251 = vmatprep.subr.mxu0 0.0
    %2252 = vmatpush1.msra.mxu0 0.0
    %2253 = vmatprep.subr.mxu0 0.0
    %2254 = vmatpush1.msra.mxu0 0.0
    %2255 = vmatprep.subr.mxu0 0.0
    %2256 = vmatpush1.msra.mxu0 0.0
    %2257 = vmatprep.subr.mxu0 0.0
    %2258 = vmatpush1.msra.mxu0 0.0
    %2259 = vmatprep.subr.mxu0 0.0
    %2260 = vmatpush1.msra.mxu0 0.0
    %2261 = vmatprep.subr.mxu0 0.0
    %2262 = vmatpush1.msra.mxu0 0.0
    %2263 = vmatprep.subr.mxu0 0.0
    %2264 = vmatpush1.msra.mxu0 0.0
    %2265 = vmatprep.subr.mxu0 0.0
    %2266 = vmatpush1.msra.mxu0 0.0
    %2267 = vmatprep.subr.mxu0 0.0
    %2268 = vmatpush1.msra.mxu0 0.0
    %2269 = vmatprep.subr.mxu0 0.0
    %2270 = vmatpush1.msra.mxu0 0.0
    %2271 = vmatprep.subr.mxu0 0.0
    %2272 = vmatpush1.msra.mxu0 0.0
    %2273 = vmatprep.subr.mxu0 0.0
    %2274 = vmatpush1.msra.mxu0 0.0
    %2275 = vmatprep.mubr.f32.mxu0 0.0
    %2276 = vmatmul.mubr.f32.gmra.mrb[0].mxu0 %v2206
    %v2277 = vpop.f32.mrb[0].mxu0
    %v2278 = vadd.f32 0.0, %v2277
    %v2279 = vpop.f32.mrb[0].mxu0
    %2280 = vmatprep.mubr.f32.mxu0 0.0
    %2281 = vmatmul.mubr.f32.gmra.mrb[0].mxu0 %v2209
    %v2282 = vpop.f32.mrb[0].mxu0
    %v2283 = vadd.f32 0.0, %v2282
    %v2284 = vpop.f32.mrb[0].mxu0
    %2285 = vdwg.mxu0
    %v2286 = vmul.f32 %v2278, 0.03125
    %v2287 = vmul.f32 %v2283, 0.03125
    %v2288 = vadd.f32 %v2286, 1e-05
    %v2289 = vadd.f32 %v2287, 1e-05
    %v2290 = vrsqrt.pop %v2288
    %v2291 = vrsqrt.pop %v2289
    %2293 = vset.pattern.permute.xlu0 0
    %2294 = vperm.xlu0 %2293, %v2290
    %v2295 = vpop.permute.xlu0 %2294
    %2298 = vset.pattern.permute.xlu0 0
    %2299 = vperm.xlu0 %2298, %v2291
    %v2300 = vpop.permute.xlu0 %2299
    %v2302 = vmul.f32 %v2201, %v2295
    %v2303 = vmul.f32 %v2202, %v2300
    %v2305 = vlaneseq
    %v2306 = vshrl.u32 %v2305, 7
    %v2307 = vsub.s32 0, %v2306
    %v2308 = vrot.slane %v2105, %v2307
    %v2310 = vmul.f32 %v2302, %v2308
    %v2311 = vmul.f32 %v2303, %v2308
    %v2313 = vlaneseq
    %v2314 = vshrl.u32 %v2313, 7
    %v2315 = vsub.s32 0, %v2314
    %v2316 = vrot.slane %v2107, %v2315
    %v2318 = vadd.f32 %v2310, %v2316
    %v2319 = vadd.f32 %v2311, %v2316
    %s2320 = scalar_lea.vmem %s5, 32
    %v2321 = vld [vmem:[%s2320] sm:$0xff]
    %v2322 = vld [vmem:[%s2320 + $0x8] sm:$0xff]
    %v2323 = vld [vmem:[%s2320 + $0x10] sm:$0xff]
    %v2324 = vld [vmem:[%s2320 + $0x18] sm:$0xff]
    %s2325 = scalar_lea.vmem %s6, 1
    %v2326 = vld [vmem:[%s2325] sm:$0x1]
    %v2328 = vlaneseq
    %v2329 = vshrl.u32 %v2328, 7
    %v2330 = vsub.s32 0, %v2329
    %v2331 = vrot.slane %v2326, %v2330
    %v2334 = vsel %vm205, %v2318, 0
    %v2337 = vsel %vm205, %v2319, 0
    %2339 = vmatprep.subr.mxu0 0.0
    %2340 = vmatpush1.msra.mxu0 %v2321
    %2341 = vmatprep.subr.mxu0 0.0
    %2342 = vmatpush1.msra.mxu0 %v2322
    %2343 = vmatprep.subr.mxu0 0.0
    %2344 = vmatpush1.msra.mxu0 %v2323
    %2345 = vmatprep.subr.mxu0 0.0
    %2346 = vmatpush1.msra.mxu0 %v2324
    %2347 = vmatprep.subr.mxu0 0.0
    %2348 = vmatpush1.msra.mxu0 0.0
    %2349 = vmatprep.subr.mxu0 0.0
    %2350 = vmatpush1.msra.mxu0 0.0
    %2351 = vmatprep.subr.mxu0 0.0
    %2352 = vmatpush1.msra.mxu0 0.0
    %2353 = vmatprep.subr.mxu0 0.0
    %2354 = vmatpush1.msra.mxu0 0.0
    %2355 = vmatprep.subr.mxu0 0.0
    %2356 = vmatpush1.msra.mxu0 0.0
    %2357 = vmatprep.subr.mxu0 0.0
    %2358 = vmatpush1.msra.mxu0 0.0
    %2359 = vmatprep.subr.mxu0 0.0
    %2360 = vmatpush1.msra.mxu0 0.0
    %2361 = vmatprep.subr.mxu0 0.0
    %2362 = vmatpush1.msra.mxu0 0.0
    %2363 = vmatprep.subr.mxu0 0.0
    %2364 = vmatpush1.msra.mxu0 0.0
    %2365 = vmatprep.subr.mxu0 0.0
    %2366 = vmatpush1.msra.mxu0 0.0
    %2367 = vmatprep.subr.mxu0 0.0
    %2368 = vmatpush1.msra.mxu0 0.0
    %2369 = vmatprep.subr.mxu0 0.0
    %2370 = vmatpush1.msra.mxu0 0.0
    %2371 = vmatprep.subr.mxu0 0.0
    %2372 = vmatpush1.msra.mxu0 0.0
    %2373 = vmatprep.subr.mxu0 0.0
    %2374 = vmatpush1.msra.mxu0 0.0
    %2375 = vmatprep.subr.mxu0 0.0
    %2376 = vmatpush1.msra.mxu0 0.0
    %2377 = vmatprep.subr.mxu0 0.0
    %2378 = vmatpush1.msra.mxu0 0.0
    %2379 = vmatprep.subr.mxu0 0.0
    %2380 = vmatpush1.msra.mxu0 0.0
    %2381 = vmatprep.subr.mxu0 0.0
    %2382 = vmatpush1.msra.mxu0 0.0
    %2383 = vmatprep.subr.mxu0 0.0
    %2384 = vmatpush1.msra.mxu0 0.0
    %2385 = vmatprep.subr.mxu0 0.0
    %2386 = vmatpush1.msra.mxu0 0.0
    %2387 = vmatprep.subr.mxu0 0.0
    %2388 = vmatpush1.msra.mxu0 0.0
    %2389 = vmatprep.subr.mxu0 0.0
    %2390 = vmatpush1.msra.mxu0 0.0
    %2391 = vmatprep.subr.mxu0 0.0
    %2392 = vmatpush1.msra.mxu0 0.0
    %2393 = vmatprep.subr.mxu0 0.0
    %2394 = vmatpush1.msra.mxu0 0.0
    %2395 = vmatprep.subr.mxu0 0.0
    %2396 = vmatpush1.msra.mxu0 0.0
    %2397 = vmatprep.subr.mxu0 0.0
    %2398 = vmatpush1.msra.mxu0 0.0
    %2399 = vmatprep.subr.mxu0 0.0
    %2400 = vmatpush1.msra.mxu0 0.0
    %2401 = vmatprep.subr.mxu0 0.0
    %2402 = vmatpush1.msra.mxu0 0.0
    %2403 = vmatprep.mubr.f32.mxu0 0.0
    %2404 = vmatmul.mubr.f32.gmra.mrb[0].mxu0 %v2334
    %v2405 = vpop.f32.mrb[0].mxu0
    %v2406 = vadd.f32 %v2331, %v2405
    %v2407 = vpop.f32.mrb[0].mxu0
    %2408 = vmatprep.mubr.f32.mxu0 0.0
    %2409 = vmatmul.mubr.f32.gmra.mrb[0].mxu0 %v2337
    %v2410 = vpop.f32.mrb[0].mxu0
    %v2411 = vadd.f32 %v2331, %v2410
    %v2412 = vpop.f32.mrb[0].mxu0
    %2413 = vdwg.mxu0
    %2414 = vmatprep.subr.mxu0 0.0
    %2415 = vmatpush1.msra.mxu0 %v2406
    %2416 = vmatprep.subr.mxu0 0.0
    %2417 = vmatpush1.msra.mxu0 %v2411
    %2418 = vmatprep.subr.mxu0 0.0
    %2419 = vmatpush1.msra.mxu0 0.0
    %2420 = vmatprep.subr.mxu0 0.0
    %2421 = vmatpush1.msra.mxu0 0.0
    %2422 = vmatprep.subr.mxu0 0.0
    %2423 = vmatpush1.msra.mxu0 0.0
    %2424 = vmatprep.subr.mxu0 0.0
    %2425 = vmatpush1.msra.mxu0 0.0
    %2426 = vmatprep.subr.mxu0 0.0
    %2427 = vmatpush1.msra.mxu0 0.0
    %2428 = vmatprep.subr.mxu0 0.0
    %2429 = vmatpush1.msra.mxu0 0.0
    %2430 = vmatprep.subr.mxu0 0.0
    %2431 = vmatpush1.msra.mxu0 0.0
    %2432 = vmatprep.subr.mxu0 0.0
    %2433 = vmatpush1.msra.mxu0 0.0
    %2434 = vmatprep.subr.mxu0 0.0
    %2435 = vmatpush1.msra.mxu0 0.0
    %2436 = vmatprep.subr.mxu0 0.0
    %2437 = vmatpush1.msra.mxu0 0.0
    %2438 = vmatprep.subr.mxu0 0.0
    %2439 = vmatpush1.msra.mxu0 0.0
    %2440 = vmatprep.subr.mxu0 0.0
    %2441 = vmatpush1.msra.mxu0 0.0
    %2442 = vmatprep.subr.mxu0 0.0
    %2443 = vmatpush1.msra.mxu0 0.0
    %2444 = vmatprep.subr.mxu0 0.0
    %2445 = vmatpush1.msra.mxu0 0.0
    %2446 = vmatprep.subr.mxu0 0.0
    %2447 = vmatpush1.msra.mxu0 0.0
    %2448 = vmatprep.subr.mxu0 0.0
    %2449 = vmatpush1.msra.mxu0 0.0
    %2450 = vmatprep.subr.mxu0 0.0
    %2451 = vmatpush1.msra.mxu0 0.0
    %2452 = vmatprep.subr.mxu0 0.0
    %2453 = vmatpush1.msra.mxu0 0.0
    %2454 = vmatprep.subr.mxu0 0.0
    %2455 = vmatpush1.msra.mxu0 0.0
    %2456 = vmatprep.subr.mxu0 0.0
    %2457 = vmatpush1.msra.mxu0 0.0
    %2458 = vmatprep.subr.mxu0 0.0
    %2459 = vmatpush1.msra.mxu0 0.0
    %2460 = vmatprep.subr.mxu0 0.0
    %2461 = vmatpush1.msra.mxu0 0.0
    %2462 = vmatprep.subr.mxu0 0.0
    %2463 = vmatpush1.msra.mxu0 0.0
    %2464 = vmatprep.subr.mxu0 0.0
    %2465 = vmatpush1.msra.mxu0 0.0
    %2466 = vmatprep.subr.mxu0 0.0
    %2467 = vmatpush1.msra.mxu0 0.0
    %2468 = vmatprep.subr.mxu0 0.0
    %2469 = vmatpush1.msra.mxu0 0.0
    %2470 = vmatprep.subr.mxu0 0.0
    %2471 = vmatpush1.msra.mxu0 0.0
    %2472 = vmatprep.subr.mxu0 0.0
    %2473 = vmatpush1.msra.mxu0 0.0
    %2474 = vmatprep.subr.mxu0 0.0
    %2475 = vmatpush1.msra.mxu0 0.0
    %2476 = vmatprep.subr.mxu0 0.0
    %2477 = vmatpush1.msra.mxu0 0.0
    %2478 = vmatprep.mubr.f32.mxu0 0.0
    %2479 = vmatmul.mubr.f32.gmra.mrb[0].mxu0 %v512
    %v2480 = vpop.f32.mrb[0].mxu0
    %v2481 = vadd.f32 0.0, %v2480
    %v2482 = vpop.f32.mrb[0].mxu0
    %2483 = vmatprep.mubr.f32.mxu0 0.0
    %2484 = vmatmul.mubr.f32.gmra.mrb[0].mxu0 %v515
    %v2485 = vpop.f32.mrb[0].mxu0
    %v2486 = vadd.f32 0.0, %v2485
    %v2487 = vpop.f32.mrb[0].mxu0
    %2488 = vmatprep.mubr.f32.mxu0 0.0
    %2489 = vmatmul.mubr.f32.gmra.mrb[0].mxu0 %v518
    %v2490 = vpop.f32.mrb[0].mxu0
    %v2491 = vadd.f32 0.0, %v2490
    %v2492 = vpop.f32.mrb[0].mxu0
    %2493 = vmatprep.mubr.f32.mxu0 0.0
    %2494 = vmatmul.mubr.f32.gmra.mrb[0].mxu0 %v521
    %v2495 = vpop.f32.mrb[0].mxu0
    %v2496 = vadd.f32 0.0, %v2495
    %v2497 = vpop.f32.mrb[0].mxu0
    %2498 = vmatprep.mubr.f32.mxu0 0.0
    %2499 = vmatmul.mubr.f32.gmra.mrb[0].mxu0 %v524
    %v2500 = vpop.f32.mrb[0].mxu0
    %v2501 = vadd.f32 0.0, %v2500
    %v2502 = vpop.f32.mrb[0].mxu0
    %2503 = vmatprep.mubr.f32.mxu0 0.0
    %2504 = vmatmul.mubr.f32.gmra.mrb[0].mxu0 %v527
    %v2505 = vpop.f32.mrb[0].mxu0
    %v2506 = vadd.f32 0.0, %v2505
    %v2507 = vpop.f32.mrb[0].mxu0
    %2508 = vmatprep.mubr.f32.mxu0 0.0
    %2509 = vmatmul.mubr.f32.gmra.mrb[0].mxu0 %v530
    %v2510 = vpop.f32.mrb[0].mxu0
    %v2511 = vadd.f32 0.0, %v2510
    %v2512 = vpop.f32.mrb[0].mxu0
    %2513 = vmatprep.mubr.f32.mxu0 0.0
    %2514 = vmatmul.mubr.f32.gmra.mrb[0].mxu0 %v533
    %v2515 = vpop.f32.mrb[0].mxu0
    %v2516 = vadd.f32 0.0, %v2515
    %v2517 = vpop.f32.mrb[0].mxu0
    %2518 = vdwg.mxu0
    %v2519 = vmul.f32 %v2481, %v180
    %v2520 = vmul.f32 %v2486, %v181
    %v2521 = vmul.f32 %v2491, %v182
    %v2522 = vmul.f32 %v2496, %v183
    %v2523 = vmul.f32 %v2501, %v184
    %v2524 = vmul.f32 %v2506, %v185
    %v2525 = vmul.f32 %v2511, %v186
    %v2526 = vmul.f32 %v2516, %v187
    %2529 = vrot.lane.b32.xlu0 %v2406, 96
    %v2530 = vpop.permute.xlu0 %2529
    %2531 = vrot.lane.b32.xlu0 %v2411, 96
    %v2532 = vpop.permute.xlu0 %2531
    %2535 = vmatprep.subr.mxu0 0.0
    %2536 = vmatpush1.msra.mxu0 %v2530
    %2537 = vmatprep.subr.mxu0 0.0
    %2538 = vmatpush1.msra.mxu0 %v2532
    %2539 = vmatprep.subr.mxu0 0.0
    %2540 = vmatpush1.msra.mxu0 0.0
    %2541 = vmatprep.subr.mxu0 0.0
    %2542 = vmatpush1.msra.mxu0 0.0
    %2543 = vmatprep.subr.mxu0 0.0
    %2544 = vmatpush1.msra.mxu0 0.0
    %2545 = vmatprep.subr.mxu0 0.0
    %2546 = vmatpush1.msra.mxu0 0.0
    %2547 = vmatprep.subr.mxu0 0.0
    %2548 = vmatpush1.msra.mxu0 0.0
    %2549 = vmatprep.subr.mxu0 0.0
    %2550 = vmatpush1.msra.mxu0 0.0
    %2551 = vmatprep.subr.mxu0 0.0
    %2552 = vmatpush1.msra.mxu0 0.0
    %2553 = vmatprep.subr.mxu0 0.0
    %2554 = vmatpush1.msra.mxu0 0.0
    %2555 = vmatprep.subr.mxu0 0.0
    %2556 = vmatpush1.msra.mxu0 0.0
    %2557 = vmatprep.subr.mxu0 0.0
    %2558 = vmatpush1.msra.mxu0 0.0
    %2559 = vmatprep.subr.mxu0 0.0
    %2560 = vmatpush1.msra.mxu0 0.0
    %2561 = vmatprep.subr.mxu0 0.0
    %2562 = vmatpush1.msra.mxu0 0.0
    %2563 = vmatprep.subr.mxu0 0.0
    %2564 = vmatpush1.msra.mxu0 0.0
    %2565 = vmatprep.subr.mxu0 0.0
    %2566 = vmatpush1.msra.mxu0 0.0
    %2567 = vmatprep.subr.mxu0 0.0
    %2568 = vmatpush1.msra.mxu0 0.0
    %2569 = vmatprep.subr.mxu0 0.0
    %2570 = vmatpush1.msra.mxu0 0.0
    %2571 = vmatprep.subr.mxu0 0.0
    %2572 = vmatpush1.msra.mxu0 0.0
    %2573 = vmatprep.subr.mxu0 0.0
    %2574 = vmatpush1.msra.mxu0 0.0
    %2575 = vmatprep.subr.mxu0 0.0
    %2576 = vmatpush1.msra.mxu0 0.0
    %2577 = vmatprep.subr.mxu0 0.0
    %2578 = vmatpush1.msra.mxu0 0.0
    %2579 = vmatprep.subr.mxu0 0.0
    %2580 = vmatpush1.msra.mxu0 0.0
    %2581 = vmatprep.subr.mxu0 0.0
    %2582 = vmatpush1.msra.mxu0 0.0
    %2583 = vmatprep.subr.mxu0 0.0
    %2584 = vmatpush1.msra.mxu0 0.0
    %2585 = vmatprep.subr.mxu0 0.0
    %2586 = vmatpush1.msra.mxu0 0.0
    %2587 = vmatprep.subr.mxu0 0.0
    %2588 = vmatpush1.msra.mxu0 0.0
    %2589 = vmatprep.subr.mxu0 0.0
    %2590 = vmatpush1.msra.mxu0 0.0
    %2591 = vmatprep.subr.mxu0 0.0
    %2592 = vmatpush1.msra.mxu0 0.0
    %2593 = vmatprep.subr.mxu0 0.0
    %2594 = vmatpush1.msra.mxu0 0.0
    %2595 = vmatprep.subr.mxu0 0.0
    %2596 = vmatpush1.msra.mxu0 0.0
    %2597 = vmatprep.subr.mxu0 0.0
    %2598 = vmatpush1.msra.mxu0 0.0
    %2599 = vmatprep.mubr.f32.mxu0 0.0
    %2600 = vmatmul.mubr.f32.gmra.mrb[0].mxu0 %v512
    %v2601 = vpop.f32.mrb[0].mxu0
    %v2602 = vadd.f32 0.0, %v2601
    %v2603 = vpop.f32.mrb[0].mxu0
    %2604 = vmatprep.mubr.f32.mxu0 0.0
    %2605 = vmatmul.mubr.f32.gmra.mrb[0].mxu0 %v515
    %v2606 = vpop.f32.mrb[0].mxu0
    %v2607 = vadd.f32 0.0, %v2606
    %v2608 = vpop.f32.mrb[0].mxu0
    %2609 = vmatprep.mubr.f32.mxu0 0.0
    %2610 = vmatmul.mubr.f32.gmra.mrb[0].mxu0 %v518
    %v2611 = vpop.f32.mrb[0].mxu0
    %v2612 = vadd.f32 0.0, %v2611
    %v2613 = vpop.f32.mrb[0].mxu0
    %2614 = vmatprep.mubr.f32.mxu0 0.0
    %2615 = vmatmul.mubr.f32.gmra.mrb[0].mxu0 %v521
    %v2616 = vpop.f32.mrb[0].mxu0
    %v2617 = vadd.f32 0.0, %v2616
    %v2618 = vpop.f32.mrb[0].mxu0
    %2619 = vmatprep.mubr.f32.mxu0 0.0
    %2620 = vmatmul.mubr.f32.gmra.mrb[0].mxu0 %v524
    %v2621 = vpop.f32.mrb[0].mxu0
    %v2622 = vadd.f32 0.0, %v2621
    %v2623 = vpop.f32.mrb[0].mxu0
    %2624 = vmatprep.mubr.f32.mxu0 0.0
    %2625 = vmatmul.mubr.f32.gmra.mrb[0].mxu0 %v527
    %v2626 = vpop.f32.mrb[0].mxu0
    %v2627 = vadd.f32 0.0, %v2626
    %v2628 = vpop.f32.mrb[0].mxu0
    %2629 = vmatprep.mubr.f32.mxu0 0.0
    %2630 = vmatmul.mubr.f32.gmra.mrb[0].mxu0 %v530
    %v2631 = vpop.f32.mrb[0].mxu0
    %v2632 = vadd.f32 0.0, %v2631
    %v2633 = vpop.f32.mrb[0].mxu0
    %2634 = vmatprep.mubr.f32.mxu0 0.0
    %2635 = vmatmul.mubr.f32.gmra.mrb[0].mxu0 %v533
    %v2636 = vpop.f32.mrb[0].mxu0
    %v2637 = vadd.f32 0.0, %v2636
    %v2638 = vpop.f32.mrb[0].mxu0
    %2639 = vdwg.mxu0
    %2640 = vrot.lane.b32.xlu0 %v2406, 64
    %v2641 = vpop.permute.xlu0 %2640
    %2642 = vrot.lane.b32.xlu0 %v2411, 64
    %v2643 = vpop.permute.xlu0 %2642
    %2646 = vmatprep.subr.mxu0 0.0
    %2647 = vmatpush1.msra.mxu0 %v2641
    %2648 = vmatprep.subr.mxu0 0.0
    %2649 = vmatpush1.msra.mxu0 %v2643
    %2650 = vmatprep.subr.mxu0 0.0
    %2651 = vmatpush1.msra.mxu0 0.0
    %2652 = vmatprep.subr.mxu0 0.0
    %2653 = vmatpush1.msra.mxu0 0.0
    %2654 = vmatprep.subr.mxu0 0.0
    %2655 = vmatpush1.msra.mxu0 0.0
    %2656 = vmatprep.subr.mxu0 0.0
    %2657 = vmatpush1.msra.mxu0 0.0
    %2658 = vmatprep.subr.mxu0 0.0
    %2659 = vmatpush1.msra.mxu0 0.0
    %2660 = vmatprep.subr.mxu0 0.0
    %2661 = vmatpush1.msra.mxu0 0.0
    %2662 = vmatprep.subr.mxu0 0.0
    %2663 = vmatpush1.msra.mxu0 0.0
    %2664 = vmatprep.subr.mxu0 0.0
    %2665 = vmatpush1.msra.mxu0 0.0
    %2666 = vmatprep.subr.mxu0 0.0
    %2667 = vmatpush1.msra.mxu0 0.0
    %2668 = vmatprep.subr.mxu0 0.0
    %2669 = vmatpush1.msra.mxu0 0.0
    %2670 = vmatprep.subr.mxu0 0.0
    %2671 = vmatpush1.msra.mxu0 0.0
    %2672 = vmatprep.subr.mxu0 0.0
    %2673 = vmatpush1.msra.mxu0 0.0
    %2674 = vmatprep.subr.mxu0 0.0
    %2675 = vmatpush1.msra.mxu0 0.0
    %2676 = vmatprep.subr.mxu0 0.0
    %2677 = vmatpush1.msra.mxu0 0.0
    %2678 = vmatprep.subr.mxu0 0.0
    %2679 = vmatpush1.msra.mxu0 0.0
    %2680 = vmatprep.subr.mxu0 0.0
    %2681 = vmatpush1.msra.mxu0 0.0
    %2682 = vmatprep.subr.mxu0 0.0
    %2683 = vmatpush1.msra.mxu0 0.0
    %2684 = vmatprep.subr.mxu0 0.0
    %2685 = vmatpush1.msra.mxu0 0.0
    %2686 = vmatprep.subr.mxu0 0.0
    %2687 = vmatpush1.msra.mxu0 0.0
    %2688 = vmatprep.subr.mxu0 0.0
    %2689 = vmatpush1.msra.mxu0 0.0
    %2690 = vmatprep.subr.mxu0 0.0
    %2691 = vmatpush1.msra.mxu0 0.0
    %2692 = vmatprep.subr.mxu0 0.0
    %2693 = vmatpush1.msra.mxu0 0.0
    %2694 = vmatprep.subr.mxu0 0.0
    %2695 = vmatpush1.msra.mxu0 0.0
    %2696 = vmatprep.subr.mxu0 0.0
    %2697 = vmatpush1.msra.mxu0 0.0
    %2698 = vmatprep.subr.mxu0 0.0
    %2699 = vmatpush1.msra.mxu0 0.0
    %2700 = vmatprep.subr.mxu0 0.0
    %2701 = vmatpush1.msra.mxu0 0.0
    %2702 = vmatprep.subr.mxu0 0.0
    %2703 = vmatpush1.msra.mxu0 0.0
    %2704 = vmatprep.subr.mxu0 0.0
    %2705 = vmatpush1.msra.mxu0 0.0
    %2706 = vmatprep.subr.mxu0 0.0
    %2707 = vmatpush1.msra.mxu0 0.0
    %2708 = vmatprep.subr.mxu0 0.0
    %2709 = vmatpush1.msra.mxu0 0.0
    %2710 = vmatprep.mubr.f32.mxu0 0.0
    %2711 = vmatmul.mubr.f32.gmra.mrb[0].mxu0 %v512
    %v2712 = vpop.f32.mrb[0].mxu0
    %v2713 = vadd.f32 0.0, %v2712
    %v2714 = vpop.f32.mrb[0].mxu0
    %2715 = vmatprep.mubr.f32.mxu0 0.0
    %2716 = vmatmul.mubr.f32.gmra.mrb[0].mxu0 %v515
    %v2717 = vpop.f32.mrb[0].mxu0
    %v2718 = vadd.f32 0.0, %v2717
    %v2719 = vpop.f32.mrb[0].mxu0
    %2720 = vmatprep.mubr.f32.mxu0 0.0
    %2721 = vmatmul.mubr.f32.gmra.mrb[0].mxu0 %v518
    %v2722 = vpop.f32.mrb[0].mxu0
    %v2723 = vadd.f32 0.0, %v2722
    %v2724 = vpop.f32.mrb[0].mxu0
    %2725 = vmatprep.mubr.f32.mxu0 0.0
    %2726 = vmatmul.mubr.f32.gmra.mrb[0].mxu0 %v521
    %v2727 = vpop.f32.mrb[0].mxu0
    %v2728 = vadd.f32 0.0, %v2727
    %v2729 = vpop.f32.mrb[0].mxu0
    %2730 = vmatprep.mubr.f32.mxu0 0.0
    %2731 = vmatmul.mubr.f32.gmra.mrb[0].mxu0 %v524
    %v2732 = vpop.f32.mrb[0].mxu0
    %v2733 = vadd.f32 0.0, %v2732
    %v2734 = vpop.f32.mrb[0].mxu0
    %2735 = vmatprep.mubr.f32.mxu0 0.0
    %2736 = vmatmul.mubr.f32.gmra.mrb[0].mxu0 %v527
    %v2737 = vpop.f32.mrb[0].mxu0
    %v2738 = vadd.f32 0.0, %v2737
    %v2739 = vpop.f32.mrb[0].mxu0
    %2740 = vmatprep.mubr.f32.mxu0 0.0
    %2741 = vmatmul.mubr.f32.gmra.mrb[0].mxu0 %v530
    %v2742 = vpop.f32.mrb[0].mxu0
    %v2743 = vadd.f32 0.0, %v2742
    %v2744 = vpop.f32.mrb[0].mxu0
    %2745 = vmatprep.mubr.f32.mxu0 0.0
    %2746 = vmatmul.mubr.f32.gmra.mrb[0].mxu0 %v533
    %v2747 = vpop.f32.mrb[0].mxu0
    %v2748 = vadd.f32 0.0, %v2747
    %v2749 = vpop.f32.mrb[0].mxu0
    %2750 = vdwg.mxu0
    %v2751 = vmul.f32 %v2713, %v180
    %v2752 = vmul.f32 %v2718, %v181
    %v2753 = vmul.f32 %v2723, %v182
    %v2754 = vmul.f32 %v2728, %v183
    %v2755 = vmul.f32 %v2733, %v184
    %v2756 = vmul.f32 %v2738, %v185
    %v2757 = vmul.f32 %v2743, %v186
    %v2758 = vmul.f32 %v2748, %v187
    %v2760 = vsel %vm205, %v2519, 0
    %v2763 = vsel %vm205, %v2520, 0
    %v2766 = vsel %vm205, %v2521, 0
    %v2769 = vsel %vm205, %v2522, 0
    %v2772 = vsel %vm205, %v2523, 0
    %v2775 = vsel %vm205, %v2524, 0
    %v2778 = vsel %vm205, %v2525, 0
    %v2781 = vsel %vm205, %v2526, 0
    %v2784 = vsel %vm205, %v2602, 0
    %v2787 = vsel %vm205, %v2607, 0
    %v2790 = vsel %vm205, %v2612, 0
    %v2793 = vsel %vm205, %v2617, 0
    %v2796 = vsel %vm205, %v2622, 0
    %v2799 = vsel %vm205, %v2627, 0
    %v2802 = vsel %vm205, %v2632, 0
    %v2805 = vsel %vm205, %v2637, 0
    %2807 = vmatprep.subr.mxu0 0.0
    %2808 = vmatpush1.xpose.msra.mxu0 %v2784
    %2809 = vmatprep.subr.mxu0 0.0
    %2810 = vmatpush1.xpose.msra.mxu0 %v2787
    %2811 = vmatprep.subr.mxu0 0.0
    %2812 = vmatpush1.xpose.msra.mxu0 %v2790
    %2813 = vmatprep.subr.mxu0 0.0
    %2814 = vmatpush1.xpose.msra.mxu0 %v2793
    %2815 = vmatprep.subr.mxu0 0.0
    %2816 = vmatpush1.xpose.msra.mxu0 %v2796
    %2817 = vmatprep.subr.mxu0 0.0
    %2818 = vmatpush1.xpose.msra.mxu0 %v2799
    %2819 = vmatprep.subr.mxu0 0.0
    %2820 = vmatpush1.xpose.msra.mxu0 %v2802
    %2821 = vmatprep.subr.mxu0 0.0
    %2822 = vmatpush1.xpose.msra.mxu0 %v2805
    %2823 = vmatprep.subr.mxu0 0.0
    %2824 = vmatpush1.xpose.msra.mxu0 0.0
    %2825 = vmatprep.subr.mxu0 0.0
    %2826 = vmatpush1.xpose.msra.mxu0 0.0
    %2827 = vmatprep.subr.mxu0 0.0
    %2828 = vmatpush1.xpose.msra.mxu0 0.0
    %2829 = vmatprep.subr.mxu0 0.0
    %2830 = vmatpush1.xpose.msra.mxu0 0.0
    %2831 = vmatprep.subr.mxu0 0.0
    %2832 = vmatpush1.xpose.msra.mxu0 0.0
    %2833 = vmatprep.subr.mxu0 0.0
    %2834 = vmatpush1.xpose.msra.mxu0 0.0
    %2835 = vmatprep.subr.mxu0 0.0
    %2836 = vmatpush1.xpose.msra.mxu0 0.0
    %2837 = vmatprep.subr.mxu0 0.0
    %2838 = vmatpush1.xpose.msra.mxu0 0.0
    %2839 = vmatprep.subr.mxu0 0.0
    %2840 = vmatpush1.xpose.msra.mxu0 0.0
    %2841 = vmatprep.subr.mxu0 0.0
    %2842 = vmatpush1.xpose.msra.mxu0 0.0
    %2843 = vmatprep.subr.mxu0 0.0
    %2844 = vmatpush1.xpose.msra.mxu0 0.0
    %2845 = vmatprep.subr.mxu0 0.0
    %2846 = vmatpush1.xpose.msra.mxu0 0.0
    %2847 = vmatprep.subr.mxu0 0.0
    %2848 = vmatpush1.xpose.msra.mxu0 0.0
    %2849 = vmatprep.subr.mxu0 0.0
    %2850 = vmatpush1.xpose.msra.mxu0 0.0
    %2851 = vmatprep.subr.mxu0 0.0
    %2852 = vmatpush1.xpose.msra.mxu0 0.0
    %2853 = vmatprep.subr.mxu0 0.0
    %2854 = vmatpush1.xpose.msra.mxu0 0.0
    %2855 = vmatprep.subr.mxu0 0.0
    %2856 = vmatpush1.xpose.msra.mxu0 0.0
    %2857 = vmatprep.subr.mxu0 0.0
    %2858 = vmatpush1.xpose.msra.mxu0 0.0
    %2859 = vmatprep.subr.mxu0 0.0
    %2860 = vmatpush1.xpose.msra.mxu0 0.0
    %2861 = vmatprep.subr.mxu0 0.0
    %2862 = vmatpush1.xpose.msra.mxu0 0.0
    %2863 = vmatprep.subr.mxu0 0.0
    %2864 = vmatpush1.xpose.msra.mxu0 0.0
    %2865 = vmatprep.subr.mxu0 0.0
    %2866 = vmatpush1.xpose.msra.mxu0 0.0
    %2867 = vmatprep.subr.mxu0 0.0
    %2868 = vmatpush1.xpose.msra.mxu0 0.0
    %2869 = vmatprep.subr.mxu0 0.0
    %2870 = vmatpush1.xpose.msra.mxu0 0.0
    %2871 = vmatprep.mubr.f32.mxu0 0.0
    %2872 = vmatmul.mubr.f32.gmra.mrb[0].mxu0 %v2760
    %v2873 = vpop.f32.mrb[0].mxu0
    %v2874 = vadd.f32 0.0, %v2873
    %v2875 = vpop.f32.mrb[0].mxu0
    %2876 = vmatprep.mubr.f32.mxu0 0.0
    %2877 = vmatmul.mubr.f32.gmra.mrb[0].mxu0 %v2763
    %v2878 = vpop.f32.mrb[0].mxu0
    %v2879 = vadd.f32 0.0, %v2878
    %v2880 = vpop.f32.mrb[0].mxu0
    %2881 = vmatprep.mubr.f32.mxu0 0.0
    %2882 = vmatmul.mubr.f32.gmra.mrb[0].mxu0 %v2766
    %v2883 = vpop.f32.mrb[0].mxu0
    %v2884 = vadd.f32 0.0, %v2883
    %v2885 = vpop.f32.mrb[0].mxu0
    %2886 = vmatprep.mubr.f32.mxu0 0.0
    %2887 = vmatmul.mubr.f32.gmra.mrb[0].mxu0 %v2769
    %v2888 = vpop.f32.mrb[0].mxu0
    %v2889 = vadd.f32 0.0, %v2888
    %v2890 = vpop.f32.mrb[0].mxu0
    %2891 = vmatprep.mubr.f32.mxu0 0.0
    %2892 = vmatmul.mubr.f32.gmra.mrb[0].mxu0 %v2772
    %v2893 = vpop.f32.mrb[0].mxu0
    %v2894 = vadd.f32 0.0, %v2893
    %v2895 = vpop.f32.mrb[0].mxu0
    %2896 = vmatprep.mubr.f32.mxu0 0.0
    %2897 = vmatmul.mubr.f32.gmra.mrb[0].mxu0 %v2775
    %v2898 = vpop.f32.mrb[0].mxu0
    %v2899 = vadd.f32 0.0, %v2898
    %v2900 = vpop.f32.mrb[0].mxu0
    %2901 = vmatprep.mubr.f32.mxu0 0.0
    %2902 = vmatmul.mubr.f32.gmra.mrb[0].mxu0 %v2778
    %v2903 = vpop.f32.mrb[0].mxu0
    %v2904 = vadd.f32 0.0, %v2903
    %v2905 = vpop.f32.mrb[0].mxu0
    %2906 = vmatprep.mubr.f32.mxu0 0.0
    %2907 = vmatmul.mubr.f32.gmra.mrb[0].mxu0 %v2781
    %v2908 = vpop.f32.mrb[0].mxu0
    %v2909 = vadd.f32 0.0, %v2908
    %v2910 = vpop.f32.mrb[0].mxu0
    %2911 = vdwg.mxu0
    %v2912 = vmul.f32 %v2874, 0.35355338
    %v2913 = vmul.f32 %v2879, 0.35355338
    %v2914 = vmul.f32 %v2884, 0.35355338
    %v2915 = vmul.f32 %v2889, 0.35355338
    %v2916 = vmul.f32 %v2894, 0.35355338
    %v2917 = vmul.f32 %v2899, 0.35355338
    %v2918 = vmul.f32 %v2904, 0.35355338
    %v2919 = vmul.f32 %v2909, 0.35355338
    %v2920 = vsel %vm109, %v2912, -1e+09
    %v2921 = vsel %vm110, %v2913, -1e+09
    %v2922 = vsel %vm111, %v2914, -1e+09
    %v2923 = vsel %vm112, %v2915, -1e+09
    %v2924 = vsel %vm113, %v2916, -1e+09
    %v2925 = vsel %vm114, %v2917, -1e+09
    %v2926 = vsel %vm115, %v2918, -1e+09
    %v2927 = vsel %vm116, %v2919, -1e+09
    %v2928 = vsel %vm1049, %v2920, -inf
    %2929 = vmax.xlane.f32.xlu0 %v2928
    %v2930 = vpop.xlane.xlu0 %2929
    %v2931 = vsel %vm1049, %v2921, -inf
    %2932 = vmax.xlane.f32.xlu0 %v2931
    %v2933 = vpop.xlane.xlu0 %2932
    %v2934 = vsel %vm1049, %v2922, -inf
    %2935 = vmax.xlane.f32.xlu0 %v2934
    %v2936 = vpop.xlane.xlu0 %2935
    %v2937 = vsel %vm1049, %v2923, -inf
    %2938 = vmax.xlane.f32.xlu0 %v2937
    %v2939 = vpop.xlane.xlu0 %2938
    %v2940 = vsel %vm1049, %v2924, -inf
    %2941 = vmax.xlane.f32.xlu0 %v2940
    %v2942 = vpop.xlane.xlu0 %2941
    %v2943 = vsel %vm1049, %v2925, -inf
    %2944 = vmax.xlane.f32.xlu0 %v2943
    %v2945 = vpop.xlane.xlu0 %2944
    %v2946 = vsel %vm1049, %v2926, -inf
    %2947 = vmax.xlane.f32.xlu0 %v2946
    %v2948 = vpop.xlane.xlu0 %2947
    %v2949 = vsel %vm1049, %v2927, -inf
    %2950 = vmax.xlane.f32.xlu0 %v2949
    %v2951 = vpop.xlane.xlu0 %2950
    %v2952 = vsub.f32 %v2920, %v2930
    %v2953 = vsub.f32 %v2921, %v2933
    %v2954 = vsub.f32 %v2922, %v2936
    %v2955 = vsub.f32 %v2923, %v2939
    %v2956 = vsub.f32 %v2924, %v2942
    %v2957 = vsub.f32 %v2925, %v2945
    %v2958 = vsub.f32 %v2926, %v2948
    %v2959 = vsub.f32 %v2927, %v2951
    %v2960 = vmul.f32 %v2952, 1.442695
    %v2961 = vpow.pop %v2960
    %v2962 = vmul.f32 %v2953, 1.442695
    %v2963 = vpow.pop %v2962
    %v2964 = vmul.f32 %v2954, 1.442695
    %v2965 = vpow.pop %v2964
    %v2966 = vmul.f32 %v2955, 1.442695
    %v2967 = vpow.pop %v2966
    %v2968 = vmul.f32 %v2956, 1.442695
    %v2969 = vpow.pop %v2968
    %v2970 = vmul.f32 %v2957, 1.442695
    %v2971 = vpow.pop %v2970
    %v2972 = vmul.f32 %v2958, 1.442695
    %v2973 = vpow.pop %v2972
    %v2974 = vmul.f32 %v2959, 1.442695
    %v2975 = vpow.pop %v2974
    %v2977 = vsel %vm1049, %v2961, 0
    %v2980 = vsel %vm1049, %v2963, 0
    %v2983 = vsel %vm1049, %v2965, 0
    %v2986 = vsel %vm1049, %v2967, 0
    %v2989 = vsel %vm1049, %v2969, 0
    %v2992 = vsel %vm1049, %v2971, 0
    %v2995 = vsel %vm1049, %v2973, 0
    %v2998 = vsel %vm1049, %v2975, 0
    %3000 = vmatprep.subr.mxu0 0.0
    %3001 = vmatpush1.msra.mxu0 1.0
    %3002 = vmatprep.subr.mxu0 0.0
    %3003 = vmatpush1.msra.mxu0 1.0
    %3004 = vmatprep.subr.mxu0 0.0
    %3005 = vmatpush1.msra.mxu0 1.0
    %3006 = vmatprep.subr.mxu0 0.0
    %3007 = vmatpush1.msra.mxu0 1.0
    %3008 = vmatprep.subr.mxu0 0.0
    %3009 = vmatpush1.msra.mxu0 1.0
    %3010 = vmatprep.subr.mxu0 0.0
    %3011 = vmatpush1.msra.mxu0 1.0
    %3012 = vmatprep.subr.mxu0 0.0
    %3013 = vmatpush1.msra.mxu0 1.0
    %3014 = vmatprep.subr.mxu0 0.0
    %3015 = vmatpush1.msra.mxu0 1.0
    %3016 = vmatprep.subr.mxu0 0.0
    %3017 = vmatpush1.msra.mxu0 0.0
    %3018 = vmatprep.subr.mxu0 0.0
    %3019 = vmatpush1.msra.mxu0 0.0
    %3020 = vmatprep.subr.mxu0 0.0
    %3021 = vmatpush1.msra.mxu0 0.0
    %3022 = vmatprep.subr.mxu0 0.0
    %3023 = vmatpush1.msra.mxu0 0.0
    %3024 = vmatprep.subr.mxu0 0.0
    %3025 = vmatpush1.msra.mxu0 0.0
    %3026 = vmatprep.subr.mxu0 0.0
    %3027 = vmatpush1.msra.mxu0 0.0
    %3028 = vmatprep.subr.mxu0 0.0
    %3029 = vmatpush1.msra.mxu0 0.0
    %3030 = vmatprep.subr.mxu0 0.0
    %3031 = vmatpush1.msra.mxu0 0.0
    %3032 = vmatprep.subr.mxu0 0.0
    %3033 = vmatpush1.msra.mxu0 0.0
    %3034 = vmatprep.subr.mxu0 0.0
    %3035 = vmatpush1.msra.mxu0 0.0
    %3036 = vmatprep.subr.mxu0 0.0
    %3037 = vmatpush1.msra.mxu0 0.0
    %3038 = vmatprep.subr.mxu0 0.0
    %3039 = vmatpush1.msra.mxu0 0.0
    %3040 = vmatprep.subr.mxu0 0.0
    %3041 = vmatpush1.msra.mxu0 0.0
    %3042 = vmatprep.subr.mxu0 0.0
    %3043 = vmatpush1.msra.mxu0 0.0
    %3044 = vmatprep.subr.mxu0 0.0
    %3045 = vmatpush1.msra.mxu0 0.0
    %3046 = vmatprep.subr.mxu0 0.0
    %3047 = vmatpush1.msra.mxu0 0.0
    %3048 = vmatprep.subr.mxu0 0.0
    %3049 = vmatpush1.msra.mxu0 0.0
    %3050 = vmatprep.subr.mxu0 0.0
    %3051 = vmatpush1.msra.mxu0 0.0
    %3052 = vmatprep.subr.mxu0 0.0
    %3053 = vmatpush1.msra.mxu0 0.0
    %3054 = vmatprep.subr.mxu0 0.0
    %3055 = vmatpush1.msra.mxu0 0.0
    %3056 = vmatprep.subr.mxu0 0.0
    %3057 = vmatpush1.msra.mxu0 0.0
    %3058 = vmatprep.subr.mxu0 0.0
    %3059 = vmatpush1.msra.mxu0 0.0
    %3060 = vmatprep.subr.mxu0 0.0
    %3061 = vmatpush1.msra.mxu0 0.0
    %3062 = vmatprep.subr.mxu0 0.0
    %3063 = vmatpush1.msra.mxu0 0.0
    %3064 = vmatprep.mubr.f32.mxu0 0.0
    %3065 = vmatmul.mubr.f32.gmra.mrb[0].mxu0 %v2977
    %v3066 = vpop.f32.mrb[0].mxu0
    %v3067 = vadd.f32 0.0, %v3066
    %v3068 = vpop.f32.mrb[0].mxu0
    %3069 = vmatprep.mubr.f32.mxu0 0.0
    %3070 = vmatmul.mubr.f32.gmra.mrb[0].mxu0 %v2980
    %v3071 = vpop.f32.mrb[0].mxu0
    %v3072 = vadd.f32 0.0, %v3071
    %v3073 = vpop.f32.mrb[0].mxu0
    %3074 = vmatprep.mubr.f32.mxu0 0.0
    %3075 = vmatmul.mubr.f32.gmra.mrb[0].mxu0 %v2983
    %v3076 = vpop.f32.mrb[0].mxu0
    %v3077 = vadd.f32 0.0, %v3076
    %v3078 = vpop.f32.mrb[0].mxu0
    %3079 = vmatprep.mubr.f32.mxu0 0.0
    %3080 = vmatmul.mubr.f32.gmra.mrb[0].mxu0 %v2986
    %v3081 = vpop.f32.mrb[0].mxu0
    %v3082 = vadd.f32 0.0, %v3081
    %v3083 = vpop.f32.mrb[0].mxu0
    %3084 = vmatprep.mubr.f32.mxu0 0.0
    %3085 = vmatmul.mubr.f32.gmra.mrb[0].mxu0 %v2989
    %v3086 = vpop.f32.mrb[0].mxu0
    %v3087 = vadd.f32 0.0, %v3086
    %v3088 = vpop.f32.mrb[0].mxu0
    %3089 = vmatprep.mubr.f32.mxu0 0.0
    %3090 = vmatmul.mubr.f32.gmra.mrb[0].mxu0 %v2992
    %v3091 = vpop.f32.mrb[0].mxu0
    %v3092 = vadd.f32 0.0, %v3091
    %v3093 = vpop.f32.mrb[0].mxu0
    %3094 = vmatprep.mubr.f32.mxu0 0.0
    %3095 = vmatmul.mubr.f32.gmra.mrb[0].mxu0 %v2995
    %v3096 = vpop.f32.mrb[0].mxu0
    %v3097 = vadd.f32 0.0, %v3096
    %v3098 = vpop.f32.mrb[0].mxu0
    %3099 = vmatprep.mubr.f32.mxu0 0.0
    %3100 = vmatmul.mubr.f32.gmra.mrb[0].mxu0 %v2998
    %v3101 = vpop.f32.mrb[0].mxu0
    %v3102 = vadd.f32 0.0, %v3101
    %v3103 = vpop.f32.mrb[0].mxu0
    %3104 = vdwg.mxu0
    %3106 = vset.pattern.permute.xlu0 0
    %3107 = vperm.xlu0 %3106, %v3067
    %v3108 = vpop.permute.xlu0 %3107
    %3111 = vset.pattern.permute.xlu0 0
    %3112 = vperm.xlu0 %3111, %v3072
    %v3113 = vpop.permute.xlu0 %3112
    %3116 = vset.pattern.permute.xlu0 0
    %3117 = vperm.xlu0 %3116, %v3077
    %v3118 = vpop.permute.xlu0 %3117
    %3121 = vset.pattern.permute.xlu0 0
    %3122 = vperm.xlu0 %3121, %v3082
    %v3123 = vpop.permute.xlu0 %3122
    %3126 = vset.pattern.permute.xlu0 0
    %3127 = vperm.xlu0 %3126, %v3087
    %v3128 = vpop.permute.xlu0 %3127
    %3131 = vset.pattern.permute.xlu0 0
    %3132 = vperm.xlu0 %3131, %v3092
    %v3133 = vpop.permute.xlu0 %3132
    %3136 = vset.pattern.permute.xlu0 0
    %3137 = vperm.xlu0 %3136, %v3097
    %v3138 = vpop.permute.xlu0 %3137
    %3141 = vset.pattern.permute.xlu0 0
    %3142 = vperm.xlu0 %3141, %v3102
    %v3143 = vpop.permute.xlu0 %3142
    %v3145 = vrcp.pop %v3108
    %v3146 = vmul.f32 %v2961, %v3145
    %v3147 = vrcp.pop %v3113
    %v3148 = vmul.f32 %v2963, %v3147
    %v3149 = vrcp.pop %v3118
    %v3150 = vmul.f32 %v2965, %v3149
    %v3151 = vrcp.pop %v3123
    %v3152 = vmul.f32 %v2967, %v3151
    %v3153 = vrcp.pop %v3128
    %v3154 = vmul.f32 %v2969, %v3153
    %v3155 = vrcp.pop %v3133
    %v3156 = vmul.f32 %v2971, %v3155
    %v3157 = vrcp.pop %v3138
    %v3158 = vmul.f32 %v2973, %v3157
    %v3159 = vrcp.pop %v3143
    %v3160 = vmul.f32 %v2975, %v3159
    %v3162 = vsel %vm1049, %v3146, 0
    %v3165 = vsel %vm1049, %v3148, 0
    %v3168 = vsel %vm1049, %v3150, 0
    %v3171 = vsel %vm1049, %v3152, 0
    %v3174 = vsel %vm1049, %v3154, 0
    %v3177 = vsel %vm1049, %v3156, 0
    %v3180 = vsel %vm1049, %v3158, 0
    %v3183 = vsel %vm1049, %v3160, 0
    %3185 = vmatprep.subr.mxu0 0.0
    %3186 = vmatpush1.msra.mxu0 %v2751
    %3187 = vmatprep.subr.mxu0 0.0
    %3188 = vmatpush1.msra.mxu0 %v2752
    %3189 = vmatprep.subr.mxu0 0.0
    %3190 = vmatpush1.msra.mxu0 %v2753
    %3191 = vmatprep.subr.mxu0 0.0
    %3192 = vmatpush1.msra.mxu0 %v2754
    %3193 = vmatprep.subr.mxu0 0.0
    %3194 = vmatpush1.msra.mxu0 %v2755
    %3195 = vmatprep.subr.mxu0 0.0
    %3196 = vmatpush1.msra.mxu0 %v2756
    %3197 = vmatprep.subr.mxu0 0.0
    %3198 = vmatpush1.msra.mxu0 %v2757
    %3199 = vmatprep.subr.mxu0 0.0
    %3200 = vmatpush1.msra.mxu0 %v2758
    %3201 = vmatprep.subr.mxu0 0.0
    %3202 = vmatpush1.msra.mxu0 0.0
    %3203 = vmatprep.subr.mxu0 0.0
    %3204 = vmatpush1.msra.mxu0 0.0
    %3205 = vmatprep.subr.mxu0 0.0
    %3206 = vmatpush1.msra.mxu0 0.0
    %3207 = vmatprep.subr.mxu0 0.0
    %3208 = vmatpush1.msra.mxu0 0.0
    %3209 = vmatprep.subr.mxu0 0.0
    %3210 = vmatpush1.msra.mxu0 0.0
    %3211 = vmatprep.subr.mxu0 0.0
    %3212 = vmatpush1.msra.mxu0 0.0
    %3213 = vmatprep.subr.mxu0 0.0
    %3214 = vmatpush1.msra.mxu0 0.0
    %3215 = vmatprep.subr.mxu0 0.0
    %3216 = vmatpush1.msra.mxu0 0.0
    %3217 = vmatprep.subr.mxu0 0.0
    %3218 = vmatpush1.msra.mxu0 0.0
    %3219 = vmatprep.subr.mxu0 0.0
    %3220 = vmatpush1.msra.mxu0 0.0
    %3221 = vmatprep.subr.mxu0 0.0
    %3222 = vmatpush1.msra.mxu0 0.0
    %3223 = vmatprep.subr.mxu0 0.0
    %3224 = vmatpush1.msra.mxu0 0.0
    %3225 = vmatprep.subr.mxu0 0.0
    %3226 = vmatpush1.msra.mxu0 0.0
    %3227 = vmatprep.subr.mxu0 0.0
    %3228 = vmatpush1.msra.mxu0 0.0
    %3229 = vmatprep.subr.mxu0 0.0
    %3230 = vmatpush1.msra.mxu0 0.0
    %3231 = vmatprep.subr.mxu0 0.0
    %3232 = vmatpush1.msra.mxu0 0.0
    %3233 = vmatprep.subr.mxu0 0.0
    %3234 = vmatpush1.msra.mxu0 0.0
    %3235 = vmatprep.subr.mxu0 0.0
    %3236 = vmatpush1.msra.mxu0 0.0
    %3237 = vmatprep.subr.mxu0 0.0
    %3238 = vmatpush1.msra.mxu0 0.0
    %3239 = vmatprep.subr.mxu0 0.0
    %3240 = vmatpush1.msra.mxu0 0.0
    %3241 = vmatprep.subr.mxu0 0.0
    %3242 = vmatpush1.msra.mxu0 0.0
    %3243 = vmatprep.subr.mxu0 0.0
    %3244 = vmatpush1.msra.mxu0 0.0
    %3245 = vmatprep.subr.mxu0 0.0
    %3246 = vmatpush1.msra.mxu0 0.0
    %3247 = vmatprep.subr.mxu0 0.0
    %3248 = vmatpush1.msra.mxu0 0.0
    %3249 = vmatprep.mubr.f32.mxu0 0.0
    %3250 = vmatmul.mubr.f32.gmra.mrb[0].mxu0 %v3162
    %v3251 = vpop.f32.mrb[0].mxu0
    %v3252 = vadd.f32 0.0, %v3251
    %v3253 = vpop.f32.mrb[0].mxu0
    %3254 = vmatprep.mubr.f32.mxu0 0.0
    %3255 = vmatmul.mubr.f32.gmra.mrb[0].mxu0 %v3165
    %v3256 = vpop.f32.mrb[0].mxu0
    %v3257 = vadd.f32 0.0, %v3256
    %v3258 = vpop.f32.mrb[0].mxu0
    %3259 = vmatprep.mubr.f32.mxu0 0.0
    %3260 = vmatmul.mubr.f32.gmra.mrb[0].mxu0 %v3168
    %v3261 = vpop.f32.mrb[0].mxu0
    %v3262 = vadd.f32 0.0, %v3261
    %v3263 = vpop.f32.mrb[0].mxu0
    %3264 = vmatprep.mubr.f32.mxu0 0.0
    %3265 = vmatmul.mubr.f32.gmra.mrb[0].mxu0 %v3171
    %v3266 = vpop.f32.mrb[0].mxu0
    %v3267 = vadd.f32 0.0, %v3266
    %v3268 = vpop.f32.mrb[0].mxu0
    %3269 = vmatprep.mubr.f32.mxu0 0.0
    %3270 = vmatmul.mubr.f32.gmra.mrb[0].mxu0 %v3174
    %v3271 = vpop.f32.mrb[0].mxu0
    %v3272 = vadd.f32 0.0, %v3271
    %v3273 = vpop.f32.mrb[0].mxu0
    %3274 = vmatprep.mubr.f32.mxu0 0.0
    %3275 = vmatmul.mubr.f32.gmra.mrb[0].mxu0 %v3177
    %v3276 = vpop.f32.mrb[0].mxu0
    %v3277 = vadd.f32 0.0, %v3276
    %v3278 = vpop.f32.mrb[0].mxu0
    %3279 = vmatprep.mubr.f32.mxu0 0.0
    %3280 = vmatmul.mubr.f32.gmra.mrb[0].mxu0 %v3180
    %v3281 = vpop.f32.mrb[0].mxu0
    %v3282 = vadd.f32 0.0, %v3281
    %v3283 = vpop.f32.mrb[0].mxu0
    %3284 = vmatprep.mubr.f32.mxu0 0.0
    %3285 = vmatmul.mubr.f32.gmra.mrb[0].mxu0 %v3183
    %v3286 = vpop.f32.mrb[0].mxu0
    %v3287 = vadd.f32 0.0, %v3286
    %v3288 = vpop.f32.mrb[0].mxu0
    %3289 = vdwg.mxu0
    %3290 = vmatprep.subr.mxu0 0.0
    %3291 = vmatpush1.msra.mxu0 %v3252
    %3292 = vmatprep.subr.mxu0 0.0
    %3293 = vmatpush1.msra.mxu0 %v3257
    %3294 = vmatprep.subr.mxu0 0.0
    %3295 = vmatpush1.msra.mxu0 %v3262
    %3296 = vmatprep.subr.mxu0 0.0
    %3297 = vmatpush1.msra.mxu0 %v3267
    %3298 = vmatprep.subr.mxu0 0.0
    %3299 = vmatpush1.msra.mxu0 %v3272
    %3300 = vmatprep.subr.mxu0 0.0
    %3301 = vmatpush1.msra.mxu0 %v3277
    %3302 = vmatprep.subr.mxu0 0.0
    %3303 = vmatpush1.msra.mxu0 %v3282
    %3304 = vmatprep.subr.mxu0 0.0
    %3305 = vmatpush1.msra.mxu0 %v3287
    %3306 = vmatprep.subr.mxu0 0.0
    %3307 = vmatpush1.msra.mxu0 0.0
    %3308 = vmatprep.subr.mxu0 0.0
    %3309 = vmatpush1.msra.mxu0 0.0
    %3310 = vmatprep.subr.mxu0 0.0
    %3311 = vmatpush1.msra.mxu0 0.0
    %3312 = vmatprep.subr.mxu0 0.0
    %3313 = vmatpush1.msra.mxu0 0.0
    %3314 = vmatprep.subr.mxu0 0.0
    %3315 = vmatpush1.msra.mxu0 0.0
    %3316 = vmatprep.subr.mxu0 0.0
    %3317 = vmatpush1.msra.mxu0 0.0
    %3318 = vmatprep.subr.mxu0 0.0
    %3319 = vmatpush1.msra.mxu0 0.0
    %3320 = vmatprep.subr.mxu0 0.0
    %3321 = vmatpush1.msra.mxu0 0.0
    %3322 = vmatprep.subr.mxu0 0.0
    %3323 = vmatpush1.msra.mxu0 0.0
    %3324 = vmatprep.subr.mxu0 0.0
    %3325 = vmatpush1.msra.mxu0 0.0
    %3326 = vmatprep.subr.mxu0 0.0
    %3327 = vmatpush1.msra.mxu0 0.0
    %3328 = vmatprep.subr.mxu0 0.0
    %3329 = vmatpush1.msra.mxu0 0.0
    %3330 = vmatprep.subr.mxu0 0.0
    %3331 = vmatpush1.msra.mxu0 0.0
    %3332 = vmatprep.subr.mxu0 0.0
    %3333 = vmatpush1.msra.mxu0 0.0
    %3334 = vmatprep.subr.mxu0 0.0
    %3335 = vmatpush1.msra.mxu0 0.0
    %3336 = vmatprep.subr.mxu0 0.0
    %3337 = vmatpush1.msra.mxu0 0.0
    %3338 = vmatprep.subr.mxu0 0.0
    %3339 = vmatpush1.msra.mxu0 0.0
    %3340 = vmatprep.subr.mxu0 0.0
    %3341 = vmatpush1.msra.mxu0 0.0
    %3342 = vmatprep.subr.mxu0 0.0
    %3343 = vmatpush1.msra.mxu0 0.0
    %3344 = vmatprep.subr.mxu0 0.0
    %3345 = vmatpush1.msra.mxu0 0.0
    %3346 = vmatprep.subr.mxu0 0.0
    %3347 = vmatpush1.msra.mxu0 0.0
    %3348 = vmatprep.subr.mxu0 0.0
    %3349 = vmatpush1.msra.mxu0 0.0
    %3350 = vmatprep.subr.mxu0 0.0
    %3351 = vmatpush1.msra.mxu0 0.0
    %3352 = vmatprep.subr.mxu0 0.0
    %3353 = vmatpush1.msra.mxu0 0.0
    %3354 = vmatprep.mubr.f32.mxu0 0.0
    %3355 = vmatmul.mubr.f32.gmra.mrb[0].mxu0 %v1413
    %v3356 = vpop.f32.mrb[0].mxu0
    %v3357 = vadd.f32 0.0, %v3356
    %v3358 = vpop.f32.mrb[0].mxu0
    %3359 = vmatprep.mubr.f32.mxu0 0.0
    %3360 = vmatmul.mubr.f32.gmra.mrb[0].mxu0 %v1416
    %v3361 = vpop.f32.mrb[0].mxu0
    %v3362 = vadd.f32 0.0, %v3361
    %v3363 = vpop.f32.mrb[0].mxu0
    %3364 = vdwg.mxu0
    %s3365 = scalar_lea.vmem %s7, 32
    %v3366 = vld [vmem:[%s3365] sm:$0xff]
    %v3367 = vld [vmem:[%s3365 + $0x8] sm:$0xff]
    %v3368 = vld [vmem:[%s3365 + $0x10] sm:$0xff]
    %v3369 = vld [vmem:[%s3365 + $0x18] sm:$0xff]
    %s3370 = scalar_lea.vmem %s8, 1
    %v3371 = vld [vmem:[%s3370] sm:$0x1]
    %v3373 = vlaneseq
    %v3374 = vshrl.u32 %v3373, 7
    %v3375 = vsub.s32 0, %v3374
    %v3376 = vrot.slane %v3371, %v3375
    %v3379 = vsel %vm205, %v3357, 0
    %v3382 = vsel %vm205, %v3362, 0
    %3384 = vmatprep.subr.mxu0 0.0
    %3385 = vmatpush1.msra.mxu0 %v3366
    %3386 = vmatprep.subr.mxu0 0.0
    %3387 = vmatpush1.msra.mxu0 %v3367
    %3388 = vmatprep.subr.mxu0 0.0
    %3389 = vmatpush1.msra.mxu0 %v3368
    %3390 = vmatprep.subr.mxu0 0.0
    %3391 = vmatpush1.msra.mxu0 %v3369
    %3392 = vmatprep.subr.mxu0 0.0
    %3393 = vmatpush1.msra.mxu0 0.0
    %3394 = vmatprep.subr.mxu0 0.0
    %3395 = vmatpush1.msra.mxu0 0.0
    %3396 = vmatprep.subr.mxu0 0.0
    %3397 = vmatpush1.msra.mxu0 0.0
    %3398 = vmatprep.subr.mxu0 0.0
    %3399 = vmatpush1.msra.mxu0 0.0
    %3400 = vmatprep.subr.mxu0 0.0
    %3401 = vmatpush1.msra.mxu0 0.0
    %3402 = vmatprep.subr.mxu0 0.0
    %3403 = vmatpush1.msra.mxu0 0.0
    %3404 = vmatprep.subr.mxu0 0.0
    %3405 = vmatpush1.msra.mxu0 0.0
    %3406 = vmatprep.subr.mxu0 0.0
    %3407 = vmatpush1.msra.mxu0 0.0
    %3408 = vmatprep.subr.mxu0 0.0
    %3409 = vmatpush1.msra.mxu0 0.0
    %3410 = vmatprep.subr.mxu0 0.0
    %3411 = vmatpush1.msra.mxu0 0.0
    %3412 = vmatprep.subr.mxu0 0.0
    %3413 = vmatpush1.msra.mxu0 0.0
    %3414 = vmatprep.subr.mxu0 0.0
    %3415 = vmatpush1.msra.mxu0 0.0
    %3416 = vmatprep.subr.mxu0 0.0
    %3417 = vmatpush1.msra.mxu0 0.0
    %3418 = vmatprep.subr.mxu0 0.0
    %3419 = vmatpush1.msra.mxu0 0.0
    %3420 = vmatprep.subr.mxu0 0.0
    %3421 = vmatpush1.msra.mxu0 0.0
    %3422 = vmatprep.subr.mxu0 0.0
    %3423 = vmatpush1.msra.mxu0 0.0
    %3424 = vmatprep.subr.mxu0 0.0
    %3425 = vmatpush1.msra.mxu0 0.0
    %3426 = vmatprep.subr.mxu0 0.0
    %3427 = vmatpush1.msra.mxu0 0.0
    %3428 = vmatprep.subr.mxu0 0.0
    %3429 = vmatpush1.msra.mxu0 0.0
    %3430 = vmatprep.subr.mxu0 0.0
    %3431 = vmatpush1.msra.mxu0 0.0
    %3432 = vmatprep.subr.mxu0 0.0
    %3433 = vmatpush1.msra.mxu0 0.0
    %3434 = vmatprep.subr.mxu0 0.0
    %3435 = vmatpush1.msra.mxu0 0.0
    %3436 = vmatprep.subr.mxu0 0.0
    %3437 = vmatpush1.msra.mxu0 0.0
    %3438 = vmatprep.subr.mxu0 0.0
    %3439 = vmatpush1.msra.mxu0 0.0
    %3440 = vmatprep.subr.mxu0 0.0
    %3441 = vmatpush1.msra.mxu0 0.0
    %3442 = vmatprep.subr.mxu0 0.0
    %3443 = vmatpush1.msra.mxu0 0.0
    %3444 = vmatprep.subr.mxu0 0.0
    %3445 = vmatpush1.msra.mxu0 0.0
    %3446 = vmatprep.subr.mxu0 0.0
    %3447 = vmatpush1.msra.mxu0 0.0
    %3448 = vmatprep.mubr.f32.mxu0 0.0
    %3449 = vmatmul.mubr.f32.gmra.mrb[0].mxu0 %v3379
    %v3450 = vpop.f32.mrb[0].mxu0
    %v3451 = vadd.f32 %v3376, %v3450
    %v3452 = vpop.f32.mrb[0].mxu0
    %3453 = vmatprep.mubr.f32.mxu0 0.0
    %3454 = vmatmul.mubr.f32.gmra.mrb[0].mxu0 %v3382
    %v3455 = vpop.f32.mrb[0].mxu0
    %v3456 = vadd.f32 %v3376, %v3455
    %v3457 = vpop.f32.mrb[0].mxu0
    %3458 = vdwg.mxu0
    %v3459 = vadd.f32 %v2102, %v3451
    %v3460 = vadd.f32 %v2103, %v3456
    %s3461 = scalar_lea.vmem %s9, 1
    %v3462 = vld [vmem:[%s3461] sm:$0x1]
    %s3463 = scalar_lea.vmem %s10, 1
    %v3464 = vld [vmem:[%s3463] sm:$0x1]
    %v3466 = vsel %vm205, %v3459, 0
    %v3469 = vsel %vm205, %v3460, 0
    %3471 = vmatprep.subr.mxu0 0.0
    %3472 = vmatpush1.msra.mxu0 1.0
    %3473 = vmatprep.subr.mxu0 0.0
    %3474 = vmatpush1.msra.mxu0 1.0
    %3475 = vmatprep.subr.mxu0 0.0
    %3476 = vmatpush1.msra.mxu0 1.0
    %3477 = vmatprep.subr.mxu0 0.0
    %3478 = vmatpush1.msra.mxu0 1.0
    %3479 = vmatprep.subr.mxu0 0.0
    %3480 = vmatpush1.msra.mxu0 0.0
    %3481 = vmatprep.subr.mxu0 0.0
    %3482 = vmatpush1.msra.mxu0 0.0
    %3483 = vmatprep.subr.mxu0 0.0
    %3484 = vmatpush1.msra.mxu0 0.0
    %3485 = vmatprep.subr.mxu0 0.0
    %3486 = vmatpush1.msra.mxu0 0.0
    %3487 = vmatprep.subr.mxu0 0.0
    %3488 = vmatpush1.msra.mxu0 0.0
    %3489 = vmatprep.subr.mxu0 0.0
    %3490 = vmatpush1.msra.mxu0 0.0
    %3491 = vmatprep.subr.mxu0 0.0
    %3492 = vmatpush1.msra.mxu0 0.0
    %3493 = vmatprep.subr.mxu0 0.0
    %3494 = vmatpush1.msra.mxu0 0.0
    %3495 = vmatprep.subr.mxu0 0.0
    %3496 = vmatpush1.msra.mxu0 0.0
    %3497 = vmatprep.subr.mxu0 0.0
    %3498 = vmatpush1.msra.mxu0 0.0
    %3499 = vmatprep.subr.mxu0 0.0
    %3500 = vmatpush1.msra.mxu0 0.0
    %3501 = vmatprep.subr.mxu0 0.0
    %3502 = vmatpush1.msra.mxu0 0.0
    %3503 = vmatprep.subr.mxu0 0.0
    %3504 = vmatpush1.msra.mxu0 0.0
    %3505 = vmatprep.subr.mxu0 0.0
    %3506 = vmatpush1.msra.mxu0 0.0
    %3507 = vmatprep.subr.mxu0 0.0
    %3508 = vmatpush1.msra.mxu0 0.0
    %3509 = vmatprep.subr.mxu0 0.0
    %3510 = vmatpush1.msra.mxu0 0.0
    %3511 = vmatprep.subr.mxu0 0.0
    %3512 = vmatpush1.msra.mxu0 0.0
    %3513 = vmatprep.subr.mxu0 0.0
    %3514 = vmatpush1.msra.mxu0 0.0
    %3515 = vmatprep.subr.mxu0 0.0
    %3516 = vmatpush1.msra.mxu0 0.0
    %3517 = vmatprep.subr.mxu0 0.0
    %3518 = vmatpush1.msra.mxu0 0.0
    %3519 = vmatprep.subr.mxu0 0.0
    %3520 = vmatpush1.msra.mxu0 0.0
    %3521 = vmatprep.subr.mxu0 0.0
    %3522 = vmatpush1.msra.mxu0 0.0
    %3523 = vmatprep.subr.mxu0 0.0
    %3524 = vmatpush1.msra.mxu0 0.0
    %3525 = vmatprep.subr.mxu0 0.0
    %3526 = vmatpush1.msra.mxu0 0.0
    %3527 = vmatprep.subr.mxu0 0.0
    %3528 = vmatpush1.msra.mxu0 0.0
    %3529 = vmatprep.subr.mxu0 0.0
    %3530 = vmatpush1.msra.mxu0 0.0
    %3531 = vmatprep.subr.mxu0 0.0
    %3532 = vmatpush1.msra.mxu0 0.0
    %3533 = vmatprep.subr.mxu0 0.0
    %3534 = vmatpush1.msra.mxu0 0.0
    %3535 = vmatprep.mubr.f32.mxu0 0.0
    %3536 = vmatmul.mubr.f32.gmra.mrb[0].mxu0 %v3466
    %v3537 = vpop.f32.mrb[0].mxu0
    %v3538 = vadd.f32 0.0, %v3537
    %v3539 = vpop.f32.mrb[0].mxu0
    %3540 = vmatprep.mubr.f32.mxu0 0.0
    %3541 = vmatmul.mubr.f32.gmra.mrb[0].mxu0 %v3469
    %v3542 = vpop.f32.mrb[0].mxu0
    %v3543 = vadd.f32 0.0, %v3542
    %v3544 = vpop.f32.mrb[0].mxu0
    %3545 = vdwg.mxu0
    %v3546 = vmul.f32 %v3538, 0.03125
    %v3547 = vmul.f32 %v3543, 0.03125
    %3549 = vset.pattern.permute.xlu0 0
    %3550 = vperm.xlu0 %3549, %v3546
    %v3551 = vpop.permute.xlu0 %3550
    %3554 = vset.pattern.permute.xlu0 0
    %3555 = vperm.xlu0 %3554, %v3547
    %v3556 = vpop.permute.xlu0 %3555
    %v3558 = vsub.f32 %v3459, %v3551
    %v3559 = vsub.f32 %v3460, %v3556
    %v3560 = vmul.f32 %v3558, %v3558
    %v3561 = vmul.f32 %v3559, %v3559
    %v3563 = vsel %vm205, %v3560, 0
    %v3566 = vsel %vm205, %v3561, 0
    %3568 = vmatprep.subr.mxu0 0.0
    %3569 = vmatpush1.msra.mxu0 1.0
    %3570 = vmatprep.subr.mxu0 0.0
    %3571 = vmatpush1.msra.mxu0 1.0
    %3572 = vmatprep.subr.mxu0 0.0
    %3573 = vmatpush1.msra.mxu0 1.0
    %3574 = vmatprep.subr.mxu0 0.0
    %3575 = vmatpush1.msra.mxu0 1.0
    %3576 = vmatprep.subr.mxu0 0.0
    %3577 = vmatpush1.msra.mxu0 0.0
    %3578 = vmatprep.subr.mxu0 0.0
    %3579 = vmatpush1.msra.mxu0 0.0
    %3580 = vmatprep.subr.mxu0 0.0
    %3581 = vmatpush1.msra.mxu0 0.0
    %3582 = vmatprep.subr.mxu0 0.0
    %3583 = vmatpush1.msra.mxu0 0.0
    %3584 = vmatprep.subr.mxu0 0.0
    %3585 = vmatpush1.msra.mxu0 0.0
    %3586 = vmatprep.subr.mxu0 0.0
    %3587 = vmatpush1.msra.mxu0 0.0
    %3588 = vmatprep.subr.mxu0 0.0
    %3589 = vmatpush1.msra.mxu0 0.0
    %3590 = vmatprep.subr.mxu0 0.0
    %3591 = vmatpush1.msra.mxu0 0.0
    %3592 = vmatprep.subr.mxu0 0.0
    %3593 = vmatpush1.msra.mxu0 0.0
    %3594 = vmatprep.subr.mxu0 0.0
    %3595 = vmatpush1.msra.mxu0 0.0
    %3596 = vmatprep.subr.mxu0 0.0
    %3597 = vmatpush1.msra.mxu0 0.0
    %3598 = vmatprep.subr.mxu0 0.0
    %3599 = vmatpush1.msra.mxu0 0.0
    %3600 = vmatprep.subr.mxu0 0.0
    %3601 = vmatpush1.msra.mxu0 0.0
    %3602 = vmatprep.subr.mxu0 0.0
    %3603 = vmatpush1.msra.mxu0 0.0
    %3604 = vmatprep.subr.mxu0 0.0
    %3605 = vmatpush1.msra.mxu0 0.0
    %3606 = vmatprep.subr.mxu0 0.0
    %3607 = vmatpush1.msra.mxu0 0.0
    %3608 = vmatprep.subr.mxu0 0.0
    %3609 = vmatpush1.msra.mxu0 0.0
    %3610 = vmatprep.subr.mxu0 0.0
    %3611 = vmatpush1.msra.mxu0 0.0
    %3612 = vmatprep.subr.mxu0 0.0
    %3613 = vmatpush1.msra.mxu0 0.0
    %3614 = vmatprep.subr.mxu0 0.0
    %3615 = vmatpush1.msra.mxu0 0.0
    %3616 = vmatprep.subr.mxu0 0.0
    %3617 = vmatpush1.msra.mxu0 0.0
    %3618 = vmatprep.subr.mxu0 0.0
    %3619 = vmatpush1.msra.mxu0 0.0
    %3620 = vmatprep.subr.mxu0 0.0
    %3621 = vmatpush1.msra.mxu0 0.0
    %3622 = vmatprep.subr.mxu0 0.0
    %3623 = vmatpush1.msra.mxu0 0.0
    %3624 = vmatprep.subr.mxu0 0.0
    %3625 = vmatpush1.msra.mxu0 0.0
    %3626 = vmatprep.subr.mxu0 0.0
    %3627 = vmatpush1.msra.mxu0 0.0
    %3628 = vmatprep.subr.mxu0 0.0
    %3629 = vmatpush1.msra.mxu0 0.0
    %3630 = vmatprep.subr.mxu0 0.0
    %3631 = vmatpush1.msra.mxu0 0.0
    %3632 = vmatprep.mubr.f32.mxu0 0.0
    %3633 = vmatmul.mubr.f32.gmra.mrb[0].mxu0 %v3563
    %v3634 = vpop.f32.mrb[0].mxu0
    %v3635 = vadd.f32 0.0, %v3634
    %v3636 = vpop.f32.mrb[0].mxu0
    %3637 = vmatprep.mubr.f32.mxu0 0.0
    %3638 = vmatmul.mubr.f32.gmra.mrb[0].mxu0 %v3566
    %v3639 = vpop.f32.mrb[0].mxu0
    %v3640 = vadd.f32 0.0, %v3639
    %v3641 = vpop.f32.mrb[0].mxu0
    %3642 = vdwg.mxu0
    %v3643 = vmul.f32 %v3635, 0.03125
    %v3644 = vmul.f32 %v3640, 0.03125
    %v3645 = vadd.f32 %v3643, 1e-05
    %v3646 = vadd.f32 %v3644, 1e-05
    %v3647 = vrsqrt.pop %v3645
    %v3648 = vrsqrt.pop %v3646
    %3650 = vset.pattern.permute.xlu0 0
    %3651 = vperm.xlu0 %3650, %v3647
    %v3652 = vpop.permute.xlu0 %3651
    %3655 = vset.pattern.permute.xlu0 0
    %3656 = vperm.xlu0 %3655, %v3648
    %v3657 = vpop.permute.xlu0 %3656
    %v3659 = vmul.f32 %v3558, %v3652
    %v3660 = vmul.f32 %v3559, %v3657
    %v3662 = vlaneseq
    %v3663 = vshrl.u32 %v3662, 7
    %v3664 = vsub.s32 0, %v3663
    %v3665 = vrot.slane %v3462, %v3664
    %v3667 = vmul.f32 %v3659, %v3665
    %v3668 = vmul.f32 %v3660, %v3665
    %v3670 = vlaneseq
    %v3671 = vshrl.u32 %v3670, 7
    %v3672 = vsub.s32 0, %v3671
    %v3673 = vrot.slane %v3464, %v3672
    %v3675 = vadd.f32 %v3667, %v3673
    %v3676 = vadd.f32 %v3668, %v3673
    %s3677 = scalar_lea.vmem %s11, 32
    %v3678 = vld [vmem:[%s3677] sm:$0xff]
    %v3679 = vld [vmem:[%s3677 + $0x8] sm:$0xff]
    %v3680 = vld [vmem:[%s3677 + $0x10] sm:$0xff]
    %v3681 = vld [vmem:[%s3677 + $0x18] sm:$0xff]
    %s3682 = scalar_lea.vmem %s12, 1
    %v3683 = vld [vmem:[%s3682] sm:$0x1]
    %v3685 = vlaneseq
    %v3686 = vshrl.u32 %v3685, 7
    %v3687 = vsub.s32 0, %v3686
    %v3688 = vrot.slane %v3683, %v3687
    %v3691 = vsel %vm205, %v3675, 0
    %v3694 = vsel %vm205, %v3676, 0
    %3696 = vmatprep.subr.mxu0 0.0
    %3697 = vmatpush1.msra.mxu0 %v3678
    %3698 = vmatprep.subr.mxu0 0.0
    %3699 = vmatpush1.msra.mxu0 %v3679
    %3700 = vmatprep.subr.mxu0 0.0
    %3701 = vmatpush1.msra.mxu0 %v3680
    %3702 = vmatprep.subr.mxu0 0.0
    %3703 = vmatpush1.msra.mxu0 %v3681
    %3704 = vmatprep.subr.mxu0 0.0
    %3705 = vmatpush1.msra.mxu0 0.0
    %3706 = vmatprep.subr.mxu0 0.0
    %3707 = vmatpush1.msra.mxu0 0.0
    %3708 = vmatprep.subr.mxu0 0.0
    %3709 = vmatpush1.msra.mxu0 0.0
    %3710 = vmatprep.subr.mxu0 0.0
    %3711 = vmatpush1.msra.mxu0 0.0
    %3712 = vmatprep.subr.mxu0 0.0
    %3713 = vmatpush1.msra.mxu0 0.0
    %3714 = vmatprep.subr.mxu0 0.0
    %3715 = vmatpush1.msra.mxu0 0.0
    %3716 = vmatprep.subr.mxu0 0.0
    %3717 = vmatpush1.msra.mxu0 0.0
    %3718 = vmatprep.subr.mxu0 0.0
    %3719 = vmatpush1.msra.mxu0 0.0
    %3720 = vmatprep.subr.mxu0 0.0
    %3721 = vmatpush1.msra.mxu0 0.0
    %3722 = vmatprep.subr.mxu0 0.0
    %3723 = vmatpush1.msra.mxu0 0.0
    %3724 = vmatprep.subr.mxu0 0.0
    %3725 = vmatpush1.msra.mxu0 0.0
    %3726 = vmatprep.subr.mxu0 0.0
    %3727 = vmatpush1.msra.mxu0 0.0
    %3728 = vmatprep.subr.mxu0 0.0
    %3729 = vmatpush1.msra.mxu0 0.0
    %3730 = vmatprep.subr.mxu0 0.0
    %3731 = vmatpush1.msra.mxu0 0.0
    %3732 = vmatprep.subr.mxu0 0.0
    %3733 = vmatpush1.msra.mxu0 0.0
    %3734 = vmatprep.subr.mxu0 0.0
    %3735 = vmatpush1.msra.mxu0 0.0
    %3736 = vmatprep.subr.mxu0 0.0
    %3737 = vmatpush1.msra.mxu0 0.0
    %3738 = vmatprep.subr.mxu0 0.0
    %3739 = vmatpush1.msra.mxu0 0.0
    %3740 = vmatprep.subr.mxu0 0.0
    %3741 = vmatpush1.msra.mxu0 0.0
    %3742 = vmatprep.subr.mxu0 0.0
    %3743 = vmatpush1.msra.mxu0 0.0
    %3744 = vmatprep.subr.mxu0 0.0
    %3745 = vmatpush1.msra.mxu0 0.0
    %3746 = vmatprep.subr.mxu0 0.0
    %3747 = vmatpush1.msra.mxu0 0.0
    %3748 = vmatprep.subr.mxu0 0.0
    %3749 = vmatpush1.msra.mxu0 0.0
    %3750 = vmatprep.subr.mxu0 0.0
    %3751 = vmatpush1.msra.mxu0 0.0
    %3752 = vmatprep.subr.mxu0 0.0
    %3753 = vmatpush1.msra.mxu0 0.0
    %3754 = vmatprep.subr.mxu0 0.0
    %3755 = vmatpush1.msra.mxu0 0.0
    %3756 = vmatprep.subr.mxu0 0.0
    %3757 = vmatpush1.msra.mxu0 0.0
    %3758 = vmatprep.subr.mxu0 0.0
    %3759 = vmatpush1.msra.mxu0 0.0
    %3760 = vmatprep.mubr.f32.mxu0 0.0
    %3761 = vmatmul.mubr.f32.gmra.mrb[0].mxu0 %v3691
    %v3762 = vpop.f32.mrb[0].mxu0
    %v3763 = vadd.f32 %v3688, %v3762
    %v3764 = vpop.f32.mrb[0].mxu0
    %3765 = vmatprep.mubr.f32.mxu0 0.0
    %3766 = vmatmul.mubr.f32.gmra.mrb[0].mxu0 %v3694
    %v3767 = vpop.f32.mrb[0].mxu0
    %v3768 = vadd.f32 %v3688, %v3767
    %v3769 = vpop.f32.mrb[0].mxu0
    %3770 = vdwg.mxu0
    %v3771 = vmul.f32 %v3763, 1.702
    %v3772 = vmul.f32 %v3768, 1.702
    %v3773 = vxor.u32 %v3771, 2147483648
    %v3774 = vxor.u32 %v3772, 2147483648
    %v3775 = vmul.f32 %v3773, 1.442695
    %v3776 = vpow.pop %v3775
    %v3777 = vmul.f32 %v3774, 1.442695
    %v3778 = vpow.pop %v3777
    %v3779 = vadd.f32 %v3776, 1.0
    %v3780 = vadd.f32 %v3778, 1.0
    %v3781 = vrcp.pop %v3779
    %v3782 = vmul.f32 1.0, %v3781
    %v3783 = vrcp.pop %v3780
    %v3784 = vmul.f32 1.0, %v3783
    %v3785 = vmul.f32 %v3763, %v3782
    %v3786 = vmul.f32 %v3768, %v3784
    %s3787 = scalar_lea.vmem %s13, 128
    %v3788 = vld [vmem:[%s3787] sm:$0xff]
    %v3789 = vld [vmem:[%s3787 + $0x8] sm:$0xff]
    %v3790 = vld [vmem:[%s3787 + $0x10] sm:$0xff]
    %v3791 = vld [vmem:[%s3787 + $0x18] sm:$0xff]
    %v3792 = vld [vmem:[%s3787 + $0x20] sm:$0xff]
    %v3793 = vld [vmem:[%s3787 + $0x28] sm:$0xff]
    %v3794 = vld [vmem:[%s3787 + $0x30] sm:$0xff]
    %v3795 = vld [vmem:[%s3787 + $0x38] sm:$0xff]
    %v3796 = vld [vmem:[%s3787 + $0x40] sm:$0xff]
    %v3797 = vld [vmem:[%s3787 + $0x48] sm:$0xff]
    %v3798 = vld [vmem:[%s3787 + $0x50] sm:$0xff]
    %v3799 = vld [vmem:[%s3787 + $0x58] sm:$0xff]
    %v3800 = vld [vmem:[%s3787 + $0x60] sm:$0xff]
    %v3801 = vld [vmem:[%s3787 + $0x68] sm:$0xff]
    %v3802 = vld [vmem:[%s3787 + $0x70] sm:$0xff]
    %v3803 = vld [vmem:[%s3787 + $0x78] sm:$0xff]
    %3804 = vmatprep.subr.mxu0 0.0
    %3805 = vmatpush1.msra.mxu0 %v3788
    %3806 = vmatprep.subr.mxu0 0.0
    %3807 = vmatpush1.msra.mxu0 %v3789
    %3808 = vmatprep.subr.mxu0 0.0
    %3809 = vmatpush1.msra.mxu0 %v3790
    %3810 = vmatprep.subr.mxu0 0.0
    %3811 = vmatpush1.msra.mxu0 %v3791
    %3812 = vmatprep.subr.mxu0 0.0
    %3813 = vmatpush1.msra.mxu0 %v3792
    %3814 = vmatprep.subr.mxu0 0.0
    %3815 = vmatpush1.msra.mxu0 %v3793
    %3816 = vmatprep.subr.mxu0 0.0
    %3817 = vmatpush1.msra.mxu0 %v3794
    %3818 = vmatprep.subr.mxu0 0.0
    %3819 = vmatpush1.msra.mxu0 %v3795
    %3820 = vmatprep.subr.mxu0 0.0
    %3821 = vmatpush1.msra.mxu0 %v3796
    %3822 = vmatprep.subr.mxu0 0.0
    %3823 = vmatpush1.msra.mxu0 %v3797
    %3824 = vmatprep.subr.mxu0 0.0
    %3825 = vmatpush1.msra.mxu0 %v3798
    %3826 = vmatprep.subr.mxu0 0.0
    %3827 = vmatpush1.msra.mxu0 %v3799
    %3828 = vmatprep.subr.mxu0 0.0
    %3829 = vmatpush1.msra.mxu0 %v3800
    %3830 = vmatprep.subr.mxu0 0.0
    %3831 = vmatpush1.msra.mxu0 %v3801
    %3832 = vmatprep.subr.mxu0 0.0
    %3833 = vmatpush1.msra.mxu0 %v3802
    %3834 = vmatprep.subr.mxu0 0.0
    %3835 = vmatpush1.msra.mxu0 %v3803
    %3836 = vmatprep.subr.mxu0 0.0
    %3837 = vmatpush1.msra.mxu0 0.0
    %3838 = vmatprep.subr.mxu0 0.0
    %3839 = vmatpush1.msra.mxu0 0.0
    %3840 = vmatprep.subr.mxu0 0.0
    %3841 = vmatpush1.msra.mxu0 0.0
    %3842 = vmatprep.subr.mxu0 0.0
    %3843 = vmatpush1.msra.mxu0 0.0
    %3844 = vmatprep.subr.mxu0 0.0
    %3845 = vmatpush1.msra.mxu0 0.0
    %3846 = vmatprep.subr.mxu0 0.0
    %3847 = vmatpush1.msra.mxu0 0.0
    %3848 = vmatprep.subr.mxu0 0.0
    %3849 = vmatpush1.msra.mxu0 0.0
    %3850 = vmatprep.subr.mxu0 0.0
    %3851 = vmatpush1.msra.mxu0 0.0
    %3852 = vmatprep.subr.mxu0 0.0
    %3853 = vmatpush1.msra.mxu0 0.0
    %3854 = vmatprep.subr.mxu0 0.0
    %3855 = vmatpush1.msra.mxu0 0.0
    %3856 = vmatprep.subr.mxu0 0.0
    %3857 = vmatpush1.msra.mxu0 0.0
    %3858 = vmatprep.subr.mxu0 0.0
    %3859 = vmatpush1.msra.mxu0 0.0
    %3860 = vmatprep.subr.mxu0 0.0
    %3861 = vmatpush1.msra.mxu0 0.0
    %3862 = vmatprep.subr.mxu0 0.0
    %3863 = vmatpush1.msra.mxu0 0.0
    %3864 = vmatprep.subr.mxu0 0.0
    %3865 = vmatpush1.msra.mxu0 0.0
    %3866 = vmatprep.subr.mxu0 0.0
    %3867 = vmatpush1.msra.mxu0 0.0
    %3868 = vmatprep.mubr.f32.mxu0 0.0
    %3869 = vmatmul.mubr.f32.gmra.mrb[0].mxu0 %v3785
    %v3870 = vpop.f32.mrb[0].mxu0
    %v3871 = vadd.f32 0.0, %v3870
    %v3872 = vpop.f32.mrb[0].mxu0
    %3873 = vmatprep.mubr.f32.mxu0 0.0
    %3874 = vmatmul.mubr.f32.gmra.mrb[0].mxu0 %v3786
    %v3875 = vpop.f32.mrb[0].mxu0
    %v3876 = vadd.f32 0.0, %v3875
    %v3877 = vpop.f32.mrb[0].mxu0
    %3878 = vdwg.mxu0
    %v3879 = vadd.f32 %v3459, %v3871
    %v3880 = vadd.f32 %v3460, %v3876
    %s3881 = scalar_lea.vmem %s14, 1
    %v3882 = vld [vmem:[%s3881] sm:$0x1]
    %v3884 = vlaneseq
    %v3885 = vshrl.u32 %v3884, 7
    %v3886 = vsub.s32 0, %v3885
    %v3887 = vrot.slane %v3882, %v3886
    %v3889 = vadd.f32 %v3879, %v3887
    %v3890 = vadd.f32 %v3880, %v3887
    %s3891 = scalar_lea.vmem %s2, 2
    %v3892 = vld [vmem:[%s3891] sm:$0x3]
    %v3894 = vsel %vm2019, %v3892, 0
    %3896 = vmatprep.subr.mxu0 0.0
    %3897 = vmatpush1.msra.mxu0 %v3894
    %3898 = vmatprep.subr.mxu0 0.0
    %3899 = vmatpush1.msra.mxu0 0.0
    %3900 = vmatprep.subr.mxu0 0.0
    %3901 = vmatpush1.msra.mxu0 0.0
    %3902 = vmatprep.subr.mxu0 0.0
    %3903 = vmatpush1.msra.mxu0 0.0
    %3904 = vmatprep.subr.mxu0 0.0
    %3905 = vmatpush1.msra.mxu0 0.0
    %3906 = vmatprep.subr.mxu0 0.0
    %3907 = vmatpush1.msra.mxu0 0.0
    %3908 = vmatprep.subr.mxu0 0.0
    %3909 = vmatpush1.msra.mxu0 0.0
    %3910 = vmatprep.subr.mxu0 0.0
    %3911 = vmatpush1.msra.mxu0 0.0
    %3912 = vmatprep.subr.mxu0 0.0
    %3913 = vmatpush1.msra.mxu0 0.0
    %3914 = vmatprep.subr.mxu0 0.0
    %3915 = vmatpush1.msra.mxu0 0.0
    %3916 = vmatprep.subr.mxu0 0.0
    %3917 = vmatpush1.msra.mxu0 0.0
    %3918 = vmatprep.subr.mxu0 0.0
    %3919 = vmatpush1.msra.mxu0 0.0
    %3920 = vmatprep.subr.mxu0 0.0
    %3921 = vmatpush1.msra.mxu0 0.0
    %3922 = vmatprep.subr.mxu0 0.0
    %3923 = vmatpush1.msra.mxu0 0.0
    %3924 = vmatprep.subr.mxu0 0.0
    %3925 = vmatpush1.msra.mxu0 0.0
    %3926 = vmatprep.subr.mxu0 0.0
    %3927 = vmatpush1.msra.mxu0 0.0
    %3928 = vmatprep.subr.mxu0 0.0
    %3929 = vmatpush1.msra.mxu0 0.0
    %3930 = vmatprep.subr.mxu0 0.0
    %3931 = vmatpush1.msra.mxu0 0.0
    %3932 = vmatprep.subr.mxu0 0.0
    %3933 = vmatpush1.msra.mxu0 0.0
    %3934 = vmatprep.subr.mxu0 0.0
    %3935 = vmatpush1.msra.mxu0 0.0
    %3936 = vmatprep.subr.mxu0 0.0
    %3937 = vmatpush1.msra.mxu0 0.0
    %3938 = vmatprep.subr.mxu0 0.0
    %3939 = vmatpush1.msra.mxu0 0.0
    %3940 = vmatprep.subr.mxu0 0.0
    %3941 = vmatpush1.msra.mxu0 0.0
    %3942 = vmatprep.subr.mxu0 0.0
    %3943 = vmatpush1.msra.mxu0 0.0
    %3944 = vmatprep.subr.mxu0 0.0
    %3945 = vmatpush1.msra.mxu0 0.0
    %3946 = vmatprep.subr.mxu0 0.0
    %3947 = vmatpush1.msra.mxu0 0.0
    %3948 = vmatprep.subr.mxu0 0.0
    %3949 = vmatpush1.msra.mxu0 0.0
    %3950 = vmatprep.subr.mxu0 0.0
    %3951 = vmatpush1.msra.mxu0 0.0
    %3952 = vmatprep.subr.mxu0 0.0
    %3953 = vmatpush1.msra.mxu0 0.0
    %3954 = vmatprep.subr.mxu0 0.0
    %3955 = vmatpush1.msra.mxu0 0.0
    %3956 = vmatprep.subr.mxu0 0.0
    %3957 = vmatpush1.msra.mxu0 0.0
    %3958 = vmatprep.subr.mxu0 0.0
    %3959 = vmatpush1.msra.mxu0 0.0
    %3960 = vmatprep.mubr.f32.mxu0 0.0
    %3961 = vmatmul.mubr.f32.gmra.mrb[0].mxu0 %v2014
    %v3962 = vpop.f32.mrb[0].mxu0
    %v3963 = vadd.f32 0.0, %v3962
    %v3964 = vpop.f32.mrb[0].mxu0
    %3965 = vmatprep.mubr.f32.mxu0 0.0
    %3966 = vmatmul.mubr.f32.gmra.mrb[0].mxu0 %v2017
    %v3967 = vpop.f32.mrb[0].mxu0
    %v3968 = vadd.f32 0.0, %v3967
    %v3969 = vpop.f32.mrb[0].mxu0
    %3970 = vdwg.mxu0
    %v3971 = vsel %vm2100, %v3963, %v3889
    %v3972 = vsel %vm2101, %v3968, %v3890
    %s3973 = scalar_lea.vmem %s3, 2
    %v3974 = vld [vmem:[%s3973] sm:$0x1]
    %s3975 = scalar_lea.vmem %s4, 2
    %v3976 = vld [vmem:[%s3975] sm:$0x1]
    %v3978 = vsel %vm205, %v3971, 0
    %v3981 = vsel %vm205, %v3972, 0
    %3983 = vmatprep.subr.mxu0 0.0
    %3984 = vmatpush1.msra.mxu0 1.0
    %3985 = vmatprep.subr.mxu0 0.0
    %3986 = vmatpush1.msra.mxu0 1.0
    %3987 = vmatprep.subr.mxu0 0.0
    %3988 = vmatpush1.msra.mxu0 1.0
    %3989 = vmatprep.subr.mxu0 0.0
    %3990 = vmatpush1.msra.mxu0 1.0
    %3991 = vmatprep.subr.mxu0 0.0
    %3992 = vmatpush1.msra.mxu0 0.0
    %3993 = vmatprep.subr.mxu0 0.0
    %3994 = vmatpush1.msra.mxu0 0.0
    %3995 = vmatprep.subr.mxu0 0.0
    %3996 = vmatpush1.msra.mxu0 0.0
    %3997 = vmatprep.subr.mxu0 0.0
    %3998 = vmatpush1.msra.mxu0 0.0
    %3999 = vmatprep.subr.mxu0 0.0
    %4000 = vmatpush1.msra.mxu0 0.0
    %4001 = vmatprep.subr.mxu0 0.0
    %4002 = vmatpush1.msra.mxu0 0.0
    %4003 = vmatprep.subr.mxu0 0.0
    %4004 = vmatpush1.msra.mxu0 0.0
    %4005 = vmatprep.subr.mxu0 0.0
    %4006 = vmatpush1.msra.mxu0 0.0
    %4007 = vmatprep.subr.mxu0 0.0
    %4008 = vmatpush1.msra.mxu0 0.0
    %4009 = vmatprep.subr.mxu0 0.0
    %4010 = vmatpush1.msra.mxu0 0.0
    %4011 = vmatprep.subr.mxu0 0.0
    %4012 = vmatpush1.msra.mxu0 0.0
    %4013 = vmatprep.subr.mxu0 0.0
    %4014 = vmatpush1.msra.mxu0 0.0
    %4015 = vmatprep.subr.mxu0 0.0
    %4016 = vmatpush1.msra.mxu0 0.0
    %4017 = vmatprep.subr.mxu0 0.0
    %4018 = vmatpush1.msra.mxu0 0.0
    %4019 = vmatprep.subr.mxu0 0.0
    %4020 = vmatpush1.msra.mxu0 0.0
    %4021 = vmatprep.subr.mxu0 0.0
    %4022 = vmatpush1.msra.mxu0 0.0
    %4023 = vmatprep.subr.mxu0 0.0
    %4024 = vmatpush1.msra.mxu0 0.0
    %4025 = vmatprep.subr.mxu0 0.0
    %4026 = vmatpush1.msra.mxu0 0.0
    %4027 = vmatprep.subr.mxu0 0.0
    %4028 = vmatpush1.msra.mxu0 0.0
    %4029 = vmatprep.subr.mxu0 0.0
    %4030 = vmatpush1.msra.mxu0 0.0
    %4031 = vmatprep.subr.mxu0 0.0
    %4032 = vmatpush1.msra.mxu0 0.0
    %4033 = vmatprep.subr.mxu0 0.0
    %4034 = vmatpush1.msra.mxu0 0.0
    %4035 = vmatprep.subr.mxu0 0.0
    %4036 = vmatpush1.msra.mxu0 0.0
    %4037 = vmatprep.subr.mxu0 0.0
    %4038 = vmatpush1.msra.mxu0 0.0
    %4039 = vmatprep.subr.mxu0 0.0
    %4040 = vmatpush1.msra.mxu0 0.0
    %4041 = vmatprep.subr.mxu0 0.0
    %4042 = vmatpush1.msra.mxu0 0.0
    %4043 = vmatprep.subr.mxu0 0.0
    %4044 = vmatpush1.msra.mxu0 0.0
    %4045 = vmatprep.subr.mxu0 0.0
    %4046 = vmatpush1.msra.mxu0 0.0
    %4047 = vmatprep.mubr.f32.mxu0 0.0
    %4048 = vmatmul.mubr.f32.gmra.mrb[0].mxu0 %v3978
    %v4049 = vpop.f32.mrb[0].mxu0
    %v4050 = vadd.f32 0.0, %v4049
    %v4051 = vpop.f32.mrb[0].mxu0
    %4052 = vmatprep.mubr.f32.mxu0 0.0
    %4053 = vmatmul.mubr.f32.gmra.mrb[0].mxu0 %v3981
    %v4054 = vpop.f32.mrb[0].mxu0
    %v4055 = vadd.f32 0.0, %v4054
    %v4056 = vpop.f32.mrb[0].mxu0
    %4057 = vdwg.mxu0
    %v4058 = vmul.f32 %v4050, 0.03125
    %v4059 = vmul.f32 %v4055, 0.03125
    %4061 = vset.pattern.permute.xlu0 0
    %4062 = vperm.xlu0 %4061, %v4058
    %v4063 = vpop.permute.xlu0 %4062
    %4066 = vset.pattern.permute.xlu0 0
    %4067 = vperm.xlu0 %4066, %v4059
    %v4068 = vpop.permute.xlu0 %4067
    %v4070 = vsub.f32 %v3971, %v4063
    %v4071 = vsub.f32 %v3972, %v4068
    %v4072 = vmul.f32 %v4070, %v4070
    %v4073 = vmul.f32 %v4071, %v4071
    %v4075 = vsel %vm205, %v4072, 0
    %v4078 = vsel %vm205, %v4073, 0
    %4080 = vmatprep.subr.mxu0 0.0
    %4081 = vmatpush1.msra.mxu0 1.0
    %4082 = vmatprep.subr.mxu0 0.0
    %4083 = vmatpush1.msra.mxu0 1.0
    %4084 = vmatprep.subr.mxu0 0.0
    %4085 = vmatpush1.msra.mxu0 1.0
    %4086 = vmatprep.subr.mxu0 0.0
    %4087 = vmatpush1.msra.mxu0 1.0
    %4088 = vmatprep.subr.mxu0 0.0
    %4089 = vmatpush1.msra.mxu0 0.0
    %4090 = vmatprep.subr.mxu0 0.0
    %4091 = vmatpush1.msra.mxu0 0.0
    %4092 = vmatprep.subr.mxu0 0.0
    %4093 = vmatpush1.msra.mxu0 0.0
    %4094 = vmatprep.subr.mxu0 0.0
    %4095 = vmatpush1.msra.mxu0 0.0
    %4096 = vmatprep.subr.mxu0 0.0
    %4097 = vmatpush1.msra.mxu0 0.0
    %4098 = vmatprep.subr.mxu0 0.0
    %4099 = vmatpush1.msra.mxu0 0.0
    %4100 = vmatprep.subr.mxu0 0.0
    %4101 = vmatpush1.msra.mxu0 0.0
    %4102 = vmatprep.subr.mxu0 0.0
    %4103 = vmatpush1.msra.mxu0 0.0
    %4104 = vmatprep.subr.mxu0 0.0
    %4105 = vmatpush1.msra.mxu0 0.0
    %4106 = vmatprep.subr.mxu0 0.0
    %4107 = vmatpush1.msra.mxu0 0.0
    %4108 = vmatprep.subr.mxu0 0.0
    %4109 = vmatpush1.msra.mxu0 0.0
    %4110 = vmatprep.subr.mxu0 0.0
    %4111 = vmatpush1.msra.mxu0 0.0
    %4112 = vmatprep.subr.mxu0 0.0
    %4113 = vmatpush1.msra.mxu0 0.0
    %4114 = vmatprep.subr.mxu0 0.0
    %4115 = vmatpush1.msra.mxu0 0.0
    %4116 = vmatprep.subr.mxu0 0.0
    %4117 = vmatpush1.msra.mxu0 0.0
    %4118 = vmatprep.subr.mxu0 0.0
    %4119 = vmatpush1.msra.mxu0 0.0
    %4120 = vmatprep.subr.mxu0 0.0
    %4121 = vmatpush1.msra.mxu0 0.0
    %4122 = vmatprep.subr.mxu0 0.0
    %4123 = vmatpush1.msra.mxu0 0.0
    %4124 = vmatprep.subr.mxu0 0.0
    %4125 = vmatpush1.msra.mxu0 0.0
    %4126 = vmatprep.subr.mxu0 0.0
    %4127 = vmatpush1.msra.mxu0 0.0
    %4128 = vmatprep.subr.mxu0 0.0
    %4129 = vmatpush1.msra.mxu0 0.0
    %4130 = vmatprep.subr.mxu0 0.0
    %4131 = vmatpush1.msra.mxu0 0.0
    %4132 = vmatprep.subr.mxu0 0.0
    %4133 = vmatpush1.msra.mxu0 0.0
    %4134 = vmatprep.subr.mxu0 0.0
    %4135 = vmatpush1.msra.mxu0 0.0
    %4136 = vmatprep.subr.mxu0 0.0
    %4137 = vmatpush1.msra.mxu0 0.0
    %4138 = vmatprep.subr.mxu0 0.0
    %4139 = vmatpush1.msra.mxu0 0.0
    %4140 = vmatprep.subr.mxu0 0.0
    %4141 = vmatpush1.msra.mxu0 0.0
    %4142 = vmatprep.subr.mxu0 0.0
    %4143 = vmatpush1.msra.mxu0 0.0
    %4144 = vmatprep.mubr.f32.mxu0 0.0
    %4145 = vmatmul.mubr.f32.gmra.mrb[0].mxu0 %v4075
    %v4146 = vpop.f32.mrb[0].mxu0
    %v4147 = vadd.f32 0.0, %v4146
    %v4148 = vpop.f32.mrb[0].mxu0
    %4149 = vmatprep.mubr.f32.mxu0 0.0
    %4150 = vmatmul.mubr.f32.gmra.mrb[0].mxu0 %v4078
    %v4151 = vpop.f32.mrb[0].mxu0
    %v4152 = vadd.f32 0.0, %v4151
    %v4153 = vpop.f32.mrb[0].mxu0
    %4154 = vdwg.mxu0
    %v4155 = vmul.f32 %v4147, 0.03125
    %v4156 = vmul.f32 %v4152, 0.03125
    %v4157 = vadd.f32 %v4155, 1e-05
    %v4158 = vadd.f32 %v4156, 1e-05
    %v4159 = vrsqrt.pop %v4157
    %v4160 = vrsqrt.pop %v4158
    %4162 = vset.pattern.permute.xlu0 0
    %4163 = vperm.xlu0 %4162, %v4159
    %v4164 = vpop.permute.xlu0 %4163
    %4167 = vset.pattern.permute.xlu0 0
    %4168 = vperm.xlu0 %4167, %v4160
    %v4169 = vpop.permute.xlu0 %4168
    %v4171 = vmul.f32 %v4070, %v4164
    %v4172 = vmul.f32 %v4071, %v4169
    %v4174 = vlaneseq
    %v4175 = vshrl.u32 %v4174, 7
    %v4176 = vsub.s32 0, %v4175
    %v4177 = vrot.slane %v3974, %v4176
    %v4179 = vmul.f32 %v4171, %v4177
    %v4180 = vmul.f32 %v4172, %v4177
    %v4182 = vlaneseq
    %v4183 = vshrl.u32 %v4182, 7
    %v4184 = vsub.s32 0, %v4183
    %v4185 = vrot.slane %v3976, %v4184
    %v4187 = vadd.f32 %v4179, %v4185
    %v4188 = vadd.f32 %v4180, %v4185
    %s4189 = scalar_lea.vmem %s5, 64
    %v4190 = vld [vmem:[%s4189] sm:$0xff]
    %v4191 = vld [vmem:[%s4189 + $0x8] sm:$0xff]
    %v4192 = vld [vmem:[%s4189 + $0x10] sm:$0xff]
    %v4193 = vld [vmem:[%s4189 + $0x18] sm:$0xff]
    %s4194 = scalar_lea.vmem %s6, 2
    %v4195 = vld [vmem:[%s4194] sm:$0x1]
    %v4197 = vlaneseq
    %v4198 = vshrl.u32 %v4197, 7
    %v4199 = vsub.s32 0, %v4198
    %v4200 = vrot.slane %v4195, %v4199
    %v4203 = vsel %vm205, %v4187, 0
    %v4206 = vsel %vm205, %v4188, 0
    %4208 = vmatprep.subr.mxu0 0.0
    %4209 = vmatpush1.msra.mxu0 %v4190
    %4210 = vmatprep.subr.mxu0 0.0
    %4211 = vmatpush1.msra.mxu0 %v4191
    %4212 = vmatprep.subr.mxu0 0.0
    %4213 = vmatpush1.msra.mxu0 %v4192
    %4214 = vmatprep.subr.mxu0 0.0
    %4215 = vmatpush1.msra.mxu0 %v4193
    %4216 = vmatprep.subr.mxu0 0.0
    %4217 = vmatpush1.msra.mxu0 0.0
    %4218 = vmatprep.subr.mxu0 0.0
    %4219 = vmatpush1.msra.mxu0 0.0
    %4220 = vmatprep.subr.mxu0 0.0
    %4221 = vmatpush1.msra.mxu0 0.0
    %4222 = vmatprep.subr.mxu0 0.0
    %4223 = vmatpush1.msra.mxu0 0.0
    %4224 = vmatprep.subr.mxu0 0.0
    %4225 = vmatpush1.msra.mxu0 0.0
    %4226 = vmatprep.subr.mxu0 0.0
    %4227 = vmatpush1.msra.mxu0 0.0
    %4228 = vmatprep.subr.mxu0 0.0
    %4229 = vmatpush1.msra.mxu0 0.0
    %4230 = vmatprep.subr.mxu0 0.0
    %4231 = vmatpush1.msra.mxu0 0.0
    %4232 = vmatprep.subr.mxu0 0.0
    %4233 = vmatpush1.msra.mxu0 0.0
    %4234 = vmatprep.subr.mxu0 0.0
    %4235 = vmatpush1.msra.mxu0 0.0
    %4236 = vmatprep.subr.mxu0 0.0
    %4237 = vmatpush1.msra.mxu0 0.0
    %4238 = vmatprep.subr.mxu0 0.0
    %4239 = vmatpush1.msra.mxu0 0.0
    %4240 = vmatprep.subr.mxu0 0.0
    %4241 = vmatpush1.msra.mxu0 0.0
    %4242 = vmatprep.subr.mxu0 0.0
    %4243 = vmatpush1.msra.mxu0 0.0
    %4244 = vmatprep.subr.mxu0 0.0
    %4245 = vmatpush1.msra.mxu0 0.0
    %4246 = vmatprep.subr.mxu0 0.0
    %4247 = vmatpush1.msra.mxu0 0.0
    %4248 = vmatprep.subr.mxu0 0.0
    %4249 = vmatpush1.msra.mxu0 0.0
    %4250 = vmatprep.subr.mxu0 0.0
    %4251 = vmatpush1.msra.mxu0 0.0
    %4252 = vmatprep.subr.mxu0 0.0
    %4253 = vmatpush1.msra.mxu0 0.0
    %4254 = vmatprep.subr.mxu0 0.0
    %4255 = vmatpush1.msra.mxu0 0.0
    %4256 = vmatprep.subr.mxu0 0.0
    %4257 = vmatpush1.msra.mxu0 0.0
    %4258 = vmatprep.subr.mxu0 0.0
    %4259 = vmatpush1.msra.mxu0 0.0
    %4260 = vmatprep.subr.mxu0 0.0
    %4261 = vmatpush1.msra.mxu0 0.0
    %4262 = vmatprep.subr.mxu0 0.0
    %4263 = vmatpush1.msra.mxu0 0.0
    %4264 = vmatprep.subr.mxu0 0.0
    %4265 = vmatpush1.msra.mxu0 0.0
    %4266 = vmatprep.subr.mxu0 0.0
    %4267 = vmatpush1.msra.mxu0 0.0
    %4268 = vmatprep.subr.mxu0 0.0
    %4269 = vmatpush1.msra.mxu0 0.0
    %4270 = vmatprep.subr.mxu0 0.0
    %4271 = vmatpush1.msra.mxu0 0.0
    %4272 = vmatprep.mubr.f32.mxu0 0.0
    %4273 = vmatmul.mubr.f32.gmra.mrb[0].mxu0 %v4203
    %v4274 = vpop.f32.mrb[0].mxu0
    %v4275 = vadd.f32 %v4200, %v4274
    %v4276 = vpop.f32.mrb[0].mxu0
    %4277 = vmatprep.mubr.f32.mxu0 0.0
    %4278 = vmatmul.mubr.f32.gmra.mrb[0].mxu0 %v4206
    %v4279 = vpop.f32.mrb[0].mxu0
    %v4280 = vadd.f32 %v4200, %v4279
    %v4281 = vpop.f32.mrb[0].mxu0
    %4282 = vdwg.mxu0
    %4283 = vmatprep.subr.mxu0 0.0
    %4284 = vmatpush1.msra.mxu0 %v4275
    %4285 = vmatprep.subr.mxu0 0.0
    %4286 = vmatpush1.msra.mxu0 %v4280
    %4287 = vmatprep.subr.mxu0 0.0
    %4288 = vmatpush1.msra.mxu0 0.0
    %4289 = vmatprep.subr.mxu0 0.0
    %4290 = vmatpush1.msra.mxu0 0.0
    %4291 = vmatprep.subr.mxu0 0.0
    %4292 = vmatpush1.msra.mxu0 0.0
    %4293 = vmatprep.subr.mxu0 0.0
    %4294 = vmatpush1.msra.mxu0 0.0
    %4295 = vmatprep.subr.mxu0 0.0
    %4296 = vmatpush1.msra.mxu0 0.0
    %4297 = vmatprep.subr.mxu0 0.0
    %4298 = vmatpush1.msra.mxu0 0.0
    %4299 = vmatprep.subr.mxu0 0.0
    %4300 = vmatpush1.msra.mxu0 0.0
    %4301 = vmatprep.subr.mxu0 0.0
    %4302 = vmatpush1.msra.mxu0 0.0
    %4303 = vmatprep.subr.mxu0 0.0
    %4304 = vmatpush1.msra.mxu0 0.0
    %4305 = vmatprep.subr.mxu0 0.0
    %4306 = vmatpush1.msra.mxu0 0.0
    %4307 = vmatprep.subr.mxu0 0.0
    %4308 = vmatpush1.msra.mxu0 0.0
    %4309 = vmatprep.subr.mxu0 0.0
    %4310 = vmatpush1.msra.mxu0 0.0
    %4311 = vmatprep.subr.mxu0 0.0
    %4312 = vmatpush1.msra.mxu0 0.0
    %4313 = vmatprep.subr.mxu0 0.0
    %4314 = vmatpush1.msra.mxu0 0.0
    %4315 = vmatprep.subr.mxu0 0.0
    %4316 = vmatpush1.msra.mxu0 0.0
    %4317 = vmatprep.subr.mxu0 0.0
    %4318 = vmatpush1.msra.mxu0 0.0
    %4319 = vmatprep.subr.mxu0 0.0
    %4320 = vmatpush1.msra.mxu0 0.0
    %4321 = vmatprep.subr.mxu0 0.0
    %4322 = vmatpush1.msra.mxu0 0.0
    %4323 = vmatprep.subr.mxu0 0.0
    %4324 = vmatpush1.msra.mxu0 0.0
    %4325 = vmatprep.subr.mxu0 0.0
    %4326 = vmatpush1.msra.mxu0 0.0
    %4327 = vmatprep.subr.mxu0 0.0
    %4328 = vmatpush1.msra.mxu0 0.0
    %4329 = vmatprep.subr.mxu0 0.0
    %4330 = vmatpush1.msra.mxu0 0.0
    %4331 = vmatprep.subr.mxu0 0.0
    %4332 = vmatpush1.msra.mxu0 0.0
    %4333 = vmatprep.subr.mxu0 0.0
    %4334 = vmatpush1.msra.mxu0 0.0
    %4335 = vmatprep.subr.mxu0 0.0
    %4336 = vmatpush1.msra.mxu0 0.0
    %4337 = vmatprep.subr.mxu0 0.0
    %4338 = vmatpush1.msra.mxu0 0.0
    %4339 = vmatprep.subr.mxu0 0.0
    %4340 = vmatpush1.msra.mxu0 0.0
    %4341 = vmatprep.subr.mxu0 0.0
    %4342 = vmatpush1.msra.mxu0 0.0
    %4343 = vmatprep.subr.mxu0 0.0
    %4344 = vmatpush1.msra.mxu0 0.0
    %4345 = vmatprep.subr.mxu0 0.0
    %4346 = vmatpush1.msra.mxu0 0.0
    %4347 = vmatprep.mubr.f32.mxu0 0.0
    %4348 = vmatmul.mubr.f32.gmra.mrb[0].mxu0 %v512
    %v4349 = vpop.f32.mrb[0].mxu0
    %v4350 = vadd.f32 0.0, %v4349
    %v4351 = vpop.f32.mrb[0].mxu0
    %4352 = vmatprep.mubr.f32.mxu0 0.0
    %4353 = vmatmul.mubr.f32.gmra.mrb[0].mxu0 %v515
    %v4354 = vpop.f32.mrb[0].mxu0
    %v4355 = vadd.f32 0.0, %v4354
    %v4356 = vpop.f32.mrb[0].mxu0
    %4357 = vmatprep.mubr.f32.mxu0 0.0
    %4358 = vmatmul.mubr.f32.gmra.mrb[0].mxu0 %v518
    %v4359 = vpop.f32.mrb[0].mxu0
    %v4360 = vadd.f32 0.0, %v4359
    %v4361 = vpop.f32.mrb[0].mxu0
    %4362 = vmatprep.mubr.f32.mxu0 0.0
    %4363 = vmatmul.mubr.f32.gmra.mrb[0].mxu0 %v521
    %v4364 = vpop.f32.mrb[0].mxu0
    %v4365 = vadd.f32 0.0, %v4364
    %v4366 = vpop.f32.mrb[0].mxu0
    %4367 = vmatprep.mubr.f32.mxu0 0.0
    %4368 = vmatmul.mubr.f32.gmra.mrb[0].mxu0 %v524
    %v4369 = vpop.f32.mrb[0].mxu0
    %v4370 = vadd.f32 0.0, %v4369
    %v4371 = vpop.f32.mrb[0].mxu0
    %4372 = vmatprep.mubr.f32.mxu0 0.0
    %4373 = vmatmul.mubr.f32.gmra.mrb[0].mxu0 %v527
    %v4374 = vpop.f32.mrb[0].mxu0
    %v4375 = vadd.f32 0.0, %v4374
    %v4376 = vpop.f32.mrb[0].mxu0
    %4377 = vmatprep.mubr.f32.mxu0 0.0
    %4378 = vmatmul.mubr.f32.gmra.mrb[0].mxu0 %v530
    %v4379 = vpop.f32.mrb[0].mxu0
    %v4380 = vadd.f32 0.0, %v4379
    %v4381 = vpop.f32.mrb[0].mxu0
    %4382 = vmatprep.mubr.f32.mxu0 0.0
    %4383 = vmatmul.mubr.f32.gmra.mrb[0].mxu0 %v533
    %v4384 = vpop.f32.mrb[0].mxu0
    %v4385 = vadd.f32 0.0, %v4384
    %v4386 = vpop.f32.mrb[0].mxu0
    %4387 = vdwg.mxu0
    %v4388 = vmul.f32 %v4350, %v180
    %v4389 = vmul.f32 %v4355, %v181
    %v4390 = vmul.f32 %v4360, %v182
    %v4391 = vmul.f32 %v4365, %v183
    %v4392 = vmul.f32 %v4370, %v184
    %v4393 = vmul.f32 %v4375, %v185
    %v4394 = vmul.f32 %v4380, %v186
    %v4395 = vmul.f32 %v4385, %v187
    %4398 = vrot.lane.b32.xlu0 %v4275, 96
    %v4399 = vpop.permute.xlu0 %4398
    %4400 = vrot.lane.b32.xlu0 %v4280, 96
    %v4401 = vpop.permute.xlu0 %4400
    %4404 = vmatprep.subr.mxu0 0.0
    %4405 = vmatpush1.msra.mxu0 %v4399
    %4406 = vmatprep.subr.mxu0 0.0
    %4407 = vmatpush1.msra.mxu0 %v4401
    %4408 = vmatprep.subr.mxu0 0.0
    %4409 = vmatpush1.msra.mxu0 0.0
    %4410 = vmatprep.subr.mxu0 0.0
    %4411 = vmatpush1.msra.mxu0 0.0
    %4412 = vmatprep.subr.mxu0 0.0
    %4413 = vmatpush1.msra.mxu0 0.0
    %4414 = vmatprep.subr.mxu0 0.0
    %4415 = vmatpush1.msra.mxu0 0.0
    %4416 = vmatprep.subr.mxu0 0.0
    %4417 = vmatpush1.msra.mxu0 0.0
    %4418 = vmatprep.subr.mxu0 0.0
    %4419 = vmatpush1.msra.mxu0 0.0
    %4420 = vmatprep.subr.mxu0 0.0
    %4421 = vmatpush1.msra.mxu0 0.0
    %4422 = vmatprep.subr.mxu0 0.0
    %4423 = vmatpush1.msra.mxu0 0.0
    %4424 = vmatprep.subr.mxu0 0.0
    %4425 = vmatpush1.msra.mxu0 0.0
    %4426 = vmatprep.subr.mxu0 0.0
    %4427 = vmatpush1.msra.mxu0 0.0
    %4428 = vmatprep.subr.mxu0 0.0
    %4429 = vmatpush1.msra.mxu0 0.0
    %4430 = vmatprep.subr.mxu0 0.0
    %4431 = vmatpush1.msra.mxu0 0.0
    %4432 = vmatprep.subr.mxu0 0.0
    %4433 = vmatpush1.msra.mxu0 0.0
    %4434 = vmatprep.subr.mxu0 0.0
    %4435 = vmatpush1.msra.mxu0 0.0
    %4436 = vmatprep.subr.mxu0 0.0
    %4437 = vmatpush1.msra.mxu0 0.0
    %4438 = vmatprep.subr.mxu0 0.0
    %4439 = vmatpush1.msra.mxu0 0.0
    %4440 = vmatprep.subr.mxu0 0.0
    %4441 = vmatpush1.msra.mxu0 0.0
    %4442 = vmatprep.subr.mxu0 0.0
    %4443 = vmatpush1.msra.mxu0 0.0
    %4444 = vmatprep.subr.mxu0 0.0
    %4445 = vmatpush1.msra.mxu0 0.0
    %4446 = vmatprep.subr.mxu0 0.0
    %4447 = vmatpush1.msra.mxu0 0.0
    %4448 = vmatprep.subr.mxu0 0.0
    %4449 = vmatpush1.msra.mxu0 0.0
    %4450 = vmatprep.subr.mxu0 0.0
    %4451 = vmatpush1.msra.mxu0 0.0
    %4452 = vmatprep.subr.mxu0 0.0
    %4453 = vmatpush1.msra.mxu0 0.0
    %4454 = vmatprep.subr.mxu0 0.0
    %4455 = vmatpush1.msra.mxu0 0.0
    %4456 = vmatprep.subr.mxu0 0.0
    %4457 = vmatpush1.msra.mxu0 0.0
    %4458 = vmatprep.subr.mxu0 0.0
    %4459 = vmatpush1.msra.mxu0 0.0
    %4460 = vmatprep.subr.mxu0 0.0
    %4461 = vmatpush1.msra.mxu0 0.0
    %4462 = vmatprep.subr.mxu0 0.0
    %4463 = vmatpush1.msra.mxu0 0.0
    %4464 = vmatprep.subr.mxu0 0.0
    %4465 = vmatpush1.msra.mxu0 0.0
    %4466 = vmatprep.subr.mxu0 0.0
    %4467 = vmatpush1.msra.mxu0 0.0
    %4468 = vmatprep.mubr.f32.mxu0 0.0
    %4469 = vmatmul.mubr.f32.gmra.mrb[0].mxu0 %v512
    %v4470 = vpop.f32.mrb[0].mxu0
    %v4471 = vadd.f32 0.0, %v4470
    %v4472 = vpop.f32.mrb[0].mxu0
    %4473 = vmatprep.mubr.f32.mxu0 0.0
    %4474 = vmatmul.mubr.f32.gmra.mrb[0].mxu0 %v515
    %v4475 = vpop.f32.mrb[0].mxu0
    %v4476 = vadd.f32 0.0, %v4475
    %v4477 = vpop.f32.mrb[0].mxu0
    %4478 = vmatprep.mubr.f32.mxu0 0.0
    %4479 = vmatmul.mubr.f32.gmra.mrb[0].mxu0 %v518
    %v4480 = vpop.f32.mrb[0].mxu0
    %v4481 = vadd.f32 0.0, %v4480
    %v4482 = vpop.f32.mrb[0].mxu0
    %4483 = vmatprep.mubr.f32.mxu0 0.0
    %4484 = vmatmul.mubr.f32.gmra.mrb[0].mxu0 %v521
    %v4485 = vpop.f32.mrb[0].mxu0
    %v4486 = vadd.f32 0.0, %v4485
    %v4487 = vpop.f32.mrb[0].mxu0
    %4488 = vmatprep.mubr.f32.mxu0 0.0
    %4489 = vmatmul.mubr.f32.gmra.mrb[0].mxu0 %v524
    %v4490 = vpop.f32.mrb[0].mxu0
    %v4491 = vadd.f32 0.0, %v4490
    %v4492 = vpop.f32.mrb[0].mxu0
    %4493 = vmatprep.mubr.f32.mxu0 0.0
    %4494 = vmatmul.mubr.f32.gmra.mrb[0].mxu0 %v527
    %v4495 = vpop.f32.mrb[0].mxu0
    %v4496 = vadd.f32 0.0, %v4495
    %v4497 = vpop.f32.mrb[0].mxu0
    %4498 = vmatprep.mubr.f32.mxu0 0.0
    %4499 = vmatmul.mubr.f32.gmra.mrb[0].mxu0 %v530
    %v4500 = vpop.f32.mrb[0].mxu0
    %v4501 = vadd.f32 0.0, %v4500
    %v4502 = vpop.f32.mrb[0].mxu0
    %4503 = vmatprep.mubr.f32.mxu0 0.0
    %4504 = vmatmul.mubr.f32.gmra.mrb[0].mxu0 %v533
    %v4505 = vpop.f32.mrb[0].mxu0
    %v4506 = vadd.f32 0.0, %v4505
    %v4507 = vpop.f32.mrb[0].mxu0
    %4508 = vdwg.mxu0
    %4509 = vrot.lane.b32.xlu0 %v4275, 64
    %v4510 = vpop.permute.xlu0 %4509
    %4511 = vrot.lane.b32.xlu0 %v4280, 64
    %v4512 = vpop.permute.xlu0 %4511
    %4515 = vmatprep.subr.mxu0 0.0
    %4516 = vmatpush1.msra.mxu0 %v4510
    %4517 = vmatprep.subr.mxu0 0.0
    %4518 = vmatpush1.msra.mxu0 %v4512
    %4519 = vmatprep.subr.mxu0 0.0
    %4520 = vmatpush1.msra.mxu0 0.0
    %4521 = vmatprep.subr.mxu0 0.0
    %4522 = vmatpush1.msra.mxu0 0.0
    %4523 = vmatprep.subr.mxu0 0.0
    %4524 = vmatpush1.msra.mxu0 0.0
    %4525 = vmatprep.subr.mxu0 0.0
    %4526 = vmatpush1.msra.mxu0 0.0
    %4527 = vmatprep.subr.mxu0 0.0
    %4528 = vmatpush1.msra.mxu0 0.0
    %4529 = vmatprep.subr.mxu0 0.0
    %4530 = vmatpush1.msra.mxu0 0.0
    %4531 = vmatprep.subr.mxu0 0.0
    %4532 = vmatpush1.msra.mxu0 0.0
    %4533 = vmatprep.subr.mxu0 0.0
    %4534 = vmatpush1.msra.mxu0 0.0
    %4535 = vmatprep.subr.mxu0 0.0
    %4536 = vmatpush1.msra.mxu0 0.0
    %4537 = vmatprep.subr.mxu0 0.0
    %4538 = vmatpush1.msra.mxu0 0.0
    %4539 = vmatprep.subr.mxu0 0.0
    %4540 = vmatpush1.msra.mxu0 0.0
    %4541 = vmatprep.subr.mxu0 0.0
    %4542 = vmatpush1.msra.mxu0 0.0
    %4543 = vmatprep.subr.mxu0 0.0
    %4544 = vmatpush1.msra.mxu0 0.0
    %4545 = vmatprep.subr.mxu0 0.0
    %4546 = vmatpush1.msra.mxu0 0.0
    %4547 = vmatprep.subr.mxu0 0.0
    %4548 = vmatpush1.msra.mxu0 0.0
    %4549 = vmatprep.subr.mxu0 0.0
    %4550 = vmatpush1.msra.mxu0 0.0
    %4551 = vmatprep.subr.mxu0 0.0
    %4552 = vmatpush1.msra.mxu0 0.0
    %4553 = vmatprep.subr.mxu0 0.0
    %4554 = vmatpush1.msra.mxu0 0.0
    %4555 = vmatprep.subr.mxu0 0.0
    %4556 = vmatpush1.msra.mxu0 0.0
    %4557 = vmatprep.subr.mxu0 0.0
    %4558 = vmatpush1.msra.mxu0 0.0
    %4559 = vmatprep.subr.mxu0 0.0
    %4560 = vmatpush1.msra.mxu0 0.0
    %4561 = vmatprep.subr.mxu0 0.0
    %4562 = vmatpush1.msra.mxu0 0.0
    %4563 = vmatprep.subr.mxu0 0.0
    %4564 = vmatpush1.msra.mxu0 0.0
    %4565 = vmatprep.subr.mxu0 0.0
    %4566 = vmatpush1.msra.mxu0 0.0
    %4567 = vmatprep.subr.mxu0 0.0
    %4568 = vmatpush1.msra.mxu0 0.0
    %4569 = vmatprep.subr.mxu0 0.0
    %4570 = vmatpush1.msra.mxu0 0.0
    %4571 = vmatprep.subr.mxu0 0.0
    %4572 = vmatpush1.msra.mxu0 0.0
    %4573 = vmatprep.subr.mxu0 0.0
    %4574 = vmatpush1.msra.mxu0 0.0
    %4575 = vmatprep.subr.mxu0 0.0
    %4576 = vmatpush1.msra.mxu0 0.0
    %4577 = vmatprep.subr.mxu0 0.0
    %4578 = vmatpush1.msra.mxu0 0.0
    %4579 = vmatprep.mubr.f32.mxu0 0.0
    %4580 = vmatmul.mubr.f32.gmra.mrb[0].mxu0 %v512
    %v4581 = vpop.f32.mrb[0].mxu0
    %v4582 = vadd.f32 0.0, %v4581
    %v4583 = vpop.f32.mrb[0].mxu0
    %4584 = vmatprep.mubr.f32.mxu0 0.0
    %4585 = vmatmul.mubr.f32.gmra.mrb[0].mxu0 %v515
    %v4586 = vpop.f32.mrb[0].mxu0
    %v4587 = vadd.f32 0.0, %v4586
    %v4588 = vpop.f32.mrb[0].mxu0
    %4589 = vmatprep.mubr.f32.mxu0 0.0
    %4590 = vmatmul.mubr.f32.gmra.mrb[0].mxu0 %v518
    %v4591 = vpop.f32.mrb[0].mxu0
    %v4592 = vadd.f32 0.0, %v4591
    %v4593 = vpop.f32.mrb[0].mxu0
    %4594 = vmatprep.mubr.f32.mxu0 0.0
    %4595 = vmatmul.mubr.f32.gmra.mrb[0].mxu0 %v521
    %v4596 = vpop.f32.mrb[0].mxu0
    %v4597 = vadd.f32 0.0, %v4596
    %v4598 = vpop.f32.mrb[0].mxu0
    %4599 = vmatprep.mubr.f32.mxu0 0.0
    %4600 = vmatmul.mubr.f32.gmra.mrb[0].mxu0 %v524
    %v4601 = vpop.f32.mrb[0].mxu0
    %v4602 = vadd.f32 0.0, %v4601
    %v4603 = vpop.f32.mrb[0].mxu0
    %4604 = vmatprep.mubr.f32.mxu0 0.0
    %4605 = vmatmul.mubr.f32.gmra.mrb[0].mxu0 %v527
    %v4606 = vpop.f32.mrb[0].mxu0
    %v4607 = vadd.f32 0.0, %v4606
    %v4608 = vpop.f32.mrb[0].mxu0
    %4609 = vmatprep.mubr.f32.mxu0 0.0
    %4610 = vmatmul.mubr.f32.gmra.mrb[0].mxu0 %v530
    %v4611 = vpop.f32.mrb[0].mxu0
    %v4612 = vadd.f32 0.0, %v4611
    %v4613 = vpop.f32.mrb[0].mxu0
    %4614 = vmatprep.mubr.f32.mxu0 0.0
    %4615 = vmatmul.mubr.f32.gmra.mrb[0].mxu0 %v533
    %v4616 = vpop.f32.mrb[0].mxu0
    %v4617 = vadd.f32 0.0, %v4616
    %v4618 = vpop.f32.mrb[0].mxu0
    %4619 = vdwg.mxu0
    %v4620 = vmul.f32 %v4582, %v180
    %v4621 = vmul.f32 %v4587, %v181
    %v4622 = vmul.f32 %v4592, %v182
    %v4623 = vmul.f32 %v4597, %v183
    %v4624 = vmul.f32 %v4602, %v184
    %v4625 = vmul.f32 %v4607, %v185
    %v4626 = vmul.f32 %v4612, %v186
    %v4627 = vmul.f32 %v4617, %v187
    %v4629 = vsel %vm205, %v4388, 0
    %v4632 = vsel %vm205, %v4389, 0
    %v4635 = vsel %vm205, %v4390, 0
    %v4638 = vsel %vm205, %v4391, 0
    %v4641 = vsel %vm205, %v4392, 0
    %v4644 = vsel %vm205, %v4393, 0
    %v4647 = vsel %vm205, %v4394, 0
    %v4650 = vsel %vm205, %v4395, 0
    %v4653 = vsel %vm205, %v4471, 0
    %v4656 = vsel %vm205, %v4476, 0
    %v4659 = vsel %vm205, %v4481, 0
    %v4662 = vsel %vm205, %v4486, 0
    %v4665 = vsel %vm205, %v4491, 0
    %v4668 = vsel %vm205, %v4496, 0
    %v4671 = vsel %vm205, %v4501, 0
    %v4674 = vsel %vm205, %v4506, 0
    %4676 = vmatprep.subr.mxu0 0.0
    %4677 = vmatpush1.xpose.msra.mxu0 %v4653
    %4678 = vmatprep.subr.mxu0 0.0
    %4679 = vmatpush1.xpose.msra.mxu0 %v4656
    %4680 = vmatprep.subr.mxu0 0.0
    %4681 = vmatpush1.xpose.msra.mxu0 %v4659
    %4682 = vmatprep.subr.mxu0 0.0
    %4683 = vmatpush1.xpose.msra.mxu0 %v4662
    %4684 = vmatprep.subr.mxu0 0.0
    %4685 = vmatpush1.xpose.msra.mxu0 %v4665
    %4686 = vmatprep.subr.mxu0 0.0
    %4687 = vmatpush1.xpose.msra.mxu0 %v4668
    %4688 = vmatprep.subr.mxu0 0.0
    %4689 = vmatpush1.xpose.msra.mxu0 %v4671
    %4690 = vmatprep.subr.mxu0 0.0
    %4691 = vmatpush1.xpose.msra.mxu0 %v4674
    %4692 = vmatprep.subr.mxu0 0.0
    %4693 = vmatpush1.xpose.msra.mxu0 0.0
    %4694 = vmatprep.subr.mxu0 0.0
    %4695 = vmatpush1.xpose.msra.mxu0 0.0
    %4696 = vmatprep.subr.mxu0 0.0
    %4697 = vmatpush1.xpose.msra.mxu0 0.0
    %4698 = vmatprep.subr.mxu0 0.0
    %4699 = vmatpush1.xpose.msra.mxu0 0.0
    %4700 = vmatprep.subr.mxu0 0.0
    %4701 = vmatpush1.xpose.msra.mxu0 0.0
    %4702 = vmatprep.subr.mxu0 0.0
    %4703 = vmatpush1.xpose.msra.mxu0 0.0
    %4704 = vmatprep.subr.mxu0 0.0
    %4705 = vmatpush1.xpose.msra.mxu0 0.0
    %4706 = vmatprep.subr.mxu0 0.0
    %4707 = vmatpush1.xpose.msra.mxu0 0.0
    %4708 = vmatprep.subr.mxu0 0.0
    %4709 = vmatpush1.xpose.msra.mxu0 0.0
    %4710 = vmatprep.subr.mxu0 0.0
    %4711 = vmatpush1.xpose.msra.mxu0 0.0
    %4712 = vmatprep.subr.mxu0 0.0
    %4713 = vmatpush1.xpose.msra.mxu0 0.0
    %4714 = vmatprep.subr.mxu0 0.0
    %4715 = vmatpush1.xpose.msra.mxu0 0.0
    %4716 = vmatprep.subr.mxu0 0.0
    %4717 = vmatpush1.xpose.msra.mxu0 0.0
    %4718 = vmatprep.subr.mxu0 0.0
    %4719 = vmatpush1.xpose.msra.mxu0 0.0
    %4720 = vmatprep.subr.mxu0 0.0
    %4721 = vmatpush1.xpose.msra.mxu0 0.0
    %4722 = vmatprep.subr.mxu0 0.0
    %4723 = vmatpush1.xpose.msra.mxu0 0.0
    %4724 = vmatprep.subr.mxu0 0.0
    %4725 = vmatpush1.xpose.msra.mxu0 0.0
    %4726 = vmatprep.subr.mxu0 0.0
    %4727 = vmatpush1.xpose.msra.mxu0 0.0
    %4728 = vmatprep.subr.mxu0 0.0
    %4729 = vmatpush1.xpose.msra.mxu0 0.0
    %4730 = vmatprep.subr.mxu0 0.0
    %4731 = vmatpush1.xpose.msra.mxu0 0.0
    %4732 = vmatprep.subr.mxu0 0.0
    %4733 = vmatpush1.xpose.msra.mxu0 0.0
    %4734 = vmatprep.subr.mxu0 0.0
    %4735 = vmatpush1.xpose.msra.mxu0 0.0
    %4736 = vmatprep.subr.mxu0 0.0
    %4737 = vmatpush1.xpose.msra.mxu0 0.0
    %4738 = vmatprep.subr.mxu0 0.0
    %4739 = vmatpush1.xpose.msra.mxu0 0.0
    %4740 = vmatprep.mubr.f32.mxu0 0.0
    %4741 = vmatmul.mubr.f32.gmra.mrb[0].mxu0 %v4629
    %v4742 = vpop.f32.mrb[0].mxu0
    %v4743 = vadd.f32 0.0, %v4742
    %v4744 = vpop.f32.mrb[0].mxu0
    %4745 = vmatprep.mubr.f32.mxu0 0.0
    %4746 = vmatmul.mubr.f32.gmra.mrb[0].mxu0 %v4632
    %v4747 = vpop.f32.mrb[0].mxu0
    %v4748 = vadd.f32 0.0, %v4747
    %v4749 = vpop.f32.mrb[0].mxu0
    %4750 = vmatprep.mubr.f32.mxu0 0.0
    %4751 = vmatmul.mubr.f32.gmra.mrb[0].mxu0 %v4635
    %v4752 = vpop.f32.mrb[0].mxu0
    %v4753 = vadd.f32 0.0, %v4752
    %v4754 = vpop.f32.mrb[0].mxu0
    %4755 = vmatprep.mubr.f32.mxu0 0.0
    %4756 = vmatmul.mubr.f32.gmra.mrb[0].mxu0 %v4638
    %v4757 = vpop.f32.mrb[0].mxu0
    %v4758 = vadd.f32 0.0, %v4757
    %v4759 = vpop.f32.mrb[0].mxu0
    %4760 = vmatprep.mubr.f32.mxu0 0.0
    %4761 = vmatmul.mubr.f32.gmra.mrb[0].mxu0 %v4641
    %v4762 = vpop.f32.mrb[0].mxu0
    %v4763 = vadd.f32 0.0, %v4762
    %v4764 = vpop.f32.mrb[0].mxu0
    %4765 = vmatprep.mubr.f32.mxu0 0.0
    %4766 = vmatmul.mubr.f32.gmra.mrb[0].mxu0 %v4644
    %v4767 = vpop.f32.mrb[0].mxu0
    %v4768 = vadd.f32 0.0, %v4767
    %v4769 = vpop.f32.mrb[0].mxu0
    %4770 = vmatprep.mubr.f32.mxu0 0.0
    %4771 = vmatmul.mubr.f32.gmra.mrb[0].mxu0 %v4647
    %v4772 = vpop.f32.mrb[0].mxu0
    %v4773 = vadd.f32 0.0, %v4772
    %v4774 = vpop.f32.mrb[0].mxu0
    %4775 = vmatprep.mubr.f32.mxu0 0.0
    %4776 = vmatmul.mubr.f32.gmra.mrb[0].mxu0 %v4650
    %v4777 = vpop.f32.mrb[0].mxu0
    %v4778 = vadd.f32 0.0, %v4777
    %v4779 = vpop.f32.mrb[0].mxu0
    %4780 = vdwg.mxu0
    %v4781 = vmul.f32 %v4743, 0.35355338
    %v4782 = vmul.f32 %v4748, 0.35355338
    %v4783 = vmul.f32 %v4753, 0.35355338
    %v4784 = vmul.f32 %v4758, 0.35355338
    %v4785 = vmul.f32 %v4763, 0.35355338
    %v4786 = vmul.f32 %v4768, 0.35355338
    %v4787 = vmul.f32 %v4773, 0.35355338
    %v4788 = vmul.f32 %v4778, 0.35355338
    %v4789 = vsel %vm109, %v4781, -1e+09
    %v4790 = vsel %vm110, %v4782, -1e+09
    %v4791 = vsel %vm111, %v4783, -1e+09
    %v4792 = vsel %vm112, %v4784, -1e+09
    %v4793 = vsel %vm113, %v4785, -1e+09
    %v4794 = vsel %vm114, %v4786, -1e+09
    %v4795 = vsel %vm115, %v4787, -1e+09
    %v4796 = vsel %vm116, %v4788, -1e+09
    %v4797 = vsel %vm1049, %v4789, -inf
    %4798 = vmax.xlane.f32.xlu0 %v4797
    %v4799 = vpop.xlane.xlu0 %4798
    %v4800 = vsel %vm1049, %v4790, -inf
    %4801 = vmax.xlane.f32.xlu0 %v4800
    %v4802 = vpop.xlane.xlu0 %4801
    %v4803 = vsel %vm1049, %v4791, -inf
    %4804 = vmax.xlane.f32.xlu0 %v4803
    %v4805 = vpop.xlane.xlu0 %4804
    %v4806 = vsel %vm1049, %v4792, -inf
    %4807 = vmax.xlane.f32.xlu0 %v4806
    %v4808 = vpop.xlane.xlu0 %4807
    %v4809 = vsel %vm1049, %v4793, -inf
    %4810 = vmax.xlane.f32.xlu0 %v4809
    %v4811 = vpop.xlane.xlu0 %4810
    %v4812 = vsel %vm1049, %v4794, -inf
    %4813 = vmax.xlane.f32.xlu0 %v4812
    %v4814 = vpop.xlane.xlu0 %4813
    %v4815 = vsel %vm1049, %v4795, -inf
    %4816 = vmax.xlane.f32.xlu0 %v4815
    %v4817 = vpop.xlane.xlu0 %4816
    %v4818 = vsel %vm1049, %v4796, -inf
    %4819 = vmax.xlane.f32.xlu0 %v4818
    %v4820 = vpop.xlane.xlu0 %4819
    %v4821 = vsub.f32 %v4789, %v4799
    %v4822 = vsub.f32 %v4790, %v4802
    %v4823 = vsub.f32 %v4791, %v4805
    %v4824 = vsub.f32 %v4792, %v4808
    %v4825 = vsub.f32 %v4793, %v4811
    %v4826 = vsub.f32 %v4794, %v4814
    %v4827 = vsub.f32 %v4795, %v4817
    %v4828 = vsub.f32 %v4796, %v4820
    %v4829 = vmul.f32 %v4821, 1.442695
    %v4830 = vpow.pop %v4829
    %v4831 = vmul.f32 %v4822, 1.442695
    %v4832 = vpow.pop %v4831
    %v4833 = vmul.f32 %v4823, 1.442695
    %v4834 = vpow.pop %v4833
    %v4835 = vmul.f32 %v4824, 1.442695
    %v4836 = vpow.pop %v4835
    %v4837 = vmul.f32 %v4825, 1.442695
    %v4838 = vpow.pop %v4837
    %v4839 = vmul.f32 %v4826, 1.442695
    %v4840 = vpow.pop %v4839
    %v4841 = vmul.f32 %v4827, 1.442695
    %v4842 = vpow.pop %v4841
    %v4843 = vmul.f32 %v4828, 1.442695
    %v4844 = vpow.pop %v4843
    %v4846 = vsel %vm1049, %v4830, 0
    %v4849 = vsel %vm1049, %v4832, 0
    %v4852 = vsel %vm1049, %v4834, 0
    %v4855 = vsel %vm1049, %v4836, 0
    %v4858 = vsel %vm1049, %v4838, 0
    %v4861 = vsel %vm1049, %v4840, 0
    %v4864 = vsel %vm1049, %v4842, 0
    %v4867 = vsel %vm1049, %v4844, 0
    %4869 = vmatprep.subr.mxu0 0.0
    %4870 = vmatpush1.msra.mxu0 1.0
    %4871 = vmatprep.subr.mxu0 0.0
    %4872 = vmatpush1.msra.mxu0 1.0
    %4873 = vmatprep.subr.mxu0 0.0
    %4874 = vmatpush1.msra.mxu0 1.0
    %4875 = vmatprep.subr.mxu0 0.0
    %4876 = vmatpush1.msra.mxu0 1.0
    %4877 = vmatprep.subr.mxu0 0.0
    %4878 = vmatpush1.msra.mxu0 1.0
    %4879 = vmatprep.subr.mxu0 0.0
    %4880 = vmatpush1.msra.mxu0 1.0
    %4881 = vmatprep.subr.mxu0 0.0
    %4882 = vmatpush1.msra.mxu0 1.0
    %4883 = vmatprep.subr.mxu0 0.0
    %4884 = vmatpush1.msra.mxu0 1.0
    %4885 = vmatprep.subr.mxu0 0.0
    %4886 = vmatpush1.msra.mxu0 0.0
    %4887 = vmatprep.subr.mxu0 0.0
    %4888 = vmatpush1.msra.mxu0 0.0
    %4889 = vmatprep.subr.mxu0 0.0
    %4890 = vmatpush1.msra.mxu0 0.0
    %4891 = vmatprep.subr.mxu0 0.0
    %4892 = vmatpush1.msra.mxu0 0.0
    %4893 = vmatprep.subr.mxu0 0.0
    %4894 = vmatpush1.msra.mxu0 0.0
    %4895 = vmatprep.subr.mxu0 0.0
    %4896 = vmatpush1.msra.mxu0 0.0
    %4897 = vmatprep.subr.mxu0 0.0
    %4898 = vmatpush1.msra.mxu0 0.0
    %4899 = vmatprep.subr.mxu0 0.0
    %4900 = vmatpush1.msra.mxu0 0.0
    %4901 = vmatprep.subr.mxu0 0.0
    %4902 = vmatpush1.msra.mxu0 0.0
    %4903 = vmatprep.subr.mxu0 0.0
    %4904 = vmatpush1.msra.mxu0 0.0
    %4905 = vmatprep.subr.mxu0 0.0
    %4906 = vmatpush1.msra.mxu0 0.0
    %4907 = vmatprep.subr.mxu0 0.0
    %4908 = vmatpush1.msra.mxu0 0.0
    %4909 = vmatprep.subr.mxu0 0.0
    %4910 = vmatpush1.msra.mxu0 0.0
    %4911 = vmatprep.subr.mxu0 0.0
    %4912 = vmatpush1.msra.mxu0 0.0
    %4913 = vmatprep.subr.mxu0 0.0
    %4914 = vmatpush1.msra.mxu0 0.0
    %4915 = vmatprep.subr.mxu0 0.0
    %4916 = vmatpush1.msra.mxu0 0.0
    %4917 = vmatprep.subr.mxu0 0.0
    %4918 = vmatpush1.msra.mxu0 0.0
    %4919 = vmatprep.subr.mxu0 0.0
    %4920 = vmatpush1.msra.mxu0 0.0
    %4921 = vmatprep.subr.mxu0 0.0
    %4922 = vmatpush1.msra.mxu0 0.0
    %4923 = vmatprep.subr.mxu0 0.0
    %4924 = vmatpush1.msra.mxu0 0.0
    %4925 = vmatprep.subr.mxu0 0.0
    %4926 = vmatpush1.msra.mxu0 0.0
    %4927 = vmatprep.subr.mxu0 0.0
    %4928 = vmatpush1.msra.mxu0 0.0
    %4929 = vmatprep.subr.mxu0 0.0
    %4930 = vmatpush1.msra.mxu0 0.0
    %4931 = vmatprep.subr.mxu0 0.0
    %4932 = vmatpush1.msra.mxu0 0.0
    %4933 = vmatprep.mubr.f32.mxu0 0.0
    %4934 = vmatmul.mubr.f32.gmra.mrb[0].mxu0 %v4846
    %v4935 = vpop.f32.mrb[0].mxu0
    %v4936 = vadd.f32 0.0, %v4935
    %v4937 = vpop.f32.mrb[0].mxu0
    %4938 = vmatprep.mubr.f32.mxu0 0.0
    %4939 = vmatmul.mubr.f32.gmra.mrb[0].mxu0 %v4849
    %v4940 = vpop.f32.mrb[0].mxu0
    %v4941 = vadd.f32 0.0, %v4940
    %v4942 = vpop.f32.mrb[0].mxu0
    %4943 = vmatprep.mubr.f32.mxu0 0.0
    %4944 = vmatmul.mubr.f32.gmra.mrb[0].mxu0 %v4852
    %v4945 = vpop.f32.mrb[0].mxu0
    %v4946 = vadd.f32 0.0, %v4945
    %v4947 = vpop.f32.mrb[0].mxu0
    %4948 = vmatprep.mubr.f32.mxu0 0.0
    %4949 = vmatmul.mubr.f32.gmra.mrb[0].mxu0 %v4855
    %v4950 = vpop.f32.mrb[0].mxu0
    %v4951 = vadd.f32 0.0, %v4950
    %v4952 = vpop.f32.mrb[0].mxu0
    %4953 = vmatprep.mubr.f32.mxu0 0.0
    %4954 = vmatmul.mubr.f32.gmra.mrb[0].mxu0 %v4858
    %v4955 = vpop.f32.mrb[0].mxu0
    %v4956 = vadd.f32 0.0, %v4955
    %v4957 = vpop.f32.mrb[0].mxu0
    %4958 = vmatprep.mubr.f32.mxu0 0.0
    %4959 = vmatmul.mubr.f32.gmra.mrb[0].mxu0 %v4861
    %v4960 = vpop.f32.mrb[0].mxu0
    %v4961 = vadd.f32 0.0, %v4960
    %v4962 = vpop.f32.mrb[0].mxu0
    %4963 = vmatprep.mubr.f32.mxu0 0.0
    %4964 = vmatmul.mubr.f32.gmra.mrb[0].mxu0 %v4864
    %v4965 = vpop.f32.mrb[0].mxu0
    %v4966 = vadd.f32 0.0, %v4965
    %v4967 = vpop.f32.mrb[0].mxu0
    %4968 = vmatprep.mubr.f32.mxu0 0.0
    %4969 = vmatmul.mubr.f32.gmra.mrb[0].mxu0 %v4867
    %v4970 = vpop.f32.mrb[0].mxu0
    %v4971 = vadd.f32 0.0, %v4970
    %v4972 = vpop.f32.mrb[0].mxu0
    %4973 = vdwg.mxu0
    %4975 = vset.pattern.permute.xlu0 0
    %4976 = vperm.xlu0 %4975, %v4936
    %v4977 = vpop.permute.xlu0 %4976
    %4980 = vset.pattern.permute.xlu0 0
    %4981 = vperm.xlu0 %4980, %v4941
    %v4982 = vpop.permute.xlu0 %4981
    %4985 = vset.pattern.permute.xlu0 0
    %4986 = vperm.xlu0 %4985, %v4946
    %v4987 = vpop.permute.xlu0 %4986
    %4990 = vset.pattern.permute.xlu0 0
    %4991 = vperm.xlu0 %4990, %v4951
    %v4992 = vpop.permute.xlu0 %4991
    %4995 = vset.pattern.permute.xlu0 0
    %4996 = vperm.xlu0 %4995, %v4956
    %v4997 = vpop.permute.xlu0 %4996
    %5000 = vset.pattern.permute.xlu0 0
    %5001 = vperm.xlu0 %5000, %v4961
    %v5002 = vpop.permute.xlu0 %5001
    %5005 = vset.pattern.permute.xlu0 0
    %5006 = vperm.xlu0 %5005, %v4966
    %v5007 = vpop.permute.xlu0 %5006
    %5010 = vset.pattern.permute.xlu0 0
    %5011 = vperm.xlu0 %5010, %v4971
    %v5012 = vpop.permute.xlu0 %5011
    %v5014 = vrcp.pop %v4977
    %v5015 = vmul.f32 %v4830, %v5014
    %v5016 = vrcp.pop %v4982
    %v5017 = vmul.f32 %v4832, %v5016
    %v5018 = vrcp.pop %v4987
    %v5019 = vmul.f32 %v4834, %v5018
    %v5020 = vrcp.pop %v4992
    %v5021 = vmul.f32 %v4836, %v5020
    %v5022 = vrcp.pop %v4997
    %v5023 = vmul.f32 %v4838, %v5022
    %v5024 = vrcp.pop %v5002
    %v5025 = vmul.f32 %v4840, %v5024
    %v5026 = vrcp.pop %v5007
    %v5027 = vmul.f32 %v4842, %v5026
    %v5028 = vrcp.pop %v5012
    %v5029 = vmul.f32 %v4844, %v5028
    %v5031 = vsel %vm1049, %v5015, 0
    %v5034 = vsel %vm1049, %v5017, 0
    %v5037 = vsel %vm1049, %v5019, 0
    %v5040 = vsel %vm1049, %v5021, 0
    %v5043 = vsel %vm1049, %v5023, 0
    %v5046 = vsel %vm1049, %v5025, 0
    %v5049 = vsel %vm1049, %v5027, 0
    %v5052 = vsel %vm1049, %v5029, 0
    %5054 = vmatprep.subr.mxu0 0.0
    %5055 = vmatpush1.msra.mxu0 %v4620
    %5056 = vmatprep.subr.mxu0 0.0
    %5057 = vmatpush1.msra.mxu0 %v4621
    %5058 = vmatprep.subr.mxu0 0.0
    %5059 = vmatpush1.msra.mxu0 %v4622
    %5060 = vmatprep.subr.mxu0 0.0
    %5061 = vmatpush1.msra.mxu0 %v4623
    %5062 = vmatprep.subr.mxu0 0.0
    %5063 = vmatpush1.msra.mxu0 %v4624
    %5064 = vmatprep.subr.mxu0 0.0
    %5065 = vmatpush1.msra.mxu0 %v4625
    %5066 = vmatprep.subr.mxu0 0.0
    %5067 = vmatpush1.msra.mxu0 %v4626
    %5068 = vmatprep.subr.mxu0 0.0
    %5069 = vmatpush1.msra.mxu0 %v4627
    %5070 = vmatprep.subr.mxu0 0.0
    %5071 = vmatpush1.msra.mxu0 0.0
    %5072 = vmatprep.subr.mxu0 0.0
    %5073 = vmatpush1.msra.mxu0 0.0
    %5074 = vmatprep.subr.mxu0 0.0
    %5075 = vmatpush1.msra.mxu0 0.0
    %5076 = vmatprep.subr.mxu0 0.0
    %5077 = vmatpush1.msra.mxu0 0.0
    %5078 = vmatprep.subr.mxu0 0.0
    %5079 = vmatpush1.msra.mxu0 0.0
    %5080 = vmatprep.subr.mxu0 0.0
    %5081 = vmatpush1.msra.mxu0 0.0
    %5082 = vmatprep.subr.mxu0 0.0
    %5083 = vmatpush1.msra.mxu0 0.0
    %5084 = vmatprep.subr.mxu0 0.0
    %5085 = vmatpush1.msra.mxu0 0.0
    %5086 = vmatprep.subr.mxu0 0.0
    %5087 = vmatpush1.msra.mxu0 0.0
    %5088 = vmatprep.subr.mxu0 0.0
    %5089 = vmatpush1.msra.mxu0 0.0
    %5090 = vmatprep.subr.mxu0 0.0
    %5091 = vmatpush1.msra.mxu0 0.0
    %5092 = vmatprep.subr.mxu0 0.0
    %5093 = vmatpush1.msra.mxu0 0.0
    %5094 = vmatprep.subr.mxu0 0.0
    %5095 = vmatpush1.msra.mxu0 0.0
    %5096 = vmatprep.subr.mxu0 0.0
    %5097 = vmatpush1.msra.mxu0 0.0
    %5098 = vmatprep.subr.mxu0 0.0
    %5099 = vmatpush1.msra.mxu0 0.0
    %5100 = vmatprep.subr.mxu0 0.0
    %5101 = vmatpush1.msra.mxu0 0.0
    %5102 = vmatprep.subr.mxu0 0.0
    %5103 = vmatpush1.msra.mxu0 0.0
    %5104 = vmatprep.subr.mxu0 0.0
    %5105 = vmatpush1.msra.mxu0 0.0
    %5106 = vmatprep.subr.mxu0 0.0
    %5107 = vmatpush1.msra.mxu0 0.0
    %5108 = vmatprep.subr.mxu0 0.0
    %5109 = vmatpush1.msra.mxu0 0.0
    %5110 = vmatprep.subr.mxu0 0.0
    %5111 = vmatpush1.msra.mxu0 0.0
    %5112 = vmatprep.subr.mxu0 0.0
    %5113 = vmatpush1.msra.mxu0 0.0
    %5114 = vmatprep.subr.mxu0 0.0
    %5115 = vmatpush1.msra.mxu0 0.0
    %5116 = vmatprep.subr.mxu0 0.0
    %5117 = vmatpush1.msra.mxu0 0.0
    %5118 = vmatprep.mubr.f32.mxu0 0.0
    %5119 = vmatmul.mubr.f32.gmra.mrb[0].mxu0 %v5031
    %v5120 = vpop.f32.mrb[0].mxu0
    %v5121 = vadd.f32 0.0, %v5120
    %v5122 = vpop.f32.mrb[0].mxu0
    %5123 = vmatprep.mubr.f32.mxu0 0.0
    %5124 = vmatmul.mubr.f32.gmra.mrb[0].mxu0 %v5034
    %v5125 = vpop.f32.mrb[0].mxu0
    %v5126 = vadd.f32 0.0, %v5125
    %v5127 = vpop.f32.mrb[0].mxu0
    %5128 = vmatprep.mubr.f32.mxu0 0.0
    %5129 = vmatmul.mubr.f32.gmra.mrb[0].mxu0 %v5037
    %v5130 = vpop.f32.mrb[0].mxu0
    %v5131 = vadd.f32 0.0, %v5130
    %v5132 = vpop.f32.mrb[0].mxu0
    %5133 = vmatprep.mubr.f32.mxu0 0.0
    %5134 = vmatmul.mubr.f32.gmra.mrb[0].mxu0 %v5040
    %v5135 = vpop.f32.mrb[0].mxu0
    %v5136 = vadd.f32 0.0, %v5135
    %v5137 = vpop.f32.mrb[0].mxu0
    %5138 = vmatprep.mubr.f32.mxu0 0.0
    %5139 = vmatmul.mubr.f32.gmra.mrb[0].mxu0 %v5043
    %v5140 = vpop.f32.mrb[0].mxu0
    %v5141 = vadd.f32 0.0, %v5140
    %v5142 = vpop.f32.mrb[0].mxu0
    %5143 = vmatprep.mubr.f32.mxu0 0.0
    %5144 = vmatmul.mubr.f32.gmra.mrb[0].mxu0 %v5046
    %v5145 = vpop.f32.mrb[0].mxu0
    %v5146 = vadd.f32 0.0, %v5145
    %v5147 = vpop.f32.mrb[0].mxu0
    %5148 = vmatprep.mubr.f32.mxu0 0.0
    %5149 = vmatmul.mubr.f32.gmra.mrb[0].mxu0 %v5049
    %v5150 = vpop.f32.mrb[0].mxu0
    %v5151 = vadd.f32 0.0, %v5150
    %v5152 = vpop.f32.mrb[0].mxu0
    %5153 = vmatprep.mubr.f32.mxu0 0.0
    %5154 = vmatmul.mubr.f32.gmra.mrb[0].mxu0 %v5052
    %v5155 = vpop.f32.mrb[0].mxu0
    %v5156 = vadd.f32 0.0, %v5155
    %v5157 = vpop.f32.mrb[0].mxu0
    %5158 = vdwg.mxu0
    %5159 = vmatprep.subr.mxu0 0.0
    %5160 = vmatpush1.msra.mxu0 %v5121
    %5161 = vmatprep.subr.mxu0 0.0
    %5162 = vmatpush1.msra.mxu0 %v5126
    %5163 = vmatprep.subr.mxu0 0.0
    %5164 = vmatpush1.msra.mxu0 %v5131
    %5165 = vmatprep.subr.mxu0 0.0
    %5166 = vmatpush1.msra.mxu0 %v5136
    %5167 = vmatprep.subr.mxu0 0.0
    %5168 = vmatpush1.msra.mxu0 %v5141
    %5169 = vmatprep.subr.mxu0 0.0
    %5170 = vmatpush1.msra.mxu0 %v5146
    %5171 = vmatprep.subr.mxu0 0.0
    %5172 = vmatpush1.msra.mxu0 %v5151
    %5173 = vmatprep.subr.mxu0 0.0
    %5174 = vmatpush1.msra.mxu0 %v5156
    %5175 = vmatprep.subr.mxu0 0.0
    %5176 = vmatpush1.msra.mxu0 0.0
    %5177 = vmatprep.subr.mxu0 0.0
    %5178 = vmatpush1.msra.mxu0 0.0
    %5179 = vmatprep.subr.mxu0 0.0
    %5180 = vmatpush1.msra.mxu0 0.0
    %5181 = vmatprep.subr.mxu0 0.0
    %5182 = vmatpush1.msra.mxu0 0.0
    %5183 = vmatprep.subr.mxu0 0.0
    %5184 = vmatpush1.msra.mxu0 0.0
    %5185 = vmatprep.subr.mxu0 0.0
    %5186 = vmatpush1.msra.mxu0 0.0
    %5187 = vmatprep.subr.mxu0 0.0
    %5188 = vmatpush1.msra.mxu0 0.0
    %5189 = vmatprep.subr.mxu0 0.0
    %5190 = vmatpush1.msra.mxu0 0.0
    %5191 = vmatprep.subr.mxu0 0.0
    %5192 = vmatpush1.msra.mxu0 0.0
    %5193 = vmatprep.subr.mxu0 0.0
    %5194 = vmatpush1.msra.mxu0 0.0
    %5195 = vmatprep.subr.mxu0 0.0
    %5196 = vmatpush1.msra.mxu0 0.0
    %5197 = vmatprep.subr.mxu0 0.0
    %5198 = vmatpush1.msra.mxu0 0.0
    %5199 = vmatprep.subr.mxu0 0.0
    %5200 = vmatpush1.msra.mxu0 0.0
    %5201 = vmatprep.subr.mxu0 0.0
    %5202 = vmatpush1.msra.mxu0 0.0
    %5203 = vmatprep.subr.mxu0 0.0
    %5204 = vmatpush1.msra.mxu0 0.0
    %5205 = vmatprep.subr.mxu0 0.0
    %5206 = vmatpush1.msra.mxu0 0.0
    %5207 = vmatprep.subr.mxu0 0.0
    %5208 = vmatpush1.msra.mxu0 0.0
    %5209 = vmatprep.subr.mxu0 0.0
    %5210 = vmatpush1.msra.mxu0 0.0
    %5211 = vmatprep.subr.mxu0 0.0
    %5212 = vmatpush1.msra.mxu0 0.0
    %5213 = vmatprep.subr.mxu0 0.0
    %5214 = vmatpush1.msra.mxu0 0.0
    %5215 = vmatprep.subr.mxu0 0.0
    %5216 = vmatpush1.msra.mxu0 0.0
    %5217 = vmatprep.subr.mxu0 0.0
    %5218 = vmatpush1.msra.mxu0 0.0
    %5219 = vmatprep.subr.mxu0 0.0
    %5220 = vmatpush1.msra.mxu0 0.0
    %5221 = vmatprep.subr.mxu0 0.0
    %5222 = vmatpush1.msra.mxu0 0.0
    %5223 = vmatprep.mubr.f32.mxu0 0.0
    %5224 = vmatmul.mubr.f32.gmra.mrb[0].mxu0 %v1413
    %v5225 = vpop.f32.mrb[0].mxu0
    %v5226 = vadd.f32 0.0, %v5225
    %v5227 = vpop.f32.mrb[0].mxu0
    %5228 = vmatprep.mubr.f32.mxu0 0.0
    %5229 = vmatmul.mubr.f32.gmra.mrb[0].mxu0 %v1416
    %v5230 = vpop.f32.mrb[0].mxu0
    %v5231 = vadd.f32 0.0, %v5230
    %v5232 = vpop.f32.mrb[0].mxu0
    %5233 = vdwg.mxu0
    %s5234 = scalar_lea.vmem %s7, 64
    %v5235 = vld [vmem:[%s5234] sm:$0xff]
    %v5236 = vld [vmem:[%s5234 + $0x8] sm:$0xff]
    %v5237 = vld [vmem:[%s5234 + $0x10] sm:$0xff]
    %v5238 = vld [vmem:[%s5234 + $0x18] sm:$0xff]
    %s5239 = scalar_lea.vmem %s8, 2
    %v5240 = vld [vmem:[%s5239] sm:$0x1]
    %v5242 = vlaneseq
    %v5243 = vshrl.u32 %v5242, 7
    %v5244 = vsub.s32 0, %v5243
    %v5245 = vrot.slane %v5240, %v5244
    %v5248 = vsel %vm205, %v5226, 0
    %v5251 = vsel %vm205, %v5231, 0
    %5253 = vmatprep.subr.mxu0 0.0
    %5254 = vmatpush1.msra.mxu0 %v5235
    %5255 = vmatprep.subr.mxu0 0.0
    %5256 = vmatpush1.msra.mxu0 %v5236
    %5257 = vmatprep.subr.mxu0 0.0
    %5258 = vmatpush1.msra.mxu0 %v5237
    %5259 = vmatprep.subr.mxu0 0.0
    %5260 = vmatpush1.msra.mxu0 %v5238
    %5261 = vmatprep.subr.mxu0 0.0
    %5262 = vmatpush1.msra.mxu0 0.0
    %5263 = vmatprep.subr.mxu0 0.0
    %5264 = vmatpush1.msra.mxu0 0.0
    %5265 = vmatprep.subr.mxu0 0.0
    %5266 = vmatpush1.msra.mxu0 0.0
    %5267 = vmatprep.subr.mxu0 0.0
    %5268 = vmatpush1.msra.mxu0 0.0
    %5269 = vmatprep.subr.mxu0 0.0
    %5270 = vmatpush1.msra.mxu0 0.0
    %5271 = vmatprep.subr.mxu0 0.0
    %5272 = vmatpush1.msra.mxu0 0.0
    %5273 = vmatprep.subr.mxu0 0.0
    %5274 = vmatpush1.msra.mxu0 0.0
    %5275 = vmatprep.subr.mxu0 0.0
    %5276 = vmatpush1.msra.mxu0 0.0
    %5277 = vmatprep.subr.mxu0 0.0
    %5278 = vmatpush1.msra.mxu0 0.0
    %5279 = vmatprep.subr.mxu0 0.0
    %5280 = vmatpush1.msra.mxu0 0.0
    %5281 = vmatprep.subr.mxu0 0.0
    %5282 = vmatpush1.msra.mxu0 0.0
    %5283 = vmatprep.subr.mxu0 0.0
    %5284 = vmatpush1.msra.mxu0 0.0
    %5285 = vmatprep.subr.mxu0 0.0
    %5286 = vmatpush1.msra.mxu0 0.0
    %5287 = vmatprep.subr.mxu0 0.0
    %5288 = vmatpush1.msra.mxu0 0.0
    %5289 = vmatprep.subr.mxu0 0.0
    %5290 = vmatpush1.msra.mxu0 0.0
    %5291 = vmatprep.subr.mxu0 0.0
    %5292 = vmatpush1.msra.mxu0 0.0
    %5293 = vmatprep.subr.mxu0 0.0
    %5294 = vmatpush1.msra.mxu0 0.0
    %5295 = vmatprep.subr.mxu0 0.0
    %5296 = vmatpush1.msra.mxu0 0.0
    %5297 = vmatprep.subr.mxu0 0.0
    %5298 = vmatpush1.msra.mxu0 0.0
    %5299 = vmatprep.subr.mxu0 0.0
    %5300 = vmatpush1.msra.mxu0 0.0
    %5301 = vmatprep.subr.mxu0 0.0
    %5302 = vmatpush1.msra.mxu0 0.0
    %5303 = vmatprep.subr.mxu0 0.0
    %5304 = vmatpush1.msra.mxu0 0.0
    %5305 = vmatprep.subr.mxu0 0.0
    %5306 = vmatpush1.msra.mxu0 0.0
    %5307 = vmatprep.subr.mxu0 0.0
    %5308 = vmatpush1.msra.mxu0 0.0
    %5309 = vmatprep.subr.mxu0 0.0
    %5310 = vmatpush1.msra.mxu0 0.0
    %5311 = vmatprep.subr.mxu0 0.0
    %5312 = vmatpush1.msra.mxu0 0.0
    %5313 = vmatprep.subr.mxu0 0.0
    %5314 = vmatpush1.msra.mxu0 0.0
    %5315 = vmatprep.subr.mxu0 0.0
    %5316 = vmatpush1.msra.mxu0 0.0
    %5317 = vmatprep.mubr.f32.mxu0 0.0
    %5318 = vmatmul.mubr.f32.gmra.mrb[0].mxu0 %v5248
    %v5319 = vpop.f32.mrb[0].mxu0
    %v5320 = vadd.f32 %v5245, %v5319
    %v5321 = vpop.f32.mrb[0].mxu0
    %5322 = vmatprep.mubr.f32.mxu0 0.0
    %5323 = vmatmul.mubr.f32.gmra.mrb[0].mxu0 %v5251
    %v5324 = vpop.f32.mrb[0].mxu0
    %v5325 = vadd.f32 %v5245, %v5324
    %v5326 = vpop.f32.mrb[0].mxu0
    %5327 = vdwg.mxu0
    %v5328 = vadd.f32 %v3971, %v5320
    %v5329 = vadd.f32 %v3972, %v5325
    %s5330 = scalar_lea.vmem %s9, 2
    %v5331 = vld [vmem:[%s5330] sm:$0x1]
    %s5332 = scalar_lea.vmem %s10, 2
    %v5333 = vld [vmem:[%s5332] sm:$0x1]
    %v5335 = vsel %vm205, %v5328, 0
    %v5338 = vsel %vm205, %v5329, 0
    %5340 = vmatprep.subr.mxu0 0.0
    %5341 = vmatpush1.msra.mxu0 1.0
    %5342 = vmatprep.subr.mxu0 0.0
    %5343 = vmatpush1.msra.mxu0 1.0
    %5344 = vmatprep.subr.mxu0 0.0
    %5345 = vmatpush1.msra.mxu0 1.0
    %5346 = vmatprep.subr.mxu0 0.0
    %5347 = vmatpush1.msra.mxu0 1.0
    %5348 = vmatprep.subr.mxu0 0.0
    %5349 = vmatpush1.msra.mxu0 0.0
    %5350 = vmatprep.subr.mxu0 0.0
    %5351 = vmatpush1.msra.mxu0 0.0
    %5352 = vmatprep.subr.mxu0 0.0
    %5353 = vmatpush1.msra.mxu0 0.0
    %5354 = vmatprep.subr.mxu0 0.0
    %5355 = vmatpush1.msra.mxu0 0.0
    %5356 = vmatprep.subr.mxu0 0.0
    %5357 = vmatpush1.msra.mxu0 0.0
    %5358 = vmatprep.subr.mxu0 0.0
    %5359 = vmatpush1.msra.mxu0 0.0
    %5360 = vmatprep.subr.mxu0 0.0
    %5361 = vmatpush1.msra.mxu0 0.0
    %5362 = vmatprep.subr.mxu0 0.0
    %5363 = vmatpush1.msra.mxu0 0.0
    %5364 = vmatprep.subr.mxu0 0.0
    %5365 = vmatpush1.msra.mxu0 0.0
    %5366 = vmatprep.subr.mxu0 0.0
    %5367 = vmatpush1.msra.mxu0 0.0
    %5368 = vmatprep.subr.mxu0 0.0
    %5369 = vmatpush1.msra.mxu0 0.0
    %5370 = vmatprep.subr.mxu0 0.0
    %5371 = vmatpush1.msra.mxu0 0.0
    %5372 = vmatprep.subr.mxu0 0.0
    %5373 = vmatpush1.msra.mxu0 0.0
    %5374 = vmatprep.subr.mxu0 0.0
    %5375 = vmatpush1.msra.mxu0 0.0
    %5376 = vmatprep.subr.mxu0 0.0
    %5377 = vmatpush1.msra.mxu0 0.0
    %5378 = vmatprep.subr.mxu0 0.0
    %5379 = vmatpush1.msra.mxu0 0.0
    %5380 = vmatprep.subr.mxu0 0.0
    %5381 = vmatpush1.msra.mxu0 0.0
    %5382 = vmatprep.subr.mxu0 0.0
    %5383 = vmatpush1.msra.mxu0 0.0
    %5384 = vmatprep.subr.mxu0 0.0
    %5385 = vmatpush1.msra.mxu0 0.0
    %5386 = vmatprep.subr.mxu0 0.0
    %5387 = vmatpush1.msra.mxu0 0.0
    %5388 = vmatprep.subr.mxu0 0.0
    %5389 = vmatpush1.msra.mxu0 0.0
    %5390 = vmatprep.subr.mxu0 0.0
    %5391 = vmatpush1.msra.mxu0 0.0
    %5392 = vmatprep.subr.mxu0 0.0
    %5393 = vmatpush1.msra.mxu0 0.0
    %5394 = vmatprep.subr.mxu0 0.0
    %5395 = vmatpush1.msra.mxu0 0.0
    %5396 = vmatprep.subr.mxu0 0.0
    %5397 = vmatpush1.msra.mxu0 0.0
    %5398 = vmatprep.subr.mxu0 0.0
    %5399 = vmatpush1.msra.mxu0 0.0
    %5400 = vmatprep.subr.mxu0 0.0
    %5401 = vmatpush1.msra.mxu0 0.0
    %5402 = vmatprep.subr.mxu0 0.0
    %5403 = vmatpush1.msra.mxu0 0.0
    %5404 = vmatprep.mubr.f32.mxu0 0.0
    %5405 = vmatmul.mubr.f32.gmra.mrb[0].mxu0 %v5335
    %v5406 = vpop.f32.mrb[0].mxu0
    %v5407 = vadd.f32 0.0, %v5406
    %v5408 = vpop.f32.mrb[0].mxu0
    %5409 = vmatprep.mubr.f32.mxu0 0.0
    %5410 = vmatmul.mubr.f32.gmra.mrb[0].mxu0 %v5338
    %v5411 = vpop.f32.mrb[0].mxu0
    %v5412 = vadd.f32 0.0, %v5411
    %v5413 = vpop.f32.mrb[0].mxu0
    %5414 = vdwg.mxu0
    %v5415 = vmul.f32 %v5407, 0.03125
    %v5416 = vmul.f32 %v5412, 0.03125
    %5418 = vset.pattern.permute.xlu0 0
    %5419 = vperm.xlu0 %5418, %v5415
    %v5420 = vpop.permute.xlu0 %5419
    %5423 = vset.pattern.permute.xlu0 0
    %5424 = vperm.xlu0 %5423, %v5416
    %v5425 = vpop.permute.xlu0 %5424
    %v5427 = vsub.f32 %v5328, %v5420
    %v5428 = vsub.f32 %v5329, %v5425
    %v5429 = vmul.f32 %v5427, %v5427
    %v5430 = vmul.f32 %v5428, %v5428
    %v5432 = vsel %vm205, %v5429, 0
    %v5435 = vsel %vm205, %v5430, 0
    %5437 = vmatprep.subr.mxu0 0.0
    %5438 = vmatpush1.msra.mxu0 1.0
    %5439 = vmatprep.subr.mxu0 0.0
    %5440 = vmatpush1.msra.mxu0 1.0
    %5441 = vmatprep.subr.mxu0 0.0
    %5442 = vmatpush1.msra.mxu0 1.0
    %5443 = vmatprep.subr.mxu0 0.0
    %5444 = vmatpush1.msra.mxu0 1.0
    %5445 = vmatprep.subr.mxu0 0.0
    %5446 = vmatpush1.msra.mxu0 0.0
    %5447 = vmatprep.subr.mxu0 0.0
    %5448 = vmatpush1.msra.mxu0 0.0
    %5449 = vmatprep.subr.mxu0 0.0
    %5450 = vmatpush1.msra.mxu0 0.0
    %5451 = vmatprep.subr.mxu0 0.0
    %5452 = vmatpush1.msra.mxu0 0.0
    %5453 = vmatprep.subr.mxu0 0.0
    %5454 = vmatpush1.msra.mxu0 0.0
    %5455 = vmatprep.subr.mxu0 0.0
    %5456 = vmatpush1.msra.mxu0 0.0
    %5457 = vmatprep.subr.mxu0 0.0
    %5458 = vmatpush1.msra.mxu0 0.0
    %5459 = vmatprep.subr.mxu0 0.0
    %5460 = vmatpush1.msra.mxu0 0.0
    %5461 = vmatprep.subr.mxu0 0.0
    %5462 = vmatpush1.msra.mxu0 0.0
    %5463 = vmatprep.subr.mxu0 0.0
    %5464 = vmatpush1.msra.mxu0 0.0
    %5465 = vmatprep.subr.mxu0 0.0
    %5466 = vmatpush1.msra.mxu0 0.0
    %5467 = vmatprep.subr.mxu0 0.0
    %5468 = vmatpush1.msra.mxu0 0.0
    %5469 = vmatprep.subr.mxu0 0.0
    %5470 = vmatpush1.msra.mxu0 0.0
    %5471 = vmatprep.subr.mxu0 0.0
    %5472 = vmatpush1.msra.mxu0 0.0
    %5473 = vmatprep.subr.mxu0 0.0
    %5474 = vmatpush1.msra.mxu0 0.0
    %5475 = vmatprep.subr.mxu0 0.0
    %5476 = vmatpush1.msra.mxu0 0.0
    %5477 = vmatprep.subr.mxu0 0.0
    %5478 = vmatpush1.msra.mxu0 0.0
    %5479 = vmatprep.subr.mxu0 0.0
    %5480 = vmatpush1.msra.mxu0 0.0
    %5481 = vmatprep.subr.mxu0 0.0
    %5482 = vmatpush1.msra.mxu0 0.0
    %5483 = vmatprep.subr.mxu0 0.0
    %5484 = vmatpush1.msra.mxu0 0.0
    %5485 = vmatprep.subr.mxu0 0.0
    %5486 = vmatpush1.msra.mxu0 0.0
    %5487 = vmatprep.subr.mxu0 0.0
    %5488 = vmatpush1.msra.mxu0 0.0
    %5489 = vmatprep.subr.mxu0 0.0
    %5490 = vmatpush1.msra.mxu0 0.0
    %5491 = vmatprep.subr.mxu0 0.0
    %5492 = vmatpush1.msra.mxu0 0.0
    %5493 = vmatprep.subr.mxu0 0.0
    %5494 = vmatpush1.msra.mxu0 0.0
    %5495 = vmatprep.subr.mxu0 0.0
    %5496 = vmatpush1.msra.mxu0 0.0
    %5497 = vmatprep.subr.mxu0 0.0
    %5498 = vmatpush1.msra.mxu0 0.0
    %5499 = vmatprep.subr.mxu0 0.0
    %5500 = vmatpush1.msra.mxu0 0.0
    %5501 = vmatprep.mubr.f32.mxu0 0.0
    %5502 = vmatmul.mubr.f32.gmra.mrb[0].mxu0 %v5432
    %v5503 = vpop.f32.mrb[0].mxu0
    %v5504 = vadd.f32 0.0, %v5503
    %v5505 = vpop.f32.mrb[0].mxu0
    %5506 = vmatprep.mubr.f32.mxu0 0.0
    %5507 = vmatmul.mubr.f32.gmra.mrb[0].mxu0 %v5435
    %v5508 = vpop.f32.mrb[0].mxu0
    %v5509 = vadd.f32 0.0, %v5508
    %v5510 = vpop.f32.mrb[0].mxu0
    %5511 = vdwg.mxu0
    %v5512 = vmul.f32 %v5504, 0.03125
    %v5513 = vmul.f32 %v5509, 0.03125
    %v5514 = vadd.f32 %v5512, 1e-05
    %v5515 = vadd.f32 %v5513, 1e-05
    %v5516 = vrsqrt.pop %v5514
    %v5517 = vrsqrt.pop %v5515
    %5519 = vset.pattern.permute.xlu0 0
    %5520 = vperm.xlu0 %5519, %v5516
    %v5521 = vpop.permute.xlu0 %5520
    %5524 = vset.pattern.permute.xlu0 0
    %5525 = vperm.xlu0 %5524, %v5517
    %v5526 = vpop.permute.xlu0 %5525
    %v5528 = vmul.f32 %v5427, %v5521
    %v5529 = vmul.f32 %v5428, %v5526
    %v5531 = vlaneseq
    %v5532 = vshrl.u32 %v5531, 7
    %v5533 = vsub.s32 0, %v5532
    %v5534 = vrot.slane %v5331, %v5533
    %v5536 = vmul.f32 %v5528, %v5534
    %v5537 = vmul.f32 %v5529, %v5534
    %v5539 = vlaneseq
    %v5540 = vshrl.u32 %v5539, 7
    %v5541 = vsub.s32 0, %v5540
    %v5542 = vrot.slane %v5333, %v5541
    %v5544 = vadd.f32 %v5536, %v5542
    %v5545 = vadd.f32 %v5537, %v5542
    %s5546 = scalar_lea.vmem %s11, 64
    %v5547 = vld [vmem:[%s5546] sm:$0xff]
    %v5548 = vld [vmem:[%s5546 + $0x8] sm:$0xff]
    %v5549 = vld [vmem:[%s5546 + $0x10] sm:$0xff]
    %v5550 = vld [vmem:[%s5546 + $0x18] sm:$0xff]
    %s5551 = scalar_lea.vmem %s12, 2
    %v5552 = vld [vmem:[%s5551] sm:$0x1]
    %v5554 = vlaneseq
    %v5555 = vshrl.u32 %v5554, 7
    %v5556 = vsub.s32 0, %v5555
    %v5557 = vrot.slane %v5552, %v5556
    %v5560 = vsel %vm205, %v5544, 0
    %v5563 = vsel %vm205, %v5545, 0
    %5565 = vmatprep.subr.mxu0 0.0
    %5566 = vmatpush1.msra.mxu0 %v5547
    %5567 = vmatprep.subr.mxu0 0.0
    %5568 = vmatpush1.msra.mxu0 %v5548
    %5569 = vmatprep.subr.mxu0 0.0
    %5570 = vmatpush1.msra.mxu0 %v5549
    %5571 = vmatprep.subr.mxu0 0.0
    %5572 = vmatpush1.msra.mxu0 %v5550
    %5573 = vmatprep.subr.mxu0 0.0
    %5574 = vmatpush1.msra.mxu0 0.0
    %5575 = vmatprep.subr.mxu0 0.0
    %5576 = vmatpush1.msra.mxu0 0.0
    %5577 = vmatprep.subr.mxu0 0.0
    %5578 = vmatpush1.msra.mxu0 0.0
    %5579 = vmatprep.subr.mxu0 0.0
    %5580 = vmatpush1.msra.mxu0 0.0
    %5581 = vmatprep.subr.mxu0 0.0
    %5582 = vmatpush1.msra.mxu0 0.0
    %5583 = vmatprep.subr.mxu0 0.0
    %5584 = vmatpush1.msra.mxu0 0.0
    %5585 = vmatprep.subr.mxu0 0.0
    %5586 = vmatpush1.msra.mxu0 0.0
    %5587 = vmatprep.subr.mxu0 0.0
    %5588 = vmatpush1.msra.mxu0 0.0
    %5589 = vmatprep.subr.mxu0 0.0
    %5590 = vmatpush1.msra.mxu0 0.0
    %5591 = vmatprep.subr.mxu0 0.0
    %5592 = vmatpush1.msra.mxu0 0.0
    %5593 = vmatprep.subr.mxu0 0.0
    %5594 = vmatpush1.msra.mxu0 0.0
    %5595 = vmatprep.subr.mxu0 0.0
    %5596 = vmatpush1.msra.mxu0 0.0
    %5597 = vmatprep.subr.mxu0 0.0
    %5598 = vmatpush1.msra.mxu0 0.0
    %5599 = vmatprep.subr.mxu0 0.0
    %5600 = vmatpush1.msra.mxu0 0.0
    %5601 = vmatprep.subr.mxu0 0.0
    %5602 = vmatpush1.msra.mxu0 0.0
    %5603 = vmatprep.subr.mxu0 0.0
    %5604 = vmatpush1.msra.mxu0 0.0
    %5605 = vmatprep.subr.mxu0 0.0
    %5606 = vmatpush1.msra.mxu0 0.0
    %5607 = vmatprep.subr.mxu0 0.0
    %5608 = vmatpush1.msra.mxu0 0.0
    %5609 = vmatprep.subr.mxu0 0.0
    %5610 = vmatpush1.msra.mxu0 0.0
    %5611 = vmatprep.subr.mxu0 0.0
    %5612 = vmatpush1.msra.mxu0 0.0
    %5613 = vmatprep.subr.mxu0 0.0
    %5614 = vmatpush1.msra.mxu0 0.0
    %5615 = vmatprep.subr.mxu0 0.0
    %5616 = vmatpush1.msra.mxu0 0.0
    %5617 = vmatprep.subr.mxu0 0.0
    %5618 = vmatpush1.msra.mxu0 0.0
    %5619 = vmatprep.subr.mxu0 0.0
    %5620 = vmatpush1.msra.mxu0 0.0
    %5621 = vmatprep.subr.mxu0 0.0
    %5622 = vmatpush1.msra.mxu0 0.0
    %5623 = vmatprep.subr.mxu0 0.0
    %5624 = vmatpush1.msra.mxu0 0.0
    %5625 = vmatprep.subr.mxu0 0.0
    %5626 = vmatpush1.msra.mxu0 0.0
    %5627 = vmatprep.subr.mxu0 0.0
    %5628 = vmatpush1.msra.mxu0 0.0
    %5629 = vmatprep.mubr.f32.mxu0 0.0
    %5630 = vmatmul.mubr.f32.gmra.mrb[0].mxu0 %v5560
    %v5631 = vpop.f32.mrb[0].mxu0
    %v5632 = vadd.f32 %v5557, %v5631
    %v5633 = vpop.f32.mrb[0].mxu0
    %5634 = vmatprep.mubr.f32.mxu0 0.0
    %5635 = vmatmul.mubr.f32.gmra.mrb[0].mxu0 %v5563
    %v5636 = vpop.f32.mrb[0].mxu0
    %v5637 = vadd.f32 %v5557, %v5636
    %v5638 = vpop.f32.mrb[0].mxu0
    %5639 = vdwg.mxu0
    %v5640 = vmul.f32 %v5632, 1.702
    %v5641 = vmul.f32 %v5637, 1.702
    %v5642 = vxor.u32 %v5640, 2147483648
    %v5643 = vxor.u32 %v5641, 2147483648
    %v5644 = vmul.f32 %v5642, 1.442695
    %v5645 = vpow.pop %v5644
    %v5646 = vmul.f32 %v5643, 1.442695
    %v5647 = vpow.pop %v5646
    %v5648 = vadd.f32 %v5645, 1.0
    %v5649 = vadd.f32 %v5647, 1.0
    %v5650 = vrcp.pop %v5648
    %v5651 = vmul.f32 1.0, %v5650
    %v5652 = vrcp.pop %v5649
    %v5653 = vmul.f32 1.0, %v5652
    %v5654 = vmul.f32 %v5632, %v5651
    %v5655 = vmul.f32 %v5637, %v5653
    %s5656 = scalar_lea.vmem %s13, 256
    %v5657 = vld [vmem:[%s5656] sm:$0xff]
    %v5658 = vld [vmem:[%s5656 + $0x8] sm:$0xff]
    %v5659 = vld [vmem:[%s5656 + $0x10] sm:$0xff]
    %v5660 = vld [vmem:[%s5656 + $0x18] sm:$0xff]
    %v5661 = vld [vmem:[%s5656 + $0x20] sm:$0xff]
    %v5662 = vld [vmem:[%s5656 + $0x28] sm:$0xff]
    %v5663 = vld [vmem:[%s5656 + $0x30] sm:$0xff]
    %v5664 = vld [vmem:[%s5656 + $0x38] sm:$0xff]
    %v5665 = vld [vmem:[%s5656 + $0x40] sm:$0xff]
    %v5666 = vld [vmem:[%s5656 + $0x48] sm:$0xff]
    %v5667 = vld [vmem:[%s5656 + $0x50] sm:$0xff]
    %v5668 = vld [vmem:[%s5656 + $0x58] sm:$0xff]
    %v5669 = vld [vmem:[%s5656 + $0x60] sm:$0xff]
    %v5670 = vld [vmem:[%s5656 + $0x68] sm:$0xff]
    %v5671 = vld [vmem:[%s5656 + $0x70] sm:$0xff]
    %v5672 = vld [vmem:[%s5656 + $0x78] sm:$0xff]
    %5673 = vmatprep.subr.mxu0 0.0
    %5674 = vmatpush1.msra.mxu0 %v5657
    %5675 = vmatprep.subr.mxu0 0.0
    %5676 = vmatpush1.msra.mxu0 %v5658
    %5677 = vmatprep.subr.mxu0 0.0
    %5678 = vmatpush1.msra.mxu0 %v5659
    %5679 = vmatprep.subr.mxu0 0.0
    %5680 = vmatpush1.msra.mxu0 %v5660
    %5681 = vmatprep.subr.mxu0 0.0
    %5682 = vmatpush1.msra.mxu0 %v5661
    %5683 = vmatprep.subr.mxu0 0.0
    %5684 = vmatpush1.msra.mxu0 %v5662
    %5685 = vmatprep.subr.mxu0 0.0
    %5686 = vmatpush1.msra.mxu0 %v5663
    %5687 = vmatprep.subr.mxu0 0.0
    %5688 = vmatpush1.msra.mxu0 %v5664
    %5689 = vmatprep.subr.mxu0 0.0
    %5690 = vmatpush1.msra.mxu0 %v5665
    %5691 = vmatprep.subr.mxu0 0.0
    %5692 = vmatpush1.msra.mxu0 %v5666
    %5693 = vmatprep.subr.mxu0 0.0
    %5694 = vmatpush1.msra.mxu0 %v5667
    %5695 = vmatprep.subr.mxu0 0.0
    %5696 = vmatpush1.msra.mxu0 %v5668
    %5697 = vmatprep.subr.mxu0 0.0
    %5698 = vmatpush1.msra.mxu0 %v5669
    %5699 = vmatprep.subr.mxu0 0.0
    %5700 = vmatpush1.msra.mxu0 %v5670
    %5701 = vmatprep.subr.mxu0 0.0
    %5702 = vmatpush1.msra.mxu0 %v5671
    %5703 = vmatprep.subr.mxu0 0.0
    %5704 = vmatpush1.msra.mxu0 %v5672
    %5705 = vmatprep.subr.mxu0 0.0
    %5706 = vmatpush1.msra.mxu0 0.0
    %5707 = vmatprep.subr.mxu0 0.0
    %5708 = vmatpush1.msra.mxu0 0.0
    %5709 = vmatprep.subr.mxu0 0.0
    %5710 = vmatpush1.msra.mxu0 0.0
    %5711 = vmatprep.subr.mxu0 0.0
    %5712 = vmatpush1.msra.mxu0 0.0
    %5713 = vmatprep.subr.mxu0 0.0
    %5714 = vmatpush1.msra.mxu0 0.0
    %5715 = vmatprep.subr.mxu0 0.0
    %5716 = vmatpush1.msra.mxu0 0.0
    %5717 = vmatprep.subr.mxu0 0.0
    %5718 = vmatpush1.msra.mxu0 0.0
    %5719 = vmatprep.subr.mxu0 0.0
    %5720 = vmatpush1.msra.mxu0 0.0
    %5721 = vmatprep.subr.mxu0 0.0
    %5722 = vmatpush1.msra.mxu0 0.0
    %5723 = vmatprep.subr.mxu0 0.0
    %5724 = vmatpush1.msra.mxu0 0.0
    %5725 = vmatprep.subr.mxu0 0.0
    %5726 = vmatpush1.msra.mxu0 0.0
    %5727 = vmatprep.subr.mxu0 0.0
    %5728 = vmatpush1.msra.mxu0 0.0
    %5729 = vmatprep.subr.mxu0 0.0
    %5730 = vmatpush1.msra.mxu0 0.0
    %5731 = vmatprep.subr.mxu0 0.0
    %5732 = vmatpush1.msra.mxu0 0.0
    %5733 = vmatprep.subr.mxu0 0.0
    %5734 = vmatpush1.msra.mxu0 0.0
    %5735 = vmatprep.subr.mxu0 0.0
    %5736 = vmatpush1.msra.mxu0 0.0
    %5737 = vmatprep.mubr.f32.mxu0 0.0
    %5738 = vmatmul.mubr.f32.gmra.mrb[0].mxu0 %v5654
    %v5739 = vpop.f32.mrb[0].mxu0
    %v5740 = vadd.f32 0.0, %v5739
    %v5741 = vpop.f32.mrb[0].mxu0
    %5742 = vmatprep.mubr.f32.mxu0 0.0
    %5743 = vmatmul.mubr.f32.gmra.mrb[0].mxu0 %v5655
    %v5744 = vpop.f32.mrb[0].mxu0
    %v5745 = vadd.f32 0.0, %v5744
    %v5746 = vpop.f32.mrb[0].mxu0
    %5747 = vdwg.mxu0
    %v5748 = vadd.f32 %v5328, %v5740
    %v5749 = vadd.f32 %v5329, %v5745
    %s5750 = scalar_lea.vmem %s14, 2
    %v5751 = vld [vmem:[%s5750] sm:$0x1]
    %v5753 = vlaneseq
    %v5754 = vshrl.u32 %v5753, 7
    %v5755 = vsub.s32 0, %v5754
    %v5756 = vrot.slane %v5751, %v5755
    %v5758 = vadd.f32 %v5748, %v5756
    %v5759 = vadd.f32 %v5749, %v5756
    %5760 = vst.msk [vmem:[#allocation2] sm:$0xff] %vm205, %v5758
    %5761 = vst.msk [vmem:[#allocation2 + $0x8] sm:$0xff] %vm205, %v5759
    %s5762 = sld [smem:[#allocation4]]
    %s5763 = scalar_lea.vmem [#allocation2], %s5762
    %v5764 = vld [vmem:[%s5763] sm:$0x1]
    %s5765 = sld [smem:[#allocation4 + $0x1]]
    %s5766 = sadd.s32 %s5765, 8
    %s5767 = scalar_lea.vmem [#allocation2], %s5766
    %v5768 = vld [vmem:[%s5767] sm:$0x1]
    %v5770 = vrot.slane %v5768, 7
    %vm5772 = vcmask 1040384
    %v5773 = vsel %vm5772, %v5764, %v5770
    %v5774 = vld [vmem:[%s15] sm:$0x1]
    %v5775 = vld [vmem:[%s16] sm:$0x1]
    %v5777 = vsel %vm205, %v5773, 0
    %5779 = vmatprep.subr.mxu0 0.0
    %5780 = vmatpush1.msra.mxu0 1.0
    %5781 = vmatprep.subr.mxu0 0.0
    %5782 = vmatpush1.msra.mxu0 1.0
    %5783 = vmatprep.subr.mxu0 0.0
    %5784 = vmatpush1.msra.mxu0 1.0
    %5785 = vmatprep.subr.mxu0 0.0
    %5786 = vmatpush1.msra.mxu0 1.0
    %5787 = vmatprep.subr.mxu0 0.0
    %5788 = vmatpush1.msra.mxu0 0.0
    %5789 = vmatprep.subr.mxu0 0.0
    %5790 = vmatpush1.msra.mxu0 0.0
    %5791 = vmatprep.subr.mxu0 0.0
    %5792 = vmatpush1.msra.mxu0 0.0
    %5793 = vmatprep.subr.mxu0 0.0
    %5794 = vmatpush1.msra.mxu0 0.0
    %5795 = vmatprep.subr.mxu0 0.0
    %5796 = vmatpush1.msra.mxu0 0.0
    %5797 = vmatprep.subr.mxu0 0.0
    %5798 = vmatpush1.msra.mxu0 0.0
    %5799 = vmatprep.subr.mxu0 0.0
    %5800 = vmatpush1.msra.mxu0 0.0
    %5801 = vmatprep.subr.mxu0 0.0
    %5802 = vmatpush1.msra.mxu0 0.0
    %5803 = vmatprep.subr.mxu0 0.0
    %5804 = vmatpush1.msra.mxu0 0.0
    %5805 = vmatprep.subr.mxu0 0.0
    %5806 = vmatpush1.msra.mxu0 0.0
    %5807 = vmatprep.subr.mxu0 0.0
    %5808 = vmatpush1.msra.mxu0 0.0
    %5809 = vmatprep.subr.mxu0 0.0
    %5810 = vmatpush1.msra.mxu0 0.0
    %5811 = vmatprep.subr.mxu0 0.0
    %5812 = vmatpush1.msra.mxu0 0.0
    %5813 = vmatprep.subr.mxu0 0.0
    %5814 = vmatpush1.msra.mxu0 0.0
    %5815 = vmatprep.subr.mxu0 0.0
    %5816 = vmatpush1.msra.mxu0 0.0
    %5817 = vmatprep.subr.mxu0 0.0
    %5818 = vmatpush1.msra.mxu0 0.0
    %5819 = vmatprep.subr.mxu0 0.0
    %5820 = vmatpush1.msra.mxu0 0.0
    %5821 = vmatprep.subr.mxu0 0.0
    %5822 = vmatpush1.msra.mxu0 0.0
    %5823 = vmatprep.subr.mxu0 0.0
    %5824 = vmatpush1.msra.mxu0 0.0
    %5825 = vmatprep.subr.mxu0 0.0
    %5826 = vmatpush1.msra.mxu0 0.0
    %5827 = vmatprep.subr.mxu0 0.0
    %5828 = vmatpush1.msra.mxu0 0.0
    %5829 = vmatprep.subr.mxu0 0.0
    %5830 = vmatpush1.msra.mxu0 0.0
    %5831 = vmatprep.subr.mxu0 0.0
    %5832 = vmatpush1.msra.mxu0 0.0
    %5833 = vmatprep.subr.mxu0 0.0
    %5834 = vmatpush1.msra.mxu0 0.0
    %5835 = vmatprep.subr.mxu0 0.0
    %5836 = vmatpush1.msra.mxu0 0.0
    %5837 = vmatprep.subr.mxu0 0.0
    %5838 = vmatpush1.msra.mxu0 0.0
    %5839 = vmatprep.subr.mxu0 0.0
    %5840 = vmatpush1.msra.mxu0 0.0
    %5841 = vmatprep.subr.mxu0 0.0
    %5842 = vmatpush1.msra.mxu0 0.0
    %5843 = vmatprep.mubr.f32.mxu0 0.0
    %5844 = vmatmul.mubr.f32.gmra.mrb[0].mxu0 %v5777
    %v5845 = vpop.f32.mrb[0].mxu0
    %v5846 = vadd.f32 0.0, %v5845
    %v5847 = vpop.f32.mrb[0].mxu0
    %5848 = vdwg.mxu0
    %v5849 = vmul.f32 %v5846, 0.03125
    %5851 = vset.pattern.permute.xlu0 0
    %5852 = vperm.xlu0 %5851, %v5849
    %v5853 = vpop.permute.xlu0 %5852
    %v5855 = vsub.f32 %v5773, %v5853
    %v5856 = vmul.f32 %v5855, %v5855
    %v5858 = vsel %vm205, %v5856, 0
    %5860 = vmatprep.subr.mxu0 0.0
    %5861 = vmatpush1.msra.mxu0 1.0
    %5862 = vmatprep.subr.mxu0 0.0
    %5863 = vmatpush1.msra.mxu0 1.0
    %5864 = vmatprep.subr.mxu0 0.0
    %5865 = vmatpush1.msra.mxu0 1.0
    %5866 = vmatprep.subr.mxu0 0.0
    %5867 = vmatpush1.msra.mxu0 1.0
    %5868 = vmatprep.subr.mxu0 0.0
    %5869 = vmatpush1.msra.mxu0 0.0
    %5870 = vmatprep.subr.mxu0 0.0
    %5871 = vmatpush1.msra.mxu0 0.0
    %5872 = vmatprep.subr.mxu0 0.0
    %5873 = vmatpush1.msra.mxu0 0.0
    %5874 = vmatprep.subr.mxu0 0.0
    %5875 = vmatpush1.msra.mxu0 0.0
    %5876 = vmatprep.subr.mxu0 0.0
    %5877 = vmatpush1.msra.mxu0 0.0
    %5878 = vmatprep.subr.mxu0 0.0
    %5879 = vmatpush1.msra.mxu0 0.0
    %5880 = vmatprep.subr.mxu0 0.0
    %5881 = vmatpush1.msra.mxu0 0.0
    %5882 = vmatprep.subr.mxu0 0.0
    %5883 = vmatpush1.msra.mxu0 0.0
    %5884 = vmatprep.subr.mxu0 0.0
    %5885 = vmatpush1.msra.mxu0 0.0
    %5886 = vmatprep.subr.mxu0 0.0
    %5887 = vmatpush1.msra.mxu0 0.0
    %5888 = vmatprep.subr.mxu0 0.0
    %5889 = vmatpush1.msra.mxu0 0.0
    %5890 = vmatprep.subr.mxu0 0.0
    %5891 = vmatpush1.msra.mxu0 0.0
    %5892 = vmatprep.subr.mxu0 0.0
    %5893 = vmatpush1.msra.mxu0 0.0
    %5894 = vmatprep.subr.mxu0 0.0
    %5895 = vmatpush1.msra.mxu0 0.0
    %5896 = vmatprep.subr.mxu0 0.0
    %5897 = vmatpush1.msra.mxu0 0.0
    %5898 = vmatprep.subr.mxu0 0.0
    %5899 = vmatpush1.msra.mxu0 0.0
    %5900 = vmatprep.subr.mxu0 0.0
    %5901 = vmatpush1.msra.mxu0 0.0
    %5902 = vmatprep.subr.mxu0 0.0
    %5903 = vmatpush1.msra.mxu0 0.0
    %5904 = vmatprep.subr.mxu0 0.0
    %5905 = vmatpush1.msra.mxu0 0.0
    %5906 = vmatprep.subr.mxu0 0.0
    %5907 = vmatpush1.msra.mxu0 0.0
    %5908 = vmatprep.subr.mxu0 0.0
    %5909 = vmatpush1.msra.mxu0 0.0
    %5910 = vmatprep.subr.mxu0 0.0
    %5911 = vmatpush1.msra.mxu0 0.0
    %5912 = vmatprep.subr.mxu0 0.0
    %5913 = vmatpush1.msra.mxu0 0.0
    %5914 = vmatprep.subr.mxu0 0.0
    %5915 = vmatpush1.msra.mxu0 0.0
    %5916 = vmatprep.subr.mxu0 0.0
    %5917 = vmatpush1.msra.mxu0 0.0
    %5918 = vmatprep.subr.mxu0 0.0
    %5919 = vmatpush1.msra.mxu0 0.0
    %5920 = vmatprep.subr.mxu0 0.0
    %5921 = vmatpush1.msra.mxu0 0.0
    %5922 = vmatprep.subr.mxu0 0.0
    %5923 = vmatpush1.msra.mxu0 0.0
    %5924 = vmatprep.mubr.f32.mxu0 0.0
    %5925 = vmatmul.mubr.f32.gmra.mrb[0].mxu0 %v5858
    %v5926 = vpop.f32.mrb[0].mxu0
    %v5927 = vadd.f32 0.0, %v5926
    %v5928 = vpop.f32.mrb[0].mxu0
    %5929 = vdwg.mxu0
    %v5930 = vmul.f32 %v5927, 0.03125
    %v5931 = vadd.f32 %v5930, 1e-05
    %v5932 = vrsqrt.pop %v5931
    %5934 = vset.pattern.permute.xlu0 0
    %5935 = vperm.xlu0 %5934, %v5932
    %v5936 = vpop.permute.xlu0 %5935
    %v5938 = vmul.f32 %v5855, %v5936
    %v5940 = vlaneseq
    %v5941 = vshrl.u32 %v5940, 7
    %v5942 = vsub.s32 0, %v5941
    %v5943 = vrot.slane %v5774, %v5942
    %v5945 = vmul.f32 %v5938, %v5943
    %v5947 = vlaneseq
    %v5948 = vshrl.u32 %v5947, 7
    %v5949 = vsub.s32 0, %v5948
    %v5950 = vrot.slane %v5775, %v5949
    %v5952 = vadd.f32 %v5945, %v5950
    %v5953 = vld [vmem:[%s17] sm:$0xff]
    %v5954 = vld [vmem:[%s17 + $0x8] sm:$0xff]
    %v5955 = vld [vmem:[%s17 + $0x10] sm:$0xff]
    %v5956 = vld [vmem:[%s17 + $0x18] sm:$0xff]
    %v5958 = vsel %vm205, %v5952, 0
    %5960 = vmatprep.subr.mxu0 0.0
    %5961 = vmatpush1.msra.mxu0 %v5953
    %5962 = vmatprep.subr.mxu0 0.0
    %5963 = vmatpush1.msra.mxu0 %v5954
    %5964 = vmatprep.subr.mxu0 0.0
    %5965 = vmatpush1.msra.mxu0 %v5955
    %5966 = vmatprep.subr.mxu0 0.0
    %5967 = vmatpush1.msra.mxu0 %v5956
    %5968 = vmatprep.subr.mxu0 0.0
    %5969 = vmatpush1.msra.mxu0 0.0
    %5970 = vmatprep.subr.mxu0 0.0
    %5971 = vmatpush1.msra.mxu0 0.0
    %5972 = vmatprep.subr.mxu0 0.0
    %5973 = vmatpush1.msra.mxu0 0.0
    %5974 = vmatprep.subr.mxu0 0.0
    %5975 = vmatpush1.msra.mxu0 0.0
    %5976 = vmatprep.subr.mxu0 0.0
    %5977 = vmatpush1.msra.mxu0 0.0
    %5978 = vmatprep.subr.mxu0 0.0
    %5979 = vmatpush1.msra.mxu0 0.0
    %5980 = vmatprep.subr.mxu0 0.0
    %5981 = vmatpush1.msra.mxu0 0.0
    %5982 = vmatprep.subr.mxu0 0.0
    %5983 = vmatpush1.msra.mxu0 0.0
    %5984 = vmatprep.subr.mxu0 0.0
    %5985 = vmatpush1.msra.mxu0 0.0
    %5986 = vmatprep.subr.mxu0 0.0
    %5987 = vmatpush1.msra.mxu0 0.0
    %5988 = vmatprep.subr.mxu0 0.0
    %5989 = vmatpush1.msra.mxu0 0.0
    %5990 = vmatprep.subr.mxu0 0.0
    %5991 = vmatpush1.msra.mxu0 0.0
    %5992 = vmatprep.subr.mxu0 0.0
    %5993 = vmatpush1.msra.mxu0 0.0
    %5994 = vmatprep.subr.mxu0 0.0
    %5995 = vmatpush1.msra.mxu0 0.0
    %5996 = vmatprep.subr.mxu0 0.0
    %5997 = vmatpush1.msra.mxu0 0.0
    %5998 = vmatprep.subr.mxu0 0.0
    %5999 = vmatpush1.msra.mxu0 0.0
    %6000 = vmatprep.subr.mxu0 0.0
    %6001 = vmatpush1.msra.mxu0 0.0
    %6002 = vmatprep.subr.mxu0 0.0
    %6003 = vmatpush1.msra.mxu0 0.0
    %6004 = vmatprep.subr.mxu0 0.0
    %6005 = vmatpush1.msra.mxu0 0.0
    %6006 = vmatprep.subr.mxu0 0.0
    %6007 = vmatpush1.msra.mxu0 0.0
    %6008 = vmatprep.subr.mxu0 0.0
    %6009 = vmatpush1.msra.mxu0 0.0
    %6010 = vmatprep.subr.mxu0 0.0
    %6011 = vmatpush1.msra.mxu0 0.0
    %6012 = vmatprep.subr.mxu0 0.0
    %6013 = vmatpush1.msra.mxu0 0.0
    %6014 = vmatprep.subr.mxu0 0.0
    %6015 = vmatpush1.msra.mxu0 0.0
    %6016 = vmatprep.subr.mxu0 0.0
    %6017 = vmatpush1.msra.mxu0 0.0
    %6018 = vmatprep.subr.mxu0 0.0
    %6019 = vmatpush1.msra.mxu0 0.0
    %6020 = vmatprep.subr.mxu0 0.0
    %6021 = vmatpush1.msra.mxu0 0.0
    %6022 = vmatprep.subr.mxu0 0.0
    %6023 = vmatpush1.msra.mxu0 0.0
    %6024 = vmatprep.mubr.f32.mxu0 0.0
    %6025 = vmatmul.mubr.f32.gmra.mrb[0].mxu0 %v5958
    %v6026 = vpop.f32.mrb[0].mxu0
    %v6027 = vadd.f32 0.0, %v6026
    %v6028 = vpop.f32.mrb[0].mxu0
    %6029 = vdwg.mxu0
    %vm6030 = vcmask 254976
    %6031 = vst.msk [vmem:[#allocation5] sm:$0x3] %vm6030, %v6027
    // Predicated region
    $region70: #{tpu_custom_call.1} parent=1 // pred_check
      _
    $region71: #{tpu_custom_call.1} parent=1 // pred_check_branch
      %6033 = sbr.rel (0) target = $region73
    $region72: #{tpu_custom_call.1} parent=1 // pred_region
      %s6035 = ssub.s32 32, 32
      %6036 = vsyncadd [#allocation6], %s6035
      %s6038 = sshll.u32 [#allocation5], 4
      %s6039 = int_to_ptr.vmem [resolvable:$true] %s6038
      %6041 = dma.vmem_to_hbm [thread:$0]  %s6039, 32, %s18, [#allocation6]
    $region73: #{tpu_custom_call.1} parent=1 // pred_fallthru
      _
    // Predicated region
    $region74: #{tpu_custom_call.1} parent=1 // pred_check
      _
    $region75: #{tpu_custom_call.1} parent=1 // pred_check_branch
      %6043 = sbr.rel (0) target = $region77
    $region76: #{tpu_custom_call.1} parent=1 // pred_region
      %6044 = dma.done [#allocation6], 32
    $region77: #{tpu_custom_call.1} parent=1 // pred_fallthru
      _
    %6045 = vsyncpa [#allocation6], 1

</llo_original>
